<compile_context>
chip_gen: v7x
topology: tpu7x:2x2x1
jax: 0.10.0
libtpu: 0.0.40
codegen_flags: <defaults>
</compile_context>

<pallas_src>
import functools

import numpy as np
import jax
import jax.numpy as jnp
from jax import lax
from jax.experimental import pallas as pl
from jax.experimental.pallas import tpu as pltpu

EPS = 1e-5                              # PyTorch BatchNorm2d default eps
VMEM_LIMIT_BYTES = 32 * 1024 * 1024     # safe on v5e/v6e (128 MiB) and v7x (64 MiB)


# --------------------------------------------------------------------------
# In-kernel building blocks (operate on channel-major (C, M=N*H*W) values)
# --------------------------------------------------------------------------
def _bn_prelu(y, gamma, beta, alpha):
    """Training-mode BatchNorm (two-pass centered, biased variance) + PReLU.

    y: (Cout, M) f32 conv output (bias-free; the Conv2d bias cancels exactly
    under batch-statistics BN).  gamma/beta: (Cout, 1) f32.  alpha: f32 scalar.
    """
    inv_m = 1.0 / y.shape[1]
    mean = jnp.sum(y, axis=1, keepdims=True) * inv_m
    yc = y - mean
    var = jnp.sum(yc * yc, axis=1, keepdims=True) * inv_m
    yn = yc * (lax.rsqrt(var + EPS) * gamma) + beta
    return jnp.where(yn > 0, yn, alpha * yn).astype(jnp.bfloat16)


def _conv1x1_acc(parts):
    """Sum of (Cout, Cin_i) @ (Cin_i, M) matmuls (K-split replaces torch.cat)."""
    acc = None
    for w_ref, act in parts:
        t = jnp.dot(w_ref[...], act, preferred_element_type=jnp.float32)
        acc = t if acc is None else acc + t
    return acc


def _conv3x3_acc(parts, msk_ref, scr_ref, cout, m, w_sp):
    """3x3 / stride-1 / pad-1 conv on channel-major activations.

    parts:   list of (w9_ref (9, cout, cin), act (cin, M) bf16); concatenated
             inputs are handled by splitting the weight along Cin.
    msk_ref: (9, M) bf16 0/1 tap-validity masks (precomputed on host).
    scr_ref: (cin, >= M + 2*(w_sp+1)) bf16 VMEM scratch, used as a zero-padded
             line buffer so every shifted tap is a plain static slice.
    """
    pw = w_sp + 1
    acc = jnp.zeros((cout, m), jnp.float32)
    for w9_ref, act in parts:
        scr_ref[...] = jnp.zeros(scr_ref.shape, scr_ref.dtype)
        scr_ref[:, pw:pw + m] = act.astype(scr_ref.dtype)
        for di in range(3):
            for dj in range(3):
                k = di * 3 + dj
                s = (di - 1) * w_sp + (dj - 1)
                tap = scr_ref[:, pw + s:pw + s + m] * msk_ref[k:k + 1, :]
                acc = acc + jnp.dot(w9_ref[k], tap,
                                    preferred_element_type=jnp.float32)
    return acc


# --------------------------------------------------------------------------
# Kernel A: conv1_1 .. conv3_5 (13 ConvBlocks + 3 AvgPools) in one launch
# --------------------------------------------------------------------------
def _stage123_kernel(x_ref,
                     w11, w12, w13, w14a, w14b,
                     w21, w22, w23, w24a, w24b,
                     w31, w32, w33, w34a, w34b,
                     w35,
                     gp1, gp2, gp3,
                     msk1, msk2, msk3,
                     gam, bet, alp,
                     c14_ref, c24_ref, c35_ref,
                     scr_ref,
                     *, n, h, w, nf):
    m1 = n * h * w
    m2 = n * (h // 2) * (w // 2)
    m3 = n * (h // 4) * (w // 4)

    def cb(y, li):   # shared ConvBlock epilogue (BN + PReLU), params packed per layer
        return _bn_prelu(y, gam[:, li:li + 1], bet[:, li:li + 1], alp[li])

    def pool(act, g_ref):   # AvgPool2d(2,2) as one MXU matmul with a 0.25-matrix
        return jnp.dot(act, g_ref[...],
                       preferred_element_type=jnp.float32).astype(jnp.bfloat16)

    x = x_ref[...]
    c11 = cb(_conv1x1_acc([(w11, x)]), 0)
    c12 = cb(_conv3x3_acc([(w12, c11)], msk1, scr_ref, nf, m1, w), 1)
    c13 = cb(_conv1x1_acc([(w13, c12)]), 2)
    c14 = cb(_conv1x1_acc([(w14a, c11), (w14b, c13)]), 3)   # cat(c1_1,c1_3) via K-split
    c14_ref[...] = c14                                      # needed by down1 (kernel B)
    p1 = pool(c14, gp1)

    c21 = cb(_conv1x1_acc([(w21, p1)]), 4)
    c22 = cb(_conv3x3_acc([(w22, c21)], msk2, scr_ref, nf, m2, w // 2), 5)
    c23 = cb(_conv1x1_acc([(w23, c22)]), 6)
    c24 = cb(_conv1x1_acc([(w24a, p1), (w24b, c23)]), 7)    # cat(p1,c2_3) via K-split
    c24_ref[...] = c24                                      # needed by down2 (kernel B)
    p2 = pool(c24, gp2)

    c31 = cb(_conv1x1_acc([(w31, p2)]), 8)
    c32 = cb(_conv3x3_acc([(w32, c31)], msk3, scr_ref, nf, m3, w // 4), 9)
    c33 = cb(_conv1x1_acc([(w33, c32)]), 10)
    c34 = cb(_conv1x1_acc([(w34a, p2), (w34b, c33)]), 11)   # cat(p2,c3_3) via K-split
    p3 = pool(c34, gp3)
    c35_ref[...] = cb(_conv1x1_acc([(w35, p3)]), 12)


# --------------------------------------------------------------------------
# Kernel B: down1, down2, conv4_1 (3x3 on 2x2 spatial), conv4_2 in one launch
# --------------------------------------------------------------------------
def _stage4_kernel(c35_ref, p1pat_ref, p2pat_ref,
                   wd1, wd2, w41a, w41b, w41c, w42,
                   mskd, gam, bet, g42, b42, alp,
                   out_ref, scr_ref,
                   *, m4, wd, nf):
    e1 = _bn_prelu(jnp.dot(wd1[...], p1pat_ref[...],
                           preferred_element_type=jnp.float32),
                   gam[:, 0:1], bet[:, 0:1], alp[0])
    e2 = _bn_prelu(jnp.dot(wd2[...], p2pat_ref[...],
                           preferred_element_type=jnp.float32),
                   gam[:, 1:2], bet[:, 1:2], alp[1])
    c35 = c35_ref[...]
    # cat(c3_5, e1, e2) handled by splitting conv4_1's weight along Cin.
    y41 = _conv3x3_acc([(w41a, c35), (w41b, e1), (w41c, e2)],
                       mskd, scr_ref, nf, m4, wd)
    o1 = _bn_prelu(y41, gam[:, 2:3], bet[:, 2:3], alp[2])
    y42 = jnp.dot(w42[...], o1, preferred_element_type=jnp.float32)
    out_ref[...] = _bn_prelu(y42, g42[...], b42[...], alp[3])


# --------------------------------------------------------------------------
# Host-side constants (trace-time numpy; become XLA constants)
# --------------------------------------------------------------------------
def _pool_matrix(n, h, w):
    """(n*h*w, n*(h//2)*(w//2)) matrix implementing AvgPool2d(2,2) as a matmul."""
    oh, ow = h // 2, w // 2
    g = np.zeros((n * h * w, n * oh * ow), np.float32)
    for b in range(n):
        for i in range(oh):
            for j in range(ow):
                mo = (b * oh + i) * ow + j
                for di in range(2):
                    for dj in range(2):
                        mi = (b * h + 2 * i + di) * w + 2 * j + dj
                        g[mi, mo] = 0.25
    return jnp.asarray(g, jnp.bfloat16)


def _conv3x3_mask(n, h, w):
    """(9, n*h*w) 0/1 masks: tap (di,dj) validity per output position (pad=1)."""
    rows = np.arange(h)[:, None]
    cols = np.arange(w)[None, :]
    msk = np.zeros((9, n * h * w), np.float32)
    for di in range(3):
        for dj in range(3):
            ok = ((rows + di - 1 >= 0) & (rows + di - 1 < h) &
                  (cols + dj - 1 >= 0) & (cols + dj - 1 < w))
            msk[di * 3 + dj] = np.tile(ok.reshape(-1).astype(np.float32), n)
    return jnp.asarray(msk, jnp.bfloat16)


def _im2col_cnhw(a4, kh, kw, stride, pad):
    """a4: (C, N, H, W) -> patches (C*kh*kw, N*OH*OW), feature order (C, kh, kw)."""
    c, n, h, w = a4.shape
    ap = jnp.pad(a4, ((0, 0), (0, 0), (pad, pad), (pad, pad)))
    oh = (h + 2 * pad - kh) // stride + 1
    ow = (w + 2 * pad - kw) // stride + 1
    cols = [ap[:, :, i:i + stride * oh:stride, j:j + stride * ow:stride]
            for i in range(kh) for j in range(kw)]
    return jnp.stack(cols, axis=1).reshape(c * kh * kw, n * oh * ow), oh, ow


# --------------------------------------------------------------------------
# EncoderBlock forward (channel-major internally; NCHW f32 at the boundary)
# --------------------------------------------------------------------------
def encoder_block_forward(x, P):
    n, cin, h, w = x.shape
    nf = P["conv1_1"]["w"].shape[0]
    outf = P["conv4_2"]["w"].shape[0]
    hd, wd = h // 8, w // 8
    m1 = n * h * w
    m2 = n * (h // 2) * (w // 2)
    m4 = n * hd * wd
    bf = jnp.bfloat16

    a = jnp.transpose(x, (1, 0, 2, 3)).reshape(cin, m1).astype(bf)

    def w1(name):                       # 1x1 conv -> (Cout, Cin)
        wt = P[name]["w"]
        return wt.reshape(wt.shape[0], wt.shape[1]).astype(bf)

    def w1_split(name, sizes):          # 1x1 conv on torch.cat input -> K-split parts
        wt = P[name]["w"]
        wm = wt.reshape(wt.shape[0], wt.shape[1])
        outs, off = [], 0
        for sz in sizes:
            outs.append(wm[:, off:off + sz].astype(bf)); off += sz
        return outs

    def w3(name):                       # 3x3 conv -> (9, Cout, Cin), k = ki*3+kj
        wt = P[name]["w"]
        return jnp.transpose(wt, (2, 3, 0, 1)).reshape(
            9, wt.shape[0], wt.shape[1]).astype(bf)

    def w3_split(name, sizes):
        wt = P[name]["w"]
        w9 = jnp.transpose(wt, (2, 3, 0, 1)).reshape(9, wt.shape[0], wt.shape[1])
        outs, off = [], 0
        for sz in sizes:
            outs.append(w9[:, :, off:off + sz].astype(bf)); off += sz
        return outs

    def wflat(name):                    # big strided conv -> (Cout, Cin*kh*kw)
        wt = P[name]["w"]
        return wt.reshape(wt.shape[0], -1).astype(bf)

    names_a = ["conv1_1", "conv1_2", "conv1_3", "conv1_4",
               "conv2_1", "conv2_2", "conv2_3", "conv2_4",
               "conv3_1", "conv3_2", "conv3_3", "conv3_4", "conv3_5"]
    gam_a = jnp.stack([P[nm]["gamma"] for nm in names_a], axis=1).astype(jnp.float32)
    bet_a = jnp.stack([P[nm]["beta"] for nm in names_a], axis=1).astype(jnp.float32)
    alp_a = jnp.stack([P[nm]["alpha"] for nm in names_a]).astype(jnp.float32)

    w14a, w14b = w1_split("conv1_4", (nf, nf))
    w24a, w24b = w1_split("conv2_4", (nf, nf))
    w34a, w34b = w1_split("conv3_4", (nf, nf))

    gp1 = _pool_matrix(n, h, w)
    gp2 = _pool_matrix(n, h // 2, w // 2)
    gp3 = _pool_matrix(n, h // 4, w // 4)
    msk1 = _conv3x3_mask(n, h, w)
    msk2 = _conv3x3_mask(n, h // 2, w // 2)
    msk3 = _conv3x3_mask(n, h // 4, w // 4)

    vmem = pl.BlockSpec(memory_space=pltpu.MemorySpace.VMEM)
    smem = pl.BlockSpec(memory_space=pltpu.MemorySpace.SMEM)
    cparams = pltpu.CompilerParams(vmem_limit_bytes=VMEM_LIMIT_BYTES)

    kernel_a = functools.partial(_stage123_kernel, n=n, h=h, w=w, nf=nf)
    c14, c24, c35 = pl.pallas_call(
        kernel_a,
        out_shape=(jax.ShapeDtypeStruct((nf, m1), bf),
                   jax.ShapeDtypeStruct((nf, m2), bf),
                   jax.ShapeDtypeStruct((nf, m4), bf)),
        in_specs=[vmem] * 25 + [smem],
        out_specs=(vmem, vmem, vmem),
        scratch_shapes=[pltpu.VMEM((nf, m1 + 2 * (w + 1)), bf)],
        compiler_params=cparams,
    )(a,
      w1("conv1_1"), w3("conv1_2"), w1("conv1_3"), w14a, w14b,
      w1("conv2_1"), w3("conv2_2"), w1("conv2_3"), w24a, w24b,
      w1("conv3_1"), w3("conv3_2"), w1("conv3_3"), w34a, w34b,
      w1("conv3_5"),
      gp1, gp2, gp3, msk1, msk2, msk3,
      gam_a, bet_a, alp_a)

    # Tiny im2col for the two strided down-convs (K<=1152, M=8).
    # TODO(synk): move this strided-window gather into kernel B for full fusion.
    p1pat, _, _ = _im2col_cnhw(c14.reshape(nf, n, h, w), 12, 12, 8, 2)
    p2pat, _, _ = _im2col_cnhw(c24.reshape(nf, n, h // 2, w // 2), 8, 8, 4, 2)

    names_b = ["down1", "down2", "conv4_1"]
    gam_b = jnp.stack([P[nm]["gamma"] for nm in names_b], axis=1).astype(jnp.float32)
    bet_b = jnp.stack([P[nm]["beta"] for nm in names_b], axis=1).astype(jnp.float32)
    alp_b = jnp.stack([P[nm]["alpha"] for nm in names_b + ["conv4_2"]]).astype(jnp.float32)
    g42 = P["conv4_2"]["gamma"].reshape(outf, 1).astype(jnp.float32)
    b42 = P["conv4_2"]["beta"].reshape(outf, 1).astype(jnp.float32)
    w41a, w41b, w41c = w3_split("conv4_1", (nf, nf, nf))
    mskd = _conv3x3_mask(n, hd, wd)

    kernel_b = functools.partial(_stage4_kernel, m4=m4, wd=wd, nf=nf)
    out = pl.pallas_call(
        kernel_b,
        out_shape=jax.ShapeDtypeStruct((outf, m4), bf),
        in_specs=[vmem] * 14 + [smem],
        out_specs=vmem,
        scratch_shapes=[pltpu.VMEM((nf, m4 + 2 * (wd + 1)), bf)],
        compiler_params=cparams,
    )(c35, p1pat.astype(bf), p2pat.astype(bf),
      wflat("down1"), wflat("down2"), w41a, w41b, w41c, w1("conv4_2"),
      mskd, gam_b, bet_b, g42, b42, alp_b)

    return jnp.transpose(out.reshape(outf, n, hd, wd), (1, 0, 2, 3)).astype(jnp.float32)


# --------------------------------------------------------------------------
# Pure-JAX reference (same bf16-activation / f32-epilogue numerics; keeps the
# conv bias to demonstrate its exact cancellation under training-mode BN)
# --------------------------------------------------------------------------
def ref_conv_block(x, p, stride, pad):
    y = lax.conv_general_dilated(
        x.astype(jnp.bfloat16), p["w"].astype(jnp.bfloat16),
        (stride, stride), [(pad, pad), (pad, pad)],
        dimension_numbers=("NCHW", "OIHW", "NCHW"),
        preferred_element_type=jnp.float32)
    y = y + p["b"][None, :, None, None]
    mean = y.mean(axis=(0, 2, 3), keepdims=True)
    var = jnp.square(y - mean).mean(axis=(0, 2, 3), keepdims=True)
    yh = (y - mean) * lax.rsqrt(var + EPS)
    yh = yh * p["gamma"][None, :, None, None] + p["beta"][None, :, None, None]
    return jnp.where(yh > 0, yh, p["alpha"] * yh).astype(jnp.bfloat16)


def ref_avg_pool_2x2(x):
    n, c, h, w = x.shape
    return x.astype(jnp.float32).reshape(n, c, h // 2, 2, w // 2, 2) \
            .mean(axis=(3, 5)).astype(jnp.bfloat16)


def encoder_block_reference(x, P):
    c1_1 = ref_conv_block(x, P["conv1_1"], 1, 0)
    c1_2 = ref_conv_block(c1_1, P["conv1_2"], 1, 1)
    c1_3 = ref_conv_block(c1_2, P["conv1_3"], 1, 0)
    c1_4 = ref_conv_block(jnp.concatenate((c1_1, c1_3), 1), P["conv1_4"], 1, 0)
    p1 = ref_avg_pool_2x2(c1_4)
    c2_1 = ref_conv_block(p1, P["conv2_1"], 1, 0)
    c2_2 = ref_conv_block(c2_1, P["conv2_2"], 1, 1)
    c2_3 = ref_conv_block(c2_2, P["conv2_3"], 1, 0)
    c2_4 = ref_conv_block(jnp.concatenate((p1, c2_3), 1), P["conv2_4"], 1, 0)
    p2 = ref_avg_pool_2x2(c2_4)
    c3_1 = ref_conv_block(p2, P["conv3_1"], 1, 0)
    c3_2 = ref_conv_block(c3_1, P["conv3_2"], 1, 1)
    c3_3 = ref_conv_block(c3_2, P["conv3_3"], 1, 0)
    c3_4 = ref_conv_block(jnp.concatenate((p2, c3_3), 1), P["conv3_4"], 1, 0)
    p3 = ref_avg_pool_2x2(c3_4)
    c3_5 = ref_conv_block(p3, P["conv3_5"], 1, 0)
    e1 = ref_conv_block(c1_4, P["down1"], 8, 2)
    e2 = ref_conv_block(c2_4, P["down2"], 4, 2)
    out1 = ref_conv_block(jnp.concatenate((c3_5, e1, e2), 1), P["conv4_1"], 1, 1)
    out = ref_conv_block(out1, P["conv4_2"], 1, 0)
    return out.astype(jnp.float32)


# --------------------------------------------------------------------------
# Deterministic synthetic parameters (no checkpoint loading)
# --------------------------------------------------------------------------
def init_conv_block_params(key, cin, cout, k):
    kw_, kb, kg, kbt = jax.random.split(key, 4)
    fan_in = cin * k * k
    return dict(
        w=jax.random.normal(kw_, (cout, cin, k, k), jnp.float32) / jnp.sqrt(fan_in),
        b=0.1 * jax.random.normal(kb, (cout,), jnp.float32),
        gamma=1.0 + 0.1 * jax.random.normal(kg, (cout,), jnp.float32),
        beta=0.1 * jax.random.normal(kbt, (cout,), jnp.float32),
        alpha=jnp.float32(0.25),   # PReLU default init
    )


def init_encoder_params(key, in_filter, out_filter, nf):
    # down3 exists in the PyTorch module but is never used in forward(); omitted.
    layer_defs = {
        "conv1_1": (in_filter, nf, 1), "conv1_2": (nf, nf, 3), "conv1_3": (nf, nf, 1),
        "conv1_4": (2 * nf, nf, 1),
        "conv2_1": (nf, nf, 1), "conv2_2": (nf, nf, 3), "conv2_3": (nf, nf, 1),
        "conv2_4": (2 * nf, nf, 1),
        "conv3_1": (nf, nf, 1), "conv3_2": (nf, nf, 3), "conv3_3": (nf, nf, 1),
        "conv3_4": (2 * nf, nf, 1), "conv3_5": (nf, nf, 1),
        "down1": (nf, nf, 12), "down2": (nf, nf, 8),
        "conv4_1": (3 * nf, nf, 3), "conv4_2": (nf, out_filter, 1),
    }
    keys = jax.random.split(key, len(layer_defs))
    return {name: init_conv_block_params(k, *spec)
            for k, (name, spec) in zip(keys, layer_defs.items())}


# --------------------------------------------------------------------------
if __name__ == "__main__":
    B, IN_F, OUT_F, NF, H, W = 2, 4, 4, 8, 16, 16

    root = jax.random.PRNGKey(0)
    kx, kp = jax.random.split(root)
    x = jax.random.normal(kx, (B, IN_F, H, W), jnp.float32)
    params = init_encoder_params(kp, IN_F, OUT_F, NF)

    fwd = jax.jit(encoder_block_forward)
    out = jax.block_until_ready(fwd(x, params))
    assert out.shape == (B, OUT_F, H // 8, W // 8), out.shape

    ref = jax.block_until_ready(jax.jit(encoder_block_reference)(x, params))
    max_err = float(jnp.max(jnp.abs(out - ref)))
    assert bool(jnp.allclose(out, ref, atol=4e-2, rtol=4e-2)), max_err

    print("KERNEL_OK")
</pallas_src>

<mosaic_0001>
module attributes {stable_mosaic.version = 11 : i64} {
  func.func @_stage123_kernel(%arg0: memref<4x512xbf16, #tpu.memory_space<vmem>>, %arg1: memref<8x4xbf16, #tpu.memory_space<vmem>>, %arg2: memref<9x8x8xbf16, #tpu.memory_space<vmem>>, %arg3: memref<8x8xbf16, #tpu.memory_space<vmem>>, %arg4: memref<8x8xbf16, #tpu.memory_space<vmem>>, %arg5: memref<8x8xbf16, #tpu.memory_space<vmem>>, %arg6: memref<8x8xbf16, #tpu.memory_space<vmem>>, %arg7: memref<9x8x8xbf16, #tpu.memory_space<vmem>>, %arg8: memref<8x8xbf16, #tpu.memory_space<vmem>>, %arg9: memref<8x8xbf16, #tpu.memory_space<vmem>>, %arg10: memref<8x8xbf16, #tpu.memory_space<vmem>>, %arg11: memref<8x8xbf16, #tpu.memory_space<vmem>>, %arg12: memref<9x8x8xbf16, #tpu.memory_space<vmem>>, %arg13: memref<8x8xbf16, #tpu.memory_space<vmem>>, %arg14: memref<8x8xbf16, #tpu.memory_space<vmem>>, %arg15: memref<8x8xbf16, #tpu.memory_space<vmem>>, %arg16: memref<8x8xbf16, #tpu.memory_space<vmem>>, %arg17: memref<512x128xbf16, #tpu.memory_space<vmem>>, %arg18: memref<128x32xbf16, #tpu.memory_space<vmem>>, %arg19: memref<32x8xbf16, #tpu.memory_space<vmem>>, %arg20: memref<9x512xbf16, #tpu.memory_space<vmem>>, %arg21: memref<9x128xbf16, #tpu.memory_space<vmem>>, %arg22: memref<9x32xbf16, #tpu.memory_space<vmem>>, %arg23: memref<8x13xf32, #tpu.memory_space<vmem>>, %arg24: memref<8x13xf32, #tpu.memory_space<vmem>>, %arg25: memref<13xf32, #tpu.memory_space<smem>>, %arg26: memref<8x512xbf16, #tpu.memory_space<vmem>>, %arg27: memref<8x128xbf16, #tpu.memory_space<vmem>>, %arg28: memref<8x8xbf16, #tpu.memory_space<vmem>>, %arg29: memref<8x546xbf16, #tpu.memory_space<vmem>>) attributes {dimension_semantics = [], scalar_prefetch = 0 : i64, scratch_operands = 1 : i64, tpu.core_type = #tpu.core_type<tc>} {
    %c0 = arith.constant 0 : index
    %c0_0 = arith.constant 0 : index
    %0 = vector.load %arg0[%c0, %c0_0] : memref<4x512xbf16, #tpu.memory_space<vmem>>, vector<4x512xbf16>
    %c0_1 = arith.constant 0 : index
    %c0_2 = arith.constant 0 : index
    %1 = vector.load %arg1[%c0_1, %c0_2] : memref<8x4xbf16, #tpu.memory_space<vmem>>, vector<8x4xbf16>
    %cst = arith.constant dense<0.000000e+00> : vector<8x512xf32>
    %2 = tpu.matmul %1, %0, %cst {dimension_numbers = #tpu.dot_dimension_numbers<[1], [0], [0], [1], [0, 0, 1, 1], [], []>} : vector<8x4xbf16>, vector<4x512xbf16>, vector<8x512xf32> -> vector<8x512xf32>
    %c0_3 = arith.constant 0 : index
    %c0_4 = arith.constant 0 : index
    %3 = vector.load %arg23[%c0_3, %c0_4] : memref<8x13xf32, #tpu.memory_space<vmem>>, vector<8x1xf32>
    %c0_5 = arith.constant 0 : index
    %c0_6 = arith.constant 0 : index
    %4 = vector.load %arg24[%c0_5, %c0_6] : memref<8x13xf32, #tpu.memory_space<vmem>>, vector<8x1xf32>
    %c0_7 = arith.constant 0 : index
    %5 = memref.load %arg25[%c0_7] : memref<13xf32, #tpu.memory_space<smem>>
    %cst_8 = arith.constant dense<0.000000e+00> : vector<8xf32>
    %6 = vector.multi_reduction <add>, %2, %cst_8 [1] : vector<8x512xf32> to vector<8xf32>
    %7 = vector.shape_cast %6 : vector<8xf32> to vector<8x1xf32>
    %cst_9 = arith.constant 0.001953125 : f32
    %8 = vector.broadcast %cst_9 : f32 to vector<8x1xf32>
    %9 = arith.mulf %7, %8 : vector<8x1xf32>
    %10 = vector.broadcast %9 : vector<8x1xf32> to vector<8x512xf32>
    %11 = arith.subf %2, %10 : vector<8x512xf32>
    %12 = arith.mulf %11, %11 : vector<8x512xf32>
    %cst_10 = arith.constant dense<0.000000e+00> : vector<8xf32>
    %13 = vector.multi_reduction <add>, %12, %cst_10 [1] : vector<8x512xf32> to vector<8xf32>
    %14 = vector.shape_cast %13 : vector<8xf32> to vector<8x1xf32>
    %cst_11 = arith.constant 0.001953125 : f32
    %15 = vector.broadcast %cst_11 : f32 to vector<8x1xf32>
    %16 = arith.mulf %14, %15 : vector<8x1xf32>
    %cst_12 = arith.constant 9.99999974E-6 : f32
    %17 = vector.broadcast %cst_12 : f32 to vector<8x1xf32>
    %18 = arith.addf %16, %17 : vector<8x1xf32>
    %19 = math.rsqrt %18 : vector<8x1xf32>
    %20 = arith.mulf %19, %3 : vector<8x1xf32>
    %21 = vector.broadcast %20 : vector<8x1xf32> to vector<8x512xf32>
    %22 = arith.mulf %11, %21 : vector<8x512xf32>
    %23 = vector.broadcast %4 : vector<8x1xf32> to vector<8x512xf32>
    %24 = arith.addf %22, %23 : vector<8x512xf32>
    %cst_13 = arith.constant 0.000000e+00 : f32
    %25 = vector.broadcast %cst_13 : f32 to vector<8x512xf32>
    %26 = arith.cmpf ogt, %24, %25 : vector<8x512xf32>
    %27 = vector.broadcast %5 : f32 to vector<8x512xf32>
    %28 = arith.mulf %27, %24 : vector<8x512xf32>
    %29 = arith.select %26, %24, %28 : vector<8x512xi1>, vector<8x512xf32>
    %30 = arith.truncf %29 : vector<8x512xf32> to vector<8x512xbf16>
    %cst_14 = arith.constant 0.000000e+00 : f32
    %31 = vector.broadcast %cst_14 : f32 to vector<8x512xf32>
    %cst_15 = arith.constant 0.000000e+00 : bf16
    %32 = vector.broadcast %cst_15 : bf16 to vector<8x546xbf16>
    %c0_16 = arith.constant 0 : index
    %c0_17 = arith.constant 0 : index
    %33 = vector.load %arg29[%c0_16, %c0_17] : memref<8x546xbf16, #tpu.memory_space<vmem>>, vector<8x546xbf16>
    tpu.vector_store %arg29[%c0_16, %c0_17], %32 {strides = array<i32>} : memref<8x546xbf16, #tpu.memory_space<vmem>>, vector<8x546xbf16>,
    %c0_18 = arith.constant 0 : index
    %c17 = arith.constant 17 : index
    %34 = vector.load %arg29[%c0_18, %c17] : memref<8x546xbf16, #tpu.memory_space<vmem>>, vector<8x512xbf16>
    tpu.vector_store %arg29[%c0_18, %c17], %30 {strides = array<i32>} : memref<8x546xbf16, #tpu.memory_space<vmem>>, vector<8x512xbf16>,
    %c0_19 = arith.constant 0 : index
    %c0_20 = arith.constant 0 : index
    %35 = vector.load %arg29[%c0_19, %c0_20] : memref<8x546xbf16, #tpu.memory_space<vmem>>, vector<8x512xbf16>
    %c0_21 = arith.constant 0 : index
    %c0_22 = arith.constant 0 : index
    %36 = vector.load %arg20[%c0_21, %c0_22] : memref<9x512xbf16, #tpu.memory_space<vmem>>, vector<1x512xbf16>
    %37 = vector.broadcast %36 : vector<1x512xbf16> to vector<8x512xbf16>
    %38 = arith.mulf %35, %37 : vector<8x512xbf16>
    %c0_23 = arith.constant 0 : index
    %c0_24 = arith.constant 0 : index
    %c0_25 = arith.constant 0 : index
    %39 = vector.load %arg2[%c0_23, %c0_24, %c0_25] : memref<9x8x8xbf16, #tpu.memory_space<vmem>>, vector<1x8x8xbf16>
    %40 = vector.shape_cast %39 : vector<1x8x8xbf16> to vector<8x8xbf16>
    %cst_26 = arith.constant dense<0.000000e+00> : vector<8x512xf32>
    %41 = tpu.matmul %40, %38, %cst_26 {dimension_numbers = #tpu.dot_dimension_numbers<[1], [0], [0], [1], [0, 0, 1, 1], [], []>} : vector<8x8xbf16>, vector<8x512xbf16>, vector<8x512xf32> -> vector<8x512xf32>
    %42 = arith.addf %31, %41 : vector<8x512xf32>
    %c0_27 = arith.constant 0 : index
    %c1 = arith.constant 1 : index
    %43 = vector.load %arg29[%c0_27, %c1] : memref<8x546xbf16, #tpu.memory_space<vmem>>, vector<8x512xbf16>
    %c1_28 = arith.constant 1 : index
    %c0_29 = arith.constant 0 : index
    %44 = vector.load %arg20[%c1_28, %c0_29] : memref<9x512xbf16, #tpu.memory_space<vmem>>, vector<1x512xbf16>
    %45 = vector.broadcast %44 : vector<1x512xbf16> to vector<8x512xbf16>
    %46 = arith.mulf %43, %45 : vector<8x512xbf16>
    %c1_30 = arith.constant 1 : index
    %c0_31 = arith.constant 0 : index
    %c0_32 = arith.constant 0 : index
    %47 = vector.load %arg2[%c1_30, %c0_31, %c0_32] : memref<9x8x8xbf16, #tpu.memory_space<vmem>>, vector<1x8x8xbf16>
    %48 = vector.shape_cast %47 : vector<1x8x8xbf16> to vector<8x8xbf16>
    %cst_33 = arith.constant dense<0.000000e+00> : vector<8x512xf32>
    %49 = tpu.matmul %48, %46, %cst_33 {dimension_numbers = #tpu.dot_dimension_numbers<[1], [0], [0], [1], [0, 0, 1, 1], [], []>} : vector<8x8xbf16>, vector<8x512xbf16>, vector<8x512xf32> -> vector<8x512xf32>
    %50 = arith.addf %42, %49 : vector<8x512xf32>
    %c0_34 = arith.constant 0 : index
    %c2 = arith.constant 2 : index
    %51 = vector.load %arg29[%c0_34, %c2] : memref<8x546xbf16, #tpu.memory_space<vmem>>, vector<8x512xbf16>
    %c2_35 = arith.constant 2 : index
    %c0_36 = arith.constant 0 : index
    %52 = vector.load %arg20[%c2_35, %c0_36] : memref<9x512xbf16, #tpu.memory_space<vmem>>, vector<1x512xbf16>
    %53 = vector.broadcast %52 : vector<1x512xbf16> to vector<8x512xbf16>
    %54 = arith.mulf %51, %53 : vector<8x512xbf16>
    %c2_37 = arith.constant 2 : index
    %c0_38 = arith.constant 0 : index
    %c0_39 = arith.constant 0 : index
    %55 = vector.load %arg2[%c2_37, %c0_38, %c0_39] : memref<9x8x8xbf16, #tpu.memory_space<vmem>>, vector<1x8x8xbf16>
    %56 = vector.shape_cast %55 : vector<1x8x8xbf16> to vector<8x8xbf16>
    %cst_40 = arith.constant dense<0.000000e+00> : vector<8x512xf32>
    %57 = tpu.matmul %56, %54, %cst_40 {dimension_numbers = #tpu.dot_dimension_numbers<[1], [0], [0], [1], [0, 0, 1, 1], [], []>} : vector<8x8xbf16>, vector<8x512xbf16>, vector<8x512xf32> -> vector<8x512xf32>
    %58 = arith.addf %50, %57 : vector<8x512xf32>
    %c0_41 = arith.constant 0 : index
    %c16 = arith.constant 16 : index
    %59 = vector.load %arg29[%c0_41, %c16] : memref<8x546xbf16, #tpu.memory_space<vmem>>, vector<8x512xbf16>
    %c3 = arith.constant 3 : index
    %c0_42 = arith.constant 0 : index
    %60 = vector.load %arg20[%c3, %c0_42] : memref<9x512xbf16, #tpu.memory_space<vmem>>, vector<1x512xbf16>
    %61 = vector.broadcast %60 : vector<1x512xbf16> to vector<8x512xbf16>
    %62 = arith.mulf %59, %61 : vector<8x512xbf16>
    %c3_43 = arith.constant 3 : index
    %c0_44 = arith.constant 0 : index
    %c0_45 = arith.constant 0 : index
    %63 = vector.load %arg2[%c3_43, %c0_44, %c0_45] : memref<9x8x8xbf16, #tpu.memory_space<vmem>>, vector<1x8x8xbf16>
    %64 = vector.shape_cast %63 : vector<1x8x8xbf16> to vector<8x8xbf16>
    %cst_46 = arith.constant dense<0.000000e+00> : vector<8x512xf32>
    %65 = tpu.matmul %64, %62, %cst_46 {dimension_numbers = #tpu.dot_dimension_numbers<[1], [0], [0], [1], [0, 0, 1, 1], [], []>} : vector<8x8xbf16>, vector<8x512xbf16>, vector<8x512xf32> -> vector<8x512xf32>
    %66 = arith.addf %58, %65 : vector<8x512xf32>
    %c0_47 = arith.constant 0 : index
    %c17_48 = arith.constant 17 : index
    %67 = vector.load %arg29[%c0_47, %c17_48] : memref<8x546xbf16, #tpu.memory_space<vmem>>, vector<8x512xbf16>
    %c4 = arith.constant 4 : index
    %c0_49 = arith.constant 0 : index
    %68 = vector.load %arg20[%c4, %c0_49] : memref<9x512xbf16, #tpu.memory_space<vmem>>, vector<1x512xbf16>
    %69 = vector.broadcast %68 : vector<1x512xbf16> to vector<8x512xbf16>
    %70 = arith.mulf %67, %69 : vector<8x512xbf16>
    %c4_50 = arith.constant 4 : index
    %c0_51 = arith.constant 0 : index
    %c0_52 = arith.constant 0 : index
    %71 = vector.load %arg2[%c4_50, %c0_51, %c0_52] : memref<9x8x8xbf16, #tpu.memory_space<vmem>>, vector<1x8x8xbf16>
    %72 = vector.shape_cast %71 : vector<1x8x8xbf16> to vector<8x8xbf16>
    %cst_53 = arith.constant dense<0.000000e+00> : vector<8x512xf32>
    %73 = tpu.matmul %72, %70, %cst_53 {dimension_numbers = #tpu.dot_dimension_numbers<[1], [0], [0], [1], [0, 0, 1, 1], [], []>} : vector<8x8xbf16>, vector<8x512xbf16>, vector<8x512xf32> -> vector<8x512xf32>
    %74 = arith.addf %66, %73 : vector<8x512xf32>
    %c0_54 = arith.constant 0 : index
    %c18 = arith.constant 18 : index
    %75 = vector.load %arg29[%c0_54, %c18] : memref<8x546xbf16, #tpu.memory_space<vmem>>, vector<8x512xbf16>
    %c5 = arith.constant 5 : index
    %c0_55 = arith.constant 0 : index
    %76 = vector.load %arg20[%c5, %c0_55] : memref<9x512xbf16, #tpu.memory_space<vmem>>, vector<1x512xbf16>
    %77 = vector.broadcast %76 : vector<1x512xbf16> to vector<8x512xbf16>
    %78 = arith.mulf %75, %77 : vector<8x512xbf16>
    %c5_56 = arith.constant 5 : index
    %c0_57 = arith.constant 0 : index
    %c0_58 = arith.constant 0 : index
    %79 = vector.load %arg2[%c5_56, %c0_57, %c0_58] : memref<9x8x8xbf16, #tpu.memory_space<vmem>>, vector<1x8x8xbf16>
    %80 = vector.shape_cast %79 : vector<1x8x8xbf16> to vector<8x8xbf16>
    %cst_59 = arith.constant dense<0.000000e+00> : vector<8x512xf32>
    %81 = tpu.matmul %80, %78, %cst_59 {dimension_numbers = #tpu.dot_dimension_numbers<[1], [0], [0], [1], [0, 0, 1, 1], [], []>} : vector<8x8xbf16>, vector<8x512xbf16>, vector<8x512xf32> -> vector<8x512xf32>
    %82 = arith.addf %74, %81 : vector<8x512xf32>
    %c0_60 = arith.constant 0 : index
    %c32 = arith.constant 32 : index
    %83 = vector.load %arg29[%c0_60, %c32] : memref<8x546xbf16, #tpu.memory_space<vmem>>, vector<8x512xbf16>
    %c6 = arith.constant 6 : index
    %c0_61 = arith.constant 0 : index
    %84 = vector.load %arg20[%c6, %c0_61] : memref<9x512xbf16, #tpu.memory_space<vmem>>, vector<1x512xbf16>
    %85 = vector.broadcast %84 : vector<1x512xbf16> to vector<8x512xbf16>
    %86 = arith.mulf %83, %85 : vector<8x512xbf16>
    %c6_62 = arith.constant 6 : index
    %c0_63 = arith.constant 0 : index
    %c0_64 = arith.constant 0 : index
    %87 = vector.load %arg2[%c6_62, %c0_63, %c0_64] : memref<9x8x8xbf16, #tpu.memory_space<vmem>>, vector<1x8x8xbf16>
    %88 = vector.shape_cast %87 : vector<1x8x8xbf16> to vector<8x8xbf16>
    %cst_65 = arith.constant dense<0.000000e+00> : vector<8x512xf32>
    %89 = tpu.matmul %88, %86, %cst_65 {dimension_numbers = #tpu.dot_dimension_numbers<[1], [0], [0], [1], [0, 0, 1, 1], [], []>} : vector<8x8xbf16>, vector<8x512xbf16>, vector<8x512xf32> -> vector<8x512xf32>
    %90 = arith.addf %82, %89 : vector<8x512xf32>
    %c0_66 = arith.constant 0 : index
    %c33 = arith.constant 33 : index
    %91 = vector.load %arg29[%c0_66, %c33] : memref<8x546xbf16, #tpu.memory_space<vmem>>, vector<8x512xbf16>
    %c7 = arith.constant 7 : index
    %c0_67 = arith.constant 0 : index
    %92 = vector.load %arg20[%c7, %c0_67] : memref<9x512xbf16, #tpu.memory_space<vmem>>, vector<1x512xbf16>
    %93 = vector.broadcast %92 : vector<1x512xbf16> to vector<8x512xbf16>
    %94 = arith.mulf %91, %93 : vector<8x512xbf16>
    %c7_68 = arith.constant 7 : index
    %c0_69 = arith.constant 0 : index
    %c0_70 = arith.constant 0 : index
    %95 = vector.load %arg2[%c7_68, %c0_69, %c0_70] : memref<9x8x8xbf16, #tpu.memory_space<vmem>>, vector<1x8x8xbf16>
    %96 = vector.shape_cast %95 : vector<1x8x8xbf16> to vector<8x8xbf16>
    %cst_71 = arith.constant dense<0.000000e+00> : vector<8x512xf32>
    %97 = tpu.matmul %96, %94, %cst_71 {dimension_numbers = #tpu.dot_dimension_numbers<[1], [0], [0], [1], [0, 0, 1, 1], [], []>} : vector<8x8xbf16>, vector<8x512xbf16>, vector<8x512xf32> -> vector<8x512xf32>
    %98 = arith.addf %90, %97 : vector<8x512xf32>
    %c0_72 = arith.constant 0 : index
    %c34 = arith.constant 34 : index
    %99 = vector.load %arg29[%c0_72, %c34] : memref<8x546xbf16, #tpu.memory_space<vmem>>, vector<8x512xbf16>
    %c8 = arith.constant 8 : index
    %c0_73 = arith.constant 0 : index
    %100 = vector.load %arg20[%c8, %c0_73] : memref<9x512xbf16, #tpu.memory_space<vmem>>, vector<1x512xbf16>
    %101 = vector.broadcast %100 : vector<1x512xbf16> to vector<8x512xbf16>
    %102 = arith.mulf %99, %101 : vector<8x512xbf16>
    %c8_74 = arith.constant 8 : index
    %c0_75 = arith.constant 0 : index
    %c0_76 = arith.constant 0 : index
    %103 = vector.load %arg2[%c8_74, %c0_75, %c0_76] : memref<9x8x8xbf16, #tpu.memory_space<vmem>>, vector<1x8x8xbf16>
    %104 = vector.shape_cast %103 : vector<1x8x8xbf16> to vector<8x8xbf16>
    %cst_77 = arith.constant dense<0.000000e+00> : vector<8x512xf32>
    %105 = tpu.matmul %104, %102, %cst_77 {dimension_numbers = #tpu.dot_dimension_numbers<[1], [0], [0], [1], [0, 0, 1, 1], [], []>} : vector<8x8xbf16>, vector<8x512xbf16>, vector<8x512xf32> -> vector<8x512xf32>
    %106 = arith.addf %98, %105 : vector<8x512xf32>
    %c0_78 = arith.constant 0 : index
    %c1_79 = arith.constant 1 : index
    %107 = vector.load %arg23[%c0_78, %c1_79] : memref<8x13xf32, #tpu.memory_space<vmem>>, vector<8x1xf32>
    %c0_80 = arith.constant 0 : index
    %c1_81 = arith.constant 1 : index
    %108 = vector.load %arg24[%c0_80, %c1_81] : memref<8x13xf32, #tpu.memory_space<vmem>>, vector<8x1xf32>
    %c1_82 = arith.constant 1 : index
    %109 = memref.load %arg25[%c1_82] : memref<13xf32, #tpu.memory_space<smem>>
    %cst_83 = arith.constant dense<0.000000e+00> : vector<8xf32>
    %110 = vector.multi_reduction <add>, %106, %cst_83 [1] : vector<8x512xf32> to vector<8xf32>
    %111 = vector.shape_cast %110 : vector<8xf32> to vector<8x1xf32>
    %cst_84 = arith.constant 0.001953125 : f32
    %112 = vector.broadcast %cst_84 : f32 to vector<8x1xf32>
    %113 = arith.mulf %111, %112 : vector<8x1xf32>
    %114 = vector.broadcast %113 : vector<8x1xf32> to vector<8x512xf32>
    %115 = arith.subf %106, %114 : vector<8x512xf32>
    %116 = arith.mulf %115, %115 : vector<8x512xf32>
    %cst_85 = arith.constant dense<0.000000e+00> : vector<8xf32>
    %117 = vector.multi_reduction <add>, %116, %cst_85 [1] : vector<8x512xf32> to vector<8xf32>
    %118 = vector.shape_cast %117 : vector<8xf32> to vector<8x1xf32>
    %cst_86 = arith.constant 0.001953125 : f32
    %119 = vector.broadcast %cst_86 : f32 to vector<8x1xf32>
    %120 = arith.mulf %118, %119 : vector<8x1xf32>
    %cst_87 = arith.constant 9.99999974E-6 : f32
    %121 = vector.broadcast %cst_87 : f32 to vector<8x1xf32>
    %122 = arith.addf %120, %121 : vector<8x1xf32>
    %123 = math.rsqrt %122 : vector<8x1xf32>
    %124 = arith.mulf %123, %107 : vector<8x1xf32>
    %125 = vector.broadcast %124 : vector<8x1xf32> to vector<8x512xf32>
    %126 = arith.mulf %115, %125 : vector<8x512xf32>
    %127 = vector.broadcast %108 : vector<8x1xf32> to vector<8x512xf32>
    %128 = arith.addf %126, %127 : vector<8x512xf32>
    %cst_88 = arith.constant 0.000000e+00 : f32
    %129 = vector.broadcast %cst_88 : f32 to vector<8x512xf32>
    %130 = arith.cmpf ogt, %128, %129 : vector<8x512xf32>
    %131 = vector.broadcast %109 : f32 to vector<8x512xf32>
    %132 = arith.mulf %131, %128 : vector<8x512xf32>
    %133 = arith.select %130, %128, %132 : vector<8x512xi1>, vector<8x512xf32>
    %134 = arith.truncf %133 : vector<8x512xf32> to vector<8x512xbf16>
    %c0_89 = arith.constant 0 : index
    %c0_90 = arith.constant 0 : index
    %135 = vector.load %arg3[%c0_89, %c0_90] : memref<8x8xbf16, #tpu.memory_space<vmem>>, vector<8x8xbf16>
    %cst_91 = arith.constant dense<0.000000e+00> : vector<8x512xf32>
    %136 = tpu.matmul %135, %134, %cst_91 {dimension_numbers = #tpu.dot_dimension_numbers<[1], [0], [0], [1], [0, 0, 1, 1], [], []>} : vector<8x8xbf16>, vector<8x512xbf16>, vector<8x512xf32> -> vector<8x512xf32>
    %c0_92 = arith.constant 0 : index
    %c2_93 = arith.constant 2 : index
    %137 = vector.load %arg23[%c0_92, %c2_93] : memref<8x13xf32, #tpu.memory_space<vmem>>, vector<8x1xf32>
    %c0_94 = arith.constant 0 : index
    %c2_95 = arith.constant 2 : index
    %138 = vector.load %arg24[%c0_94, %c2_95] : memref<8x13xf32, #tpu.memory_space<vmem>>, vector<8x1xf32>
    %c2_96 = arith.constant 2 : index
    %139 = memref.load %arg25[%c2_96] : memref<13xf32, #tpu.memory_space<smem>>
    %cst_97 = arith.constant dense<0.000000e+00> : vector<8xf32>
    %140 = vector.multi_reduction <add>, %136, %cst_97 [1] : vector<8x512xf32> to vector<8xf32>
    %141 = vector.shape_cast %140 : vector<8xf32> to vector<8x1xf32>
    %cst_98 = arith.constant 0.001953125 : f32
    %142 = vector.broadcast %cst_98 : f32 to vector<8x1xf32>
    %143 = arith.mulf %141, %142 : vector<8x1xf32>
    %144 = vector.broadcast %143 : vector<8x1xf32> to vector<8x512xf32>
    %145 = arith.subf %136, %144 : vector<8x512xf32>
    %146 = arith.mulf %145, %145 : vector<8x512xf32>
    %cst_99 = arith.constant dense<0.000000e+00> : vector<8xf32>
    %147 = vector.multi_reduction <add>, %146, %cst_99 [1] : vector<8x512xf32> to vector<8xf32>
    %148 = vector.shape_cast %147 : vector<8xf32> to vector<8x1xf32>
    %cst_100 = arith.constant 0.001953125 : f32
    %149 = vector.broadcast %cst_100 : f32 to vector<8x1xf32>
    %150 = arith.mulf %148, %149 : vector<8x1xf32>
    %cst_101 = arith.constant 9.99999974E-6 : f32
    %151 = vector.broadcast %cst_101 : f32 to vector<8x1xf32>
    %152 = arith.addf %150, %151 : vector<8x1xf32>
    %153 = math.rsqrt %152 : vector<8x1xf32>
    %154 = arith.mulf %153, %137 : vector<8x1xf32>
    %155 = vector.broadcast %154 : vector<8x1xf32> to vector<8x512xf32>
    %156 = arith.mulf %145, %155 : vector<8x512xf32>
    %157 = vector.broadcast %138 : vector<8x1xf32> to vector<8x512xf32>
    %158 = arith.addf %156, %157 : vector<8x512xf32>
    %cst_102 = arith.constant 0.000000e+00 : f32
    %159 = vector.broadcast %cst_102 : f32 to vector<8x512xf32>
    %160 = arith.cmpf ogt, %158, %159 : vector<8x512xf32>
    %161 = vector.broadcast %139 : f32 to vector<8x512xf32>
    %162 = arith.mulf %161, %158 : vector<8x512xf32>
    %163 = arith.select %160, %158, %162 : vector<8x512xi1>, vector<8x512xf32>
    %164 = arith.truncf %163 : vector<8x512xf32> to vector<8x512xbf16>
    %c0_103 = arith.constant 0 : index
    %c0_104 = arith.constant 0 : index
    %165 = vector.load %arg4[%c0_103, %c0_104] : memref<8x8xbf16, #tpu.memory_space<vmem>>, vector<8x8xbf16>
    %cst_105 = arith.constant dense<0.000000e+00> : vector<8x512xf32>
    %166 = tpu.matmul %165, %30, %cst_105 {dimension_numbers = #tpu.dot_dimension_numbers<[1], [0], [0], [1], [0, 0, 1, 1], [], []>} : vector<8x8xbf16>, vector<8x512xbf16>, vector<8x512xf32> -> vector<8x512xf32>
    %c0_106 = arith.constant 0 : index
    %c0_107 = arith.constant 0 : index
    %167 = vector.load %arg5[%c0_106, %c0_107] : memref<8x8xbf16, #tpu.memory_space<vmem>>, vector<8x8xbf16>
    %cst_108 = arith.constant dense<0.000000e+00> : vector<8x512xf32>
    %168 = tpu.matmul %167, %164, %cst_108 {dimension_numbers = #tpu.dot_dimension_numbers<[1], [0], [0], [1], [0, 0, 1, 1], [], []>} : vector<8x8xbf16>, vector<8x512xbf16>, vector<8x512xf32> -> vector<8x512xf32>
    %169 = arith.addf %166, %168 : vector<8x512xf32>
    %c0_109 = arith.constant 0 : index
    %c3_110 = arith.constant 3 : index
    %170 = vector.load %arg23[%c0_109, %c3_110] : memref<8x13xf32, #tpu.memory_space<vmem>>, vector<8x1xf32>
    %c0_111 = arith.constant 0 : index
    %c3_112 = arith.constant 3 : index
    %171 = vector.load %arg24[%c0_111, %c3_112] : memref<8x13xf32, #tpu.memory_space<vmem>>, vector<8x1xf32>
    %c3_113 = arith.constant 3 : index
    %172 = memref.load %arg25[%c3_113] : memref<13xf32, #tpu.memory_space<smem>>
    %cst_114 = arith.constant dense<0.000000e+00> : vector<8xf32>
    %173 = vector.multi_reduction <add>, %169, %cst_114 [1] : vector<8x512xf32> to vector<8xf32>
    %174 = vector.shape_cast %173 : vector<8xf32> to vector<8x1xf32>
    %cst_115 = arith.constant 0.001953125 : f32
    %175 = vector.broadcast %cst_115 : f32 to vector<8x1xf32>
    %176 = arith.mulf %174, %175 : vector<8x1xf32>
    %177 = vector.broadcast %176 : vector<8x1xf32> to vector<8x512xf32>
    %178 = arith.subf %169, %177 : vector<8x512xf32>
    %179 = arith.mulf %178, %178 : vector<8x512xf32>
    %cst_116 = arith.constant dense<0.000000e+00> : vector<8xf32>
    %180 = vector.multi_reduction <add>, %179, %cst_116 [1] : vector<8x512xf32> to vector<8xf32>
    %181 = vector.shape_cast %180 : vector<8xf32> to vector<8x1xf32>
    %cst_117 = arith.constant 0.001953125 : f32
    %182 = vector.broadcast %cst_117 : f32 to vector<8x1xf32>
    %183 = arith.mulf %181, %182 : vector<8x1xf32>
    %cst_118 = arith.constant 9.99999974E-6 : f32
    %184 = vector.broadcast %cst_118 : f32 to vector<8x1xf32>
    %185 = arith.addf %183, %184 : vector<8x1xf32>
    %186 = math.rsqrt %185 : vector<8x1xf32>
    %187 = arith.mulf %186, %170 : vector<8x1xf32>
    %188 = vector.broadcast %187 : vector<8x1xf32> to vector<8x512xf32>
    %189 = arith.mulf %178, %188 : vector<8x512xf32>
    %190 = vector.broadcast %171 : vector<8x1xf32> to vector<8x512xf32>
    %191 = arith.addf %189, %190 : vector<8x512xf32>
    %cst_119 = arith.constant 0.000000e+00 : f32
    %192 = vector.broadcast %cst_119 : f32 to vector<8x512xf32>
    %193 = arith.cmpf ogt, %191, %192 : vector<8x512xf32>
    %194 = vector.broadcast %172 : f32 to vector<8x512xf32>
    %195 = arith.mulf %194, %191 : vector<8x512xf32>
    %196 = arith.select %193, %191, %195 : vector<8x512xi1>, vector<8x512xf32>
    %197 = arith.truncf %196 : vector<8x512xf32> to vector<8x512xbf16>
    %c0_120 = arith.constant 0 : index
    %c0_121 = arith.constant 0 : index
    %198 = vector.load %arg26[%c0_120, %c0_121] : memref<8x512xbf16, #tpu.memory_space<vmem>>, vector<8x512xbf16>
    tpu.vector_store %arg26[%c0_120, %c0_121], %197 {strides = array<i32>} : memref<8x512xbf16, #tpu.memory_space<vmem>>, vector<8x512xbf16>,
    %c0_122 = arith.constant 0 : index
    %c0_123 = arith.constant 0 : index
    %199 = vector.load %arg17[%c0_122, %c0_123] : memref<512x128xbf16, #tpu.memory_space<vmem>>, vector<512x128xbf16>
    %cst_124 = arith.constant dense<0.000000e+00> : vector<8x128xf32>
    %200 = tpu.matmul %197, %199, %cst_124 {dimension_numbers = #tpu.dot_dimension_numbers<[1], [0], [0], [1], [0, 0, 1, 1], [], []>} : vector<8x512xbf16>, vector<512x128xbf16>, vector<8x128xf32> -> vector<8x128xf32>
    %201 = arith.truncf %200 : vector<8x128xf32> to vector<8x128xbf16>
    %c0_125 = arith.constant 0 : index
    %c0_126 = arith.constant 0 : index
    %202 = vector.load %arg6[%c0_125, %c0_126] : memref<8x8xbf16, #tpu.memory_space<vmem>>, vector<8x8xbf16>
    %cst_127 = arith.constant dense<0.000000e+00> : vector<8x128xf32>
    %203 = tpu.matmul %202, %201, %cst_127 {dimension_numbers = #tpu.dot_dimension_numbers<[1], [0], [0], [1], [0, 0, 1, 1], [], []>} : vector<8x8xbf16>, vector<8x128xbf16>, vector<8x128xf32> -> vector<8x128xf32>
    %c0_128 = arith.constant 0 : index
    %c4_129 = arith.constant 4 : index
    %204 = vector.load %arg23[%c0_128, %c4_129] : memref<8x13xf32, #tpu.memory_space<vmem>>, vector<8x1xf32>
    %c0_130 = arith.constant 0 : index
    %c4_131 = arith.constant 4 : index
    %205 = vector.load %arg24[%c0_130, %c4_131] : memref<8x13xf32, #tpu.memory_space<vmem>>, vector<8x1xf32>
    %c4_132 = arith.constant 4 : index
    %206 = memref.load %arg25[%c4_132] : memref<13xf32, #tpu.memory_space<smem>>
    %cst_133 = arith.constant dense<0.000000e+00> : vector<8xf32>
    %207 = vector.multi_reduction <add>, %203, %cst_133 [1] : vector<8x128xf32> to vector<8xf32>
    %208 = vector.shape_cast %207 : vector<8xf32> to vector<8x1xf32>
    %cst_134 = arith.constant 7.812500e-03 : f32
    %209 = vector.broadcast %cst_134 : f32 to vector<8x1xf32>
    %210 = arith.mulf %208, %209 : vector<8x1xf32>
    %211 = vector.broadcast %210 : vector<8x1xf32> to vector<8x128xf32>
    %212 = arith.subf %203, %211 : vector<8x128xf32>
    %213 = arith.mulf %212, %212 : vector<8x128xf32>
    %cst_135 = arith.constant dense<0.000000e+00> : vector<8xf32>
    %214 = vector.multi_reduction <add>, %213, %cst_135 [1] : vector<8x128xf32> to vector<8xf32>
    %215 = vector.shape_cast %214 : vector<8xf32> to vector<8x1xf32>
    %cst_136 = arith.constant 7.812500e-03 : f32
    %216 = vector.broadcast %cst_136 : f32 to vector<8x1xf32>
    %217 = arith.mulf %215, %216 : vector<8x1xf32>
    %cst_137 = arith.constant 9.99999974E-6 : f32
    %218 = vector.broadcast %cst_137 : f32 to vector<8x1xf32>
    %219 = arith.addf %217, %218 : vector<8x1xf32>
    %220 = math.rsqrt %219 : vector<8x1xf32>
    %221 = arith.mulf %220, %204 : vector<8x1xf32>
    %222 = vector.broadcast %221 : vector<8x1xf32> to vector<8x128xf32>
    %223 = arith.mulf %212, %222 : vector<8x128xf32>
    %224 = vector.broadcast %205 : vector<8x1xf32> to vector<8x128xf32>
    %225 = arith.addf %223, %224 : vector<8x128xf32>
    %cst_138 = arith.constant 0.000000e+00 : f32
    %226 = vector.broadcast %cst_138 : f32 to vector<8x128xf32>
    %227 = arith.cmpf ogt, %225, %226 : vector<8x128xf32>
    %228 = vector.broadcast %206 : f32 to vector<8x128xf32>
    %229 = arith.mulf %228, %225 : vector<8x128xf32>
    %230 = arith.select %227, %225, %229 : vector<8x128xi1>, vector<8x128xf32>
    %231 = arith.truncf %230 : vector<8x128xf32> to vector<8x128xbf16>
    %cst_139 = arith.constant 0.000000e+00 : f32
    %232 = vector.broadcast %cst_139 : f32 to vector<8x128xf32>
    %cst_140 = arith.constant 0.000000e+00 : bf16
    %233 = vector.broadcast %cst_140 : bf16 to vector<8x546xbf16>
    %c0_141 = arith.constant 0 : index
    %c0_142 = arith.constant 0 : index
    %234 = vector.load %arg29[%c0_141, %c0_142] : memref<8x546xbf16, #tpu.memory_space<vmem>>, vector<8x546xbf16>
    tpu.vector_store %arg29[%c0_141, %c0_142], %233 {strides = array<i32>} : memref<8x546xbf16, #tpu.memory_space<vmem>>, vector<8x546xbf16>,
    %c0_143 = arith.constant 0 : index
    %c9 = arith.constant 9 : index
    %235 = vector.load %arg29[%c0_143, %c9] : memref<8x546xbf16, #tpu.memory_space<vmem>>, vector<8x128xbf16>
    tpu.vector_store %arg29[%c0_143, %c9], %231 {strides = array<i32>} : memref<8x546xbf16, #tpu.memory_space<vmem>>, vector<8x128xbf16>,
    %c0_144 = arith.constant 0 : index
    %c0_145 = arith.constant 0 : index
    %236 = vector.load %arg29[%c0_144, %c0_145] : memref<8x546xbf16, #tpu.memory_space<vmem>>, vector<8x128xbf16>
    %c0_146 = arith.constant 0 : index
    %c0_147 = arith.constant 0 : index
    %237 = vector.load %arg21[%c0_146, %c0_147] : memref<9x128xbf16, #tpu.memory_space<vmem>>, vector<1x128xbf16>
    %238 = vector.broadcast %237 : vector<1x128xbf16> to vector<8x128xbf16>
    %239 = arith.mulf %236, %238 : vector<8x128xbf16>
    %c0_148 = arith.constant 0 : index
    %c0_149 = arith.constant 0 : index
    %c0_150 = arith.constant 0 : index
    %240 = vector.load %arg7[%c0_148, %c0_149, %c0_150] : memref<9x8x8xbf16, #tpu.memory_space<vmem>>, vector<1x8x8xbf16>
    %241 = vector.shape_cast %240 : vector<1x8x8xbf16> to vector<8x8xbf16>
    %cst_151 = arith.constant dense<0.000000e+00> : vector<8x128xf32>
    %242 = tpu.matmul %241, %239, %cst_151 {dimension_numbers = #tpu.dot_dimension_numbers<[1], [0], [0], [1], [0, 0, 1, 1], [], []>} : vector<8x8xbf16>, vector<8x128xbf16>, vector<8x128xf32> -> vector<8x128xf32>
    %243 = arith.addf %232, %242 : vector<8x128xf32>
    %c0_152 = arith.constant 0 : index
    %c1_153 = arith.constant 1 : index
    %244 = vector.load %arg29[%c0_152, %c1_153] : memref<8x546xbf16, #tpu.memory_space<vmem>>, vector<8x128xbf16>
    %c1_154 = arith.constant 1 : index
    %c0_155 = arith.constant 0 : index
    %245 = vector.load %arg21[%c1_154, %c0_155] : memref<9x128xbf16, #tpu.memory_space<vmem>>, vector<1x128xbf16>
    %246 = vector.broadcast %245 : vector<1x128xbf16> to vector<8x128xbf16>
    %247 = arith.mulf %244, %246 : vector<8x128xbf16>
    %c1_156 = arith.constant 1 : index
    %c0_157 = arith.constant 0 : index
    %c0_158 = arith.constant 0 : index
    %248 = vector.load %arg7[%c1_156, %c0_157, %c0_158] : memref<9x8x8xbf16, #tpu.memory_space<vmem>>, vector<1x8x8xbf16>
    %249 = vector.shape_cast %248 : vector<1x8x8xbf16> to vector<8x8xbf16>
    %cst_159 = arith.constant dense<0.000000e+00> : vector<8x128xf32>
    %250 = tpu.matmul %249, %247, %cst_159 {dimension_numbers = #tpu.dot_dimension_numbers<[1], [0], [0], [1], [0, 0, 1, 1], [], []>} : vector<8x8xbf16>, vector<8x128xbf16>, vector<8x128xf32> -> vector<8x128xf32>
    %251 = arith.addf %243, %250 : vector<8x128xf32>
    %c0_160 = arith.constant 0 : index
    %c2_161 = arith.constant 2 : index
    %252 = vector.load %arg29[%c0_160, %c2_161] : memref<8x546xbf16, #tpu.memory_space<vmem>>, vector<8x128xbf16>
    %c2_162 = arith.constant 2 : index
    %c0_163 = arith.constant 0 : index
    %253 = vector.load %arg21[%c2_162, %c0_163] : memref<9x128xbf16, #tpu.memory_space<vmem>>, vector<1x128xbf16>
    %254 = vector.broadcast %253 : vector<1x128xbf16> to vector<8x128xbf16>
    %255 = arith.mulf %252, %254 : vector<8x128xbf16>
    %c2_164 = arith.constant 2 : index
    %c0_165 = arith.constant 0 : index
    %c0_166 = arith.constant 0 : index
    %256 = vector.load %arg7[%c2_164, %c0_165, %c0_166] : memref<9x8x8xbf16, #tpu.memory_space<vmem>>, vector<1x8x8xbf16>
    %257 = vector.shape_cast %256 : vector<1x8x8xbf16> to vector<8x8xbf16>
    %cst_167 = arith.constant dense<0.000000e+00> : vector<8x128xf32>
    %258 = tpu.matmul %257, %255, %cst_167 {dimension_numbers = #tpu.dot_dimension_numbers<[1], [0], [0], [1], [0, 0, 1, 1], [], []>} : vector<8x8xbf16>, vector<8x128xbf16>, vector<8x128xf32> -> vector<8x128xf32>
    %259 = arith.addf %251, %258 : vector<8x128xf32>
    %c0_168 = arith.constant 0 : index
    %c8_169 = arith.constant 8 : index
    %260 = vector.load %arg29[%c0_168, %c8_169] : memref<8x546xbf16, #tpu.memory_space<vmem>>, vector<8x128xbf16>
    %c3_170 = arith.constant 3 : index
    %c0_171 = arith.constant 0 : index
    %261 = vector.load %arg21[%c3_170, %c0_171] : memref<9x128xbf16, #tpu.memory_space<vmem>>, vector<1x128xbf16>
    %262 = vector.broadcast %261 : vector<1x128xbf16> to vector<8x128xbf16>
    %263 = arith.mulf %260, %262 : vector<8x128xbf16>
    %c3_172 = arith.constant 3 : index
    %c0_173 = arith.constant 0 : index
    %c0_174 = arith.constant 0 : index
    %264 = vector.load %arg7[%c3_172, %c0_173, %c0_174] : memref<9x8x8xbf16, #tpu.memory_space<vmem>>, vector<1x8x8xbf16>
    %265 = vector.shape_cast %264 : vector<1x8x8xbf16> to vector<8x8xbf16>
    %cst_175 = arith.constant dense<0.000000e+00> : vector<8x128xf32>
    %266 = tpu.matmul %265, %263, %cst_175 {dimension_numbers = #tpu.dot_dimension_numbers<[1], [0], [0], [1], [0, 0, 1, 1], [], []>} : vector<8x8xbf16>, vector<8x128xbf16>, vector<8x128xf32> -> vector<8x128xf32>
    %267 = arith.addf %259, %266 : vector<8x128xf32>
    %c0_176 = arith.constant 0 : index
    %c9_177 = arith.constant 9 : index
    %268 = vector.load %arg29[%c0_176, %c9_177] : memref<8x546xbf16, #tpu.memory_space<vmem>>, vector<8x128xbf16>
    %c4_178 = arith.constant 4 : index
    %c0_179 = arith.constant 0 : index
    %269 = vector.load %arg21[%c4_178, %c0_179] : memref<9x128xbf16, #tpu.memory_space<vmem>>, vector<1x128xbf16>
    %270 = vector.broadcast %269 : vector<1x128xbf16> to vector<8x128xbf16>
    %271 = arith.mulf %268, %270 : vector<8x128xbf16>
    %c4_180 = arith.constant 4 : index
    %c0_181 = arith.constant 0 : index
    %c0_182 = arith.constant 0 : index
    %272 = vector.load %arg7[%c4_180, %c0_181, %c0_182] : memref<9x8x8xbf16, #tpu.memory_space<vmem>>, vector<1x8x8xbf16>
    %273 = vector.shape_cast %272 : vector<1x8x8xbf16> to vector<8x8xbf16>
    %cst_183 = arith.constant dense<0.000000e+00> : vector<8x128xf32>
    %274 = tpu.matmul %273, %271, %cst_183 {dimension_numbers = #tpu.dot_dimension_numbers<[1], [0], [0], [1], [0, 0, 1, 1], [], []>} : vector<8x8xbf16>, vector<8x128xbf16>, vector<8x128xf32> -> vector<8x128xf32>
    %275 = arith.addf %267, %274 : vector<8x128xf32>
    %c0_184 = arith.constant 0 : index
    %c10 = arith.constant 10 : index
    %276 = vector.load %arg29[%c0_184, %c10] : memref<8x546xbf16, #tpu.memory_space<vmem>>, vector<8x128xbf16>
    %c5_185 = arith.constant 5 : index
    %c0_186 = arith.constant 0 : index
    %277 = vector.load %arg21[%c5_185, %c0_186] : memref<9x128xbf16, #tpu.memory_space<vmem>>, vector<1x128xbf16>
    %278 = vector.broadcast %277 : vector<1x128xbf16> to vector<8x128xbf16>
    %279 = arith.mulf %276, %278 : vector<8x128xbf16>
    %c5_187 = arith.constant 5 : index
    %c0_188 = arith.constant 0 : index
    %c0_189 = arith.constant 0 : index
    %280 = vector.load %arg7[%c5_187, %c0_188, %c0_189] : memref<9x8x8xbf16, #tpu.memory_space<vmem>>, vector<1x8x8xbf16>
    %281 = vector.shape_cast %280 : vector<1x8x8xbf16> to vector<8x8xbf16>
    %cst_190 = arith.constant dense<0.000000e+00> : vector<8x128xf32>
    %282 = tpu.matmul %281, %279, %cst_190 {dimension_numbers = #tpu.dot_dimension_numbers<[1], [0], [0], [1], [0, 0, 1, 1], [], []>} : vector<8x8xbf16>, vector<8x128xbf16>, vector<8x128xf32> -> vector<8x128xf32>
    %283 = arith.addf %275, %282 : vector<8x128xf32>
    %c0_191 = arith.constant 0 : index
    %c16_192 = arith.constant 16 : index
    %284 = vector.load %arg29[%c0_191, %c16_192] : memref<8x546xbf16, #tpu.memory_space<vmem>>, vector<8x128xbf16>
    %c6_193 = arith.constant 6 : index
    %c0_194 = arith.constant 0 : index
    %285 = vector.load %arg21[%c6_193, %c0_194] : memref<9x128xbf16, #tpu.memory_space<vmem>>, vector<1x128xbf16>
    %286 = vector.broadcast %285 : vector<1x128xbf16> to vector<8x128xbf16>
    %287 = arith.mulf %284, %286 : vector<8x128xbf16>
    %c6_195 = arith.constant 6 : index
    %c0_196 = arith.constant 0 : index
    %c0_197 = arith.constant 0 : index
    %288 = vector.load %arg7[%c6_195, %c0_196, %c0_197] : memref<9x8x8xbf16, #tpu.memory_space<vmem>>, vector<1x8x8xbf16>
    %289 = vector.shape_cast %288 : vector<1x8x8xbf16> to vector<8x8xbf16>
    %cst_198 = arith.constant dense<0.000000e+00> : vector<8x128xf32>
    %290 = tpu.matmul %289, %287, %cst_198 {dimension_numbers = #tpu.dot_dimension_numbers<[1], [0], [0], [1], [0, 0, 1, 1], [], []>} : vector<8x8xbf16>, vector<8x128xbf16>, vector<8x128xf32> -> vector<8x128xf32>
    %291 = arith.addf %283, %290 : vector<8x128xf32>
    %c0_199 = arith.constant 0 : index
    %c17_200 = arith.constant 17 : index
    %292 = vector.load %arg29[%c0_199, %c17_200] : memref<8x546xbf16, #tpu.memory_space<vmem>>, vector<8x128xbf16>
    %c7_201 = arith.constant 7 : index
    %c0_202 = arith.constant 0 : index
    %293 = vector.load %arg21[%c7_201, %c0_202] : memref<9x128xbf16, #tpu.memory_space<vmem>>, vector<1x128xbf16>
    %294 = vector.broadcast %293 : vector<1x128xbf16> to vector<8x128xbf16>
    %295 = arith.mulf %292, %294 : vector<8x128xbf16>
    %c7_203 = arith.constant 7 : index
    %c0_204 = arith.constant 0 : index
    %c0_205 = arith.constant 0 : index
    %296 = vector.load %arg7[%c7_203, %c0_204, %c0_205] : memref<9x8x8xbf16, #tpu.memory_space<vmem>>, vector<1x8x8xbf16>
    %297 = vector.shape_cast %296 : vector<1x8x8xbf16> to vector<8x8xbf16>
    %cst_206 = arith.constant dense<0.000000e+00> : vector<8x128xf32>
    %298 = tpu.matmul %297, %295, %cst_206 {dimension_numbers = #tpu.dot_dimension_numbers<[1], [0], [0], [1], [0, 0, 1, 1], [], []>} : vector<8x8xbf16>, vector<8x128xbf16>, vector<8x128xf32> -> vector<8x128xf32>
    %299 = arith.addf %291, %298 : vector<8x128xf32>
    %c0_207 = arith.constant 0 : index
    %c18_208 = arith.constant 18 : index
    %300 = vector.load %arg29[%c0_207, %c18_208] : memref<8x546xbf16, #tpu.memory_space<vmem>>, vector<8x128xbf16>
    %c8_209 = arith.constant 8 : index
    %c0_210 = arith.constant 0 : index
    %301 = vector.load %arg21[%c8_209, %c0_210] : memref<9x128xbf16, #tpu.memory_space<vmem>>, vector<1x128xbf16>
    %302 = vector.broadcast %301 : vector<1x128xbf16> to vector<8x128xbf16>
    %303 = arith.mulf %300, %302 : vector<8x128xbf16>
    %c8_211 = arith.constant 8 : index
    %c0_212 = arith.constant 0 : index
    %c0_213 = arith.constant 0 : index
    %304 = vector.load %arg7[%c8_211, %c0_212, %c0_213] : memref<9x8x8xbf16, #tpu.memory_space<vmem>>, vector<1x8x8xbf16>
    %305 = vector.shape_cast %304 : vector<1x8x8xbf16> to vector<8x8xbf16>
    %cst_214 = arith.constant dense<0.000000e+00> : vector<8x128xf32>
    %306 = tpu.matmul %305, %303, %cst_214 {dimension_numbers = #tpu.dot_dimension_numbers<[1], [0], [0], [1], [0, 0, 1, 1], [], []>} : vector<8x8xbf16>, vector<8x128xbf16>, vector<8x128xf32> -> vector<8x128xf32>
    %307 = arith.addf %299, %306 : vector<8x128xf32>
    %c0_215 = arith.constant 0 : index
    %c5_216 = arith.constant 5 : index
    %308 = vector.load %arg23[%c0_215, %c5_216] : memref<8x13xf32, #tpu.memory_space<vmem>>, vector<8x1xf32>
    %c0_217 = arith.constant 0 : index
    %c5_218 = arith.constant 5 : index
    %309 = vector.load %arg24[%c0_217, %c5_218] : memref<8x13xf32, #tpu.memory_space<vmem>>, vector<8x1xf32>
    %c5_219 = arith.constant 5 : index
    %310 = memref.load %arg25[%c5_219] : memref<13xf32, #tpu.memory_space<smem>>
    %cst_220 = arith.constant dense<0.000000e+00> : vector<8xf32>
    %311 = vector.multi_reduction <add>, %307, %cst_220 [1] : vector<8x128xf32> to vector<8xf32>
    %312 = vector.shape_cast %311 : vector<8xf32> to vector<8x1xf32>
    %cst_221 = arith.constant 7.812500e-03 : f32
    %313 = vector.broadcast %cst_221 : f32 to vector<8x1xf32>
    %314 = arith.mulf %312, %313 : vector<8x1xf32>
    %315 = vector.broadcast %314 : vector<8x1xf32> to vector<8x128xf32>
    %316 = arith.subf %307, %315 : vector<8x128xf32>
    %317 = arith.mulf %316, %316 : vector<8x128xf32>
    %cst_222 = arith.constant dense<0.000000e+00> : vector<8xf32>
    %318 = vector.multi_reduction <add>, %317, %cst_222 [1] : vector<8x128xf32> to vector<8xf32>
    %319 = vector.shape_cast %318 : vector<8xf32> to vector<8x1xf32>
    %cst_223 = arith.constant 7.812500e-03 : f32
    %320 = vector.broadcast %cst_223 : f32 to vector<8x1xf32>
    %321 = arith.mulf %319, %320 : vector<8x1xf32>
    %cst_224 = arith.constant 9.99999974E-6 : f32
    %322 = vector.broadcast %cst_224 : f32 to vector<8x1xf32>
    %323 = arith.addf %321, %322 : vector<8x1xf32>
    %324 = math.rsqrt %323 : vector<8x1xf32>
    %325 = arith.mulf %324, %308 : vector<8x1xf32>
    %326 = vector.broadcast %325 : vector<8x1xf32> to vector<8x128xf32>
    %327 = arith.mulf %316, %326 : vector<8x128xf32>
    %328 = vector.broadcast %309 : vector<8x1xf32> to vector<8x128xf32>
    %329 = arith.addf %327, %328 : vector<8x128xf32>
    %cst_225 = arith.constant 0.000000e+00 : f32
    %330 = vector.broadcast %cst_225 : f32 to vector<8x128xf32>
    %331 = arith.cmpf ogt, %329, %330 : vector<8x128xf32>
    %332 = vector.broadcast %310 : f32 to vector<8x128xf32>
    %333 = arith.mulf %332, %329 : vector<8x128xf32>
    %334 = arith.select %331, %329, %333 : vector<8x128xi1>, vector<8x128xf32>
    %335 = arith.truncf %334 : vector<8x128xf32> to vector<8x128xbf16>
    %c0_226 = arith.constant 0 : index
    %c0_227 = arith.constant 0 : index
    %336 = vector.load %arg8[%c0_226, %c0_227] : memref<8x8xbf16, #tpu.memory_space<vmem>>, vector<8x8xbf16>
    %cst_228 = arith.constant dense<0.000000e+00> : vector<8x128xf32>
    %337 = tpu.matmul %336, %335, %cst_228 {dimension_numbers = #tpu.dot_dimension_numbers<[1], [0], [0], [1], [0, 0, 1, 1], [], []>} : vector<8x8xbf16>, vector<8x128xbf16>, vector<8x128xf32> -> vector<8x128xf32>
    %c0_229 = arith.constant 0 : index
    %c6_230 = arith.constant 6 : index
    %338 = vector.load %arg23[%c0_229, %c6_230] : memref<8x13xf32, #tpu.memory_space<vmem>>, vector<8x1xf32>
    %c0_231 = arith.constant 0 : index
    %c6_232 = arith.constant 6 : index
    %339 = vector.load %arg24[%c0_231, %c6_232] : memref<8x13xf32, #tpu.memory_space<vmem>>, vector<8x1xf32>
    %c6_233 = arith.constant 6 : index
    %340 = memref.load %arg25[%c6_233] : memref<13xf32, #tpu.memory_space<smem>>
    %cst_234 = arith.constant dense<0.000000e+00> : vector<8xf32>
    %341 = vector.multi_reduction <add>, %337, %cst_234 [1] : vector<8x128xf32> to vector<8xf32>
    %342 = vector.shape_cast %341 : vector<8xf32> to vector<8x1xf32>
    %cst_235 = arith.constant 7.812500e-03 : f32
    %343 = vector.broadcast %cst_235 : f32 to vector<8x1xf32>
    %344 = arith.mulf %342, %343 : vector<8x1xf32>
    %345 = vector.broadcast %344 : vector<8x1xf32> to vector<8x128xf32>
    %346 = arith.subf %337, %345 : vector<8x128xf32>
    %347 = arith.mulf %346, %346 : vector<8x128xf32>
    %cst_236 = arith.constant dense<0.000000e+00> : vector<8xf32>
    %348 = vector.multi_reduction <add>, %347, %cst_236 [1] : vector<8x128xf32> to vector<8xf32>
    %349 = vector.shape_cast %348 : vector<8xf32> to vector<8x1xf32>
    %cst_237 = arith.constant 7.812500e-03 : f32
    %350 = vector.broadcast %cst_237 : f32 to vector<8x1xf32>
    %351 = arith.mulf %349, %350 : vector<8x1xf32>
    %cst_238 = arith.constant 9.99999974E-6 : f32
    %352 = vector.broadcast %cst_238 : f32 to vector<8x1xf32>
    %353 = arith.addf %351, %352 : vector<8x1xf32>
    %354 = math.rsqrt %353 : vector<8x1xf32>
    %355 = arith.mulf %354, %338 : vector<8x1xf32>
    %356 = vector.broadcast %355 : vector<8x1xf32> to vector<8x128xf32>
    %357 = arith.mulf %346, %356 : vector<8x128xf32>
    %358 = vector.broadcast %339 : vector<8x1xf32> to vector<8x128xf32>
    %359 = arith.addf %357, %358 : vector<8x128xf32>
    %cst_239 = arith.constant 0.000000e+00 : f32
    %360 = vector.broadcast %cst_239 : f32 to vector<8x128xf32>
    %361 = arith.cmpf ogt, %359, %360 : vector<8x128xf32>
    %362 = vector.broadcast %340 : f32 to vector<8x128xf32>
    %363 = arith.mulf %362, %359 : vector<8x128xf32>
    %364 = arith.select %361, %359, %363 : vector<8x128xi1>, vector<8x128xf32>
    %365 = arith.truncf %364 : vector<8x128xf32> to vector<8x128xbf16>
    %c0_240 = arith.constant 0 : index
    %c0_241 = arith.constant 0 : index
    %366 = vector.load %arg9[%c0_240, %c0_241] : memref<8x8xbf16, #tpu.memory_space<vmem>>, vector<8x8xbf16>
    %cst_242 = arith.constant dense<0.000000e+00> : vector<8x128xf32>
    %367 = tpu.matmul %366, %201, %cst_242 {dimension_numbers = #tpu.dot_dimension_numbers<[1], [0], [0], [1], [0, 0, 1, 1], [], []>} : vector<8x8xbf16>, vector<8x128xbf16>, vector<8x128xf32> -> vector<8x128xf32>
    %c0_243 = arith.constant 0 : index
    %c0_244 = arith.constant 0 : index
    %368 = vector.load %arg10[%c0_243, %c0_244] : memref<8x8xbf16, #tpu.memory_space<vmem>>, vector<8x8xbf16>
    %cst_245 = arith.constant dense<0.000000e+00> : vector<8x128xf32>
    %369 = tpu.matmul %368, %365, %cst_245 {dimension_numbers = #tpu.dot_dimension_numbers<[1], [0], [0], [1], [0, 0, 1, 1], [], []>} : vector<8x8xbf16>, vector<8x128xbf16>, vector<8x128xf32> -> vector<8x128xf32>
    %370 = arith.addf %367, %369 : vector<8x128xf32>
    %c0_246 = arith.constant 0 : index
    %c7_247 = arith.constant 7 : index
    %371 = vector.load %arg23[%c0_246, %c7_247] : memref<8x13xf32, #tpu.memory_space<vmem>>, vector<8x1xf32>
    %c0_248 = arith.constant 0 : index
    %c7_249 = arith.constant 7 : index
    %372 = vector.load %arg24[%c0_248, %c7_249] : memref<8x13xf32, #tpu.memory_space<vmem>>, vector<8x1xf32>
    %c7_250 = arith.constant 7 : index
    %373 = memref.load %arg25[%c7_250] : memref<13xf32, #tpu.memory_space<smem>>
    %cst_251 = arith.constant dense<0.000000e+00> : vector<8xf32>
    %374 = vector.multi_reduction <add>, %370, %cst_251 [1] : vector<8x128xf32> to vector<8xf32>
    %375 = vector.shape_cast %374 : vector<8xf32> to vector<8x1xf32>
    %cst_252 = arith.constant 7.812500e-03 : f32
    %376 = vector.broadcast %cst_252 : f32 to vector<8x1xf32>
    %377 = arith.mulf %375, %376 : vector<8x1xf32>
    %378 = vector.broadcast %377 : vector<8x1xf32> to vector<8x128xf32>
    %379 = arith.subf %370, %378 : vector<8x128xf32>
    %380 = arith.mulf %379, %379 : vector<8x128xf32>
    %cst_253 = arith.constant dense<0.000000e+00> : vector<8xf32>
    %381 = vector.multi_reduction <add>, %380, %cst_253 [1] : vector<8x128xf32> to vector<8xf32>
    %382 = vector.shape_cast %381 : vector<8xf32> to vector<8x1xf32>
    %cst_254 = arith.constant 7.812500e-03 : f32
    %383 = vector.broadcast %cst_254 : f32 to vector<8x1xf32>
    %384 = arith.mulf %382, %383 : vector<8x1xf32>
    %cst_255 = arith.constant 9.99999974E-6 : f32
    %385 = vector.broadcast %cst_255 : f32 to vector<8x1xf32>
    %386 = arith.addf %384, %385 : vector<8x1xf32>
    %387 = math.rsqrt %386 : vector<8x1xf32>
    %388 = arith.mulf %387, %371 : vector<8x1xf32>
    %389 = vector.broadcast %388 : vector<8x1xf32> to vector<8x128xf32>
    %390 = arith.mulf %379, %389 : vector<8x128xf32>
    %391 = vector.broadcast %372 : vector<8x1xf32> to vector<8x128xf32>
    %392 = arith.addf %390, %391 : vector<8x128xf32>
    %cst_256 = arith.constant 0.000000e+00 : f32
    %393 = vector.broadcast %cst_256 : f32 to vector<8x128xf32>
    %394 = arith.cmpf ogt, %392, %393 : vector<8x128xf32>
    %395 = vector.broadcast %373 : f32 to vector<8x128xf32>
    %396 = arith.mulf %395, %392 : vector<8x128xf32>
    %397 = arith.select %394, %392, %396 : vector<8x128xi1>, vector<8x128xf32>
    %398 = arith.truncf %397 : vector<8x128xf32> to vector<8x128xbf16>
    %c0_257 = arith.constant 0 : index
    %c0_258 = arith.constant 0 : index
    %399 = vector.load %arg27[%c0_257, %c0_258] : memref<8x128xbf16, #tpu.memory_space<vmem>>, vector<8x128xbf16>
    tpu.vector_store %arg27[%c0_257, %c0_258], %398 {strides = array<i32>} : memref<8x128xbf16, #tpu.memory_space<vmem>>, vector<8x128xbf16>,
    %c0_259 = arith.constant 0 : index
    %c0_260 = arith.constant 0 : index
    %400 = vector.load %arg18[%c0_259, %c0_260] : memref<128x32xbf16, #tpu.memory_space<vmem>>, vector<128x32xbf16>
    %cst_261 = arith.constant dense<0.000000e+00> : vector<8x32xf32>
    %401 = tpu.matmul %398, %400, %cst_261 {dimension_numbers = #tpu.dot_dimension_numbers<[1], [0], [0], [1], [0, 0, 1, 1], [], []>} : vector<8x128xbf16>, vector<128x32xbf16>, vector<8x32xf32> -> vector<8x32xf32>
    %402 = arith.truncf %401 : vector<8x32xf32> to vector<8x32xbf16>
    %c0_262 = arith.constant 0 : index
    %c0_263 = arith.constant 0 : index
    %403 = vector.load %arg11[%c0_262, %c0_263] : memref<8x8xbf16, #tpu.memory_space<vmem>>, vector<8x8xbf16>
    %cst_264 = arith.constant dense<0.000000e+00> : vector<8x32xf32>
    %404 = tpu.matmul %403, %402, %cst_264 {dimension_numbers = #tpu.dot_dimension_numbers<[1], [0], [0], [1], [0, 0, 1, 1], [], []>} : vector<8x8xbf16>, vector<8x32xbf16>, vector<8x32xf32> -> vector<8x32xf32>
    %c0_265 = arith.constant 0 : index
    %c8_266 = arith.constant 8 : index
    %405 = vector.load %arg23[%c0_265, %c8_266] : memref<8x13xf32, #tpu.memory_space<vmem>>, vector<8x1xf32>
    %c0_267 = arith.constant 0 : index
    %c8_268 = arith.constant 8 : index
    %406 = vector.load %arg24[%c0_267, %c8_268] : memref<8x13xf32, #tpu.memory_space<vmem>>, vector<8x1xf32>
    %c8_269 = arith.constant 8 : index
    %407 = memref.load %arg25[%c8_269] : memref<13xf32, #tpu.memory_space<smem>>
    %cst_270 = arith.constant dense<0.000000e+00> : vector<8xf32>
    %408 = vector.multi_reduction <add>, %404, %cst_270 [1] : vector<8x32xf32> to vector<8xf32>
    %409 = vector.shape_cast %408 : vector<8xf32> to vector<8x1xf32>
    %cst_271 = arith.constant 3.125000e-02 : f32
    %410 = vector.broadcast %cst_271 : f32 to vector<8x1xf32>
    %411 = arith.mulf %409, %410 : vector<8x1xf32>
    %412 = vector.broadcast %411 : vector<8x1xf32> to vector<8x32xf32>
    %413 = arith.subf %404, %412 : vector<8x32xf32>
    %414 = arith.mulf %413, %413 : vector<8x32xf32>
    %cst_272 = arith.constant dense<0.000000e+00> : vector<8xf32>
    %415 = vector.multi_reduction <add>, %414, %cst_272 [1] : vector<8x32xf32> to vector<8xf32>
    %416 = vector.shape_cast %415 : vector<8xf32> to vector<8x1xf32>
    %cst_273 = arith.constant 3.125000e-02 : f32
    %417 = vector.broadcast %cst_273 : f32 to vector<8x1xf32>
    %418 = arith.mulf %416, %417 : vector<8x1xf32>
    %cst_274 = arith.constant 9.99999974E-6 : f32
    %419 = vector.broadcast %cst_274 : f32 to vector<8x1xf32>
    %420 = arith.addf %418, %419 : vector<8x1xf32>
    %421 = math.rsqrt %420 : vector<8x1xf32>
    %422 = arith.mulf %421, %405 : vector<8x1xf32>
    %423 = vector.broadcast %422 : vector<8x1xf32> to vector<8x32xf32>
    %424 = arith.mulf %413, %423 : vector<8x32xf32>
    %425 = vector.broadcast %406 : vector<8x1xf32> to vector<8x32xf32>
    %426 = arith.addf %424, %425 : vector<8x32xf32>
    %cst_275 = arith.constant 0.000000e+00 : f32
    %427 = vector.broadcast %cst_275 : f32 to vector<8x32xf32>
    %428 = arith.cmpf ogt, %426, %427 : vector<8x32xf32>
    %429 = vector.broadcast %407 : f32 to vector<8x32xf32>
    %430 = arith.mulf %429, %426 : vector<8x32xf32>
    %431 = arith.select %428, %426, %430 : vector<8x32xi1>, vector<8x32xf32>
    %432 = arith.truncf %431 : vector<8x32xf32> to vector<8x32xbf16>
    %cst_276 = arith.constant 0.000000e+00 : f32
    %433 = vector.broadcast %cst_276 : f32 to vector<8x32xf32>
    %cst_277 = arith.constant 0.000000e+00 : bf16
    %434 = vector.broadcast %cst_277 : bf16 to vector<8x546xbf16>
    %c0_278 = arith.constant 0 : index
    %c0_279 = arith.constant 0 : index
    %435 = vector.load %arg29[%c0_278, %c0_279] : memref<8x546xbf16, #tpu.memory_space<vmem>>, vector<8x546xbf16>
    tpu.vector_store %arg29[%c0_278, %c0_279], %434 {strides = array<i32>} : memref<8x546xbf16, #tpu.memory_space<vmem>>, vector<8x546xbf16>,
    %c0_280 = arith.constant 0 : index
    %c5_281 = arith.constant 5 : index
    %436 = vector.load %arg29[%c0_280, %c5_281] : memref<8x546xbf16, #tpu.memory_space<vmem>>, vector<8x32xbf16>
    tpu.vector_store %arg29[%c0_280, %c5_281], %432 {strides = array<i32>} : memref<8x546xbf16, #tpu.memory_space<vmem>>, vector<8x32xbf16>,
    %c0_282 = arith.constant 0 : index
    %c0_283 = arith.constant 0 : index
    %437 = vector.load %arg29[%c0_282, %c0_283] : memref<8x546xbf16, #tpu.memory_space<vmem>>, vector<8x32xbf16>
    %c0_284 = arith.constant 0 : index
    %c0_285 = arith.constant 0 : index
    %438 = vector.load %arg22[%c0_284, %c0_285] : memref<9x32xbf16, #tpu.memory_space<vmem>>, vector<1x32xbf16>
    %439 = vector.broadcast %438 : vector<1x32xbf16> to vector<8x32xbf16>
    %440 = arith.mulf %437, %439 : vector<8x32xbf16>
    %c0_286 = arith.constant 0 : index
    %c0_287 = arith.constant 0 : index
    %c0_288 = arith.constant 0 : index
    %441 = vector.load %arg12[%c0_286, %c0_287, %c0_288] : memref<9x8x8xbf16, #tpu.memory_space<vmem>>, vector<1x8x8xbf16>
    %442 = vector.shape_cast %441 : vector<1x8x8xbf16> to vector<8x8xbf16>
    %cst_289 = arith.constant dense<0.000000e+00> : vector<8x32xf32>
    %443 = tpu.matmul %442, %440, %cst_289 {dimension_numbers = #tpu.dot_dimension_numbers<[1], [0], [0], [1], [0, 0, 1, 1], [], []>} : vector<8x8xbf16>, vector<8x32xbf16>, vector<8x32xf32> -> vector<8x32xf32>
    %444 = arith.addf %433, %443 : vector<8x32xf32>
    %c0_290 = arith.constant 0 : index
    %c1_291 = arith.constant 1 : index
    %445 = vector.load %arg29[%c0_290, %c1_291] : memref<8x546xbf16, #tpu.memory_space<vmem>>, vector<8x32xbf16>
    %c1_292 = arith.constant 1 : index
    %c0_293 = arith.constant 0 : index
    %446 = vector.load %arg22[%c1_292, %c0_293] : memref<9x32xbf16, #tpu.memory_space<vmem>>, vector<1x32xbf16>
    %447 = vector.broadcast %446 : vector<1x32xbf16> to vector<8x32xbf16>
    %448 = arith.mulf %445, %447 : vector<8x32xbf16>
    %c1_294 = arith.constant 1 : index
    %c0_295 = arith.constant 0 : index
    %c0_296 = arith.constant 0 : index
    %449 = vector.load %arg12[%c1_294, %c0_295, %c0_296] : memref<9x8x8xbf16, #tpu.memory_space<vmem>>, vector<1x8x8xbf16>
    %450 = vector.shape_cast %449 : vector<1x8x8xbf16> to vector<8x8xbf16>
    %cst_297 = arith.constant dense<0.000000e+00> : vector<8x32xf32>
    %451 = tpu.matmul %450, %448, %cst_297 {dimension_numbers = #tpu.dot_dimension_numbers<[1], [0], [0], [1], [0, 0, 1, 1], [], []>} : vector<8x8xbf16>, vector<8x32xbf16>, vector<8x32xf32> -> vector<8x32xf32>
    %452 = arith.addf %444, %451 : vector<8x32xf32>
    %c0_298 = arith.constant 0 : index
    %c2_299 = arith.constant 2 : index
    %453 = vector.load %arg29[%c0_298, %c2_299] : memref<8x546xbf16, #tpu.memory_space<vmem>>, vector<8x32xbf16>
    %c2_300 = arith.constant 2 : index
    %c0_301 = arith.constant 0 : index
    %454 = vector.load %arg22[%c2_300, %c0_301] : memref<9x32xbf16, #tpu.memory_space<vmem>>, vector<1x32xbf16>
    %455 = vector.broadcast %454 : vector<1x32xbf16> to vector<8x32xbf16>
    %456 = arith.mulf %453, %455 : vector<8x32xbf16>
    %c2_302 = arith.constant 2 : index
    %c0_303 = arith.constant 0 : index
    %c0_304 = arith.constant 0 : index
    %457 = vector.load %arg12[%c2_302, %c0_303, %c0_304] : memref<9x8x8xbf16, #tpu.memory_space<vmem>>, vector<1x8x8xbf16>
    %458 = vector.shape_cast %457 : vector<1x8x8xbf16> to vector<8x8xbf16>
    %cst_305 = arith.constant dense<0.000000e+00> : vector<8x32xf32>
    %459 = tpu.matmul %458, %456, %cst_305 {dimension_numbers = #tpu.dot_dimension_numbers<[1], [0], [0], [1], [0, 0, 1, 1], [], []>} : vector<8x8xbf16>, vector<8x32xbf16>, vector<8x32xf32> -> vector<8x32xf32>
    %460 = arith.addf %452, %459 : vector<8x32xf32>
    %c0_306 = arith.constant 0 : index
    %c4_307 = arith.constant 4 : index
    %461 = vector.load %arg29[%c0_306, %c4_307] : memref<8x546xbf16, #tpu.memory_space<vmem>>, vector<8x32xbf16>
    %c3_308 = arith.constant 3 : index
    %c0_309 = arith.constant 0 : index
    %462 = vector.load %arg22[%c3_308, %c0_309] : memref<9x32xbf16, #tpu.memory_space<vmem>>, vector<1x32xbf16>
    %463 = vector.broadcast %462 : vector<1x32xbf16> to vector<8x32xbf16>
    %464 = arith.mulf %461, %463 : vector<8x32xbf16>
    %c3_310 = arith.constant 3 : index
    %c0_311 = arith.constant 0 : index
    %c0_312 = arith.constant 0 : index
    %465 = vector.load %arg12[%c3_310, %c0_311, %c0_312] : memref<9x8x8xbf16, #tpu.memory_space<vmem>>, vector<1x8x8xbf16>
    %466 = vector.shape_cast %465 : vector<1x8x8xbf16> to vector<8x8xbf16>
    %cst_313 = arith.constant dense<0.000000e+00> : vector<8x32xf32>
    %467 = tpu.matmul %466, %464, %cst_313 {dimension_numbers = #tpu.dot_dimension_numbers<[1], [0], [0], [1], [0, 0, 1, 1], [], []>} : vector<8x8xbf16>, vector<8x32xbf16>, vector<8x32xf32> -> vector<8x32xf32>
    %468 = arith.addf %460, %467 : vector<8x32xf32>
    %c0_314 = arith.constant 0 : index
    %c5_315 = arith.constant 5 : index
    %469 = vector.load %arg29[%c0_314, %c5_315] : memref<8x546xbf16, #tpu.memory_space<vmem>>, vector<8x32xbf16>
    %c4_316 = arith.constant 4 : index
    %c0_317 = arith.constant 0 : index
    %470 = vector.load %arg22[%c4_316, %c0_317] : memref<9x32xbf16, #tpu.memory_space<vmem>>, vector<1x32xbf16>
    %471 = vector.broadcast %470 : vector<1x32xbf16> to vector<8x32xbf16>
    %472 = arith.mulf %469, %471 : vector<8x32xbf16>
    %c4_318 = arith.constant 4 : index
    %c0_319 = arith.constant 0 : index
    %c0_320 = arith.constant 0 : index
    %473 = vector.load %arg12[%c4_318, %c0_319, %c0_320] : memref<9x8x8xbf16, #tpu.memory_space<vmem>>, vector<1x8x8xbf16>
    %474 = vector.shape_cast %473 : vector<1x8x8xbf16> to vector<8x8xbf16>
    %cst_321 = arith.constant dense<0.000000e+00> : vector<8x32xf32>
    %475 = tpu.matmul %474, %472, %cst_321 {dimension_numbers = #tpu.dot_dimension_numbers<[1], [0], [0], [1], [0, 0, 1, 1], [], []>} : vector<8x8xbf16>, vector<8x32xbf16>, vector<8x32xf32> -> vector<8x32xf32>
    %476 = arith.addf %468, %475 : vector<8x32xf32>
    %c0_322 = arith.constant 0 : index
    %c6_323 = arith.constant 6 : index
    %477 = vector.load %arg29[%c0_322, %c6_323] : memref<8x546xbf16, #tpu.memory_space<vmem>>, vector<8x32xbf16>
    %c5_324 = arith.constant 5 : index
    %c0_325 = arith.constant 0 : index
    %478 = vector.load %arg22[%c5_324, %c0_325] : memref<9x32xbf16, #tpu.memory_space<vmem>>, vector<1x32xbf16>
    %479 = vector.broadcast %478 : vector<1x32xbf16> to vector<8x32xbf16>
    %480 = arith.mulf %477, %479 : vector<8x32xbf16>
    %c5_326 = arith.constant 5 : index
    %c0_327 = arith.constant 0 : index
    %c0_328 = arith.constant 0 : index
    %481 = vector.load %arg12[%c5_326, %c0_327, %c0_328] : memref<9x8x8xbf16, #tpu.memory_space<vmem>>, vector<1x8x8xbf16>
    %482 = vector.shape_cast %481 : vector<1x8x8xbf16> to vector<8x8xbf16>
    %cst_329 = arith.constant dense<0.000000e+00> : vector<8x32xf32>
    %483 = tpu.matmul %482, %480, %cst_329 {dimension_numbers = #tpu.dot_dimension_numbers<[1], [0], [0], [1], [0, 0, 1, 1], [], []>} : vector<8x8xbf16>, vector<8x32xbf16>, vector<8x32xf32> -> vector<8x32xf32>
    %484 = arith.addf %476, %483 : vector<8x32xf32>
    %c0_330 = arith.constant 0 : index
    %c8_331 = arith.constant 8 : index
    %485 = vector.load %arg29[%c0_330, %c8_331] : memref<8x546xbf16, #tpu.memory_space<vmem>>, vector<8x32xbf16>
    %c6_332 = arith.constant 6 : index
    %c0_333 = arith.constant 0 : index
    %486 = vector.load %arg22[%c6_332, %c0_333] : memref<9x32xbf16, #tpu.memory_space<vmem>>, vector<1x32xbf16>
    %487 = vector.broadcast %486 : vector<1x32xbf16> to vector<8x32xbf16>
    %488 = arith.mulf %485, %487 : vector<8x32xbf16>
    %c6_334 = arith.constant 6 : index
    %c0_335 = arith.constant 0 : index
    %c0_336 = arith.constant 0 : index
    %489 = vector.load %arg12[%c6_334, %c0_335, %c0_336] : memref<9x8x8xbf16, #tpu.memory_space<vmem>>, vector<1x8x8xbf16>
    %490 = vector.shape_cast %489 : vector<1x8x8xbf16> to vector<8x8xbf16>
    %cst_337 = arith.constant dense<0.000000e+00> : vector<8x32xf32>
    %491 = tpu.matmul %490, %488, %cst_337 {dimension_numbers = #tpu.dot_dimension_numbers<[1], [0], [0], [1], [0, 0, 1, 1], [], []>} : vector<8x8xbf16>, vector<8x32xbf16>, vector<8x32xf32> -> vector<8x32xf32>
    %492 = arith.addf %484, %491 : vector<8x32xf32>
    %c0_338 = arith.constant 0 : index
    %c9_339 = arith.constant 9 : index
    %493 = vector.load %arg29[%c0_338, %c9_339] : memref<8x546xbf16, #tpu.memory_space<vmem>>, vector<8x32xbf16>
    %c7_340 = arith.constant 7 : index
    %c0_341 = arith.constant 0 : index
    %494 = vector.load %arg22[%c7_340, %c0_341] : memref<9x32xbf16, #tpu.memory_space<vmem>>, vector<1x32xbf16>
    %495 = vector.broadcast %494 : vector<1x32xbf16> to vector<8x32xbf16>
    %496 = arith.mulf %493, %495 : vector<8x32xbf16>
    %c7_342 = arith.constant 7 : index
    %c0_343 = arith.constant 0 : index
    %c0_344 = arith.constant 0 : index
    %497 = vector.load %arg12[%c7_342, %c0_343, %c0_344] : memref<9x8x8xbf16, #tpu.memory_space<vmem>>, vector<1x8x8xbf16>
    %498 = vector.shape_cast %497 : vector<1x8x8xbf16> to vector<8x8xbf16>
    %cst_345 = arith.constant dense<0.000000e+00> : vector<8x32xf32>
    %499 = tpu.matmul %498, %496, %cst_345 {dimension_numbers = #tpu.dot_dimension_numbers<[1], [0], [0], [1], [0, 0, 1, 1], [], []>} : vector<8x8xbf16>, vector<8x32xbf16>, vector<8x32xf32> -> vector<8x32xf32>
    %500 = arith.addf %492, %499 : vector<8x32xf32>
    %c0_346 = arith.constant 0 : index
    %c10_347 = arith.constant 10 : index
    %501 = vector.load %arg29[%c0_346, %c10_347] : memref<8x546xbf16, #tpu.memory_space<vmem>>, vector<8x32xbf16>
    %c8_348 = arith.constant 8 : index
    %c0_349 = arith.constant 0 : index
    %502 = vector.load %arg22[%c8_348, %c0_349] : memref<9x32xbf16, #tpu.memory_space<vmem>>, vector<1x32xbf16>
    %503 = vector.broadcast %502 : vector<1x32xbf16> to vector<8x32xbf16>
    %504 = arith.mulf %501, %503 : vector<8x32xbf16>
    %c8_350 = arith.constant 8 : index
    %c0_351 = arith.constant 0 : index
    %c0_352 = arith.constant 0 : index
    %505 = vector.load %arg12[%c8_350, %c0_351, %c0_352] : memref<9x8x8xbf16, #tpu.memory_space<vmem>>, vector<1x8x8xbf16>
    %506 = vector.shape_cast %505 : vector<1x8x8xbf16> to vector<8x8xbf16>
    %cst_353 = arith.constant dense<0.000000e+00> : vector<8x32xf32>
    %507 = tpu.matmul %506, %504, %cst_353 {dimension_numbers = #tpu.dot_dimension_numbers<[1], [0], [0], [1], [0, 0, 1, 1], [], []>} : vector<8x8xbf16>, vector<8x32xbf16>, vector<8x32xf32> -> vector<8x32xf32>
    %508 = arith.addf %500, %507 : vector<8x32xf32>
    %c0_354 = arith.constant 0 : index
    %c9_355 = arith.constant 9 : index
    %509 = vector.load %arg23[%c0_354, %c9_355] : memref<8x13xf32, #tpu.memory_space<vmem>>, vector<8x1xf32>
    %c0_356 = arith.constant 0 : index
    %c9_357 = arith.constant 9 : index
    %510 = vector.load %arg24[%c0_356, %c9_357] : memref<8x13xf32, #tpu.memory_space<vmem>>, vector<8x1xf32>
    %c9_358 = arith.constant 9 : index
    %511 = memref.load %arg25[%c9_358] : memref<13xf32, #tpu.memory_space<smem>>
    %cst_359 = arith.constant dense<0.000000e+00> : vector<8xf32>
    %512 = vector.multi_reduction <add>, %508, %cst_359 [1] : vector<8x32xf32> to vector<8xf32>
    %513 = vector.shape_cast %512 : vector<8xf32> to vector<8x1xf32>
    %cst_360 = arith.constant 3.125000e-02 : f32
    %514 = vector.broadcast %cst_360 : f32 to vector<8x1xf32>
    %515 = arith.mulf %513, %514 : vector<8x1xf32>
    %516 = vector.broadcast %515 : vector<8x1xf32> to vector<8x32xf32>
    %517 = arith.subf %508, %516 : vector<8x32xf32>
    %518 = arith.mulf %517, %517 : vector<8x32xf32>
    %cst_361 = arith.constant dense<0.000000e+00> : vector<8xf32>
    %519 = vector.multi_reduction <add>, %518, %cst_361 [1] : vector<8x32xf32> to vector<8xf32>
    %520 = vector.shape_cast %519 : vector<8xf32> to vector<8x1xf32>
    %cst_362 = arith.constant 3.125000e-02 : f32
    %521 = vector.broadcast %cst_362 : f32 to vector<8x1xf32>
    %522 = arith.mulf %520, %521 : vector<8x1xf32>
    %cst_363 = arith.constant 9.99999974E-6 : f32
    %523 = vector.broadcast %cst_363 : f32 to vector<8x1xf32>
    %524 = arith.addf %522, %523 : vector<8x1xf32>
    %525 = math.rsqrt %524 : vector<8x1xf32>
    %526 = arith.mulf %525, %509 : vector<8x1xf32>
    %527 = vector.broadcast %526 : vector<8x1xf32> to vector<8x32xf32>
    %528 = arith.mulf %517, %527 : vector<8x32xf32>
    %529 = vector.broadcast %510 : vector<8x1xf32> to vector<8x32xf32>
    %530 = arith.addf %528, %529 : vector<8x32xf32>
    %cst_364 = arith.constant 0.000000e+00 : f32
    %531 = vector.broadcast %cst_364 : f32 to vector<8x32xf32>
    %532 = arith.cmpf ogt, %530, %531 : vector<8x32xf32>
    %533 = vector.broadcast %511 : f32 to vector<8x32xf32>
    %534 = arith.mulf %533, %530 : vector<8x32xf32>
    %535 = arith.select %532, %530, %534 : vector<8x32xi1>, vector<8x32xf32>
    %536 = arith.truncf %535 : vector<8x32xf32> to vector<8x32xbf16>
    %c0_365 = arith.constant 0 : index
    %c0_366 = arith.constant 0 : index
    %537 = vector.load %arg13[%c0_365, %c0_366] : memref<8x8xbf16, #tpu.memory_space<vmem>>, vector<8x8xbf16>
    %cst_367 = arith.constant dense<0.000000e+00> : vector<8x32xf32>
    %538 = tpu.matmul %537, %536, %cst_367 {dimension_numbers = #tpu.dot_dimension_numbers<[1], [0], [0], [1], [0, 0, 1, 1], [], []>} : vector<8x8xbf16>, vector<8x32xbf16>, vector<8x32xf32> -> vector<8x32xf32>
    %c0_368 = arith.constant 0 : index
    %c10_369 = arith.constant 10 : index
    %539 = vector.load %arg23[%c0_368, %c10_369] : memref<8x13xf32, #tpu.memory_space<vmem>>, vector<8x1xf32>
    %c0_370 = arith.constant 0 : index
    %c10_371 = arith.constant 10 : index
    %540 = vector.load %arg24[%c0_370, %c10_371] : memref<8x13xf32, #tpu.memory_space<vmem>>, vector<8x1xf32>
    %c10_372 = arith.constant 10 : index
    %541 = memref.load %arg25[%c10_372] : memref<13xf32, #tpu.memory_space<smem>>
    %cst_373 = arith.constant dense<0.000000e+00> : vector<8xf32>
    %542 = vector.multi_reduction <add>, %538, %cst_373 [1] : vector<8x32xf32> to vector<8xf32>
    %543 = vector.shape_cast %542 : vector<8xf32> to vector<8x1xf32>
    %cst_374 = arith.constant 3.125000e-02 : f32
    %544 = vector.broadcast %cst_374 : f32 to vector<8x1xf32>
    %545 = arith.mulf %543, %544 : vector<8x1xf32>
    %546 = vector.broadcast %545 : vector<8x1xf32> to vector<8x32xf32>
    %547 = arith.subf %538, %546 : vector<8x32xf32>
    %548 = arith.mulf %547, %547 : vector<8x32xf32>
    %cst_375 = arith.constant dense<0.000000e+00> : vector<8xf32>
    %549 = vector.multi_reduction <add>, %548, %cst_375 [1] : vector<8x32xf32> to vector<8xf32>
    %550 = vector.shape_cast %549 : vector<8xf32> to vector<8x1xf32>
    %cst_376 = arith.constant 3.125000e-02 : f32
    %551 = vector.broadcast %cst_376 : f32 to vector<8x1xf32>
    %552 = arith.mulf %550, %551 : vector<8x1xf32>
    %cst_377 = arith.constant 9.99999974E-6 : f32
    %553 = vector.broadcast %cst_377 : f32 to vector<8x1xf32>
    %554 = arith.addf %552, %553 : vector<8x1xf32>
    %555 = math.rsqrt %554 : vector<8x1xf32>
    %556 = arith.mulf %555, %539 : vector<8x1xf32>
    %557 = vector.broadcast %556 : vector<8x1xf32> to vector<8x32xf32>
    %558 = arith.mulf %547, %557 : vector<8x32xf32>
    %559 = vector.broadcast %540 : vector<8x1xf32> to vector<8x32xf32>
    %560 = arith.addf %558, %559 : vector<8x32xf32>
    %cst_378 = arith.constant 0.000000e+00 : f32
    %561 = vector.broadcast %cst_378 : f32 to vector<8x32xf32>
    %562 = arith.cmpf ogt, %560, %561 : vector<8x32xf32>
    %563 = vector.broadcast %541 : f32 to vector<8x32xf32>
    %564 = arith.mulf %563, %560 : vector<8x32xf32>
    %565 = arith.select %562, %560, %564 : vector<8x32xi1>, vector<8x32xf32>
    %566 = arith.truncf %565 : vector<8x32xf32> to vector<8x32xbf16>
    %c0_379 = arith.constant 0 : index
    %c0_380 = arith.constant 0 : index
    %567 = vector.load %arg14[%c0_379, %c0_380] : memref<8x8xbf16, #tpu.memory_space<vmem>>, vector<8x8xbf16>
    %cst_381 = arith.constant dense<0.000000e+00> : vector<8x32xf32>
    %568 = tpu.matmul %567, %402, %cst_381 {dimension_numbers = #tpu.dot_dimension_numbers<[1], [0], [0], [1], [0, 0, 1, 1], [], []>} : vector<8x8xbf16>, vector<8x32xbf16>, vector<8x32xf32> -> vector<8x32xf32>
    %c0_382 = arith.constant 0 : index
    %c0_383 = arith.constant 0 : index
    %569 = vector.load %arg15[%c0_382, %c0_383] : memref<8x8xbf16, #tpu.memory_space<vmem>>, vector<8x8xbf16>
    %cst_384 = arith.constant dense<0.000000e+00> : vector<8x32xf32>
    %570 = tpu.matmul %569, %566, %cst_384 {dimension_numbers = #tpu.dot_dimension_numbers<[1], [0], [0], [1], [0, 0, 1, 1], [], []>} : vector<8x8xbf16>, vector<8x32xbf16>, vector<8x32xf32> -> vector<8x32xf32>
    %571 = arith.addf %568, %570 : vector<8x32xf32>
    %c0_385 = arith.constant 0 : index
    %c11 = arith.constant 11 : index
    %572 = vector.load %arg23[%c0_385, %c11] : memref<8x13xf32, #tpu.memory_space<vmem>>, vector<8x1xf32>
    %c0_386 = arith.constant 0 : index
    %c11_387 = arith.constant 11 : index
    %573 = vector.load %arg24[%c0_386, %c11_387] : memref<8x13xf32, #tpu.memory_space<vmem>>, vector<8x1xf32>
    %c11_388 = arith.constant 11 : index
    %574 = memref.load %arg25[%c11_388] : memref<13xf32, #tpu.memory_space<smem>>
    %cst_389 = arith.constant dense<0.000000e+00> : vector<8xf32>
    %575 = vector.multi_reduction <add>, %571, %cst_389 [1] : vector<8x32xf32> to vector<8xf32>
    %576 = vector.shape_cast %575 : vector<8xf32> to vector<8x1xf32>
    %cst_390 = arith.constant 3.125000e-02 : f32
    %577 = vector.broadcast %cst_390 : f32 to vector<8x1xf32>
    %578 = arith.mulf %576, %577 : vector<8x1xf32>
    %579 = vector.broadcast %578 : vector<8x1xf32> to vector<8x32xf32>
    %580 = arith.subf %571, %579 : vector<8x32xf32>
    %581 = arith.mulf %580, %580 : vector<8x32xf32>
    %cst_391 = arith.constant dense<0.000000e+00> : vector<8xf32>
    %582 = vector.multi_reduction <add>, %581, %cst_391 [1] : vector<8x32xf32> to vector<8xf32>
    %583 = vector.shape_cast %582 : vector<8xf32> to vector<8x1xf32>
    %cst_392 = arith.constant 3.125000e-02 : f32
    %584 = vector.broadcast %cst_392 : f32 to vector<8x1xf32>
    %585 = arith.mulf %583, %584 : vector<8x1xf32>
    %cst_393 = arith.constant 9.99999974E-6 : f32
    %586 = vector.broadcast %cst_393 : f32 to vector<8x1xf32>
    %587 = arith.addf %585, %586 : vector<8x1xf32>
    %588 = math.rsqrt %587 : vector<8x1xf32>
    %589 = arith.mulf %588, %572 : vector<8x1xf32>
    %590 = vector.broadcast %589 : vector<8x1xf32> to vector<8x32xf32>
    %591 = arith.mulf %580, %590 : vector<8x32xf32>
    %592 = vector.broadcast %573 : vector<8x1xf32> to vector<8x32xf32>
    %593 = arith.addf %591, %592 : vector<8x32xf32>
    %cst_394 = arith.constant 0.000000e+00 : f32
    %594 = vector.broadcast %cst_394 : f32 to vector<8x32xf32>
    %595 = arith.cmpf ogt, %593, %594 : vector<8x32xf32>
    %596 = vector.broadcast %574 : f32 to vector<8x32xf32>
    %597 = arith.mulf %596, %593 : vector<8x32xf32>
    %598 = arith.select %595, %593, %597 : vector<8x32xi1>, vector<8x32xf32>
    %599 = arith.truncf %598 : vector<8x32xf32> to vector<8x32xbf16>
    %c0_395 = arith.constant 0 : index
    %c0_396 = arith.constant 0 : index
    %600 = vector.load %arg19[%c0_395, %c0_396] : memref<32x8xbf16, #tpu.memory_space<vmem>>, vector<32x8xbf16>
    %cst_397 = arith.constant dense<0.000000e+00> : vector<8x8xf32>
    %601 = tpu.matmul %599, %600, %cst_397 {dimension_numbers = #tpu.dot_dimension_numbers<[1], [0], [0], [1], [0, 0, 1, 1], [], []>} : vector<8x32xbf16>, vector<32x8xbf16>, vector<8x8xf32> -> vector<8x8xf32>
    %602 = arith.truncf %601 : vector<8x8xf32> to vector<8x8xbf16>
    %c0_398 = arith.constant 0 : index
    %c0_399 = arith.constant 0 : index
    %603 = vector.load %arg16[%c0_398, %c0_399] : memref<8x8xbf16, #tpu.memory_space<vmem>>, vector<8x8xbf16>
    %cst_400 = arith.constant dense<0.000000e+00> : vector<8x8xf32>
    %604 = tpu.matmul %603, %602, %cst_400 {dimension_numbers = #tpu.dot_dimension_numbers<[1], [0], [0], [1], [0, 0, 1, 1], [], []>} : vector<8x8xbf16>, vector<8x8xbf16>, vector<8x8xf32> -> vector<8x8xf32>
    %c0_401 = arith.constant 0 : index
    %c12 = arith.constant 12 : index
    %605 = vector.load %arg23[%c0_401, %c12] : memref<8x13xf32, #tpu.memory_space<vmem>>, vector<8x1xf32>
    %c0_402 = arith.constant 0 : index
    %c12_403 = arith.constant 12 : index
    %606 = vector.load %arg24[%c0_402, %c12_403] : memref<8x13xf32, #tpu.memory_space<vmem>>, vector<8x1xf32>
    %c12_404 = arith.constant 12 : index
    %607 = memref.load %arg25[%c12_404] : memref<13xf32, #tpu.memory_space<smem>>
    %cst_405 = arith.constant dense<0.000000e+00> : vector<8xf32>
    %608 = vector.multi_reduction <add>, %604, %cst_405 [1] : vector<8x8xf32> to vector<8xf32>
    %609 = vector.shape_cast %608 : vector<8xf32> to vector<8x1xf32>
    %cst_406 = arith.constant 1.250000e-01 : f32
    %610 = vector.broadcast %cst_406 : f32 to vector<8x1xf32>
    %611 = arith.mulf %609, %610 : vector<8x1xf32>
    %612 = vector.broadcast %611 : vector<8x1xf32> to vector<8x8xf32>
    %613 = arith.subf %604, %612 : vector<8x8xf32>
    %614 = arith.mulf %613, %613 : vector<8x8xf32>
    %cst_407 = arith.constant dense<0.000000e+00> : vector<8xf32>
    %615 = vector.multi_reduction <add>, %614, %cst_407 [1] : vector<8x8xf32> to vector<8xf32>
    %616 = vector.shape_cast %615 : vector<8xf32> to vector<8x1xf32>
    %cst_408 = arith.constant 1.250000e-01 : f32
    %617 = vector.broadcast %cst_408 : f32 to vector<8x1xf32>
    %618 = arith.mulf %616, %617 : vector<8x1xf32>
    %cst_409 = arith.constant 9.99999974E-6 : f32
    %619 = vector.broadcast %cst_409 : f32 to vector<8x1xf32>
    %620 = arith.addf %618, %619 : vector<8x1xf32>
    %621 = math.rsqrt %620 : vector<8x1xf32>
    %622 = arith.mulf %621, %605 : vector<8x1xf32>
    %623 = vector.broadcast %622 : vector<8x1xf32> to vector<8x8xf32>
    %624 = arith.mulf %613, %623 : vector<8x8xf32>
    %625 = vector.broadcast %606 : vector<8x1xf32> to vector<8x8xf32>
    %626 = arith.addf %624, %625 : vector<8x8xf32>
    %cst_410 = arith.constant 0.000000e+00 : f32
    %627 = vector.broadcast %cst_410 : f32 to vector<8x8xf32>
    %628 = arith.cmpf ogt, %626, %627 : vector<8x8xf32>
    %629 = vector.broadcast %607 : f32 to vector<8x8xf32>
    %630 = arith.mulf %629, %626 : vector<8x8xf32>
    %631 = arith.select %628, %626, %630 : vector<8x8xi1>, vector<8x8xf32>
    %632 = arith.truncf %631 : vector<8x8xf32> to vector<8x8xbf16>
    %c0_411 = arith.constant 0 : index
    %c0_412 = arith.constant 0 : index
    %633 = vector.load %arg28[%c0_411, %c0_412] : memref<8x8xbf16, #tpu.memory_space<vmem>>, vector<8x8xbf16>
    tpu.vector_store %arg28[%c0_411, %c0_412], %632 {strides = array<i32>} : memref<8x8xbf16, #tpu.memory_space<vmem>>, vector<8x8xbf16>,
    return
  }
}

module attributes {stable_mosaic.version = 11 : i64} {
  func.func @_stage4_kernel(%arg0: memref<8x8xbf16, #tpu.memory_space<vmem>>, %arg1: memref<1152x8xbf16, #tpu.memory_space<vmem>>, %arg2: memref<512x8xbf16, #tpu.memory_space<vmem>>, %arg3: memref<8x1152xbf16, #tpu.memory_space<vmem>>, %arg4: memref<8x512xbf16, #tpu.memory_space<vmem>>, %arg5: memref<9x8x8xbf16, #tpu.memory_space<vmem>>, %arg6: memref<9x8x8xbf16, #tpu.memory_space<vmem>>, %arg7: memref<9x8x8xbf16, #tpu.memory_space<vmem>>, %arg8: memref<4x8xbf16, #tpu.memory_space<vmem>>, %arg9: memref<9x8xbf16, #tpu.memory_space<vmem>>, %arg10: memref<8x3xf32, #tpu.memory_space<vmem>>, %arg11: memref<8x3xf32, #tpu.memory_space<vmem>>, %arg12: memref<4x1xf32, #tpu.memory_space<vmem>>, %arg13: memref<4x1xf32, #tpu.memory_space<vmem>>, %arg14: memref<4xf32, #tpu.memory_space<smem>>, %arg15: memref<4x8xbf16, #tpu.memory_space<vmem>>, %arg16: memref<8x14xbf16, #tpu.memory_space<vmem>>) attributes {dimension_semantics = [], scalar_prefetch = 0 : i64, scratch_operands = 1 : i64, tpu.core_type = #tpu.core_type<tc>} {
    %c0 = arith.constant 0 : index
    %c0_0 = arith.constant 0 : index
    %0 = vector.load %arg3[%c0, %c0_0] : memref<8x1152xbf16, #tpu.memory_space<vmem>>, vector<8x1152xbf16>
    %c0_1 = arith.constant 0 : index
    %c0_2 = arith.constant 0 : index
    %1 = vector.load %arg1[%c0_1, %c0_2] : memref<1152x8xbf16, #tpu.memory_space<vmem>>, vector<1152x8xbf16>
    %cst = arith.constant dense<0.000000e+00> : vector<8x8xf32>
    %2 = tpu.matmul %0, %1, %cst {dimension_numbers = #tpu.dot_dimension_numbers<[1], [0], [0], [1], [0, 0, 1, 1], [], []>} : vector<8x1152xbf16>, vector<1152x8xbf16>, vector<8x8xf32> -> vector<8x8xf32>
    %c0_3 = arith.constant 0 : index
    %c0_4 = arith.constant 0 : index
    %3 = vector.load %arg10[%c0_3, %c0_4] : memref<8x3xf32, #tpu.memory_space<vmem>>, vector<8x1xf32>
    %c0_5 = arith.constant 0 : index
    %c0_6 = arith.constant 0 : index
    %4 = vector.load %arg11[%c0_5, %c0_6] : memref<8x3xf32, #tpu.memory_space<vmem>>, vector<8x1xf32>
    %c0_7 = arith.constant 0 : index
    %5 = memref.load %arg14[%c0_7] : memref<4xf32, #tpu.memory_space<smem>>
    %cst_8 = arith.constant dense<0.000000e+00> : vector<8xf32>
    %6 = vector.multi_reduction <add>, %2, %cst_8 [1] : vector<8x8xf32> to vector<8xf32>
    %7 = vector.shape_cast %6 : vector<8xf32> to vector<8x1xf32>
    %cst_9 = arith.constant 1.250000e-01 : f32
    %8 = vector.broadcast %cst_9 : f32 to vector<8x1xf32>
    %9 = arith.mulf %7, %8 : vector<8x1xf32>
    %10 = vector.broadcast %9 : vector<8x1xf32> to vector<8x8xf32>
    %11 = arith.subf %2, %10 : vector<8x8xf32>
    %12 = arith.mulf %11, %11 : vector<8x8xf32>
    %cst_10 = arith.constant dense<0.000000e+00> : vector<8xf32>
    %13 = vector.multi_reduction <add>, %12, %cst_10 [1] : vector<8x8xf32> to vector<8xf32>
    %14 = vector.shape_cast %13 : vector<8xf32> to vector<8x1xf32>
    %cst_11 = arith.constant 1.250000e-01 : f32
    %15 = vector.broadcast %cst_11 : f32 to vector<8x1xf32>
    %16 = arith.mulf %14, %15 : vector<8x1xf32>
    %cst_12 = arith.constant 9.99999974E-6 : f32
    %17 = vector.broadcast %cst_12 : f32 to vector<8x1xf32>
    %18 = arith.addf %16, %17 : vector<8x1xf32>
    %19 = math.rsqrt %18 : vector<8x1xf32>
    %20 = arith.mulf %19, %3 : vector<8x1xf32>
    %21 = vector.broadcast %20 : vector<8x1xf32> to vector<8x8xf32>
    %22 = arith.mulf %11, %21 : vector<8x8xf32>
    %23 = vector.broadcast %4 : vector<8x1xf32> to vector<8x8xf32>
    %24 = arith.addf %22, %23 : vector<8x8xf32>
    %cst_13 = arith.constant 0.000000e+00 : f32
    %25 = vector.broadcast %cst_13 : f32 to vector<8x8xf32>
    %26 = arith.cmpf ogt, %24, %25 : vector<8x8xf32>
    %27 = vector.broadcast %5 : f32 to vector<8x8xf32>
    %28 = arith.mulf %27, %24 : vector<8x8xf32>
    %29 = arith.select %26, %24, %28 : vector<8x8xi1>, vector<8x8xf32>
    %30 = arith.truncf %29 : vector<8x8xf32> to vector<8x8xbf16>
    %c0_14 = arith.constant 0 : index
    %c0_15 = arith.constant 0 : index
    %31 = vector.load %arg4[%c0_14, %c0_15] : memref<8x512xbf16, #tpu.memory_space<vmem>>, vector<8x512xbf16>
    %c0_16 = arith.constant 0 : index
    %c0_17 = arith.constant 0 : index
    %32 = vector.load %arg2[%c0_16, %c0_17] : memref<512x8xbf16, #tpu.memory_space<vmem>>, vector<512x8xbf16>
    %cst_18 = arith.constant dense<0.000000e+00> : vector<8x8xf32>
    %33 = tpu.matmul %31, %32, %cst_18 {dimension_numbers = #tpu.dot_dimension_numbers<[1], [0], [0], [1], [0, 0, 1, 1], [], []>} : vector<8x512xbf16>, vector<512x8xbf16>, vector<8x8xf32> -> vector<8x8xf32>
    %c0_19 = arith.constant 0 : index
    %c1 = arith.constant 1 : index
    %34 = vector.load %arg10[%c0_19, %c1] : memref<8x3xf32, #tpu.memory_space<vmem>>, vector<8x1xf32>
    %c0_20 = arith.constant 0 : index
    %c1_21 = arith.constant 1 : index
    %35 = vector.load %arg11[%c0_20, %c1_21] : memref<8x3xf32, #tpu.memory_space<vmem>>, vector<8x1xf32>
    %c1_22 = arith.constant 1 : index
    %36 = memref.load %arg14[%c1_22] : memref<4xf32, #tpu.memory_space<smem>>
    %cst_23 = arith.constant dense<0.000000e+00> : vector<8xf32>
    %37 = vector.multi_reduction <add>, %33, %cst_23 [1] : vector<8x8xf32> to vector<8xf32>
    %38 = vector.shape_cast %37 : vector<8xf32> to vector<8x1xf32>
    %cst_24 = arith.constant 1.250000e-01 : f32
    %39 = vector.broadcast %cst_24 : f32 to vector<8x1xf32>
    %40 = arith.mulf %38, %39 : vector<8x1xf32>
    %41 = vector.broadcast %40 : vector<8x1xf32> to vector<8x8xf32>
    %42 = arith.subf %33, %41 : vector<8x8xf32>
    %43 = arith.mulf %42, %42 : vector<8x8xf32>
    %cst_25 = arith.constant dense<0.000000e+00> : vector<8xf32>
    %44 = vector.multi_reduction <add>, %43, %cst_25 [1] : vector<8x8xf32> to vector<8xf32>
    %45 = vector.shape_cast %44 : vector<8xf32> to vector<8x1xf32>
    %cst_26 = arith.constant 1.250000e-01 : f32
    %46 = vector.broadcast %cst_26 : f32 to vector<8x1xf32>
    %47 = arith.mulf %45, %46 : vector<8x1xf32>
    %cst_27 = arith.constant 9.99999974E-6 : f32
    %48 = vector.broadcast %cst_27 : f32 to vector<8x1xf32>
    %49 = arith.addf %47, %48 : vector<8x1xf32>
    %50 = math.rsqrt %49 : vector<8x1xf32>
    %51 = arith.mulf %50, %34 : vector<8x1xf32>
    %52 = vector.broadcast %51 : vector<8x1xf32> to vector<8x8xf32>
    %53 = arith.mulf %42, %52 : vector<8x8xf32>
    %54 = vector.broadcast %35 : vector<8x1xf32> to vector<8x8xf32>
    %55 = arith.addf %53, %54 : vector<8x8xf32>
    %cst_28 = arith.constant 0.000000e+00 : f32
    %56 = vector.broadcast %cst_28 : f32 to vector<8x8xf32>
    %57 = arith.cmpf ogt, %55, %56 : vector<8x8xf32>
    %58 = vector.broadcast %36 : f32 to vector<8x8xf32>
    %59 = arith.mulf %58, %55 : vector<8x8xf32>
    %60 = arith.select %57, %55, %59 : vector<8x8xi1>, vector<8x8xf32>
    %61 = arith.truncf %60 : vector<8x8xf32> to vector<8x8xbf16>
    %c0_29 = arith.constant 0 : index
    %c0_30 = arith.constant 0 : index
    %62 = vector.load %arg0[%c0_29, %c0_30] : memref<8x8xbf16, #tpu.memory_space<vmem>>, vector<8x8xbf16>
    %cst_31 = arith.constant 0.000000e+00 : f32
    %63 = vector.broadcast %cst_31 : f32 to vector<8x8xf32>
    %cst_32 = arith.constant 0.000000e+00 : bf16
    %64 = vector.broadcast %cst_32 : bf16 to vector<8x14xbf16>
    %c0_33 = arith.constant 0 : index
    %c0_34 = arith.constant 0 : index
    %65 = vector.load %arg16[%c0_33, %c0_34] : memref<8x14xbf16, #tpu.memory_space<vmem>>, vector<8x14xbf16>
    tpu.vector_store %arg16[%c0_33, %c0_34], %64 {strides = array<i32>} : memref<8x14xbf16, #tpu.memory_space<vmem>>, vector<8x14xbf16>,
    %c0_35 = arith.constant 0 : index
    %c3 = arith.constant 3 : index
    %66 = vector.load %arg16[%c0_35, %c3] : memref<8x14xbf16, #tpu.memory_space<vmem>>, vector<8x8xbf16>
    tpu.vector_store %arg16[%c0_35, %c3], %62 {strides = array<i32>} : memref<8x14xbf16, #tpu.memory_space<vmem>>, vector<8x8xbf16>,
    %c0_36 = arith.constant 0 : index
    %c0_37 = arith.constant 0 : index
    %67 = vector.load %arg16[%c0_36, %c0_37] : memref<8x14xbf16, #tpu.memory_space<vmem>>, vector<8x8xbf16>
    %c0_38 = arith.constant 0 : index
    %c0_39 = arith.constant 0 : index
    %68 = vector.load %arg9[%c0_38, %c0_39] : memref<9x8xbf16, #tpu.memory_space<vmem>>, vector<1x8xbf16>
    %69 = vector.broadcast %68 : vector<1x8xbf16> to vector<8x8xbf16>
    %70 = arith.mulf %67, %69 : vector<8x8xbf16>
    %c0_40 = arith.constant 0 : index
    %c0_41 = arith.constant 0 : index
    %c0_42 = arith.constant 0 : index
    %71 = vector.load %arg5[%c0_40, %c0_41, %c0_42] : memref<9x8x8xbf16, #tpu.memory_space<vmem>>, vector<1x8x8xbf16>
    %72 = vector.shape_cast %71 : vector<1x8x8xbf16> to vector<8x8xbf16>
    %cst_43 = arith.constant dense<0.000000e+00> : vector<8x8xf32>
    %73 = tpu.matmul %72, %70, %cst_43 {dimension_numbers = #tpu.dot_dimension_numbers<[1], [0], [0], [1], [0, 0, 1, 1], [], []>} : vector<8x8xbf16>, vector<8x8xbf16>, vector<8x8xf32> -> vector<8x8xf32>
    %74 = arith.addf %63, %73 : vector<8x8xf32>
    %c0_44 = arith.constant 0 : index
    %c1_45 = arith.constant 1 : index
    %75 = vector.load %arg16[%c0_44, %c1_45] : memref<8x14xbf16, #tpu.memory_space<vmem>>, vector<8x8xbf16>
    %c1_46 = arith.constant 1 : index
    %c0_47 = arith.constant 0 : index
    %76 = vector.load %arg9[%c1_46, %c0_47] : memref<9x8xbf16, #tpu.memory_space<vmem>>, vector<1x8xbf16>
    %77 = vector.broadcast %76 : vector<1x8xbf16> to vector<8x8xbf16>
    %78 = arith.mulf %75, %77 : vector<8x8xbf16>
    %c1_48 = arith.constant 1 : index
    %c0_49 = arith.constant 0 : index
    %c0_50 = arith.constant 0 : index
    %79 = vector.load %arg5[%c1_48, %c0_49, %c0_50] : memref<9x8x8xbf16, #tpu.memory_space<vmem>>, vector<1x8x8xbf16>
    %80 = vector.shape_cast %79 : vector<1x8x8xbf16> to vector<8x8xbf16>
    %cst_51 = arith.constant dense<0.000000e+00> : vector<8x8xf32>
    %81 = tpu.matmul %80, %78, %cst_51 {dimension_numbers = #tpu.dot_dimension_numbers<[1], [0], [0], [1], [0, 0, 1, 1], [], []>} : vector<8x8xbf16>, vector<8x8xbf16>, vector<8x8xf32> -> vector<8x8xf32>
    %82 = arith.addf %74, %81 : vector<8x8xf32>
    %c0_52 = arith.constant 0 : index
    %c2 = arith.constant 2 : index
    %83 = vector.load %arg16[%c0_52, %c2] : memref<8x14xbf16, #tpu.memory_space<vmem>>, vector<8x8xbf16>
    %c2_53 = arith.constant 2 : index
    %c0_54 = arith.constant 0 : index
    %84 = vector.load %arg9[%c2_53, %c0_54] : memref<9x8xbf16, #tpu.memory_space<vmem>>, vector<1x8xbf16>
    %85 = vector.broadcast %84 : vector<1x8xbf16> to vector<8x8xbf16>
    %86 = arith.mulf %83, %85 : vector<8x8xbf16>
    %c2_55 = arith.constant 2 : index
    %c0_56 = arith.constant 0 : index
    %c0_57 = arith.constant 0 : index
    %87 = vector.load %arg5[%c2_55, %c0_56, %c0_57] : memref<9x8x8xbf16, #tpu.memory_space<vmem>>, vector<1x8x8xbf16>
    %88 = vector.shape_cast %87 : vector<1x8x8xbf16> to vector<8x8xbf16>
    %cst_58 = arith.constant dense<0.000000e+00> : vector<8x8xf32>
    %89 = tpu.matmul %88, %86, %cst_58 {dimension_numbers = #tpu.dot_dimension_numbers<[1], [0], [0], [1], [0, 0, 1, 1], [], []>} : vector<8x8xbf16>, vector<8x8xbf16>, vector<8x8xf32> -> vector<8x8xf32>
    %90 = arith.addf %82, %89 : vector<8x8xf32>
    %c0_59 = arith.constant 0 : index
    %c2_60 = arith.constant 2 : index
    %91 = vector.load %arg16[%c0_59, %c2_60] : memref<8x14xbf16, #tpu.memory_space<vmem>>, vector<8x8xbf16>
    %c3_61 = arith.constant 3 : index
    %c0_62 = arith.constant 0 : index
    %92 = vector.load %arg9[%c3_61, %c0_62] : memref<9x8xbf16, #tpu.memory_space<vmem>>, vector<1x8xbf16>
    %93 = vector.broadcast %92 : vector<1x8xbf16> to vector<8x8xbf16>
    %94 = arith.mulf %91, %93 : vector<8x8xbf16>
    %c3_63 = arith.constant 3 : index
    %c0_64 = arith.constant 0 : index
    %c0_65 = arith.constant 0 : index
    %95 = vector.load %arg5[%c3_63, %c0_64, %c0_65] : memref<9x8x8xbf16, #tpu.memory_space<vmem>>, vector<1x8x8xbf16>
    %96 = vector.shape_cast %95 : vector<1x8x8xbf16> to vector<8x8xbf16>
    %cst_66 = arith.constant dense<0.000000e+00> : vector<8x8xf32>
    %97 = tpu.matmul %96, %94, %cst_66 {dimension_numbers = #tpu.dot_dimension_numbers<[1], [0], [0], [1], [0, 0, 1, 1], [], []>} : vector<8x8xbf16>, vector<8x8xbf16>, vector<8x8xf32> -> vector<8x8xf32>
    %98 = arith.addf %90, %97 : vector<8x8xf32>
    %c0_67 = arith.constant 0 : index
    %c3_68 = arith.constant 3 : index
    %99 = vector.load %arg16[%c0_67, %c3_68] : memref<8x14xbf16, #tpu.memory_space<vmem>>, vector<8x8xbf16>
    %c4 = arith.constant 4 : index
    %c0_69 = arith.constant 0 : index
    %100 = vector.load %arg9[%c4, %c0_69] : memref<9x8xbf16, #tpu.memory_space<vmem>>, vector<1x8xbf16>
    %101 = vector.broadcast %100 : vector<1x8xbf16> to vector<8x8xbf16>
    %102 = arith.mulf %99, %101 : vector<8x8xbf16>
    %c4_70 = arith.constant 4 : index
    %c0_71 = arith.constant 0 : index
    %c0_72 = arith.constant 0 : index
    %103 = vector.load %arg5[%c4_70, %c0_71, %c0_72] : memref<9x8x8xbf16, #tpu.memory_space<vmem>>, vector<1x8x8xbf16>
    %104 = vector.shape_cast %103 : vector<1x8x8xbf16> to vector<8x8xbf16>
    %cst_73 = arith.constant dense<0.000000e+00> : vector<8x8xf32>
    %105 = tpu.matmul %104, %102, %cst_73 {dimension_numbers = #tpu.dot_dimension_numbers<[1], [0], [0], [1], [0, 0, 1, 1], [], []>} : vector<8x8xbf16>, vector<8x8xbf16>, vector<8x8xf32> -> vector<8x8xf32>
    %106 = arith.addf %98, %105 : vector<8x8xf32>
    %c0_74 = arith.constant 0 : index
    %c4_75 = arith.constant 4 : index
    %107 = vector.load %arg16[%c0_74, %c4_75] : memref<8x14xbf16, #tpu.memory_space<vmem>>, vector<8x8xbf16>
    %c5 = arith.constant 5 : index
    %c0_76 = arith.constant 0 : index
    %108 = vector.load %arg9[%c5, %c0_76] : memref<9x8xbf16, #tpu.memory_space<vmem>>, vector<1x8xbf16>
    %109 = vector.broadcast %108 : vector<1x8xbf16> to vector<8x8xbf16>
    %110 = arith.mulf %107, %109 : vector<8x8xbf16>
    %c5_77 = arith.constant 5 : index
    %c0_78 = arith.constant 0 : index
    %c0_79 = arith.constant 0 : index
    %111 = vector.load %arg5[%c5_77, %c0_78, %c0_79] : memref<9x8x8xbf16, #tpu.memory_space<vmem>>, vector<1x8x8xbf16>
    %112 = vector.shape_cast %111 : vector<1x8x8xbf16> to vector<8x8xbf16>
    %cst_80 = arith.constant dense<0.000000e+00> : vector<8x8xf32>
    %113 = tpu.matmul %112, %110, %cst_80 {dimension_numbers = #tpu.dot_dimension_numbers<[1], [0], [0], [1], [0, 0, 1, 1], [], []>} : vector<8x8xbf16>, vector<8x8xbf16>, vector<8x8xf32> -> vector<8x8xf32>
    %114 = arith.addf %106, %113 : vector<8x8xf32>
    %c0_81 = arith.constant 0 : index
    %c4_82 = arith.constant 4 : index
    %115 = vector.load %arg16[%c0_81, %c4_82] : memref<8x14xbf16, #tpu.memory_space<vmem>>, vector<8x8xbf16>
    %c6 = arith.constant 6 : index
    %c0_83 = arith.constant 0 : index
    %116 = vector.load %arg9[%c6, %c0_83] : memref<9x8xbf16, #tpu.memory_space<vmem>>, vector<1x8xbf16>
    %117 = vector.broadcast %116 : vector<1x8xbf16> to vector<8x8xbf16>
    %118 = arith.mulf %115, %117 : vector<8x8xbf16>
    %c6_84 = arith.constant 6 : index
    %c0_85 = arith.constant 0 : index
    %c0_86 = arith.constant 0 : index
    %119 = vector.load %arg5[%c6_84, %c0_85, %c0_86] : memref<9x8x8xbf16, #tpu.memory_space<vmem>>, vector<1x8x8xbf16>
    %120 = vector.shape_cast %119 : vector<1x8x8xbf16> to vector<8x8xbf16>
    %cst_87 = arith.constant dense<0.000000e+00> : vector<8x8xf32>
    %121 = tpu.matmul %120, %118, %cst_87 {dimension_numbers = #tpu.dot_dimension_numbers<[1], [0], [0], [1], [0, 0, 1, 1], [], []>} : vector<8x8xbf16>, vector<8x8xbf16>, vector<8x8xf32> -> vector<8x8xf32>
    %122 = arith.addf %114, %121 : vector<8x8xf32>
    %c0_88 = arith.constant 0 : index
    %c5_89 = arith.constant 5 : index
    %123 = vector.load %arg16[%c0_88, %c5_89] : memref<8x14xbf16, #tpu.memory_space<vmem>>, vector<8x8xbf16>
    %c7 = arith.constant 7 : index
    %c0_90 = arith.constant 0 : index
    %124 = vector.load %arg9[%c7, %c0_90] : memref<9x8xbf16, #tpu.memory_space<vmem>>, vector<1x8xbf16>
    %125 = vector.broadcast %124 : vector<1x8xbf16> to vector<8x8xbf16>
    %126 = arith.mulf %123, %125 : vector<8x8xbf16>
    %c7_91 = arith.constant 7 : index
    %c0_92 = arith.constant 0 : index
    %c0_93 = arith.constant 0 : index
    %127 = vector.load %arg5[%c7_91, %c0_92, %c0_93] : memref<9x8x8xbf16, #tpu.memory_space<vmem>>, vector<1x8x8xbf16>
    %128 = vector.shape_cast %127 : vector<1x8x8xbf16> to vector<8x8xbf16>
    %cst_94 = arith.constant dense<0.000000e+00> : vector<8x8xf32>
    %129 = tpu.matmul %128, %126, %cst_94 {dimension_numbers = #tpu.dot_dimension_numbers<[1], [0], [0], [1], [0, 0, 1, 1], [], []>} : vector<8x8xbf16>, vector<8x8xbf16>, vector<8x8xf32> -> vector<8x8xf32>
    %130 = arith.addf %122, %129 : vector<8x8xf32>
    %c0_95 = arith.constant 0 : index
    %c6_96 = arith.constant 6 : index
    %131 = vector.load %arg16[%c0_95, %c6_96] : memref<8x14xbf16, #tpu.memory_space<vmem>>, vector<8x8xbf16>
    %c8 = arith.constant 8 : index
    %c0_97 = arith.constant 0 : index
    %132 = vector.load %arg9[%c8, %c0_97] : memref<9x8xbf16, #tpu.memory_space<vmem>>, vector<1x8xbf16>
    %133 = vector.broadcast %132 : vector<1x8xbf16> to vector<8x8xbf16>
    %134 = arith.mulf %131, %133 : vector<8x8xbf16>
    %c8_98 = arith.constant 8 : index
    %c0_99 = arith.constant 0 : index
    %c0_100 = arith.constant 0 : index
    %135 = vector.load %arg5[%c8_98, %c0_99, %c0_100] : memref<9x8x8xbf16, #tpu.memory_space<vmem>>, vector<1x8x8xbf16>
    %136 = vector.shape_cast %135 : vector<1x8x8xbf16> to vector<8x8xbf16>
    %cst_101 = arith.constant dense<0.000000e+00> : vector<8x8xf32>
    %137 = tpu.matmul %136, %134, %cst_101 {dimension_numbers = #tpu.dot_dimension_numbers<[1], [0], [0], [1], [0, 0, 1, 1], [], []>} : vector<8x8xbf16>, vector<8x8xbf16>, vector<8x8xf32> -> vector<8x8xf32>
    %138 = arith.addf %130, %137 : vector<8x8xf32>
    %cst_102 = arith.constant 0.000000e+00 : bf16
    %139 = vector.broadcast %cst_102 : bf16 to vector<8x14xbf16>
    %c0_103 = arith.constant 0 : index
    %c0_104 = arith.constant 0 : index
    %140 = vector.load %arg16[%c0_103, %c0_104] : memref<8x14xbf16, #tpu.memory_space<vmem>>, vector<8x14xbf16>
    tpu.vector_store %arg16[%c0_103, %c0_104], %139 {strides = array<i32>} : memref<8x14xbf16, #tpu.memory_space<vmem>>, vector<8x14xbf16>,
    %c0_105 = arith.constant 0 : index
    %c3_106 = arith.constant 3 : index
    %141 = vector.load %arg16[%c0_105, %c3_106] : memref<8x14xbf16, #tpu.memory_space<vmem>>, vector<8x8xbf16>
    tpu.vector_store %arg16[%c0_105, %c3_106], %30 {strides = array<i32>} : memref<8x14xbf16, #tpu.memory_space<vmem>>, vector<8x8xbf16>,
    %c0_107 = arith.constant 0 : index
    %c0_108 = arith.constant 0 : index
    %142 = vector.load %arg16[%c0_107, %c0_108] : memref<8x14xbf16, #tpu.memory_space<vmem>>, vector<8x8xbf16>
    %c0_109 = arith.constant 0 : index
    %c0_110 = arith.constant 0 : index
    %143 = vector.load %arg9[%c0_109, %c0_110] : memref<9x8xbf16, #tpu.memory_space<vmem>>, vector<1x8xbf16>
    %144 = vector.broadcast %143 : vector<1x8xbf16> to vector<8x8xbf16>
    %145 = arith.mulf %142, %144 : vector<8x8xbf16>
    %c0_111 = arith.constant 0 : index
    %c0_112 = arith.constant 0 : index
    %c0_113 = arith.constant 0 : index
    %146 = vector.load %arg6[%c0_111, %c0_112, %c0_113] : memref<9x8x8xbf16, #tpu.memory_space<vmem>>, vector<1x8x8xbf16>
    %147 = vector.shape_cast %146 : vector<1x8x8xbf16> to vector<8x8xbf16>
    %cst_114 = arith.constant dense<0.000000e+00> : vector<8x8xf32>
    %148 = tpu.matmul %147, %145, %cst_114 {dimension_numbers = #tpu.dot_dimension_numbers<[1], [0], [0], [1], [0, 0, 1, 1], [], []>} : vector<8x8xbf16>, vector<8x8xbf16>, vector<8x8xf32> -> vector<8x8xf32>
    %149 = arith.addf %138, %148 : vector<8x8xf32>
    %c0_115 = arith.constant 0 : index
    %c1_116 = arith.constant 1 : index
    %150 = vector.load %arg16[%c0_115, %c1_116] : memref<8x14xbf16, #tpu.memory_space<vmem>>, vector<8x8xbf16>
    %c1_117 = arith.constant 1 : index
    %c0_118 = arith.constant 0 : index
    %151 = vector.load %arg9[%c1_117, %c0_118] : memref<9x8xbf16, #tpu.memory_space<vmem>>, vector<1x8xbf16>
    %152 = vector.broadcast %151 : vector<1x8xbf16> to vector<8x8xbf16>
    %153 = arith.mulf %150, %152 : vector<8x8xbf16>
    %c1_119 = arith.constant 1 : index
    %c0_120 = arith.constant 0 : index
    %c0_121 = arith.constant 0 : index
    %154 = vector.load %arg6[%c1_119, %c0_120, %c0_121] : memref<9x8x8xbf16, #tpu.memory_space<vmem>>, vector<1x8x8xbf16>
    %155 = vector.shape_cast %154 : vector<1x8x8xbf16> to vector<8x8xbf16>
    %cst_122 = arith.constant dense<0.000000e+00> : vector<8x8xf32>
    %156 = tpu.matmul %155, %153, %cst_122 {dimension_numbers = #tpu.dot_dimension_numbers<[1], [0], [0], [1], [0, 0, 1, 1], [], []>} : vector<8x8xbf16>, vector<8x8xbf16>, vector<8x8xf32> -> vector<8x8xf32>
    %157 = arith.addf %149, %156 : vector<8x8xf32>
    %c0_123 = arith.constant 0 : index
    %c2_124 = arith.constant 2 : index
    %158 = vector.load %arg16[%c0_123, %c2_124] : memref<8x14xbf16, #tpu.memory_space<vmem>>, vector<8x8xbf16>
    %c2_125 = arith.constant 2 : index
    %c0_126 = arith.constant 0 : index
    %159 = vector.load %arg9[%c2_125, %c0_126] : memref<9x8xbf16, #tpu.memory_space<vmem>>, vector<1x8xbf16>
    %160 = vector.broadcast %159 : vector<1x8xbf16> to vector<8x8xbf16>
    %161 = arith.mulf %158, %160 : vector<8x8xbf16>
    %c2_127 = arith.constant 2 : index
    %c0_128 = arith.constant 0 : index
    %c0_129 = arith.constant 0 : index
    %162 = vector.load %arg6[%c2_127, %c0_128, %c0_129] : memref<9x8x8xbf16, #tpu.memory_space<vmem>>, vector<1x8x8xbf16>
    %163 = vector.shape_cast %162 : vector<1x8x8xbf16> to vector<8x8xbf16>
    %cst_130 = arith.constant dense<0.000000e+00> : vector<8x8xf32>
    %164 = tpu.matmul %163, %161, %cst_130 {dimension_numbers = #tpu.dot_dimension_numbers<[1], [0], [0], [1], [0, 0, 1, 1], [], []>} : vector<8x8xbf16>, vector<8x8xbf16>, vector<8x8xf32> -> vector<8x8xf32>
    %165 = arith.addf %157, %164 : vector<8x8xf32>
    %c0_131 = arith.constant 0 : index
    %c2_132 = arith.constant 2 : index
    %166 = vector.load %arg16[%c0_131, %c2_132] : memref<8x14xbf16, #tpu.memory_space<vmem>>, vector<8x8xbf16>
    %c3_133 = arith.constant 3 : index
    %c0_134 = arith.constant 0 : index
    %167 = vector.load %arg9[%c3_133, %c0_134] : memref<9x8xbf16, #tpu.memory_space<vmem>>, vector<1x8xbf16>
    %168 = vector.broadcast %167 : vector<1x8xbf16> to vector<8x8xbf16>
    %169 = arith.mulf %166, %168 : vector<8x8xbf16>
    %c3_135 = arith.constant 3 : index
    %c0_136 = arith.constant 0 : index
    %c0_137 = arith.constant 0 : index
    %170 = vector.load %arg6[%c3_135, %c0_136, %c0_137] : memref<9x8x8xbf16, #tpu.memory_space<vmem>>, vector<1x8x8xbf16>
    %171 = vector.shape_cast %170 : vector<1x8x8xbf16> to vector<8x8xbf16>
    %cst_138 = arith.constant dense<0.000000e+00> : vector<8x8xf32>
    %172 = tpu.matmul %171, %169, %cst_138 {dimension_numbers = #tpu.dot_dimension_numbers<[1], [0], [0], [1], [0, 0, 1, 1], [], []>} : vector<8x8xbf16>, vector<8x8xbf16>, vector<8x8xf32> -> vector<8x8xf32>
    %173 = arith.addf %165, %172 : vector<8x8xf32>
    %c0_139 = arith.constant 0 : index
    %c3_140 = arith.constant 3 : index
    %174 = vector.load %arg16[%c0_139, %c3_140] : memref<8x14xbf16, #tpu.memory_space<vmem>>, vector<8x8xbf16>
    %c4_141 = arith.constant 4 : index
    %c0_142 = arith.constant 0 : index
    %175 = vector.load %arg9[%c4_141, %c0_142] : memref<9x8xbf16, #tpu.memory_space<vmem>>, vector<1x8xbf16>
    %176 = vector.broadcast %175 : vector<1x8xbf16> to vector<8x8xbf16>
    %177 = arith.mulf %174, %176 : vector<8x8xbf16>
    %c4_143 = arith.constant 4 : index
    %c0_144 = arith.constant 0 : index
    %c0_145 = arith.constant 0 : index
    %178 = vector.load %arg6[%c4_143, %c0_144, %c0_145] : memref<9x8x8xbf16, #tpu.memory_space<vmem>>, vector<1x8x8xbf16>
    %179 = vector.shape_cast %178 : vector<1x8x8xbf16> to vector<8x8xbf16>
    %cst_146 = arith.constant dense<0.000000e+00> : vector<8x8xf32>
    %180 = tpu.matmul %179, %177, %cst_146 {dimension_numbers = #tpu.dot_dimension_numbers<[1], [0], [0], [1], [0, 0, 1, 1], [], []>} : vector<8x8xbf16>, vector<8x8xbf16>, vector<8x8xf32> -> vector<8x8xf32>
    %181 = arith.addf %173, %180 : vector<8x8xf32>
    %c0_147 = arith.constant 0 : index
    %c4_148 = arith.constant 4 : index
    %182 = vector.load %arg16[%c0_147, %c4_148] : memref<8x14xbf16, #tpu.memory_space<vmem>>, vector<8x8xbf16>
    %c5_149 = arith.constant 5 : index
    %c0_150 = arith.constant 0 : index
    %183 = vector.load %arg9[%c5_149, %c0_150] : memref<9x8xbf16, #tpu.memory_space<vmem>>, vector<1x8xbf16>
    %184 = vector.broadcast %183 : vector<1x8xbf16> to vector<8x8xbf16>
    %185 = arith.mulf %182, %184 : vector<8x8xbf16>
    %c5_151 = arith.constant 5 : index
    %c0_152 = arith.constant 0 : index
    %c0_153 = arith.constant 0 : index
    %186 = vector.load %arg6[%c5_151, %c0_152, %c0_153] : memref<9x8x8xbf16, #tpu.memory_space<vmem>>, vector<1x8x8xbf16>
    %187 = vector.shape_cast %186 : vector<1x8x8xbf16> to vector<8x8xbf16>
    %cst_154 = arith.constant dense<0.000000e+00> : vector<8x8xf32>
    %188 = tpu.matmul %187, %185, %cst_154 {dimension_numbers = #tpu.dot_dimension_numbers<[1], [0], [0], [1], [0, 0, 1, 1], [], []>} : vector<8x8xbf16>, vector<8x8xbf16>, vector<8x8xf32> -> vector<8x8xf32>
    %189 = arith.addf %181, %188 : vector<8x8xf32>
    %c0_155 = arith.constant 0 : index
    %c4_156 = arith.constant 4 : index
    %190 = vector.load %arg16[%c0_155, %c4_156] : memref<8x14xbf16, #tpu.memory_space<vmem>>, vector<8x8xbf16>
    %c6_157 = arith.constant 6 : index
    %c0_158 = arith.constant 0 : index
    %191 = vector.load %arg9[%c6_157, %c0_158] : memref<9x8xbf16, #tpu.memory_space<vmem>>, vector<1x8xbf16>
    %192 = vector.broadcast %191 : vector<1x8xbf16> to vector<8x8xbf16>
    %193 = arith.mulf %190, %192 : vector<8x8xbf16>
    %c6_159 = arith.constant 6 : index
    %c0_160 = arith.constant 0 : index
    %c0_161 = arith.constant 0 : index
    %194 = vector.load %arg6[%c6_159, %c0_160, %c0_161] : memref<9x8x8xbf16, #tpu.memory_space<vmem>>, vector<1x8x8xbf16>
    %195 = vector.shape_cast %194 : vector<1x8x8xbf16> to vector<8x8xbf16>
    %cst_162 = arith.constant dense<0.000000e+00> : vector<8x8xf32>
    %196 = tpu.matmul %195, %193, %cst_162 {dimension_numbers = #tpu.dot_dimension_numbers<[1], [0], [0], [1], [0, 0, 1, 1], [], []>} : vector<8x8xbf16>, vector<8x8xbf16>, vector<8x8xf32> -> vector<8x8xf32>
    %197 = arith.addf %189, %196 : vector<8x8xf32>
    %c0_163 = arith.constant 0 : index
    %c5_164 = arith.constant 5 : index
    %198 = vector.load %arg16[%c0_163, %c5_164] : memref<8x14xbf16, #tpu.memory_space<vmem>>, vector<8x8xbf16>
    %c7_165 = arith.constant 7 : index
    %c0_166 = arith.constant 0 : index
    %199 = vector.load %arg9[%c7_165, %c0_166] : memref<9x8xbf16, #tpu.memory_space<vmem>>, vector<1x8xbf16>
    %200 = vector.broadcast %199 : vector<1x8xbf16> to vector<8x8xbf16>
    %201 = arith.mulf %198, %200 : vector<8x8xbf16>
    %c7_167 = arith.constant 7 : index
    %c0_168 = arith.constant 0 : index
    %c0_169 = arith.constant 0 : index
    %202 = vector.load %arg6[%c7_167, %c0_168, %c0_169] : memref<9x8x8xbf16, #tpu.memory_space<vmem>>, vector<1x8x8xbf16>
    %203 = vector.shape_cast %202 : vector<1x8x8xbf16> to vector<8x8xbf16>
    %cst_170 = arith.constant dense<0.000000e+00> : vector<8x8xf32>
    %204 = tpu.matmul %203, %201, %cst_170 {dimension_numbers = #tpu.dot_dimension_numbers<[1], [0], [0], [1], [0, 0, 1, 1], [], []>} : vector<8x8xbf16>, vector<8x8xbf16>, vector<8x8xf32> -> vector<8x8xf32>
    %205 = arith.addf %197, %204 : vector<8x8xf32>
    %c0_171 = arith.constant 0 : index
    %c6_172 = arith.constant 6 : index
    %206 = vector.load %arg16[%c0_171, %c6_172] : memref<8x14xbf16, #tpu.memory_space<vmem>>, vector<8x8xbf16>
    %c8_173 = arith.constant 8 : index
    %c0_174 = arith.constant 0 : index
    %207 = vector.load %arg9[%c8_173, %c0_174] : memref<9x8xbf16, #tpu.memory_space<vmem>>, vector<1x8xbf16>
    %208 = vector.broadcast %207 : vector<1x8xbf16> to vector<8x8xbf16>
    %209 = arith.mulf %206, %208 : vector<8x8xbf16>
    %c8_175 = arith.constant 8 : index
    %c0_176 = arith.constant 0 : index
    %c0_177 = arith.constant 0 : index
    %210 = vector.load %arg6[%c8_175, %c0_176, %c0_177] : memref<9x8x8xbf16, #tpu.memory_space<vmem>>, vector<1x8x8xbf16>
    %211 = vector.shape_cast %210 : vector<1x8x8xbf16> to vector<8x8xbf16>
    %cst_178 = arith.constant dense<0.000000e+00> : vector<8x8xf32>
    %212 = tpu.matmul %211, %209, %cst_178 {dimension_numbers = #tpu.dot_dimension_numbers<[1], [0], [0], [1], [0, 0, 1, 1], [], []>} : vector<8x8xbf16>, vector<8x8xbf16>, vector<8x8xf32> -> vector<8x8xf32>
    %213 = arith.addf %205, %212 : vector<8x8xf32>
    %cst_179 = arith.constant 0.000000e+00 : bf16
    %214 = vector.broadcast %cst_179 : bf16 to vector<8x14xbf16>
    %c0_180 = arith.constant 0 : index
    %c0_181 = arith.constant 0 : index
    %215 = vector.load %arg16[%c0_180, %c0_181] : memref<8x14xbf16, #tpu.memory_space<vmem>>, vector<8x14xbf16>
    tpu.vector_store %arg16[%c0_180, %c0_181], %214 {strides = array<i32>} : memref<8x14xbf16, #tpu.memory_space<vmem>>, vector<8x14xbf16>,
    %c0_182 = arith.constant 0 : index
    %c3_183 = arith.constant 3 : index
    %216 = vector.load %arg16[%c0_182, %c3_183] : memref<8x14xbf16, #tpu.memory_space<vmem>>, vector<8x8xbf16>
    tpu.vector_store %arg16[%c0_182, %c3_183], %61 {strides = array<i32>} : memref<8x14xbf16, #tpu.memory_space<vmem>>, vector<8x8xbf16>,
    %c0_184 = arith.constant 0 : index
    %c0_185 = arith.constant 0 : index
    %217 = vector.load %arg16[%c0_184, %c0_185] : memref<8x14xbf16, #tpu.memory_space<vmem>>, vector<8x8xbf16>
    %c0_186 = arith.constant 0 : index
    %c0_187 = arith.constant 0 : index
    %218 = vector.load %arg9[%c0_186, %c0_187] : memref<9x8xbf16, #tpu.memory_space<vmem>>, vector<1x8xbf16>
    %219 = vector.broadcast %218 : vector<1x8xbf16> to vector<8x8xbf16>
    %220 = arith.mulf %217, %219 : vector<8x8xbf16>
    %c0_188 = arith.constant 0 : index
    %c0_189 = arith.constant 0 : index
    %c0_190 = arith.constant 0 : index
    %221 = vector.load %arg7[%c0_188, %c0_189, %c0_190] : memref<9x8x8xbf16, #tpu.memory_space<vmem>>, vector<1x8x8xbf16>
    %222 = vector.shape_cast %221 : vector<1x8x8xbf16> to vector<8x8xbf16>
    %cst_191 = arith.constant dense<0.000000e+00> : vector<8x8xf32>
    %223 = tpu.matmul %222, %220, %cst_191 {dimension_numbers = #tpu.dot_dimension_numbers<[1], [0], [0], [1], [0, 0, 1, 1], [], []>} : vector<8x8xbf16>, vector<8x8xbf16>, vector<8x8xf32> -> vector<8x8xf32>
    %224 = arith.addf %213, %223 : vector<8x8xf32>
    %c0_192 = arith.constant 0 : index
    %c1_193 = arith.constant 1 : index
    %225 = vector.load %arg16[%c0_192, %c1_193] : memref<8x14xbf16, #tpu.memory_space<vmem>>, vector<8x8xbf16>
    %c1_194 = arith.constant 1 : index
    %c0_195 = arith.constant 0 : index
    %226 = vector.load %arg9[%c1_194, %c0_195] : memref<9x8xbf16, #tpu.memory_space<vmem>>, vector<1x8xbf16>
    %227 = vector.broadcast %226 : vector<1x8xbf16> to vector<8x8xbf16>
    %228 = arith.mulf %225, %227 : vector<8x8xbf16>
    %c1_196 = arith.constant 1 : index
    %c0_197 = arith.constant 0 : index
    %c0_198 = arith.constant 0 : index
    %229 = vector.load %arg7[%c1_196, %c0_197, %c0_198] : memref<9x8x8xbf16, #tpu.memory_space<vmem>>, vector<1x8x8xbf16>
    %230 = vector.shape_cast %229 : vector<1x8x8xbf16> to vector<8x8xbf16>
    %cst_199 = arith.constant dense<0.000000e+00> : vector<8x8xf32>
    %231 = tpu.matmul %230, %228, %cst_199 {dimension_numbers = #tpu.dot_dimension_numbers<[1], [0], [0], [1], [0, 0, 1, 1], [], []>} : vector<8x8xbf16>, vector<8x8xbf16>, vector<8x8xf32> -> vector<8x8xf32>
    %232 = arith.addf %224, %231 : vector<8x8xf32>
    %c0_200 = arith.constant 0 : index
    %c2_201 = arith.constant 2 : index
    %233 = vector.load %arg16[%c0_200, %c2_201] : memref<8x14xbf16, #tpu.memory_space<vmem>>, vector<8x8xbf16>
    %c2_202 = arith.constant 2 : index
    %c0_203 = arith.constant 0 : index
    %234 = vector.load %arg9[%c2_202, %c0_203] : memref<9x8xbf16, #tpu.memory_space<vmem>>, vector<1x8xbf16>
    %235 = vector.broadcast %234 : vector<1x8xbf16> to vector<8x8xbf16>
    %236 = arith.mulf %233, %235 : vector<8x8xbf16>
    %c2_204 = arith.constant 2 : index
    %c0_205 = arith.constant 0 : index
    %c0_206 = arith.constant 0 : index
    %237 = vector.load %arg7[%c2_204, %c0_205, %c0_206] : memref<9x8x8xbf16, #tpu.memory_space<vmem>>, vector<1x8x8xbf16>
    %238 = vector.shape_cast %237 : vector<1x8x8xbf16> to vector<8x8xbf16>
    %cst_207 = arith.constant dense<0.000000e+00> : vector<8x8xf32>
    %239 = tpu.matmul %238, %236, %cst_207 {dimension_numbers = #tpu.dot_dimension_numbers<[1], [0], [0], [1], [0, 0, 1, 1], [], []>} : vector<8x8xbf16>, vector<8x8xbf16>, vector<8x8xf32> -> vector<8x8xf32>
    %240 = arith.addf %232, %239 : vector<8x8xf32>
    %c0_208 = arith.constant 0 : index
    %c2_209 = arith.constant 2 : index
    %241 = vector.load %arg16[%c0_208, %c2_209] : memref<8x14xbf16, #tpu.memory_space<vmem>>, vector<8x8xbf16>
    %c3_210 = arith.constant 3 : index
    %c0_211 = arith.constant 0 : index
    %242 = vector.load %arg9[%c3_210, %c0_211] : memref<9x8xbf16, #tpu.memory_space<vmem>>, vector<1x8xbf16>
    %243 = vector.broadcast %242 : vector<1x8xbf16> to vector<8x8xbf16>
    %244 = arith.mulf %241, %243 : vector<8x8xbf16>
    %c3_212 = arith.constant 3 : index
    %c0_213 = arith.constant 0 : index
    %c0_214 = arith.constant 0 : index
    %245 = vector.load %arg7[%c3_212, %c0_213, %c0_214] : memref<9x8x8xbf16, #tpu.memory_space<vmem>>, vector<1x8x8xbf16>
    %246 = vector.shape_cast %245 : vector<1x8x8xbf16> to vector<8x8xbf16>
    %cst_215 = arith.constant dense<0.000000e+00> : vector<8x8xf32>
    %247 = tpu.matmul %246, %244, %cst_215 {dimension_numbers = #tpu.dot_dimension_numbers<[1], [0], [0], [1], [0, 0, 1, 1], [], []>} : vector<8x8xbf16>, vector<8x8xbf16>, vector<8x8xf32> -> vector<8x8xf32>
    %248 = arith.addf %240, %247 : vector<8x8xf32>
    %c0_216 = arith.constant 0 : index
    %c3_217 = arith.constant 3 : index
    %249 = vector.load %arg16[%c0_216, %c3_217] : memref<8x14xbf16, #tpu.memory_space<vmem>>, vector<8x8xbf16>
    %c4_218 = arith.constant 4 : index
    %c0_219 = arith.constant 0 : index
    %250 = vector.load %arg9[%c4_218, %c0_219] : memref<9x8xbf16, #tpu.memory_space<vmem>>, vector<1x8xbf16>
    %251 = vector.broadcast %250 : vector<1x8xbf16> to vector<8x8xbf16>
    %252 = arith.mulf %249, %251 : vector<8x8xbf16>
    %c4_220 = arith.constant 4 : index
    %c0_221 = arith.constant 0 : index
    %c0_222 = arith.constant 0 : index
    %253 = vector.load %arg7[%c4_220, %c0_221, %c0_222] : memref<9x8x8xbf16, #tpu.memory_space<vmem>>, vector<1x8x8xbf16>
    %254 = vector.shape_cast %253 : vector<1x8x8xbf16> to vector<8x8xbf16>
    %cst_223 = arith.constant dense<0.000000e+00> : vector<8x8xf32>
    %255 = tpu.matmul %254, %252, %cst_223 {dimension_numbers = #tpu.dot_dimension_numbers<[1], [0], [0], [1], [0, 0, 1, 1], [], []>} : vector<8x8xbf16>, vector<8x8xbf16>, vector<8x8xf32> -> vector<8x8xf32>
    %256 = arith.addf %248, %255 : vector<8x8xf32>
    %c0_224 = arith.constant 0 : index
    %c4_225 = arith.constant 4 : index
    %257 = vector.load %arg16[%c0_224, %c4_225] : memref<8x14xbf16, #tpu.memory_space<vmem>>, vector<8x8xbf16>
    %c5_226 = arith.constant 5 : index
    %c0_227 = arith.constant 0 : index
    %258 = vector.load %arg9[%c5_226, %c0_227] : memref<9x8xbf16, #tpu.memory_space<vmem>>, vector<1x8xbf16>
    %259 = vector.broadcast %258 : vector<1x8xbf16> to vector<8x8xbf16>
    %260 = arith.mulf %257, %259 : vector<8x8xbf16>
    %c5_228 = arith.constant 5 : index
    %c0_229 = arith.constant 0 : index
    %c0_230 = arith.constant 0 : index
    %261 = vector.load %arg7[%c5_228, %c0_229, %c0_230] : memref<9x8x8xbf16, #tpu.memory_space<vmem>>, vector<1x8x8xbf16>
    %262 = vector.shape_cast %261 : vector<1x8x8xbf16> to vector<8x8xbf16>
    %cst_231 = arith.constant dense<0.000000e+00> : vector<8x8xf32>
    %263 = tpu.matmul %262, %260, %cst_231 {dimension_numbers = #tpu.dot_dimension_numbers<[1], [0], [0], [1], [0, 0, 1, 1], [], []>} : vector<8x8xbf16>, vector<8x8xbf16>, vector<8x8xf32> -> vector<8x8xf32>
    %264 = arith.addf %256, %263 : vector<8x8xf32>
    %c0_232 = arith.constant 0 : index
    %c4_233 = arith.constant 4 : index
    %265 = vector.load %arg16[%c0_232, %c4_233] : memref<8x14xbf16, #tpu.memory_space<vmem>>, vector<8x8xbf16>
    %c6_234 = arith.constant 6 : index
    %c0_235 = arith.constant 0 : index
    %266 = vector.load %arg9[%c6_234, %c0_235] : memref<9x8xbf16, #tpu.memory_space<vmem>>, vector<1x8xbf16>
    %267 = vector.broadcast %266 : vector<1x8xbf16> to vector<8x8xbf16>
    %268 = arith.mulf %265, %267 : vector<8x8xbf16>
    %c6_236 = arith.constant 6 : index
    %c0_237 = arith.constant 0 : index
    %c0_238 = arith.constant 0 : index
    %269 = vector.load %arg7[%c6_236, %c0_237, %c0_238] : memref<9x8x8xbf16, #tpu.memory_space<vmem>>, vector<1x8x8xbf16>
    %270 = vector.shape_cast %269 : vector<1x8x8xbf16> to vector<8x8xbf16>
    %cst_239 = arith.constant dense<0.000000e+00> : vector<8x8xf32>
    %271 = tpu.matmul %270, %268, %cst_239 {dimension_numbers = #tpu.dot_dimension_numbers<[1], [0], [0], [1], [0, 0, 1, 1], [], []>} : vector<8x8xbf16>, vector<8x8xbf16>, vector<8x8xf32> -> vector<8x8xf32>
    %272 = arith.addf %264, %271 : vector<8x8xf32>
    %c0_240 = arith.constant 0 : index
    %c5_241 = arith.constant 5 : index
    %273 = vector.load %arg16[%c0_240, %c5_241] : memref<8x14xbf16, #tpu.memory_space<vmem>>, vector<8x8xbf16>
    %c7_242 = arith.constant 7 : index
    %c0_243 = arith.constant 0 : index
    %274 = vector.load %arg9[%c7_242, %c0_243] : memref<9x8xbf16, #tpu.memory_space<vmem>>, vector<1x8xbf16>
    %275 = vector.broadcast %274 : vector<1x8xbf16> to vector<8x8xbf16>
    %276 = arith.mulf %273, %275 : vector<8x8xbf16>
    %c7_244 = arith.constant 7 : index
    %c0_245 = arith.constant 0 : index
    %c0_246 = arith.constant 0 : index
    %277 = vector.load %arg7[%c7_244, %c0_245, %c0_246] : memref<9x8x8xbf16, #tpu.memory_space<vmem>>, vector<1x8x8xbf16>
    %278 = vector.shape_cast %277 : vector<1x8x8xbf16> to vector<8x8xbf16>
    %cst_247 = arith.constant dense<0.000000e+00> : vector<8x8xf32>
    %279 = tpu.matmul %278, %276, %cst_247 {dimension_numbers = #tpu.dot_dimension_numbers<[1], [0], [0], [1], [0, 0, 1, 1], [], []>} : vector<8x8xbf16>, vector<8x8xbf16>, vector<8x8xf32> -> vector<8x8xf32>
    %280 = arith.addf %272, %279 : vector<8x8xf32>
    %c0_248 = arith.constant 0 : index
    %c6_249 = arith.constant 6 : index
    %281 = vector.load %arg16[%c0_248, %c6_249] : memref<8x14xbf16, #tpu.memory_space<vmem>>, vector<8x8xbf16>
    %c8_250 = arith.constant 8 : index
    %c0_251 = arith.constant 0 : index
    %282 = vector.load %arg9[%c8_250, %c0_251] : memref<9x8xbf16, #tpu.memory_space<vmem>>, vector<1x8xbf16>
    %283 = vector.broadcast %282 : vector<1x8xbf16> to vector<8x8xbf16>
    %284 = arith.mulf %281, %283 : vector<8x8xbf16>
    %c8_252 = arith.constant 8 : index
    %c0_253 = arith.constant 0 : index
    %c0_254 = arith.constant 0 : index
    %285 = vector.load %arg7[%c8_252, %c0_253, %c0_254] : memref<9x8x8xbf16, #tpu.memory_space<vmem>>, vector<1x8x8xbf16>
    %286 = vector.shape_cast %285 : vector<1x8x8xbf16> to vector<8x8xbf16>
    %cst_255 = arith.constant dense<0.000000e+00> : vector<8x8xf32>
    %287 = tpu.matmul %286, %284, %cst_255 {dimension_numbers = #tpu.dot_dimension_numbers<[1], [0], [0], [1], [0, 0, 1, 1], [], []>} : vector<8x8xbf16>, vector<8x8xbf16>, vector<8x8xf32> -> vector<8x8xf32>
    %288 = arith.addf %280, %287 : vector<8x8xf32>
    %c0_256 = arith.constant 0 : index
    %c2_257 = arith.constant 2 : index
    %289 = vector.load %arg10[%c0_256, %c2_257] : memref<8x3xf32, #tpu.memory_space<vmem>>, vector<8x1xf32>
    %c0_258 = arith.constant 0 : index
    %c2_259 = arith.constant 2 : index
    %290 = vector.load %arg11[%c0_258, %c2_259] : memref<8x3xf32, #tpu.memory_space<vmem>>, vector<8x1xf32>
    %c2_260 = arith.constant 2 : index
    %291 = memref.load %arg14[%c2_260] : memref<4xf32, #tpu.memory_space<smem>>
    %cst_261 = arith.constant dense<0.000000e+00> : vector<8xf32>
    %292 = vector.multi_reduction <add>, %288, %cst_261 [1] : vector<8x8xf32> to vector<8xf32>
    %293 = vector.shape_cast %292 : vector<8xf32> to vector<8x1xf32>
    %cst_262 = arith.constant 1.250000e-01 : f32
    %294 = vector.broadcast %cst_262 : f32 to vector<8x1xf32>
    %295 = arith.mulf %293, %294 : vector<8x1xf32>
    %296 = vector.broadcast %295 : vector<8x1xf32> to vector<8x8xf32>
    %297 = arith.subf %288, %296 : vector<8x8xf32>
    %298 = arith.mulf %297, %297 : vector<8x8xf32>
    %cst_263 = arith.constant dense<0.000000e+00> : vector<8xf32>
    %299 = vector.multi_reduction <add>, %298, %cst_263 [1] : vector<8x8xf32> to vector<8xf32>
    %300 = vector.shape_cast %299 : vector<8xf32> to vector<8x1xf32>
    %cst_264 = arith.constant 1.250000e-01 : f32
    %301 = vector.broadcast %cst_264 : f32 to vector<8x1xf32>
    %302 = arith.mulf %300, %301 : vector<8x1xf32>
    %cst_265 = arith.constant 9.99999974E-6 : f32
    %303 = vector.broadcast %cst_265 : f32 to vector<8x1xf32>
    %304 = arith.addf %302, %303 : vector<8x1xf32>
    %305 = math.rsqrt %304 : vector<8x1xf32>
    %306 = arith.mulf %305, %289 : vector<8x1xf32>
    %307 = vector.broadcast %306 : vector<8x1xf32> to vector<8x8xf32>
    %308 = arith.mulf %297, %307 : vector<8x8xf32>
    %309 = vector.broadcast %290 : vector<8x1xf32> to vector<8x8xf32>
    %310 = arith.addf %308, %309 : vector<8x8xf32>
    %cst_266 = arith.constant 0.000000e+00 : f32
    %311 = vector.broadcast %cst_266 : f32 to vector<8x8xf32>
    %312 = arith.cmpf ogt, %310, %311 : vector<8x8xf32>
    %313 = vector.broadcast %291 : f32 to vector<8x8xf32>
    %314 = arith.mulf %313, %310 : vector<8x8xf32>
    %315 = arith.select %312, %310, %314 : vector<8x8xi1>, vector<8x8xf32>
    %316 = arith.truncf %315 : vector<8x8xf32> to vector<8x8xbf16>
    %c0_267 = arith.constant 0 : index
    %c0_268 = arith.constant 0 : index
    %317 = vector.load %arg8[%c0_267, %c0_268] : memref<4x8xbf16, #tpu.memory_space<vmem>>, vector<4x8xbf16>
    %cst_269 = arith.constant dense<0.000000e+00> : vector<4x8xf32>
    %318 = tpu.matmul %317, %316, %cst_269 {dimension_numbers = #tpu.dot_dimension_numbers<[1], [0], [0], [1], [0, 0, 1, 1], [], []>} : vector<4x8xbf16>, vector<8x8xbf16>, vector<4x8xf32> -> vector<4x8xf32>
    %c0_270 = arith.constant 0 : index
    %c0_271 = arith.constant 0 : index
    %319 = vector.load %arg12[%c0_270, %c0_271] : memref<4x1xf32, #tpu.memory_space<vmem>>, vector<4x1xf32>
    %c0_272 = arith.constant 0 : index
    %c0_273 = arith.constant 0 : index
    %320 = vector.load %arg13[%c0_272, %c0_273] : memref<4x1xf32, #tpu.memory_space<vmem>>, vector<4x1xf32>
    %c3_274 = arith.constant 3 : index
    %321 = memref.load %arg14[%c3_274] : memref<4xf32, #tpu.memory_space<smem>>
    %cst_275 = arith.constant dense<0.000000e+00> : vector<4xf32>
    %322 = vector.multi_reduction <add>, %318, %cst_275 [1] : vector<4x8xf32> to vector<4xf32>
    %323 = vector.shape_cast %322 : vector<4xf32> to vector<4x1xf32>
    %cst_276 = arith.constant 1.250000e-01 : f32
    %324 = vector.broadcast %cst_276 : f32 to vector<4x1xf32>
    %325 = arith.mulf %323, %324 : vector<4x1xf32>
    %326 = vector.broadcast %325 : vector<4x1xf32> to vector<4x8xf32>
    %327 = arith.subf %318, %326 : vector<4x8xf32>
    %328 = arith.mulf %327, %327 : vector<4x8xf32>
    %cst_277 = arith.constant dense<0.000000e+00> : vector<4xf32>
    %329 = vector.multi_reduction <add>, %328, %cst_277 [1] : vector<4x8xf32> to vector<4xf32>
    %330 = vector.shape_cast %329 : vector<4xf32> to vector<4x1xf32>
    %cst_278 = arith.constant 1.250000e-01 : f32
    %331 = vector.broadcast %cst_278 : f32 to vector<4x1xf32>
    %332 = arith.mulf %330, %331 : vector<4x1xf32>
    %cst_279 = arith.constant 9.99999974E-6 : f32
    %333 = vector.broadcast %cst_279 : f32 to vector<4x1xf32>
    %334 = arith.addf %332, %333 : vector<4x1xf32>
    %335 = math.rsqrt %334 : vector<4x1xf32>
    %336 = arith.mulf %335, %319 : vector<4x1xf32>
    %337 = vector.broadcast %336 : vector<4x1xf32> to vector<4x8xf32>
    %338 = arith.mulf %327, %337 : vector<4x8xf32>
    %339 = vector.broadcast %320 : vector<4x1xf32> to vector<4x8xf32>
    %340 = arith.addf %338, %339 : vector<4x8xf32>
    %cst_280 = arith.constant 0.000000e+00 : f32
    %341 = vector.broadcast %cst_280 : f32 to vector<4x8xf32>
    %342 = arith.cmpf ogt, %340, %341 : vector<4x8xf32>
    %343 = vector.broadcast %321 : f32 to vector<4x8xf32>
    %344 = arith.mulf %343, %340 : vector<4x8xf32>
    %345 = arith.select %342, %340, %344 : vector<4x8xi1>, vector<4x8xf32>
    %346 = arith.truncf %345 : vector<4x8xf32> to vector<4x8xbf16>
    %c0_281 = arith.constant 0 : index
    %c0_282 = arith.constant 0 : index
    %347 = vector.load %arg15[%c0_281, %c0_282] : memref<4x8xbf16, #tpu.memory_space<vmem>>, vector<4x8xbf16>
    tpu.vector_store %arg15[%c0_281, %c0_282], %346 {strides = array<i32>} : memref<4x8xbf16, #tpu.memory_space<vmem>>, vector<4x8xbf16>,
    return
  }
}

</mosaic_0001>

<llo_original>
// kernel: encoder_block_forward.2
$region0: #{encoder_block_forward.2}
  #allocation0 [shape = 'u32[]', space=smem, size = 0x4, offset = 0x4, fixed_abs, tag = 'smem constant byte address 0x4 - core index']
  #allocation1 [shape = 'u32[144,128]{1,0:T(1,128)}', space=vmem, size = 0x12000, scoped, tag = 'internal scratch']
  #allocation2 [shape = 'bf16[8,546]{1,0:T(8,128)(2,1)}', space=vmem, size = 0x2800, scoped, tag = 'scratch operand']
  %s0 = inlined_call_operand.vmem [shape: bf16[4,512], index: 0, kind: input, shape index: {}]
  %s1 = inlined_call_operand.vmem [shape: bf16[8,4], index: 1, kind: input, shape index: {}]
  %s2 = inlined_call_operand.vmem [shape: bf16[9,8,8], index: 2, kind: input, shape index: {}]
  %s3 = inlined_call_operand.vmem [shape: bf16[8,8], index: 3, kind: input, shape index: {}]
  %s4 = inlined_call_operand.vmem [shape: bf16[8,8], index: 4, kind: input, shape index: {}]
  %s5 = inlined_call_operand.vmem [shape: bf16[8,8], index: 5, kind: input, shape index: {}]
  %s6 = inlined_call_operand.vmem [shape: bf16[8,8], index: 6, kind: input, shape index: {}]
  %s7 = inlined_call_operand.vmem [shape: bf16[9,8,8], index: 7, kind: input, shape index: {}]
  %s8 = inlined_call_operand.vmem [shape: bf16[8,8], index: 8, kind: input, shape index: {}]
  %s9 = inlined_call_operand.vmem [shape: bf16[8,8], index: 9, kind: input, shape index: {}]
  %s10 = inlined_call_operand.vmem [shape: bf16[8,8], index: 10, kind: input, shape index: {}]
  %s11 = inlined_call_operand.vmem [shape: bf16[8,8], index: 11, kind: input, shape index: {}]
  %s12 = inlined_call_operand.vmem [shape: bf16[9,8,8], index: 12, kind: input, shape index: {}]
  %s13 = inlined_call_operand.vmem [shape: bf16[8,8], index: 13, kind: input, shape index: {}]
  %s14 = inlined_call_operand.vmem [shape: bf16[8,8], index: 14, kind: input, shape index: {}]
  %s15 = inlined_call_operand.vmem [shape: bf16[8,8], index: 15, kind: input, shape index: {}]
  %s16 = inlined_call_operand.vmem [shape: bf16[8,8], index: 16, kind: input, shape index: {}]
  %s17 = inlined_call_operand.vmem [shape: bf16[512,128], index: 17, kind: input, shape index: {}]
  %s18 = inlined_call_operand.vmem [shape: bf16[128,32], index: 18, kind: input, shape index: {}]
  %s19 = inlined_call_operand.vmem [shape: bf16[32,8], index: 19, kind: input, shape index: {}]
  %s20 = inlined_call_operand.vmem [shape: bf16[9,512], index: 20, kind: input, shape index: {}]
  %s21 = inlined_call_operand.vmem [shape: bf16[9,128], index: 21, kind: input, shape index: {}]
  %s22 = inlined_call_operand.vmem [shape: bf16[9,32], index: 22, kind: input, shape index: {}]
  %s23 = inlined_call_operand.vmem [shape: f32[8,13], index: 23, kind: input, shape index: {}]
  %s24 = inlined_call_operand.vmem [shape: f32[8,13], index: 24, kind: input, shape index: {}]
  %s25 = inlined_call_operand.vmem [shape: f32[13], index: 25, kind: input, shape index: {}]
  %s26 = inlined_call_operand.vmem [shape: bf16[8,512], index: 26, kind: output, shape index: {0}]
  %s27 = inlined_call_operand.vmem [shape: bf16[8,128], index: 27, kind: output, shape index: {1}]
  %s28 = inlined_call_operand.vmem [shape: bf16[8,8], index: 28, kind: output, shape index: {2}]
  %29 = xla_tuple %s26, %s27, %s28
  %s30 = sld [smem:[#allocation0]]
  $region134: #{encoder_block_forward.2} parent=0
    _
  %s32 = ssub.s32 1, %s30
  %s33 = scalar_select 0, %s32, %s30
  $region1: #{encoder_block_forward.2} parent=0
    #allocation3 [shape = 'u8[512]{0}', space=smem, size = 0x200, scoped, tag = 'input window, operand 25, single buffered']
    #allocation4 [shape = 's32[1]{0}', space=sflag, size = 0x4, scoped, tag = 'scoped memory for encoder_block_forward.2']
    %34 = vsyncpa [#allocation4], 0
    // Predicated region
    $region2: #{encoder_block_forward.2} parent=1 // pred_check
      _
    $region3: #{encoder_block_forward.2} parent=1 // pred_check_branch
      %36 = sbr.rel (0) target = $region5
    $region4: #{encoder_block_forward.2} parent=1 // pred_region
      _
    $region5: #{encoder_block_forward.2} parent=1 // pred_fallthru
      _
    // Predicated region
    $region6: #{encoder_block_forward.2} parent=1 // pred_check
      _
    $region7: #{encoder_block_forward.2} parent=1 // pred_check_branch
      %38 = sbr.rel (0) target = $region9
    $region8: #{encoder_block_forward.2} parent=1 // pred_region
      _
    $region9: #{encoder_block_forward.2} parent=1 // pred_fallthru
      _
    // Predicated region
    $region10: #{encoder_block_forward.2} parent=1 // pred_check
      _
    $region11: #{encoder_block_forward.2} parent=1 // pred_check_branch
      %40 = sbr.rel (0) target = $region13
    $region12: #{encoder_block_forward.2} parent=1 // pred_region
      _
    $region13: #{encoder_block_forward.2} parent=1 // pred_fallthru
      _
    // Predicated region
    $region14: #{encoder_block_forward.2} parent=1 // pred_check
      _
    $region15: #{encoder_block_forward.2} parent=1 // pred_check_branch
      %42 = sbr.rel (0) target = $region17
    $region16: #{encoder_block_forward.2} parent=1 // pred_region
      _
    $region17: #{encoder_block_forward.2} parent=1 // pred_fallthru
      _
    // Predicated region
    $region18: #{encoder_block_forward.2} parent=1 // pred_check
      _
    $region19: #{encoder_block_forward.2} parent=1 // pred_check_branch
      %44 = sbr.rel (0) target = $region21
    $region20: #{encoder_block_forward.2} parent=1 // pred_region
      _
    $region21: #{encoder_block_forward.2} parent=1 // pred_fallthru
      _
    // Predicated region
    $region22: #{encoder_block_forward.2} parent=1 // pred_check
      _
    $region23: #{encoder_block_forward.2} parent=1 // pred_check_branch
      %46 = sbr.rel (0) target = $region25
    $region24: #{encoder_block_forward.2} parent=1 // pred_region
      _
    $region25: #{encoder_block_forward.2} parent=1 // pred_fallthru
      _
    // Predicated region
    $region26: #{encoder_block_forward.2} parent=1 // pred_check
      _
    $region27: #{encoder_block_forward.2} parent=1 // pred_check_branch
      %48 = sbr.rel (0) target = $region29
    $region28: #{encoder_block_forward.2} parent=1 // pred_region
      _
    $region29: #{encoder_block_forward.2} parent=1 // pred_fallthru
      _
    // Predicated region
    $region30: #{encoder_block_forward.2} parent=1 // pred_check
      _
    $region31: #{encoder_block_forward.2} parent=1 // pred_check_branch
      %50 = sbr.rel (0) target = $region33
    $region32: #{encoder_block_forward.2} parent=1 // pred_region
      _
    $region33: #{encoder_block_forward.2} parent=1 // pred_fallthru
      _
    // Predicated region
    $region34: #{encoder_block_forward.2} parent=1 // pred_check
      _
    $region35: #{encoder_block_forward.2} parent=1 // pred_check_branch
      %52 = sbr.rel (0) target = $region37
    $region36: #{encoder_block_forward.2} parent=1 // pred_region
      _
    $region37: #{encoder_block_forward.2} parent=1 // pred_fallthru
      _
    // Predicated region
    $region38: #{encoder_block_forward.2} parent=1 // pred_check
      _
    $region39: #{encoder_block_forward.2} parent=1 // pred_check_branch
      %54 = sbr.rel (0) target = $region41
    $region40: #{encoder_block_forward.2} parent=1 // pred_region
      _
    $region41: #{encoder_block_forward.2} parent=1 // pred_fallthru
      _
    // Predicated region
    $region42: #{encoder_block_forward.2} parent=1 // pred_check
      _
    $region43: #{encoder_block_forward.2} parent=1 // pred_check_branch
      %56 = sbr.rel (0) target = $region45
    $region44: #{encoder_block_forward.2} parent=1 // pred_region
      _
    $region45: #{encoder_block_forward.2} parent=1 // pred_fallthru
      _
    // Predicated region
    $region46: #{encoder_block_forward.2} parent=1 // pred_check
      _
    $region47: #{encoder_block_forward.2} parent=1 // pred_check_branch
      %58 = sbr.rel (0) target = $region49
    $region48: #{encoder_block_forward.2} parent=1 // pred_region
      _
    $region49: #{encoder_block_forward.2} parent=1 // pred_fallthru
      _
    // Predicated region
    $region50: #{encoder_block_forward.2} parent=1 // pred_check
      _
    $region51: #{encoder_block_forward.2} parent=1 // pred_check_branch
      %60 = sbr.rel (0) target = $region53
    $region52: #{encoder_block_forward.2} parent=1 // pred_region
      _
    $region53: #{encoder_block_forward.2} parent=1 // pred_fallthru
      _
    // Predicated region
    $region54: #{encoder_block_forward.2} parent=1 // pred_check
      _
    $region55: #{encoder_block_forward.2} parent=1 // pred_check_branch
      %62 = sbr.rel (0) target = $region57
    $region56: #{encoder_block_forward.2} parent=1 // pred_region
      _
    $region57: #{encoder_block_forward.2} parent=1 // pred_fallthru
      _
    // Predicated region
    $region58: #{encoder_block_forward.2} parent=1 // pred_check
      _
    $region59: #{encoder_block_forward.2} parent=1 // pred_check_branch
      %64 = sbr.rel (0) target = $region61
    $region60: #{encoder_block_forward.2} parent=1 // pred_region
      _
    $region61: #{encoder_block_forward.2} parent=1 // pred_fallthru
      _
    // Predicated region
    $region62: #{encoder_block_forward.2} parent=1 // pred_check
      _
    $region63: #{encoder_block_forward.2} parent=1 // pred_check_branch
      %66 = sbr.rel (0) target = $region65
    $region64: #{encoder_block_forward.2} parent=1 // pred_region
      _
    $region65: #{encoder_block_forward.2} parent=1 // pred_fallthru
      _
    // Predicated region
    $region66: #{encoder_block_forward.2} parent=1 // pred_check
      _
    $region67: #{encoder_block_forward.2} parent=1 // pred_check_branch
      %68 = sbr.rel (0) target = $region69
    $region68: #{encoder_block_forward.2} parent=1 // pred_region
      _
    $region69: #{encoder_block_forward.2} parent=1 // pred_fallthru
      _
    // Predicated region
    $region70: #{encoder_block_forward.2} parent=1 // pred_check
      _
    $region71: #{encoder_block_forward.2} parent=1 // pred_check_branch
      %70 = sbr.rel (0) target = $region73
    $region72: #{encoder_block_forward.2} parent=1 // pred_region
      _
    $region73: #{encoder_block_forward.2} parent=1 // pred_fallthru
      _
    // Predicated region
    $region74: #{encoder_block_forward.2} parent=1 // pred_check
      _
    $region75: #{encoder_block_forward.2} parent=1 // pred_check_branch
      %72 = sbr.rel (0) target = $region77
    $region76: #{encoder_block_forward.2} parent=1 // pred_region
      _
    $region77: #{encoder_block_forward.2} parent=1 // pred_fallthru
      _
    // Predicated region
    $region78: #{encoder_block_forward.2} parent=1 // pred_check
      _
    $region79: #{encoder_block_forward.2} parent=1 // pred_check_branch
      %74 = sbr.rel (0) target = $region81
    $region80: #{encoder_block_forward.2} parent=1 // pred_region
      _
    $region81: #{encoder_block_forward.2} parent=1 // pred_fallthru
      _
    // Predicated region
    $region82: #{encoder_block_forward.2} parent=1 // pred_check
      _
    $region83: #{encoder_block_forward.2} parent=1 // pred_check_branch
      %76 = sbr.rel (0) target = $region85
    $region84: #{encoder_block_forward.2} parent=1 // pred_region
      _
    $region85: #{encoder_block_forward.2} parent=1 // pred_fallthru
      _
    // Predicated region
    $region86: #{encoder_block_forward.2} parent=1 // pred_check
      _
    $region87: #{encoder_block_forward.2} parent=1 // pred_check_branch
      %78 = sbr.rel (0) target = $region89
    $region88: #{encoder_block_forward.2} parent=1 // pred_region
      _
    $region89: #{encoder_block_forward.2} parent=1 // pred_fallthru
      _
    // Predicated region
    $region90: #{encoder_block_forward.2} parent=1 // pred_check
      _
    $region91: #{encoder_block_forward.2} parent=1 // pred_check_branch
      %80 = sbr.rel (0) target = $region93
    $region92: #{encoder_block_forward.2} parent=1 // pred_region
      _
    $region93: #{encoder_block_forward.2} parent=1 // pred_fallthru
      _
    // Predicated region
    $region94: #{encoder_block_forward.2} parent=1 // pred_check
      _
    $region95: #{encoder_block_forward.2} parent=1 // pred_check_branch
      %82 = sbr.rel (0) target = $region97
    $region96: #{encoder_block_forward.2} parent=1 // pred_region
      _
    $region97: #{encoder_block_forward.2} parent=1 // pred_fallthru
      _
    // Predicated region
    $region98: #{encoder_block_forward.2} parent=1 // pred_check
      _
    $region99: #{encoder_block_forward.2} parent=1 // pred_check_branch
      %84 = sbr.rel (0) target = $region101
    $region100: #{encoder_block_forward.2} parent=1 // pred_region
      _
    $region101: #{encoder_block_forward.2} parent=1 // pred_fallthru
      _
    // Predicated region
    $region102: #{encoder_block_forward.2} parent=1 // pred_check
      _
    $region103: #{encoder_block_forward.2} parent=1 // pred_check_branch
      %86 = sbr.rel (0) target = $region105
    $region104: #{encoder_block_forward.2} parent=1 // pred_region
      %s88 = ssub.s32 16, 16
      %89 = vsyncadd [#allocation4], %s88
      %s91 = sshll.u32 %s25, 4
      %s92 = int_to_ptr.vmem [resolvable:$true] %s91
      %94 = dma.vmem_to_smem %s92, 16, [#allocation3], [#allocation4]
    $region105: #{encoder_block_forward.2} parent=1 // pred_fallthru
      _
    // Predicated region
    $region106: #{encoder_block_forward.2} parent=1 // pred_check
      _
    $region107: #{encoder_block_forward.2} parent=1 // pred_check_branch
      %96 = sbr.rel (0) target = $region109
    $region108: #{encoder_block_forward.2} parent=1 // pred_region
      %97 = dma.done [#allocation4], 16
    $region109: #{encoder_block_forward.2} parent=1 // pred_fallthru
      _
    %98 = sfence
    %v100 = vld [vmem:[%s0] sm:$0xff]
    %v101 = vld [vmem:[%s1] sm:$0xf]
    %v103 = vcombine.high %v100, %v100
    %v105 = vunpack.c.l.s4 1983009808
    %v106 = vunpack.c.0.s8 %v105
    %v107 = vlaneseq
    %v108 = vshrl.u32 %v107, 7
    %v109 = vsub.s32 %v106, %v108
    %v110 = vrot.slane %v100, %v109
    %v112 = vunpack.c.l.s4 1983009808
    %v113 = vunpack.c.0.s8 %v112
    %v114 = vlaneseq
    %v115 = vshrl.u32 %v114, 7
    %v116 = vsub.s32 %v113, %v115
    %v117 = vrot.slane %v103, %v116
    %v118 = vcombine.high %v110, %v110
    %v119 = vcombine.high %v117, %v117
    %vm120 = vcmask 31744
    %v122 = vsel %vm120, %v101, 0
    %vm124 = vcmask 1041408
    %v126 = vsel %vm124, %v110, 0
    %v129 = vsel %vm124, %v118, 0
    %v132 = vsel %vm124, %v117, 0
    %v135 = vsel %vm124, %v119, 0
    %137 = vmatprep.subr.bf16.mxu0 %v129
    %138 = vmatpush1.bf16.msra.mxu0 %v126
    %139 = vmatprep.subr.bf16.mxu0 0
    %140 = vmatpush1.bf16.msra.mxu0 0
    %141 = vmatprep.subr.bf16.mxu0 0
    %142 = vmatpush1.bf16.msra.mxu0 0
    %143 = vmatprep.subr.bf16.mxu0 0
    %144 = vmatpush1.bf16.msra.mxu0 0
    %145 = vmatprep.subr.bf16.mxu0 0
    %146 = vmatpush1.bf16.msra.mxu0 0
    %147 = vmatprep.subr.bf16.mxu0 0
    %148 = vmatpush1.bf16.msra.mxu0 0
    %149 = vmatprep.subr.bf16.mxu0 0
    %150 = vmatpush1.bf16.msra.mxu0 0
    %151 = vmatprep.subr.bf16.mxu0 0
    %152 = vmatpush1.bf16.msra.mxu0 0
    %153 = vmatprep.subr.bf16.mxu0 0
    %154 = vmatpush1.bf16.msra.mxu0 0
    %155 = vmatprep.subr.bf16.mxu0 0
    %156 = vmatpush1.bf16.msra.mxu0 0
    %157 = vmatprep.subr.bf16.mxu0 0
    %158 = vmatpush1.bf16.msra.mxu0 0
    %159 = vmatprep.subr.bf16.mxu0 0
    %160 = vmatpush1.bf16.msra.mxu0 0
    %161 = vmatprep.subr.bf16.mxu0 0
    %162 = vmatpush1.bf16.msra.mxu0 0
    %163 = vmatprep.subr.bf16.mxu0 0
    %164 = vmatpush1.bf16.msra.mxu0 0
    %165 = vmatprep.subr.bf16.mxu0 0
    %166 = vmatpush1.bf16.msra.mxu0 0
    %167 = vmatprep.subr.bf16.mxu0 0
    %168 = vmatpush1.bf16.msra.mxu0 0
    %169 = vmatprep.mubr.bf16.mxu0 0
    %170 = vmatmul.mubr.bf16.gmra.mrb[0].mxu0 %v122
    %v171 = vpop.f32.mrb[0].mxu0
    %v172 = vadd.f32 0.0, %v171
    %v173 = vpop.f32.mrb[0].mxu0
    %v174 = vadd.f32 0.0, %v173
    %v175 = vpop.f32.mrb[0].mxu0
    %v176 = vpop.f32.mrb[0].mxu0
    %177 = vdwg.mxu0
    %178 = vmatprep.subr.bf16.mxu0 %v135
    %179 = vmatpush1.bf16.msra.mxu0 %v132
    %180 = vmatprep.subr.bf16.mxu0 0
    %181 = vmatpush1.bf16.msra.mxu0 0
    %182 = vmatprep.subr.bf16.mxu0 0
    %183 = vmatpush1.bf16.msra.mxu0 0
    %184 = vmatprep.subr.bf16.mxu0 0
    %185 = vmatpush1.bf16.msra.mxu0 0
    %186 = vmatprep.subr.bf16.mxu0 0
    %187 = vmatpush1.bf16.msra.mxu0 0
    %188 = vmatprep.subr.bf16.mxu0 0
    %189 = vmatpush1.bf16.msra.mxu0 0
    %190 = vmatprep.subr.bf16.mxu0 0
    %191 = vmatpush1.bf16.msra.mxu0 0
    %192 = vmatprep.subr.bf16.mxu0 0
    %193 = vmatpush1.bf16.msra.mxu0 0
    %194 = vmatprep.subr.bf16.mxu0 0
    %195 = vmatpush1.bf16.msra.mxu0 0
    %196 = vmatprep.subr.bf16.mxu0 0
    %197 = vmatpush1.bf16.msra.mxu0 0
    %198 = vmatprep.subr.bf16.mxu0 0
    %199 = vmatpush1.bf16.msra.mxu0 0
    %200 = vmatprep.subr.bf16.mxu0 0
    %201 = vmatpush1.bf16.msra.mxu0 0
    %202 = vmatprep.subr.bf16.mxu0 0
    %203 = vmatpush1.bf16.msra.mxu0 0
    %204 = vmatprep.subr.bf16.mxu0 0
    %205 = vmatpush1.bf16.msra.mxu0 0
    %206 = vmatprep.subr.bf16.mxu0 0
    %207 = vmatpush1.bf16.msra.mxu0 0
    %208 = vmatprep.subr.bf16.mxu0 0
    %209 = vmatpush1.bf16.msra.mxu0 0
    %210 = vmatprep.mubr.bf16.mxu0 0
    %211 = vmatmul.mubr.bf16.gmra.mrb[0].mxu0 %v122
    %v212 = vpop.f32.mrb[0].mxu0
    %v213 = vadd.f32 0.0, %v212
    %v214 = vpop.f32.mrb[0].mxu0
    %v215 = vadd.f32 0.0, %v214
    %v216 = vpop.f32.mrb[0].mxu0
    %v217 = vpop.f32.mrb[0].mxu0
    %218 = vdwg.mxu0
    %v219 = vld [vmem:[%s23] sm:$0xff]
    %v220 = vld [vmem:[%s24] sm:$0xff]
    %s221 = sld [smem:[#allocation3]]
    %v222 = vadd.f32 %v172, %v174
    %v223 = vadd.f32 %v222, %v213
    %v224 = vadd.f32 %v223, %v215
    %225 = vadd.xlane.f32.xlu0 %v224
    %v226 = vpop.xlane.xlu0 %225
    %v227 = vmul.f32 %v226, 0.001953125
    %v228 = vsub.f32 %v172, %v227
    %v229 = vsub.f32 %v174, %v227
    %v230 = vsub.f32 %v213, %v227
    %v231 = vsub.f32 %v215, %v227
    %v232 = vmul.f32 %v228, %v228
    %v233 = vmul.f32 %v229, %v229
    %v234 = vmul.f32 %v230, %v230
    %v235 = vmul.f32 %v231, %v231
    %v236 = vadd.f32 %v232, %v233
    %v237 = vadd.f32 %v236, %v234
    %v238 = vadd.f32 %v237, %v235
    %239 = vadd.xlane.f32.xlu0 %v238
    %v240 = vpop.xlane.xlu0 %239
    %v241 = vmul.f32 %v240, 0.001953125
    %v242 = vadd.f32 %v241, 1e-05
    %v243 = vrsqrt.pop %v242
    %v244 = vmul.f32 %v243, %v219
    %246 = vset.pattern.permute.xlu0 0
    %247 = vperm.xlu0 %246, %v244
    %v248 = vpop.permute.xlu0 %247
    %v250 = vmul.f32 %v228, %v248
    %v251 = vmul.f32 %v229, %v248
    %v252 = vmul.f32 %v230, %v248
    %v253 = vmul.f32 %v231, %v248
    %255 = vset.pattern.permute.xlu0 0
    %256 = vperm.xlu0 %255, %v220
    %v257 = vpop.permute.xlu0 %256
    %v259 = vadd.f32 %v250, %v257
    %v260 = vadd.f32 %v251, %v257
    %v261 = vadd.f32 %v252, %v257
    %v262 = vadd.f32 %v253, %v257
    %vm263 = vcmp.gt.f32.partialorder %v259, 0.0
    %vm264 = vcmp.gt.f32.partialorder %v260, 0.0
    %vm265 = vcmp.gt.f32.partialorder %v261, 0.0
    %vm266 = vcmp.gt.f32.partialorder %v262, 0.0
    %v267 = vstv %s221
    %v268 = vmul.f32 %v267, %v259
    %v269 = vmul.f32 %v267, %v260
    %v270 = vmul.f32 %v267, %v261
    %v271 = vmul.f32 %v267, %v262
    %v272 = vsel %vm263, %v259, %v268
    %v273 = vsel %vm264, %v260, %v269
    %v274 = vsel %vm265, %v261, %v270
    %v275 = vsel %vm266, %v262, %v271
    %v276 = vpack.c.bf16 %v272, %v272
    %v277 = vpack.c.bf16 %v273, %v273
    %v278 = vpack.c.bf16 %v274, %v274
    %v279 = vpack.c.bf16 %v275, %v275
    %280 = vst [vmem:[#allocation2] sm:$0xff] 0
    %281 = vst [vmem:[#allocation2 + $0x8] sm:$0xff] 0
    %vm282 = vcmask 273408
    %283 = vst.msk [vmem:[#allocation2 + $0x10] sm:$0xf] %vm282, 0
    %v288 = vunpack.c.l.b16 %v276
    %v289 = vunpack.c.l.b16 %v277
    %v290 = vunpack.c.l.b16 %v278
    %v291 = vunpack.c.l.b16 %v279
    %v292 = vpack.c.b16 %v289, %v288
    %v293 = vpack.c.b16 %v291, %v290
    %294 = vrot.lane.b32.xlu0 %v292, 17
    %v295 = vpop.permute.xlu0 %294
    %296 = vrot.lane.b32.xlu0 %v293, 17
    %v297 = vpop.permute.xlu0 %296
    %v298 = vrot.slane %v295, 4
    %v299 = vrot.slane %v297, 4
    %vm300 = vcmask 138240
    %v301 = vsel %vm300, %v298, %v295
    %vm302 = vcmask 1043456
    %v303 = vsel %vm302, %v298, %v299
    %v304 = vsel %vm300, %v303, %v297
    %vm308 = vcmask 1043592
    %vm309 = vcmask 1047556
    %vm310 = vmor %vm309, %vm308
    %311 = vst.msk [vmem:[#allocation2] sm:$0xff] %vm310, %v301
    %312 = vst [vmem:[#allocation2 + $0x8] sm:$0xff] %v304
    %vm313 = vcmask 134144
    %314 = vst.msk [vmem:[#allocation2 + $0x10] sm:$0xf] %vm313, %v299
    %v315 = vld [vmem:[#allocation2] sm:$0xff]
    %v316 = vld [vmem:[#allocation2 + $0x8] sm:$0xff]
    %v317 = vld [vmem:[%s20] sm:$0x11]
    %v318 = vld [vmem:[%s20 + $0x8] sm:$0x11]
    %v321 = vunpack.c.l.b16 %v317
    %v322 = vunpack.c.h.b16 %v317
    %v323 = vunpack.c.l.b16 %v318
    %v324 = vunpack.c.h.b16 %v318
    %v325 = vpack.c.b16 %v321, %v321
    %v326 = vpack.c.b16 %v322, %v322
    %v327 = vpack.c.b16 %v323, %v323
    %v328 = vpack.c.b16 %v324, %v324
    %v330 = vpack.i.b16 %v325, %v325
    %v332 = vlaneseq
    %v333 = vshrl.u32 %v332, 7
    %v334 = vsub.s32 0, %v333
    %v335 = vrot.slane %v330, %v334
    %v337 = vpack.i.b16 %v326, %v326
    %v339 = vlaneseq
    %v340 = vshrl.u32 %v339, 7
    %v341 = vsub.s32 0, %v340
    %v342 = vrot.slane %v337, %v341
    %v344 = vpack.i.b16 %v327, %v327
    %v346 = vlaneseq
    %v347 = vshrl.u32 %v346, 7
    %v348 = vsub.s32 0, %v347
    %v349 = vrot.slane %v344, %v348
    %v351 = vpack.i.b16 %v328, %v328
    %v353 = vlaneseq
    %v354 = vshrl.u32 %v353, 7
    %v355 = vsub.s32 0, %v354
    %v356 = vrot.slane %v351, %v355
    %v361 = vunpack.c.l.b16 %v335
    %v362 = vunpack.c.l.b16 %v342
    %v363 = vunpack.c.l.b16 %v349
    %v364 = vunpack.c.l.b16 %v356
    %v365 = vpack.c.b16 %v362, %v361
    %v366 = vpack.c.b16 %v364, %v363
    %v369 = vmul.bf16 %v315, %v365
    %v370 = vmul.bf16 %v316, %v366
    %v371 = vld [vmem:[%s2] sm:$0xf]
    %v372 = vld [vmem:[#allocation2 + $0x10] sm:$0xf]
    %v373 = vshrl.u32 %v325, 16
    %v374 = vpack.i.b16 %v373, %v373
    %v376 = vlaneseq
    %v377 = vshrl.u32 %v376, 7
    %v378 = vsub.s32 0, %v377
    %v379 = vrot.slane %v374, %v378
    %v380 = vshrl.u32 %v326, 16
    %v381 = vpack.i.b16 %v380, %v380
    %v383 = vlaneseq
    %v384 = vshrl.u32 %v383, 7
    %v385 = vsub.s32 0, %v384
    %v386 = vrot.slane %v381, %v385
    %v387 = vshrl.u32 %v327, 16
    %v388 = vpack.i.b16 %v387, %v387
    %v390 = vlaneseq
    %v391 = vshrl.u32 %v390, 7
    %v392 = vsub.s32 0, %v391
    %v393 = vrot.slane %v388, %v392
    %v394 = vshrl.u32 %v328, 16
    %v395 = vpack.i.b16 %v394, %v394
    %v397 = vlaneseq
    %v398 = vshrl.u32 %v397, 7
    %v399 = vsub.s32 0, %v398
    %v400 = vrot.slane %v395, %v399
    %v405 = vunpack.c.l.b16 %v379
    %v406 = vunpack.c.l.b16 %v386
    %v407 = vunpack.c.l.b16 %v393
    %v408 = vunpack.c.l.b16 %v400
    %v409 = vpack.c.b16 %v406, %v405
    %v410 = vpack.c.b16 %v408, %v407
    %411 = vrot.lane.b32.xlu0 %v409, 1
    %v412 = vpop.permute.xlu0 %411
    %413 = vrot.lane.b32.xlu0 %v410, 1
    %v414 = vpop.permute.xlu0 %413
    %v415 = vrot.slane %v412, 4
    %v416 = vrot.slane %v414, 4
    %vm417 = vcmask 7168
    %v418 = vsel %vm417, %v415, %v412
    %v419 = vsel %vm302, %v415, %v416
    %v420 = vsel %vm417, %v419, %v414
    %v424 = vmul.bf16 %v315, %v418
    %v425 = vmul.bf16 %v316, %v420
    %v426 = vmul.bf16 %v372, %v416
    %s427 = scalar_lea.vmem %s2, 4
    %v428 = vld [vmem:[%s427] sm:$0xf]
    %v432 = vunpack.c.l.b16 %v424
    %v433 = vunpack.c.h.b16 %v424
    %v434 = vunpack.c.l.b16 %v425
    %v435 = vunpack.c.h.b16 %v425
    %v436 = vunpack.c.l.b16 %v426
    %v437 = vpack.c.b16 %v432, %v432
    %v438 = vpack.c.b16 %v433, %v433
    %v439 = vpack.c.b16 %v434, %v434
    %v440 = vpack.c.b16 %v435, %v435
    %v441 = vpack.c.b16 %v436, %v436
    %442 = vrot.lane.b32.xlu0 %v437, 127
    %v443 = vpop.permute.xlu0 %442
    %444 = vrot.lane.b32.xlu0 %v438, 127
    %v445 = vpop.permute.xlu0 %444
    %446 = vrot.lane.b32.xlu0 %v439, 127
    %v447 = vpop.permute.xlu0 %446
    %448 = vrot.lane.b32.xlu0 %v440, 127
    %v449 = vpop.permute.xlu0 %448
    %450 = vrot.lane.b32.xlu0 %v441, 127
    %v451 = vpop.permute.xlu0 %450
    %vm452 = vcmask 1039360
    %v453 = vsel %vm452, %v443, %v445
    %v454 = vsel %vm452, %v445, %v447
    %v455 = vsel %vm452, %v447, %v449
    %v456 = vsel %vm452, %v449, %v451
    %vm457 = vcmask 64512
    %v459 = vsel %vm457, %v428, 0
    %vm461 = vcmask 1043456
    %v463 = vsel %vm461, %v453, 0
    %v466 = vsel %vm461, %v454, 0
    %v469 = vsel %vm461, %v455, 0
    %v472 = vsel %vm461, %v456, 0
    %474 = vmatprep.subr.bf16.mxu0 %v466
    %475 = vmatpush1.bf16.msra.mxu0 %v463
    %476 = vmatprep.subr.bf16.mxu0 0
    %477 = vmatpush1.bf16.msra.mxu0 0
    %478 = vmatprep.subr.bf16.mxu0 0
    %479 = vmatpush1.bf16.msra.mxu0 0
    %480 = vmatprep.subr.bf16.mxu0 0
    %481 = vmatpush1.bf16.msra.mxu0 0
    %482 = vmatprep.subr.bf16.mxu0 0
    %483 = vmatpush1.bf16.msra.mxu0 0
    %484 = vmatprep.subr.bf16.mxu0 0
    %485 = vmatpush1.bf16.msra.mxu0 0
    %486 = vmatprep.subr.bf16.mxu0 0
    %487 = vmatpush1.bf16.msra.mxu0 0
    %488 = vmatprep.subr.bf16.mxu0 0
    %489 = vmatpush1.bf16.msra.mxu0 0
    %490 = vmatprep.subr.bf16.mxu0 0
    %491 = vmatpush1.bf16.msra.mxu0 0
    %492 = vmatprep.subr.bf16.mxu0 0
    %493 = vmatpush1.bf16.msra.mxu0 0
    %494 = vmatprep.subr.bf16.mxu0 0
    %495 = vmatpush1.bf16.msra.mxu0 0
    %496 = vmatprep.subr.bf16.mxu0 0
    %497 = vmatpush1.bf16.msra.mxu0 0
    %498 = vmatprep.subr.bf16.mxu0 0
    %499 = vmatpush1.bf16.msra.mxu0 0
    %500 = vmatprep.subr.bf16.mxu0 0
    %501 = vmatpush1.bf16.msra.mxu0 0
    %502 = vmatprep.subr.bf16.mxu0 0
    %503 = vmatpush1.bf16.msra.mxu0 0
    %504 = vmatprep.subr.bf16.mxu0 0
    %505 = vmatpush1.bf16.msra.mxu0 0
    %506 = vmatprep.mubr.bf16.mxu0 0
    %507 = vmatmul.mubr.bf16.gmra.mrb[0].mxu0 %v459
    %v508 = vpop.f32.mrb[0].mxu0
    %v509 = vadd.f32 0.0, %v508
    %v510 = vpop.f32.mrb[0].mxu0
    %v511 = vadd.f32 0.0, %v510
    %v512 = vpop.f32.mrb[0].mxu0
    %v513 = vpop.f32.mrb[0].mxu0
    %514 = vdwg.mxu0
    %515 = vmatprep.subr.bf16.mxu0 %v472
    %516 = vmatpush1.bf16.msra.mxu0 %v469
    %517 = vmatprep.subr.bf16.mxu0 0
    %518 = vmatpush1.bf16.msra.mxu0 0
    %519 = vmatprep.subr.bf16.mxu0 0
    %520 = vmatpush1.bf16.msra.mxu0 0
    %521 = vmatprep.subr.bf16.mxu0 0
    %522 = vmatpush1.bf16.msra.mxu0 0
    %523 = vmatprep.subr.bf16.mxu0 0
    %524 = vmatpush1.bf16.msra.mxu0 0
    %525 = vmatprep.subr.bf16.mxu0 0
    %526 = vmatpush1.bf16.msra.mxu0 0
    %527 = vmatprep.subr.bf16.mxu0 0
    %528 = vmatpush1.bf16.msra.mxu0 0
    %529 = vmatprep.subr.bf16.mxu0 0
    %530 = vmatpush1.bf16.msra.mxu0 0
    %531 = vmatprep.subr.bf16.mxu0 0
    %532 = vmatpush1.bf16.msra.mxu0 0
    %533 = vmatprep.subr.bf16.mxu0 0
    %534 = vmatpush1.bf16.msra.mxu0 0
    %535 = vmatprep.subr.bf16.mxu0 0
    %536 = vmatpush1.bf16.msra.mxu0 0
    %537 = vmatprep.subr.bf16.mxu0 0
    %538 = vmatpush1.bf16.msra.mxu0 0
    %539 = vmatprep.subr.bf16.mxu0 0
    %540 = vmatpush1.bf16.msra.mxu0 0
    %541 = vmatprep.subr.bf16.mxu0 0
    %542 = vmatpush1.bf16.msra.mxu0 0
    %543 = vmatprep.subr.bf16.mxu0 0
    %544 = vmatpush1.bf16.msra.mxu0 0
    %545 = vmatprep.subr.bf16.mxu0 0
    %546 = vmatpush1.bf16.msra.mxu0 0
    %547 = vmatprep.mubr.bf16.mxu0 0
    %548 = vmatmul.mubr.bf16.gmra.mrb[0].mxu0 %v459
    %v549 = vpop.f32.mrb[0].mxu0
    %v550 = vadd.f32 0.0, %v549
    %v551 = vpop.f32.mrb[0].mxu0
    %v552 = vadd.f32 0.0, %v551
    %v553 = vpop.f32.mrb[0].mxu0
    %v554 = vpop.f32.mrb[0].mxu0
    %555 = vdwg.mxu0
    %v558 = vunpack.c.l.b16 %v369
    %v559 = vunpack.c.h.b16 %v369
    %v560 = vunpack.c.l.b16 %v370
    %v561 = vunpack.c.h.b16 %v370
    %v562 = vpack.c.b16 %v558, %v558
    %v563 = vpack.c.b16 %v559, %v559
    %v564 = vpack.c.b16 %v560, %v560
    %v565 = vpack.c.b16 %v561, %v561
    %v567 = vsel %vm457, %v371, 0
    %v570 = vsel %vm461, %v562, 0
    %v573 = vsel %vm461, %v563, 0
    %v576 = vsel %vm461, %v564, 0
    %v579 = vsel %vm461, %v565, 0
    %581 = vmatprep.subr.bf16.mxu0 %v573
    %582 = vmatpush1.bf16.msra.mxu0 %v570
    %583 = vmatprep.subr.bf16.mxu0 0
    %584 = vmatpush1.bf16.msra.mxu0 0
    %585 = vmatprep.subr.bf16.mxu0 0
    %586 = vmatpush1.bf16.msra.mxu0 0
    %587 = vmatprep.subr.bf16.mxu0 0
    %588 = vmatpush1.bf16.msra.mxu0 0
    %589 = vmatprep.subr.bf16.mxu0 0
    %590 = vmatpush1.bf16.msra.mxu0 0
    %591 = vmatprep.subr.bf16.mxu0 0
    %592 = vmatpush1.bf16.msra.mxu0 0
    %593 = vmatprep.subr.bf16.mxu0 0
    %594 = vmatpush1.bf16.msra.mxu0 0
    %595 = vmatprep.subr.bf16.mxu0 0
    %596 = vmatpush1.bf16.msra.mxu0 0
    %597 = vmatprep.subr.bf16.mxu0 0
    %598 = vmatpush1.bf16.msra.mxu0 0
    %599 = vmatprep.subr.bf16.mxu0 0
    %600 = vmatpush1.bf16.msra.mxu0 0
    %601 = vmatprep.subr.bf16.mxu0 0
    %602 = vmatpush1.bf16.msra.mxu0 0
    %603 = vmatprep.subr.bf16.mxu0 0
    %604 = vmatpush1.bf16.msra.mxu0 0
    %605 = vmatprep.subr.bf16.mxu0 0
    %606 = vmatpush1.bf16.msra.mxu0 0
    %607 = vmatprep.subr.bf16.mxu0 0
    %608 = vmatpush1.bf16.msra.mxu0 0
    %609 = vmatprep.subr.bf16.mxu0 0
    %610 = vmatpush1.bf16.msra.mxu0 0
    %611 = vmatprep.subr.bf16.mxu0 0
    %612 = vmatpush1.bf16.msra.mxu0 0
    %613 = vmatprep.mubr.bf16.mxu0 0
    %614 = vmatmul.mubr.bf16.gmra.mrb[0].mxu0 %v567
    %v615 = vpop.f32.mrb[0].mxu0
    %v616 = vadd.f32 %v509, %v615
    %v617 = vpop.f32.mrb[0].mxu0
    %v618 = vadd.f32 %v511, %v617
    %v619 = vpop.f32.mrb[0].mxu0
    %v620 = vpop.f32.mrb[0].mxu0
    %621 = vdwg.mxu0
    %622 = vmatprep.subr.bf16.mxu0 %v579
    %623 = vmatpush1.bf16.msra.mxu0 %v576
    %624 = vmatprep.subr.bf16.mxu0 0
    %625 = vmatpush1.bf16.msra.mxu0 0
    %626 = vmatprep.subr.bf16.mxu0 0
    %627 = vmatpush1.bf16.msra.mxu0 0
    %628 = vmatprep.subr.bf16.mxu0 0
    %629 = vmatpush1.bf16.msra.mxu0 0
    %630 = vmatprep.subr.bf16.mxu0 0
    %631 = vmatpush1.bf16.msra.mxu0 0
    %632 = vmatprep.subr.bf16.mxu0 0
    %633 = vmatpush1.bf16.msra.mxu0 0
    %634 = vmatprep.subr.bf16.mxu0 0
    %635 = vmatpush1.bf16.msra.mxu0 0
    %636 = vmatprep.subr.bf16.mxu0 0
    %637 = vmatpush1.bf16.msra.mxu0 0
    %638 = vmatprep.subr.bf16.mxu0 0
    %639 = vmatpush1.bf16.msra.mxu0 0
    %640 = vmatprep.subr.bf16.mxu0 0
    %641 = vmatpush1.bf16.msra.mxu0 0
    %642 = vmatprep.subr.bf16.mxu0 0
    %643 = vmatpush1.bf16.msra.mxu0 0
    %644 = vmatprep.subr.bf16.mxu0 0
    %645 = vmatpush1.bf16.msra.mxu0 0
    %646 = vmatprep.subr.bf16.mxu0 0
    %647 = vmatpush1.bf16.msra.mxu0 0
    %648 = vmatprep.subr.bf16.mxu0 0
    %649 = vmatpush1.bf16.msra.mxu0 0
    %650 = vmatprep.subr.bf16.mxu0 0
    %651 = vmatpush1.bf16.msra.mxu0 0
    %652 = vmatprep.subr.bf16.mxu0 0
    %653 = vmatpush1.bf16.msra.mxu0 0
    %654 = vmatprep.mubr.bf16.mxu0 0
    %655 = vmatmul.mubr.bf16.gmra.mrb[0].mxu0 %v567
    %v656 = vpop.f32.mrb[0].mxu0
    %v657 = vadd.f32 %v550, %v656
    %v658 = vpop.f32.mrb[0].mxu0
    %v659 = vadd.f32 %v552, %v658
    %v660 = vpop.f32.mrb[0].mxu0
    %v661 = vpop.f32.mrb[0].mxu0
    %662 = vdwg.mxu0
    %v663 = vld [vmem:[%s20] sm:$0x22]
    %v664 = vld [vmem:[%s20 + $0x8] sm:$0x22]
    %v667 = vunpack.c.l.b16 %v663
    %v668 = vunpack.c.h.b16 %v663
    %v669 = vunpack.c.l.b16 %v664
    %v670 = vunpack.c.h.b16 %v664
    %v671 = vpack.c.b16 %v667, %v667
    %v672 = vpack.c.b16 %v668, %v668
    %v673 = vpack.c.b16 %v669, %v669
    %v674 = vpack.c.b16 %v670, %v670
    %v676 = vpack.i.b16 %v671, %v671
    %v678 = vlaneseq
    %v679 = vshrl.u32 %v678, 7
    %v680 = vsub.s32 1, %v679
    %v681 = vrot.slane %v676, %v680
    %v683 = vpack.i.b16 %v672, %v672
    %v685 = vlaneseq
    %v686 = vshrl.u32 %v685, 7
    %v687 = vsub.s32 1, %v686
    %v688 = vrot.slane %v683, %v687
    %v690 = vpack.i.b16 %v673, %v673
    %v692 = vlaneseq
    %v693 = vshrl.u32 %v692, 7
    %v694 = vsub.s32 1, %v693
    %v695 = vrot.slane %v690, %v694
    %v697 = vpack.i.b16 %v674, %v674
    %v699 = vlaneseq
    %v700 = vshrl.u32 %v699, 7
    %v701 = vsub.s32 1, %v700
    %v702 = vrot.slane %v697, %v701
    %v707 = vunpack.c.l.b16 %v681
    %v708 = vunpack.c.l.b16 %v688
    %v709 = vunpack.c.l.b16 %v695
    %v710 = vunpack.c.l.b16 %v702
    %v711 = vpack.c.b16 %v708, %v707
    %v712 = vpack.c.b16 %v710, %v709
    %713 = vrot.lane.b32.xlu0 %v711, 2
    %v714 = vpop.permute.xlu0 %713
    %715 = vrot.lane.b32.xlu0 %v712, 2
    %v716 = vpop.permute.xlu0 %715
    %v717 = vrot.slane %v714, 4
    %v718 = vrot.slane %v716, 4
    %vm719 = vcmask 15360
    %v720 = vsel %vm719, %v717, %v714
    %v721 = vsel %vm302, %v717, %v718
    %v722 = vsel %vm719, %v721, %v716
    %v726 = vmul.bf16 %v315, %v720
    %v727 = vmul.bf16 %v316, %v722
    %v728 = vmul.bf16 %v372, %v718
    %s729 = scalar_lea.vmem %s2, 8
    %v730 = vld [vmem:[%s729] sm:$0xf]
    %v734 = vunpack.c.l.b16 %v726
    %v735 = vunpack.c.h.b16 %v726
    %v736 = vunpack.c.l.b16 %v727
    %v737 = vunpack.c.h.b16 %v727
    %v738 = vunpack.c.l.b16 %v728
    %v739 = vpack.c.b16 %v734, %v734
    %v740 = vpack.c.b16 %v735, %v735
    %v741 = vpack.c.b16 %v736, %v736
    %v742 = vpack.c.b16 %v737, %v737
    %v743 = vpack.c.b16 %v738, %v738
    %744 = vrot.lane.b32.xlu0 %v739, 126
    %v745 = vpop.permute.xlu0 %744
    %746 = vrot.lane.b32.xlu0 %v740, 126
    %v747 = vpop.permute.xlu0 %746
    %748 = vrot.lane.b32.xlu0 %v741, 126
    %v749 = vpop.permute.xlu0 %748
    %750 = vrot.lane.b32.xlu0 %v742, 126
    %v751 = vpop.permute.xlu0 %750
    %752 = vrot.lane.b32.xlu0 %v743, 126
    %v753 = vpop.permute.xlu0 %752
    %vm754 = vcmask 1031168
    %v755 = vsel %vm754, %v745, %v747
    %v756 = vsel %vm754, %v747, %v749
    %v757 = vsel %vm754, %v749, %v751
    %v758 = vsel %vm754, %v751, %v753
    %v760 = vsel %vm457, %v730, 0
    %v763 = vsel %vm461, %v755, 0
    %v766 = vsel %vm461, %v756, 0
    %v769 = vsel %vm461, %v757, 0
    %v772 = vsel %vm461, %v758, 0
    %774 = vmatprep.subr.bf16.mxu0 %v766
    %775 = vmatpush1.bf16.msra.mxu0 %v763
    %776 = vmatprep.subr.bf16.mxu0 0
    %777 = vmatpush1.bf16.msra.mxu0 0
    %778 = vmatprep.subr.bf16.mxu0 0
    %779 = vmatpush1.bf16.msra.mxu0 0
    %780 = vmatprep.subr.bf16.mxu0 0
    %781 = vmatpush1.bf16.msra.mxu0 0
    %782 = vmatprep.subr.bf16.mxu0 0
    %783 = vmatpush1.bf16.msra.mxu0 0
    %784 = vmatprep.subr.bf16.mxu0 0
    %785 = vmatpush1.bf16.msra.mxu0 0
    %786 = vmatprep.subr.bf16.mxu0 0
    %787 = vmatpush1.bf16.msra.mxu0 0
    %788 = vmatprep.subr.bf16.mxu0 0
    %789 = vmatpush1.bf16.msra.mxu0 0
    %790 = vmatprep.subr.bf16.mxu0 0
    %791 = vmatpush1.bf16.msra.mxu0 0
    %792 = vmatprep.subr.bf16.mxu0 0
    %793 = vmatpush1.bf16.msra.mxu0 0
    %794 = vmatprep.subr.bf16.mxu0 0
    %795 = vmatpush1.bf16.msra.mxu0 0
    %796 = vmatprep.subr.bf16.mxu0 0
    %797 = vmatpush1.bf16.msra.mxu0 0
    %798 = vmatprep.subr.bf16.mxu0 0
    %799 = vmatpush1.bf16.msra.mxu0 0
    %800 = vmatprep.subr.bf16.mxu0 0
    %801 = vmatpush1.bf16.msra.mxu0 0
    %802 = vmatprep.subr.bf16.mxu0 0
    %803 = vmatpush1.bf16.msra.mxu0 0
    %804 = vmatprep.subr.bf16.mxu0 0
    %805 = vmatpush1.bf16.msra.mxu0 0
    %806 = vmatprep.mubr.bf16.mxu0 0
    %807 = vmatmul.mubr.bf16.gmra.mrb[0].mxu0 %v760
    %v808 = vpop.f32.mrb[0].mxu0
    %v809 = vadd.f32 0.0, %v808
    %v810 = vpop.f32.mrb[0].mxu0
    %v811 = vadd.f32 0.0, %v810
    %v812 = vpop.f32.mrb[0].mxu0
    %v813 = vpop.f32.mrb[0].mxu0
    %814 = vdwg.mxu0
    %815 = vmatprep.subr.bf16.mxu0 %v772
    %816 = vmatpush1.bf16.msra.mxu0 %v769
    %817 = vmatprep.subr.bf16.mxu0 0
    %818 = vmatpush1.bf16.msra.mxu0 0
    %819 = vmatprep.subr.bf16.mxu0 0
    %820 = vmatpush1.bf16.msra.mxu0 0
    %821 = vmatprep.subr.bf16.mxu0 0
    %822 = vmatpush1.bf16.msra.mxu0 0
    %823 = vmatprep.subr.bf16.mxu0 0
    %824 = vmatpush1.bf16.msra.mxu0 0
    %825 = vmatprep.subr.bf16.mxu0 0
    %826 = vmatpush1.bf16.msra.mxu0 0
    %827 = vmatprep.subr.bf16.mxu0 0
    %828 = vmatpush1.bf16.msra.mxu0 0
    %829 = vmatprep.subr.bf16.mxu0 0
    %830 = vmatpush1.bf16.msra.mxu0 0
    %831 = vmatprep.subr.bf16.mxu0 0
    %832 = vmatpush1.bf16.msra.mxu0 0
    %833 = vmatprep.subr.bf16.mxu0 0
    %834 = vmatpush1.bf16.msra.mxu0 0
    %835 = vmatprep.subr.bf16.mxu0 0
    %836 = vmatpush1.bf16.msra.mxu0 0
    %837 = vmatprep.subr.bf16.mxu0 0
    %838 = vmatpush1.bf16.msra.mxu0 0
    %839 = vmatprep.subr.bf16.mxu0 0
    %840 = vmatpush1.bf16.msra.mxu0 0
    %841 = vmatprep.subr.bf16.mxu0 0
    %842 = vmatpush1.bf16.msra.mxu0 0
    %843 = vmatprep.subr.bf16.mxu0 0
    %844 = vmatpush1.bf16.msra.mxu0 0
    %845 = vmatprep.subr.bf16.mxu0 0
    %846 = vmatpush1.bf16.msra.mxu0 0
    %847 = vmatprep.mubr.bf16.mxu0 0
    %848 = vmatmul.mubr.bf16.gmra.mrb[0].mxu0 %v760
    %v849 = vpop.f32.mrb[0].mxu0
    %v850 = vadd.f32 0.0, %v849
    %v851 = vpop.f32.mrb[0].mxu0
    %v852 = vadd.f32 0.0, %v851
    %v853 = vpop.f32.mrb[0].mxu0
    %v854 = vpop.f32.mrb[0].mxu0
    %855 = vdwg.mxu0
    %v856 = vadd.f32 %v616, %v809
    %v857 = vadd.f32 %v618, %v811
    %v858 = vadd.f32 %v657, %v850
    %v859 = vadd.f32 %v659, %v852
    %v860 = vshrl.u32 %v671, 16
    %v861 = vpack.i.b16 %v860, %v860
    %v863 = vlaneseq
    %v864 = vshrl.u32 %v863, 7
    %v865 = vsub.s32 1, %v864
    %v866 = vrot.slane %v861, %v865
    %v867 = vshrl.u32 %v672, 16
    %v868 = vpack.i.b16 %v867, %v867
    %v870 = vlaneseq
    %v871 = vshrl.u32 %v870, 7
    %v872 = vsub.s32 1, %v871
    %v873 = vrot.slane %v868, %v872
    %v874 = vshrl.u32 %v673, 16
    %v875 = vpack.i.b16 %v874, %v874
    %v877 = vlaneseq
    %v878 = vshrl.u32 %v877, 7
    %v879 = vsub.s32 1, %v878
    %v880 = vrot.slane %v875, %v879
    %v881 = vshrl.u32 %v674, 16
    %v882 = vpack.i.b16 %v881, %v881
    %v884 = vlaneseq
    %v885 = vshrl.u32 %v884, 7
    %v886 = vsub.s32 1, %v885
    %v887 = vrot.slane %v882, %v886
    %v892 = vunpack.c.l.b16 %v866
    %v893 = vunpack.c.l.b16 %v873
    %v894 = vunpack.c.l.b16 %v880
    %v895 = vunpack.c.l.b16 %v887
    %v896 = vpack.c.b16 %v893, %v892
    %v897 = vpack.c.b16 %v895, %v894
    %898 = vrot.lane.b32.xlu0 %v896, 16
    %v899 = vpop.permute.xlu0 %898
    %900 = vrot.lane.b32.xlu0 %v897, 16
    %v901 = vpop.permute.xlu0 %900
    %v902 = vrot.slane %v899, 4
    %v903 = vrot.slane %v901, 4
    %vm904 = vcmask 130048
    %v905 = vsel %vm904, %v902, %v899
    %v906 = vsel %vm302, %v902, %v903
    %v907 = vsel %vm904, %v906, %v901
    %v911 = vmul.bf16 %v315, %v905
    %v912 = vmul.bf16 %v316, %v907
    %v913 = vmul.bf16 %v372, %v903
    %s914 = scalar_lea.vmem %s2, 12
    %v915 = vld [vmem:[%s914] sm:$0xf]
    %v919 = vunpack.c.l.b16 %v911
    %v920 = vunpack.c.h.b16 %v911
    %v921 = vunpack.c.l.b16 %v912
    %v922 = vunpack.c.h.b16 %v912
    %v923 = vunpack.c.l.b16 %v913
    %v924 = vpack.c.b16 %v919, %v919
    %v925 = vpack.c.b16 %v920, %v920
    %v926 = vpack.c.b16 %v921, %v921
    %v927 = vpack.c.b16 %v922, %v922
    %v928 = vpack.c.b16 %v923, %v923
    %929 = vrot.lane.b32.xlu0 %v924, 112
    %v930 = vpop.permute.xlu0 %929
    %931 = vrot.lane.b32.xlu0 %v925, 112
    %v932 = vpop.permute.xlu0 %931
    %933 = vrot.lane.b32.xlu0 %v926, 112
    %v934 = vpop.permute.xlu0 %933
    %935 = vrot.lane.b32.xlu0 %v927, 112
    %v936 = vpop.permute.xlu0 %935
    %937 = vrot.lane.b32.xlu0 %v928, 112
    %v938 = vpop.permute.xlu0 %937
    %vm939 = vcmask 916480
    %v940 = vsel %vm939, %v930, %v932
    %v941 = vsel %vm939, %v932, %v934
    %v942 = vsel %vm939, %v934, %v936
    %v943 = vsel %vm939, %v936, %v938
    %v945 = vsel %vm457, %v915, 0
    %v948 = vsel %vm461, %v940, 0
    %v951 = vsel %vm461, %v941, 0
    %v954 = vsel %vm461, %v942, 0
    %v957 = vsel %vm461, %v943, 0
    %959 = vmatprep.subr.bf16.mxu0 %v951
    %960 = vmatpush1.bf16.msra.mxu0 %v948
    %961 = vmatprep.subr.bf16.mxu0 0
    %962 = vmatpush1.bf16.msra.mxu0 0
    %963 = vmatprep.subr.bf16.mxu0 0
    %964 = vmatpush1.bf16.msra.mxu0 0
    %965 = vmatprep.subr.bf16.mxu0 0
    %966 = vmatpush1.bf16.msra.mxu0 0
    %967 = vmatprep.subr.bf16.mxu0 0
    %968 = vmatpush1.bf16.msra.mxu0 0
    %969 = vmatprep.subr.bf16.mxu0 0
    %970 = vmatpush1.bf16.msra.mxu0 0
    %971 = vmatprep.subr.bf16.mxu0 0
    %972 = vmatpush1.bf16.msra.mxu0 0
    %973 = vmatprep.subr.bf16.mxu0 0
    %974 = vmatpush1.bf16.msra.mxu0 0
    %975 = vmatprep.subr.bf16.mxu0 0
    %976 = vmatpush1.bf16.msra.mxu0 0
    %977 = vmatprep.subr.bf16.mxu0 0
    %978 = vmatpush1.bf16.msra.mxu0 0
    %979 = vmatprep.subr.bf16.mxu0 0
    %980 = vmatpush1.bf16.msra.mxu0 0
    %981 = vmatprep.subr.bf16.mxu0 0
    %982 = vmatpush1.bf16.msra.mxu0 0
    %983 = vmatprep.subr.bf16.mxu0 0
    %984 = vmatpush1.bf16.msra.mxu0 0
    %985 = vmatprep.subr.bf16.mxu0 0
    %986 = vmatpush1.bf16.msra.mxu0 0
    %987 = vmatprep.subr.bf16.mxu0 0
    %988 = vmatpush1.bf16.msra.mxu0 0
    %989 = vmatprep.subr.bf16.mxu0 0
    %990 = vmatpush1.bf16.msra.mxu0 0
    %991 = vmatprep.mubr.bf16.mxu0 0
    %992 = vmatmul.mubr.bf16.gmra.mrb[0].mxu0 %v945
    %v993 = vpop.f32.mrb[0].mxu0
    %v994 = vadd.f32 0.0, %v993
    %v995 = vpop.f32.mrb[0].mxu0
    %v996 = vadd.f32 0.0, %v995
    %v997 = vpop.f32.mrb[0].mxu0
    %v998 = vpop.f32.mrb[0].mxu0
    %999 = vdwg.mxu0
    %1000 = vmatprep.subr.bf16.mxu0 %v957
    %1001 = vmatpush1.bf16.msra.mxu0 %v954
    %1002 = vmatprep.subr.bf16.mxu0 0
    %1003 = vmatpush1.bf16.msra.mxu0 0
    %1004 = vmatprep.subr.bf16.mxu0 0
    %1005 = vmatpush1.bf16.msra.mxu0 0
    %1006 = vmatprep.subr.bf16.mxu0 0
    %1007 = vmatpush1.bf16.msra.mxu0 0
    %1008 = vmatprep.subr.bf16.mxu0 0
    %1009 = vmatpush1.bf16.msra.mxu0 0
    %1010 = vmatprep.subr.bf16.mxu0 0
    %1011 = vmatpush1.bf16.msra.mxu0 0
    %1012 = vmatprep.subr.bf16.mxu0 0
    %1013 = vmatpush1.bf16.msra.mxu0 0
    %1014 = vmatprep.subr.bf16.mxu0 0
    %1015 = vmatpush1.bf16.msra.mxu0 0
    %1016 = vmatprep.subr.bf16.mxu0 0
    %1017 = vmatpush1.bf16.msra.mxu0 0
    %1018 = vmatprep.subr.bf16.mxu0 0
    %1019 = vmatpush1.bf16.msra.mxu0 0
    %1020 = vmatprep.subr.bf16.mxu0 0
    %1021 = vmatpush1.bf16.msra.mxu0 0
    %1022 = vmatprep.subr.bf16.mxu0 0
    %1023 = vmatpush1.bf16.msra.mxu0 0
    %1024 = vmatprep.subr.bf16.mxu0 0
    %1025 = vmatpush1.bf16.msra.mxu0 0
    %1026 = vmatprep.subr.bf16.mxu0 0
    %1027 = vmatpush1.bf16.msra.mxu0 0
    %1028 = vmatprep.subr.bf16.mxu0 0
    %1029 = vmatpush1.bf16.msra.mxu0 0
    %1030 = vmatprep.subr.bf16.mxu0 0
    %1031 = vmatpush1.bf16.msra.mxu0 0
    %1032 = vmatprep.mubr.bf16.mxu0 0
    %1033 = vmatmul.mubr.bf16.gmra.mrb[0].mxu0 %v945
    %v1034 = vpop.f32.mrb[0].mxu0
    %v1035 = vadd.f32 0.0, %v1034
    %v1036 = vpop.f32.mrb[0].mxu0
    %v1037 = vadd.f32 0.0, %v1036
    %v1038 = vpop.f32.mrb[0].mxu0
    %v1039 = vpop.f32.mrb[0].mxu0
    %1040 = vdwg.mxu0
    %v1041 = vadd.f32 %v856, %v994
    %v1042 = vadd.f32 %v857, %v996
    %v1043 = vadd.f32 %v858, %v1035
    %v1044 = vadd.f32 %v859, %v1037
    %v1045 = vld [vmem:[%s20] sm:$0x44]
    %v1046 = vld [vmem:[%s20 + $0x8] sm:$0x44]
    %v1049 = vunpack.c.l.b16 %v1045
    %v1050 = vunpack.c.h.b16 %v1045
    %v1051 = vunpack.c.l.b16 %v1046
    %v1052 = vunpack.c.h.b16 %v1046
    %v1053 = vpack.c.b16 %v1049, %v1049
    %v1054 = vpack.c.b16 %v1050, %v1050
    %v1055 = vpack.c.b16 %v1051, %v1051
    %v1056 = vpack.c.b16 %v1052, %v1052
    %v1058 = vpack.i.b16 %v1053, %v1053
    %v1060 = vlaneseq
    %v1061 = vshrl.u32 %v1060, 7
    %v1062 = vsub.s32 2, %v1061
    %v1063 = vrot.slane %v1058, %v1062
    %v1065 = vpack.i.b16 %v1054, %v1054
    %v1067 = vlaneseq
    %v1068 = vshrl.u32 %v1067, 7
    %v1069 = vsub.s32 2, %v1068
    %v1070 = vrot.slane %v1065, %v1069
    %v1072 = vpack.i.b16 %v1055, %v1055
    %v1074 = vlaneseq
    %v1075 = vshrl.u32 %v1074, 7
    %v1076 = vsub.s32 2, %v1075
    %v1077 = vrot.slane %v1072, %v1076
    %v1079 = vpack.i.b16 %v1056, %v1056
    %v1081 = vlaneseq
    %v1082 = vshrl.u32 %v1081, 7
    %v1083 = vsub.s32 2, %v1082
    %v1084 = vrot.slane %v1079, %v1083
    %v1089 = vunpack.c.l.b16 %v1063
    %v1090 = vunpack.c.l.b16 %v1070
    %v1091 = vunpack.c.l.b16 %v1077
    %v1092 = vunpack.c.l.b16 %v1084
    %v1093 = vpack.c.b16 %v1090, %v1089
    %v1094 = vpack.c.b16 %v1092, %v1091
    %1095 = vrot.lane.b32.xlu0 %v1093, 17
    %v1096 = vpop.permute.xlu0 %1095
    %1097 = vrot.lane.b32.xlu0 %v1094, 17
    %v1098 = vpop.permute.xlu0 %1097
    %v1099 = vrot.slane %v1096, 4
    %v1100 = vrot.slane %v1098, 4
    %v1101 = vsel %vm300, %v1099, %v1096
    %v1102 = vsel %vm302, %v1099, %v1100
    %v1103 = vsel %vm300, %v1102, %v1098
    %v1107 = vmul.bf16 %v315, %v1101
    %v1108 = vmul.bf16 %v316, %v1103
    %v1109 = vmul.bf16 %v372, %v1100
    %s1110 = scalar_lea.vmem %s2, 16
    %v1111 = vld [vmem:[%s1110] sm:$0xf]
    %v1115 = vunpack.c.l.b16 %v1107
    %v1116 = vunpack.c.h.b16 %v1107
    %v1117 = vunpack.c.l.b16 %v1108
    %v1118 = vunpack.c.h.b16 %v1108
    %v1119 = vunpack.c.l.b16 %v1109
    %v1120 = vpack.c.b16 %v1115, %v1115
    %v1121 = vpack.c.b16 %v1116, %v1116
    %v1122 = vpack.c.b16 %v1117, %v1117
    %v1123 = vpack.c.b16 %v1118, %v1118
    %v1124 = vpack.c.b16 %v1119, %v1119
    %1125 = vrot.lane.b32.xlu0 %v1120, 111
    %v1126 = vpop.permute.xlu0 %1125
    %1127 = vrot.lane.b32.xlu0 %v1121, 111
    %v1128 = vpop.permute.xlu0 %1127
    %1129 = vrot.lane.b32.xlu0 %v1122, 111
    %v1130 = vpop.permute.xlu0 %1129
    %1131 = vrot.lane.b32.xlu0 %v1123, 111
    %v1132 = vpop.permute.xlu0 %1131
    %1133 = vrot.lane.b32.xlu0 %v1124, 111
    %v1134 = vpop.permute.xlu0 %1133
    %vm1135 = vcmask 908288
    %v1136 = vsel %vm1135, %v1126, %v1128
    %v1137 = vsel %vm1135, %v1128, %v1130
    %v1138 = vsel %vm1135, %v1130, %v1132
    %v1139 = vsel %vm1135, %v1132, %v1134
    %v1141 = vsel %vm457, %v1111, 0
    %v1144 = vsel %vm461, %v1136, 0
    %v1147 = vsel %vm461, %v1137, 0
    %v1150 = vsel %vm461, %v1138, 0
    %v1153 = vsel %vm461, %v1139, 0
    %1155 = vmatprep.subr.bf16.mxu0 %v1147
    %1156 = vmatpush1.bf16.msra.mxu0 %v1144
    %1157 = vmatprep.subr.bf16.mxu0 0
    %1158 = vmatpush1.bf16.msra.mxu0 0
    %1159 = vmatprep.subr.bf16.mxu0 0
    %1160 = vmatpush1.bf16.msra.mxu0 0
    %1161 = vmatprep.subr.bf16.mxu0 0
    %1162 = vmatpush1.bf16.msra.mxu0 0
    %1163 = vmatprep.subr.bf16.mxu0 0
    %1164 = vmatpush1.bf16.msra.mxu0 0
    %1165 = vmatprep.subr.bf16.mxu0 0
    %1166 = vmatpush1.bf16.msra.mxu0 0
    %1167 = vmatprep.subr.bf16.mxu0 0
    %1168 = vmatpush1.bf16.msra.mxu0 0
    %1169 = vmatprep.subr.bf16.mxu0 0
    %1170 = vmatpush1.bf16.msra.mxu0 0
    %1171 = vmatprep.subr.bf16.mxu0 0
    %1172 = vmatpush1.bf16.msra.mxu0 0
    %1173 = vmatprep.subr.bf16.mxu0 0
    %1174 = vmatpush1.bf16.msra.mxu0 0
    %1175 = vmatprep.subr.bf16.mxu0 0
    %1176 = vmatpush1.bf16.msra.mxu0 0
    %1177 = vmatprep.subr.bf16.mxu0 0
    %1178 = vmatpush1.bf16.msra.mxu0 0
    %1179 = vmatprep.subr.bf16.mxu0 0
    %1180 = vmatpush1.bf16.msra.mxu0 0
    %1181 = vmatprep.subr.bf16.mxu0 0
    %1182 = vmatpush1.bf16.msra.mxu0 0
    %1183 = vmatprep.subr.bf16.mxu0 0
    %1184 = vmatpush1.bf16.msra.mxu0 0
    %1185 = vmatprep.subr.bf16.mxu0 0
    %1186 = vmatpush1.bf16.msra.mxu0 0
    %1187 = vmatprep.mubr.bf16.mxu0 0
    %1188 = vmatmul.mubr.bf16.gmra.mrb[0].mxu0 %v1141
    %v1189 = vpop.f32.mrb[0].mxu0
    %v1190 = vadd.f32 0.0, %v1189
    %v1191 = vpop.f32.mrb[0].mxu0
    %v1192 = vadd.f32 0.0, %v1191
    %v1193 = vpop.f32.mrb[0].mxu0
    %v1194 = vpop.f32.mrb[0].mxu0
    %1195 = vdwg.mxu0
    %1196 = vmatprep.subr.bf16.mxu0 %v1153
    %1197 = vmatpush1.bf16.msra.mxu0 %v1150
    %1198 = vmatprep.subr.bf16.mxu0 0
    %1199 = vmatpush1.bf16.msra.mxu0 0
    %1200 = vmatprep.subr.bf16.mxu0 0
    %1201 = vmatpush1.bf16.msra.mxu0 0
    %1202 = vmatprep.subr.bf16.mxu0 0
    %1203 = vmatpush1.bf16.msra.mxu0 0
    %1204 = vmatprep.subr.bf16.mxu0 0
    %1205 = vmatpush1.bf16.msra.mxu0 0
    %1206 = vmatprep.subr.bf16.mxu0 0
    %1207 = vmatpush1.bf16.msra.mxu0 0
    %1208 = vmatprep.subr.bf16.mxu0 0
    %1209 = vmatpush1.bf16.msra.mxu0 0
    %1210 = vmatprep.subr.bf16.mxu0 0
    %1211 = vmatpush1.bf16.msra.mxu0 0
    %1212 = vmatprep.subr.bf16.mxu0 0
    %1213 = vmatpush1.bf16.msra.mxu0 0
    %1214 = vmatprep.subr.bf16.mxu0 0
    %1215 = vmatpush1.bf16.msra.mxu0 0
    %1216 = vmatprep.subr.bf16.mxu0 0
    %1217 = vmatpush1.bf16.msra.mxu0 0
    %1218 = vmatprep.subr.bf16.mxu0 0
    %1219 = vmatpush1.bf16.msra.mxu0 0
    %1220 = vmatprep.subr.bf16.mxu0 0
    %1221 = vmatpush1.bf16.msra.mxu0 0
    %1222 = vmatprep.subr.bf16.mxu0 0
    %1223 = vmatpush1.bf16.msra.mxu0 0
    %1224 = vmatprep.subr.bf16.mxu0 0
    %1225 = vmatpush1.bf16.msra.mxu0 0
    %1226 = vmatprep.subr.bf16.mxu0 0
    %1227 = vmatpush1.bf16.msra.mxu0 0
    %1228 = vmatprep.mubr.bf16.mxu0 0
    %1229 = vmatmul.mubr.bf16.gmra.mrb[0].mxu0 %v1141
    %v1230 = vpop.f32.mrb[0].mxu0
    %v1231 = vadd.f32 0.0, %v1230
    %v1232 = vpop.f32.mrb[0].mxu0
    %v1233 = vadd.f32 0.0, %v1232
    %v1234 = vpop.f32.mrb[0].mxu0
    %v1235 = vpop.f32.mrb[0].mxu0
    %1236 = vdwg.mxu0
    %v1237 = vadd.f32 %v1041, %v1190
    %v1238 = vadd.f32 %v1042, %v1192
    %v1239 = vadd.f32 %v1043, %v1231
    %v1240 = vadd.f32 %v1044, %v1233
    %v1241 = vshrl.u32 %v1053, 16
    %v1242 = vpack.i.b16 %v1241, %v1241
    %v1244 = vlaneseq
    %v1245 = vshrl.u32 %v1244, 7
    %v1246 = vsub.s32 2, %v1245
    %v1247 = vrot.slane %v1242, %v1246
    %v1248 = vshrl.u32 %v1054, 16
    %v1249 = vpack.i.b16 %v1248, %v1248
    %v1251 = vlaneseq
    %v1252 = vshrl.u32 %v1251, 7
    %v1253 = vsub.s32 2, %v1252
    %v1254 = vrot.slane %v1249, %v1253
    %v1255 = vshrl.u32 %v1055, 16
    %v1256 = vpack.i.b16 %v1255, %v1255
    %v1258 = vlaneseq
    %v1259 = vshrl.u32 %v1258, 7
    %v1260 = vsub.s32 2, %v1259
    %v1261 = vrot.slane %v1256, %v1260
    %v1262 = vshrl.u32 %v1056, 16
    %v1263 = vpack.i.b16 %v1262, %v1262
    %v1265 = vlaneseq
    %v1266 = vshrl.u32 %v1265, 7
    %v1267 = vsub.s32 2, %v1266
    %v1268 = vrot.slane %v1263, %v1267
    %v1273 = vunpack.c.l.b16 %v1247
    %v1274 = vunpack.c.l.b16 %v1254
    %v1275 = vunpack.c.l.b16 %v1261
    %v1276 = vunpack.c.l.b16 %v1268
    %v1277 = vpack.c.b16 %v1274, %v1273
    %v1278 = vpack.c.b16 %v1276, %v1275
    %1279 = vrot.lane.b32.xlu0 %v1277, 18
    %v1280 = vpop.permute.xlu0 %1279
    %1281 = vrot.lane.b32.xlu0 %v1278, 18
    %v1282 = vpop.permute.xlu0 %1281
    %v1283 = vrot.slane %v1280, 4
    %v1284 = vrot.slane %v1282, 4
    %vm1285 = vcmask 146432
    %v1286 = vsel %vm1285, %v1283, %v1280
    %v1287 = vsel %vm302, %v1283, %v1284
    %v1288 = vsel %vm1285, %v1287, %v1282
    %v1292 = vmul.bf16 %v315, %v1286
    %v1293 = vmul.bf16 %v316, %v1288
    %v1294 = vmul.bf16 %v372, %v1284
    %s1295 = scalar_lea.vmem %s2, 20
    %v1296 = vld [vmem:[%s1295] sm:$0xf]
    %v1300 = vunpack.c.l.b16 %v1292
    %v1301 = vunpack.c.h.b16 %v1292
    %v1302 = vunpack.c.l.b16 %v1293
    %v1303 = vunpack.c.h.b16 %v1293
    %v1304 = vunpack.c.l.b16 %v1294
    %v1305 = vpack.c.b16 %v1300, %v1300
    %v1306 = vpack.c.b16 %v1301, %v1301
    %v1307 = vpack.c.b16 %v1302, %v1302
    %v1308 = vpack.c.b16 %v1303, %v1303
    %v1309 = vpack.c.b16 %v1304, %v1304
    %1310 = vrot.lane.b32.xlu0 %v1305, 110
    %v1311 = vpop.permute.xlu0 %1310
    %1312 = vrot.lane.b32.xlu0 %v1306, 110
    %v1313 = vpop.permute.xlu0 %1312
    %1314 = vrot.lane.b32.xlu0 %v1307, 110
    %v1315 = vpop.permute.xlu0 %1314
    %1316 = vrot.lane.b32.xlu0 %v1308, 110
    %v1317 = vpop.permute.xlu0 %1316
    %1318 = vrot.lane.b32.xlu0 %v1309, 110
    %v1319 = vpop.permute.xlu0 %1318
    %vm1320 = vcmask 900096
    %v1321 = vsel %vm1320, %v1311, %v1313
    %v1322 = vsel %vm1320, %v1313, %v1315
    %v1323 = vsel %vm1320, %v1315, %v1317
    %v1324 = vsel %vm1320, %v1317, %v1319
    %v1326 = vsel %vm457, %v1296, 0
    %v1329 = vsel %vm461, %v1321, 0
    %v1332 = vsel %vm461, %v1322, 0
    %v1335 = vsel %vm461, %v1323, 0
    %v1338 = vsel %vm461, %v1324, 0
    %1340 = vmatprep.subr.bf16.mxu0 %v1332
    %1341 = vmatpush1.bf16.msra.mxu0 %v1329
    %1342 = vmatprep.subr.bf16.mxu0 0
    %1343 = vmatpush1.bf16.msra.mxu0 0
    %1344 = vmatprep.subr.bf16.mxu0 0
    %1345 = vmatpush1.bf16.msra.mxu0 0
    %1346 = vmatprep.subr.bf16.mxu0 0
    %1347 = vmatpush1.bf16.msra.mxu0 0
    %1348 = vmatprep.subr.bf16.mxu0 0
    %1349 = vmatpush1.bf16.msra.mxu0 0
    %1350 = vmatprep.subr.bf16.mxu0 0
    %1351 = vmatpush1.bf16.msra.mxu0 0
    %1352 = vmatprep.subr.bf16.mxu0 0
    %1353 = vmatpush1.bf16.msra.mxu0 0
    %1354 = vmatprep.subr.bf16.mxu0 0
    %1355 = vmatpush1.bf16.msra.mxu0 0
    %1356 = vmatprep.subr.bf16.mxu0 0
    %1357 = vmatpush1.bf16.msra.mxu0 0
    %1358 = vmatprep.subr.bf16.mxu0 0
    %1359 = vmatpush1.bf16.msra.mxu0 0
    %1360 = vmatprep.subr.bf16.mxu0 0
    %1361 = vmatpush1.bf16.msra.mxu0 0
    %1362 = vmatprep.subr.bf16.mxu0 0
    %1363 = vmatpush1.bf16.msra.mxu0 0
    %1364 = vmatprep.subr.bf16.mxu0 0
    %1365 = vmatpush1.bf16.msra.mxu0 0
    %1366 = vmatprep.subr.bf16.mxu0 0
    %1367 = vmatpush1.bf16.msra.mxu0 0
    %1368 = vmatprep.subr.bf16.mxu0 0
    %1369 = vmatpush1.bf16.msra.mxu0 0
    %1370 = vmatprep.subr.bf16.mxu0 0
    %1371 = vmatpush1.bf16.msra.mxu0 0
    %1372 = vmatprep.mubr.bf16.mxu0 0
    %1373 = vmatmul.mubr.bf16.gmra.mrb[0].mxu0 %v1326
    %v1374 = vpop.f32.mrb[0].mxu0
    %v1375 = vadd.f32 0.0, %v1374
    %v1376 = vpop.f32.mrb[0].mxu0
    %v1377 = vadd.f32 0.0, %v1376
    %v1378 = vpop.f32.mrb[0].mxu0
    %v1379 = vpop.f32.mrb[0].mxu0
    %1380 = vdwg.mxu0
    %1381 = vmatprep.subr.bf16.mxu0 %v1338
    %1382 = vmatpush1.bf16.msra.mxu0 %v1335
    %1383 = vmatprep.subr.bf16.mxu0 0
    %1384 = vmatpush1.bf16.msra.mxu0 0
    %1385 = vmatprep.subr.bf16.mxu0 0
    %1386 = vmatpush1.bf16.msra.mxu0 0
    %1387 = vmatprep.subr.bf16.mxu0 0
    %1388 = vmatpush1.bf16.msra.mxu0 0
    %1389 = vmatprep.subr.bf16.mxu0 0
    %1390 = vmatpush1.bf16.msra.mxu0 0
    %1391 = vmatprep.subr.bf16.mxu0 0
    %1392 = vmatpush1.bf16.msra.mxu0 0
    %1393 = vmatprep.subr.bf16.mxu0 0
    %1394 = vmatpush1.bf16.msra.mxu0 0
    %1395 = vmatprep.subr.bf16.mxu0 0
    %1396 = vmatpush1.bf16.msra.mxu0 0
    %1397 = vmatprep.subr.bf16.mxu0 0
    %1398 = vmatpush1.bf16.msra.mxu0 0
    %1399 = vmatprep.subr.bf16.mxu0 0
    %1400 = vmatpush1.bf16.msra.mxu0 0
    %1401 = vmatprep.subr.bf16.mxu0 0
    %1402 = vmatpush1.bf16.msra.mxu0 0
    %1403 = vmatprep.subr.bf16.mxu0 0
    %1404 = vmatpush1.bf16.msra.mxu0 0
    %1405 = vmatprep.subr.bf16.mxu0 0
    %1406 = vmatpush1.bf16.msra.mxu0 0
    %1407 = vmatprep.subr.bf16.mxu0 0
    %1408 = vmatpush1.bf16.msra.mxu0 0
    %1409 = vmatprep.subr.bf16.mxu0 0
    %1410 = vmatpush1.bf16.msra.mxu0 0
    %1411 = vmatprep.subr.bf16.mxu0 0
    %1412 = vmatpush1.bf16.msra.mxu0 0
    %1413 = vmatprep.mubr.bf16.mxu0 0
    %1414 = vmatmul.mubr.bf16.gmra.mrb[0].mxu0 %v1326
    %v1415 = vpop.f32.mrb[0].mxu0
    %v1416 = vadd.f32 0.0, %v1415
    %v1417 = vpop.f32.mrb[0].mxu0
    %v1418 = vadd.f32 0.0, %v1417
    %v1419 = vpop.f32.mrb[0].mxu0
    %v1420 = vpop.f32.mrb[0].mxu0
    %1421 = vdwg.mxu0
    %v1422 = vadd.f32 %v1237, %v1375
    %v1423 = vadd.f32 %v1238, %v1377
    %v1424 = vadd.f32 %v1239, %v1416
    %v1425 = vadd.f32 %v1240, %v1418
    %v1426 = vld [vmem:[%s20] sm:$0x88]
    %v1427 = vld [vmem:[%s20 + $0x8] sm:$0x88]
    %v1430 = vunpack.c.l.b16 %v1426
    %v1431 = vunpack.c.h.b16 %v1426
    %v1432 = vunpack.c.l.b16 %v1427
    %v1433 = vunpack.c.h.b16 %v1427
    %v1434 = vpack.c.b16 %v1430, %v1430
    %v1435 = vpack.c.b16 %v1431, %v1431
    %v1436 = vpack.c.b16 %v1432, %v1432
    %v1437 = vpack.c.b16 %v1433, %v1433
    %v1439 = vpack.i.b16 %v1434, %v1434
    %v1441 = vlaneseq
    %v1442 = vshrl.u32 %v1441, 7
    %v1443 = vsub.s32 3, %v1442
    %v1444 = vrot.slane %v1439, %v1443
    %v1446 = vpack.i.b16 %v1435, %v1435
    %v1448 = vlaneseq
    %v1449 = vshrl.u32 %v1448, 7
    %v1450 = vsub.s32 3, %v1449
    %v1451 = vrot.slane %v1446, %v1450
    %v1453 = vpack.i.b16 %v1436, %v1436
    %v1455 = vlaneseq
    %v1456 = vshrl.u32 %v1455, 7
    %v1457 = vsub.s32 3, %v1456
    %v1458 = vrot.slane %v1453, %v1457
    %v1460 = vpack.i.b16 %v1437, %v1437
    %v1462 = vlaneseq
    %v1463 = vshrl.u32 %v1462, 7
    %v1464 = vsub.s32 3, %v1463
    %v1465 = vrot.slane %v1460, %v1464
    %v1470 = vunpack.c.l.b16 %v1444
    %v1471 = vunpack.c.l.b16 %v1451
    %v1472 = vunpack.c.l.b16 %v1458
    %v1473 = vunpack.c.l.b16 %v1465
    %v1474 = vpack.c.b16 %v1471, %v1470
    %v1475 = vpack.c.b16 %v1473, %v1472
    %1476 = vrot.lane.b32.xlu0 %v1474, 32
    %v1477 = vpop.permute.xlu0 %1476
    %1478 = vrot.lane.b32.xlu0 %v1475, 32
    %v1479 = vpop.permute.xlu0 %1478
    %v1480 = vrot.slane %v1477, 4
    %v1481 = vrot.slane %v1479, 4
    %vm1482 = vcmask 261120
    %v1483 = vsel %vm1482, %v1480, %v1477
    %v1484 = vsel %vm302, %v1480, %v1481
    %v1485 = vsel %vm1482, %v1484, %v1479
    %v1489 = vmul.bf16 %v315, %v1483
    %v1490 = vmul.bf16 %v316, %v1485
    %v1491 = vmul.bf16 %v372, %v1481
    %s1492 = scalar_lea.vmem %s2, 24
    %v1493 = vld [vmem:[%s1492] sm:$0xf]
    %v1497 = vunpack.c.l.b16 %v1489
    %v1498 = vunpack.c.h.b16 %v1489
    %v1499 = vunpack.c.l.b16 %v1490
    %v1500 = vunpack.c.h.b16 %v1490
    %v1501 = vunpack.c.l.b16 %v1491
    %v1502 = vpack.c.b16 %v1497, %v1497
    %v1503 = vpack.c.b16 %v1498, %v1498
    %v1504 = vpack.c.b16 %v1499, %v1499
    %v1505 = vpack.c.b16 %v1500, %v1500
    %v1506 = vpack.c.b16 %v1501, %v1501
    %1507 = vrot.lane.b32.xlu0 %v1502, 96
    %v1508 = vpop.permute.xlu0 %1507
    %1509 = vrot.lane.b32.xlu0 %v1503, 96
    %v1510 = vpop.permute.xlu0 %1509
    %1511 = vrot.lane.b32.xlu0 %v1504, 96
    %v1512 = vpop.permute.xlu0 %1511
    %1513 = vrot.lane.b32.xlu0 %v1505, 96
    %v1514 = vpop.permute.xlu0 %1513
    %1515 = vrot.lane.b32.xlu0 %v1506, 96
    %v1516 = vpop.permute.xlu0 %1515
    %vm1517 = vcmask 785408
    %v1518 = vsel %vm1517, %v1508, %v1510
    %v1519 = vsel %vm1517, %v1510, %v1512
    %v1520 = vsel %vm1517, %v1512, %v1514
    %v1521 = vsel %vm1517, %v1514, %v1516
    %v1523 = vsel %vm457, %v1493, 0
    %v1526 = vsel %vm461, %v1518, 0
    %v1529 = vsel %vm461, %v1519, 0
    %v1532 = vsel %vm461, %v1520, 0
    %v1535 = vsel %vm461, %v1521, 0
    %1537 = vmatprep.subr.bf16.mxu0 %v1529
    %1538 = vmatpush1.bf16.msra.mxu0 %v1526
    %1539 = vmatprep.subr.bf16.mxu0 0
    %1540 = vmatpush1.bf16.msra.mxu0 0
    %1541 = vmatprep.subr.bf16.mxu0 0
    %1542 = vmatpush1.bf16.msra.mxu0 0
    %1543 = vmatprep.subr.bf16.mxu0 0
    %1544 = vmatpush1.bf16.msra.mxu0 0
    %1545 = vmatprep.subr.bf16.mxu0 0
    %1546 = vmatpush1.bf16.msra.mxu0 0
    %1547 = vmatprep.subr.bf16.mxu0 0
    %1548 = vmatpush1.bf16.msra.mxu0 0
    %1549 = vmatprep.subr.bf16.mxu0 0
    %1550 = vmatpush1.bf16.msra.mxu0 0
    %1551 = vmatprep.subr.bf16.mxu0 0
    %1552 = vmatpush1.bf16.msra.mxu0 0
    %1553 = vmatprep.subr.bf16.mxu0 0
    %1554 = vmatpush1.bf16.msra.mxu0 0
    %1555 = vmatprep.subr.bf16.mxu0 0
    %1556 = vmatpush1.bf16.msra.mxu0 0
    %1557 = vmatprep.subr.bf16.mxu0 0
    %1558 = vmatpush1.bf16.msra.mxu0 0
    %1559 = vmatprep.subr.bf16.mxu0 0
    %1560 = vmatpush1.bf16.msra.mxu0 0
    %1561 = vmatprep.subr.bf16.mxu0 0
    %1562 = vmatpush1.bf16.msra.mxu0 0
    %1563 = vmatprep.subr.bf16.mxu0 0
    %1564 = vmatpush1.bf16.msra.mxu0 0
    %1565 = vmatprep.subr.bf16.mxu0 0
    %1566 = vmatpush1.bf16.msra.mxu0 0
    %1567 = vmatprep.subr.bf16.mxu0 0
    %1568 = vmatpush1.bf16.msra.mxu0 0
    %1569 = vmatprep.mubr.bf16.mxu0 0
    %1570 = vmatmul.mubr.bf16.gmra.mrb[0].mxu0 %v1523
    %v1571 = vpop.f32.mrb[0].mxu0
    %v1572 = vadd.f32 0.0, %v1571
    %v1573 = vpop.f32.mrb[0].mxu0
    %v1574 = vadd.f32 0.0, %v1573
    %v1575 = vpop.f32.mrb[0].mxu0
    %v1576 = vpop.f32.mrb[0].mxu0
    %1577 = vdwg.mxu0
    %1578 = vmatprep.subr.bf16.mxu0 %v1535
    %1579 = vmatpush1.bf16.msra.mxu0 %v1532
    %1580 = vmatprep.subr.bf16.mxu0 0
    %1581 = vmatpush1.bf16.msra.mxu0 0
    %1582 = vmatprep.subr.bf16.mxu0 0
    %1583 = vmatpush1.bf16.msra.mxu0 0
    %1584 = vmatprep.subr.bf16.mxu0 0
    %1585 = vmatpush1.bf16.msra.mxu0 0
    %1586 = vmatprep.subr.bf16.mxu0 0
    %1587 = vmatpush1.bf16.msra.mxu0 0
    %1588 = vmatprep.subr.bf16.mxu0 0
    %1589 = vmatpush1.bf16.msra.mxu0 0
    %1590 = vmatprep.subr.bf16.mxu0 0
    %1591 = vmatpush1.bf16.msra.mxu0 0
    %1592 = vmatprep.subr.bf16.mxu0 0
    %1593 = vmatpush1.bf16.msra.mxu0 0
    %1594 = vmatprep.subr.bf16.mxu0 0
    %1595 = vmatpush1.bf16.msra.mxu0 0
    %1596 = vmatprep.subr.bf16.mxu0 0
    %1597 = vmatpush1.bf16.msra.mxu0 0
    %1598 = vmatprep.subr.bf16.mxu0 0
    %1599 = vmatpush1.bf16.msra.mxu0 0
    %1600 = vmatprep.subr.bf16.mxu0 0
    %1601 = vmatpush1.bf16.msra.mxu0 0
    %1602 = vmatprep.subr.bf16.mxu0 0
    %1603 = vmatpush1.bf16.msra.mxu0 0
    %1604 = vmatprep.subr.bf16.mxu0 0
    %1605 = vmatpush1.bf16.msra.mxu0 0
    %1606 = vmatprep.subr.bf16.mxu0 0
    %1607 = vmatpush1.bf16.msra.mxu0 0
    %1608 = vmatprep.subr.bf16.mxu0 0
    %1609 = vmatpush1.bf16.msra.mxu0 0
    %1610 = vmatprep.mubr.bf16.mxu0 0
    %1611 = vmatmul.mubr.bf16.gmra.mrb[0].mxu0 %v1523
    %v1612 = vpop.f32.mrb[0].mxu0
    %v1613 = vadd.f32 0.0, %v1612
    %v1614 = vpop.f32.mrb[0].mxu0
    %v1615 = vadd.f32 0.0, %v1614
    %v1616 = vpop.f32.mrb[0].mxu0
    %v1617 = vpop.f32.mrb[0].mxu0
    %1618 = vdwg.mxu0
    %v1619 = vadd.f32 %v1422, %v1572
    %v1620 = vadd.f32 %v1423, %v1574
    %v1621 = vadd.f32 %v1424, %v1613
    %v1622 = vadd.f32 %v1425, %v1615
    %v1623 = vshrl.u32 %v1434, 16
    %v1624 = vpack.i.b16 %v1623, %v1623
    %v1626 = vlaneseq
    %v1627 = vshrl.u32 %v1626, 7
    %v1628 = vsub.s32 3, %v1627
    %v1629 = vrot.slane %v1624, %v1628
    %v1630 = vshrl.u32 %v1435, 16
    %v1631 = vpack.i.b16 %v1630, %v1630
    %v1633 = vlaneseq
    %v1634 = vshrl.u32 %v1633, 7
    %v1635 = vsub.s32 3, %v1634
    %v1636 = vrot.slane %v1631, %v1635
    %v1637 = vshrl.u32 %v1436, 16
    %v1638 = vpack.i.b16 %v1637, %v1637
    %v1640 = vlaneseq
    %v1641 = vshrl.u32 %v1640, 7
    %v1642 = vsub.s32 3, %v1641
    %v1643 = vrot.slane %v1638, %v1642
    %v1644 = vshrl.u32 %v1437, 16
    %v1645 = vpack.i.b16 %v1644, %v1644
    %v1647 = vlaneseq
    %v1648 = vshrl.u32 %v1647, 7
    %v1649 = vsub.s32 3, %v1648
    %v1650 = vrot.slane %v1645, %v1649
    %v1655 = vunpack.c.l.b16 %v1629
    %v1656 = vunpack.c.l.b16 %v1636
    %v1657 = vunpack.c.l.b16 %v1643
    %v1658 = vunpack.c.l.b16 %v1650
    %v1659 = vpack.c.b16 %v1656, %v1655
    %v1660 = vpack.c.b16 %v1658, %v1657
    %1661 = vrot.lane.b32.xlu0 %v1659, 33
    %v1662 = vpop.permute.xlu0 %1661
    %1663 = vrot.lane.b32.xlu0 %v1660, 33
    %v1664 = vpop.permute.xlu0 %1663
    %v1665 = vrot.slane %v1662, 4
    %v1666 = vrot.slane %v1664, 4
    %vm1667 = vcmask 269312
    %v1668 = vsel %vm1667, %v1665, %v1662
    %v1669 = vsel %vm302, %v1665, %v1666
    %v1670 = vsel %vm1667, %v1669, %v1664
    %v1674 = vmul.bf16 %v315, %v1668
    %v1675 = vmul.bf16 %v316, %v1670
    %v1676 = vmul.bf16 %v372, %v1666
    %s1677 = scalar_lea.vmem %s2, 28
    %v1678 = vld [vmem:[%s1677] sm:$0xf]
    %v1682 = vunpack.c.l.b16 %v1674
    %v1683 = vunpack.c.h.b16 %v1674
    %v1684 = vunpack.c.l.b16 %v1675
    %v1685 = vunpack.c.h.b16 %v1675
    %v1686 = vunpack.c.l.b16 %v1676
    %v1687 = vpack.c.b16 %v1682, %v1682
    %v1688 = vpack.c.b16 %v1683, %v1683
    %v1689 = vpack.c.b16 %v1684, %v1684
    %v1690 = vpack.c.b16 %v1685, %v1685
    %v1691 = vpack.c.b16 %v1686, %v1686
    %1692 = vrot.lane.b32.xlu0 %v1687, 95
    %v1693 = vpop.permute.xlu0 %1692
    %1694 = vrot.lane.b32.xlu0 %v1688, 95
    %v1695 = vpop.permute.xlu0 %1694
    %1696 = vrot.lane.b32.xlu0 %v1689, 95
    %v1697 = vpop.permute.xlu0 %1696
    %1698 = vrot.lane.b32.xlu0 %v1690, 95
    %v1699 = vpop.permute.xlu0 %1698
    %1700 = vrot.lane.b32.xlu0 %v1691, 95
    %v1701 = vpop.permute.xlu0 %1700
    %vm1702 = vcmask 777216
    %v1703 = vsel %vm1702, %v1693, %v1695
    %v1704 = vsel %vm1702, %v1695, %v1697
    %v1705 = vsel %vm1702, %v1697, %v1699
    %v1706 = vsel %vm1702, %v1699, %v1701
    %v1708 = vsel %vm457, %v1678, 0
    %v1711 = vsel %vm461, %v1703, 0
    %v1714 = vsel %vm461, %v1704, 0
    %v1717 = vsel %vm461, %v1705, 0
    %v1720 = vsel %vm461, %v1706, 0
    %1722 = vmatprep.subr.bf16.mxu0 %v1714
    %1723 = vmatpush1.bf16.msra.mxu0 %v1711
    %1724 = vmatprep.subr.bf16.mxu0 0
    %1725 = vmatpush1.bf16.msra.mxu0 0
    %1726 = vmatprep.subr.bf16.mxu0 0
    %1727 = vmatpush1.bf16.msra.mxu0 0
    %1728 = vmatprep.subr.bf16.mxu0 0
    %1729 = vmatpush1.bf16.msra.mxu0 0
    %1730 = vmatprep.subr.bf16.mxu0 0
    %1731 = vmatpush1.bf16.msra.mxu0 0
    %1732 = vmatprep.subr.bf16.mxu0 0
    %1733 = vmatpush1.bf16.msra.mxu0 0
    %1734 = vmatprep.subr.bf16.mxu0 0
    %1735 = vmatpush1.bf16.msra.mxu0 0
    %1736 = vmatprep.subr.bf16.mxu0 0
    %1737 = vmatpush1.bf16.msra.mxu0 0
    %1738 = vmatprep.subr.bf16.mxu0 0
    %1739 = vmatpush1.bf16.msra.mxu0 0
    %1740 = vmatprep.subr.bf16.mxu0 0
    %1741 = vmatpush1.bf16.msra.mxu0 0
    %1742 = vmatprep.subr.bf16.mxu0 0
    %1743 = vmatpush1.bf16.msra.mxu0 0
    %1744 = vmatprep.subr.bf16.mxu0 0
    %1745 = vmatpush1.bf16.msra.mxu0 0
    %1746 = vmatprep.subr.bf16.mxu0 0
    %1747 = vmatpush1.bf16.msra.mxu0 0
    %1748 = vmatprep.subr.bf16.mxu0 0
    %1749 = vmatpush1.bf16.msra.mxu0 0
    %1750 = vmatprep.subr.bf16.mxu0 0
    %1751 = vmatpush1.bf16.msra.mxu0 0
    %1752 = vmatprep.subr.bf16.mxu0 0
    %1753 = vmatpush1.bf16.msra.mxu0 0
    %1754 = vmatprep.mubr.bf16.mxu0 0
    %1755 = vmatmul.mubr.bf16.gmra.mrb[0].mxu0 %v1708
    %v1756 = vpop.f32.mrb[0].mxu0
    %v1757 = vadd.f32 0.0, %v1756
    %v1758 = vpop.f32.mrb[0].mxu0
    %v1759 = vadd.f32 0.0, %v1758
    %v1760 = vpop.f32.mrb[0].mxu0
    %v1761 = vpop.f32.mrb[0].mxu0
    %1762 = vdwg.mxu0
    %1763 = vmatprep.subr.bf16.mxu0 %v1720
    %1764 = vmatpush1.bf16.msra.mxu0 %v1717
    %1765 = vmatprep.subr.bf16.mxu0 0
    %1766 = vmatpush1.bf16.msra.mxu0 0
    %1767 = vmatprep.subr.bf16.mxu0 0
    %1768 = vmatpush1.bf16.msra.mxu0 0
    %1769 = vmatprep.subr.bf16.mxu0 0
    %1770 = vmatpush1.bf16.msra.mxu0 0
    %1771 = vmatprep.subr.bf16.mxu0 0
    %1772 = vmatpush1.bf16.msra.mxu0 0
    %1773 = vmatprep.subr.bf16.mxu0 0
    %1774 = vmatpush1.bf16.msra.mxu0 0
    %1775 = vmatprep.subr.bf16.mxu0 0
    %1776 = vmatpush1.bf16.msra.mxu0 0
    %1777 = vmatprep.subr.bf16.mxu0 0
    %1778 = vmatpush1.bf16.msra.mxu0 0
    %1779 = vmatprep.subr.bf16.mxu0 0
    %1780 = vmatpush1.bf16.msra.mxu0 0
    %1781 = vmatprep.subr.bf16.mxu0 0
    %1782 = vmatpush1.bf16.msra.mxu0 0
    %1783 = vmatprep.subr.bf16.mxu0 0
    %1784 = vmatpush1.bf16.msra.mxu0 0
    %1785 = vmatprep.subr.bf16.mxu0 0
    %1786 = vmatpush1.bf16.msra.mxu0 0
    %1787 = vmatprep.subr.bf16.mxu0 0
    %1788 = vmatpush1.bf16.msra.mxu0 0
    %1789 = vmatprep.subr.bf16.mxu0 0
    %1790 = vmatpush1.bf16.msra.mxu0 0
    %1791 = vmatprep.subr.bf16.mxu0 0
    %1792 = vmatpush1.bf16.msra.mxu0 0
    %1793 = vmatprep.subr.bf16.mxu0 0
    %1794 = vmatpush1.bf16.msra.mxu0 0
    %1795 = vmatprep.mubr.bf16.mxu0 0
    %1796 = vmatmul.mubr.bf16.gmra.mrb[0].mxu0 %v1708
    %v1797 = vpop.f32.mrb[0].mxu0
    %v1798 = vadd.f32 0.0, %v1797
    %v1799 = vpop.f32.mrb[0].mxu0
    %v1800 = vadd.f32 0.0, %v1799
    %v1801 = vpop.f32.mrb[0].mxu0
    %v1802 = vpop.f32.mrb[0].mxu0
    %1803 = vdwg.mxu0
    %v1804 = vadd.f32 %v1619, %v1757
    %v1805 = vadd.f32 %v1620, %v1759
    %v1806 = vadd.f32 %v1621, %v1798
    %v1807 = vadd.f32 %v1622, %v1800
    %v1808 = vld [vmem:[%s20 + $0x10] sm:$0x11]
    %v1809 = vld [vmem:[%s20 + $0x18] sm:$0x11]
    %v1812 = vunpack.c.l.b16 %v1808
    %v1813 = vunpack.c.h.b16 %v1808
    %v1814 = vunpack.c.l.b16 %v1809
    %v1815 = vunpack.c.h.b16 %v1809
    %v1816 = vpack.c.b16 %v1812, %v1812
    %v1817 = vpack.c.b16 %v1813, %v1813
    %v1818 = vpack.c.b16 %v1814, %v1814
    %v1819 = vpack.c.b16 %v1815, %v1815
    %v1821 = vpack.i.b16 %v1816, %v1816
    %v1823 = vlaneseq
    %v1824 = vshrl.u32 %v1823, 7
    %v1825 = vsub.s32 0, %v1824
    %v1826 = vrot.slane %v1821, %v1825
    %v1828 = vpack.i.b16 %v1817, %v1817
    %v1830 = vlaneseq
    %v1831 = vshrl.u32 %v1830, 7
    %v1832 = vsub.s32 0, %v1831
    %v1833 = vrot.slane %v1828, %v1832
    %v1835 = vpack.i.b16 %v1818, %v1818
    %v1837 = vlaneseq
    %v1838 = vshrl.u32 %v1837, 7
    %v1839 = vsub.s32 0, %v1838
    %v1840 = vrot.slane %v1835, %v1839
    %v1842 = vpack.i.b16 %v1819, %v1819
    %v1844 = vlaneseq
    %v1845 = vshrl.u32 %v1844, 7
    %v1846 = vsub.s32 0, %v1845
    %v1847 = vrot.slane %v1842, %v1846
    %v1852 = vunpack.c.l.b16 %v1826
    %v1853 = vunpack.c.l.b16 %v1833
    %v1854 = vunpack.c.l.b16 %v1840
    %v1855 = vunpack.c.l.b16 %v1847
    %v1856 = vpack.c.b16 %v1853, %v1852
    %v1857 = vpack.c.b16 %v1855, %v1854
    %1858 = vrot.lane.b32.xlu0 %v1856, 34
    %v1859 = vpop.permute.xlu0 %1858
    %1860 = vrot.lane.b32.xlu0 %v1857, 34
    %v1861 = vpop.permute.xlu0 %1860
    %v1862 = vrot.slane %v1859, 4
    %v1863 = vrot.slane %v1861, 4
    %vm1864 = vcmask 277504
    %v1865 = vsel %vm1864, %v1862, %v1859
    %v1866 = vsel %vm302, %v1862, %v1863
    %v1867 = vsel %vm1864, %v1866, %v1861
    %v1871 = vmul.bf16 %v315, %v1865
    %v1872 = vmul.bf16 %v316, %v1867
    %v1873 = vmul.bf16 %v372, %v1863
    %s1874 = scalar_lea.vmem %s2, 32
    %v1875 = vld [vmem:[%s1874] sm:$0xf]
    %v1879 = vunpack.c.l.b16 %v1871
    %v1880 = vunpack.c.h.b16 %v1871
    %v1881 = vunpack.c.l.b16 %v1872
    %v1882 = vunpack.c.h.b16 %v1872
    %v1883 = vunpack.c.l.b16 %v1873
    %v1884 = vpack.c.b16 %v1879, %v1879
    %v1885 = vpack.c.b16 %v1880, %v1880
    %v1886 = vpack.c.b16 %v1881, %v1881
    %v1887 = vpack.c.b16 %v1882, %v1882
    %v1888 = vpack.c.b16 %v1883, %v1883
    %1889 = vrot.lane.b32.xlu0 %v1884, 94
    %v1890 = vpop.permute.xlu0 %1889
    %1891 = vrot.lane.b32.xlu0 %v1885, 94
    %v1892 = vpop.permute.xlu0 %1891
    %1893 = vrot.lane.b32.xlu0 %v1886, 94
    %v1894 = vpop.permute.xlu0 %1893
    %1895 = vrot.lane.b32.xlu0 %v1887, 94
    %v1896 = vpop.permute.xlu0 %1895
    %1897 = vrot.lane.b32.xlu0 %v1888, 94
    %v1898 = vpop.permute.xlu0 %1897
    %vm1899 = vcmask 769024
    %v1900 = vsel %vm1899, %v1890, %v1892
    %v1901 = vsel %vm1899, %v1892, %v1894
    %v1902 = vsel %vm1899, %v1894, %v1896
    %v1903 = vsel %vm1899, %v1896, %v1898
    %v1905 = vsel %vm457, %v1875, 0
    %v1908 = vsel %vm461, %v1900, 0
    %v1911 = vsel %vm461, %v1901, 0
    %v1914 = vsel %vm461, %v1902, 0
    %v1917 = vsel %vm461, %v1903, 0
    %1919 = vmatprep.subr.bf16.mxu0 %v1911
    %1920 = vmatpush1.bf16.msra.mxu0 %v1908
    %1921 = vmatprep.subr.bf16.mxu0 0
    %1922 = vmatpush1.bf16.msra.mxu0 0
    %1923 = vmatprep.subr.bf16.mxu0 0
    %1924 = vmatpush1.bf16.msra.mxu0 0
    %1925 = vmatprep.subr.bf16.mxu0 0
    %1926 = vmatpush1.bf16.msra.mxu0 0
    %1927 = vmatprep.subr.bf16.mxu0 0
    %1928 = vmatpush1.bf16.msra.mxu0 0
    %1929 = vmatprep.subr.bf16.mxu0 0
    %1930 = vmatpush1.bf16.msra.mxu0 0
    %1931 = vmatprep.subr.bf16.mxu0 0
    %1932 = vmatpush1.bf16.msra.mxu0 0
    %1933 = vmatprep.subr.bf16.mxu0 0
    %1934 = vmatpush1.bf16.msra.mxu0 0
    %1935 = vmatprep.subr.bf16.mxu0 0
    %1936 = vmatpush1.bf16.msra.mxu0 0
    %1937 = vmatprep.subr.bf16.mxu0 0
    %1938 = vmatpush1.bf16.msra.mxu0 0
    %1939 = vmatprep.subr.bf16.mxu0 0
    %1940 = vmatpush1.bf16.msra.mxu0 0
    %1941 = vmatprep.subr.bf16.mxu0 0
    %1942 = vmatpush1.bf16.msra.mxu0 0
    %1943 = vmatprep.subr.bf16.mxu0 0
    %1944 = vmatpush1.bf16.msra.mxu0 0
    %1945 = vmatprep.subr.bf16.mxu0 0
    %1946 = vmatpush1.bf16.msra.mxu0 0
    %1947 = vmatprep.subr.bf16.mxu0 0
    %1948 = vmatpush1.bf16.msra.mxu0 0
    %1949 = vmatprep.subr.bf16.mxu0 0
    %1950 = vmatpush1.bf16.msra.mxu0 0
    %1951 = vmatprep.mubr.bf16.mxu0 0
    %1952 = vmatmul.mubr.bf16.gmra.mrb[0].mxu0 %v1905
    %v1953 = vpop.f32.mrb[0].mxu0
    %v1954 = vadd.f32 0.0, %v1953
    %v1955 = vpop.f32.mrb[0].mxu0
    %v1956 = vadd.f32 0.0, %v1955
    %v1957 = vpop.f32.mrb[0].mxu0
    %v1958 = vpop.f32.mrb[0].mxu0
    %1959 = vdwg.mxu0
    %1960 = vmatprep.subr.bf16.mxu0 %v1917
    %1961 = vmatpush1.bf16.msra.mxu0 %v1914
    %1962 = vmatprep.subr.bf16.mxu0 0
    %1963 = vmatpush1.bf16.msra.mxu0 0
    %1964 = vmatprep.subr.bf16.mxu0 0
    %1965 = vmatpush1.bf16.msra.mxu0 0
    %1966 = vmatprep.subr.bf16.mxu0 0
    %1967 = vmatpush1.bf16.msra.mxu0 0
    %1968 = vmatprep.subr.bf16.mxu0 0
    %1969 = vmatpush1.bf16.msra.mxu0 0
    %1970 = vmatprep.subr.bf16.mxu0 0
    %1971 = vmatpush1.bf16.msra.mxu0 0
    %1972 = vmatprep.subr.bf16.mxu0 0
    %1973 = vmatpush1.bf16.msra.mxu0 0
    %1974 = vmatprep.subr.bf16.mxu0 0
    %1975 = vmatpush1.bf16.msra.mxu0 0
    %1976 = vmatprep.subr.bf16.mxu0 0
    %1977 = vmatpush1.bf16.msra.mxu0 0
    %1978 = vmatprep.subr.bf16.mxu0 0
    %1979 = vmatpush1.bf16.msra.mxu0 0
    %1980 = vmatprep.subr.bf16.mxu0 0
    %1981 = vmatpush1.bf16.msra.mxu0 0
    %1982 = vmatprep.subr.bf16.mxu0 0
    %1983 = vmatpush1.bf16.msra.mxu0 0
    %1984 = vmatprep.subr.bf16.mxu0 0
    %1985 = vmatpush1.bf16.msra.mxu0 0
    %1986 = vmatprep.subr.bf16.mxu0 0
    %1987 = vmatpush1.bf16.msra.mxu0 0
    %1988 = vmatprep.subr.bf16.mxu0 0
    %1989 = vmatpush1.bf16.msra.mxu0 0
    %1990 = vmatprep.subr.bf16.mxu0 0
    %1991 = vmatpush1.bf16.msra.mxu0 0
    %1992 = vmatprep.mubr.bf16.mxu0 0
    %1993 = vmatmul.mubr.bf16.gmra.mrb[0].mxu0 %v1905
    %v1994 = vpop.f32.mrb[0].mxu0
    %v1995 = vadd.f32 0.0, %v1994
    %v1996 = vpop.f32.mrb[0].mxu0
    %v1997 = vadd.f32 0.0, %v1996
    %v1998 = vpop.f32.mrb[0].mxu0
    %v1999 = vpop.f32.mrb[0].mxu0
    %2000 = vdwg.mxu0
    %v2001 = vadd.f32 %v1804, %v1954
    %v2002 = vadd.f32 %v1805, %v1956
    %v2003 = vadd.f32 %v1806, %v1995
    %v2004 = vadd.f32 %v1807, %v1997
    %v2005 = vld [vmem:[%s23] sm:$0xff]
    %v2006 = vld [vmem:[%s24] sm:$0xff]
    %s2007 = sld [smem:[#allocation3 + $0x1]]
    %v2008 = vadd.f32 %v2001, %v2002
    %v2009 = vadd.f32 %v2008, %v2003
    %v2010 = vadd.f32 %v2009, %v2004
    %2011 = vadd.xlane.f32.xlu0 %v2010
    %v2012 = vpop.xlane.xlu0 %2011
    %v2013 = vmul.f32 %v2012, 0.001953125
    %v2014 = vsub.f32 %v2001, %v2013
    %v2015 = vsub.f32 %v2002, %v2013
    %v2016 = vsub.f32 %v2003, %v2013
    %v2017 = vsub.f32 %v2004, %v2013
    %v2018 = vmul.f32 %v2014, %v2014
    %v2019 = vmul.f32 %v2015, %v2015
    %v2020 = vmul.f32 %v2016, %v2016
    %v2021 = vmul.f32 %v2017, %v2017
    %v2022 = vadd.f32 %v2018, %v2019
    %v2023 = vadd.f32 %v2022, %v2020
    %v2024 = vadd.f32 %v2023, %v2021
    %2025 = vadd.xlane.f32.xlu0 %v2024
    %v2026 = vpop.xlane.xlu0 %2025
    %v2027 = vmul.f32 %v2026, 0.001953125
    %v2028 = vadd.f32 %v2027, 1e-05
    %v2029 = vrsqrt.pop %v2028
    %v2030 = vmul.f32 %v2029, %v2005
    %2032 = vset.pattern.permute.xlu0 1
    %2033 = vperm.xlu0 %2032, %v2030
    %v2034 = vpop.permute.xlu0 %2033
    %v2036 = vmul.f32 %v2014, %v2034
    %v2037 = vmul.f32 %v2015, %v2034
    %v2038 = vmul.f32 %v2016, %v2034
    %v2039 = vmul.f32 %v2017, %v2034
    %2041 = vset.pattern.permute.xlu0 1
    %2042 = vperm.xlu0 %2041, %v2006
    %v2043 = vpop.permute.xlu0 %2042
    %v2045 = vadd.f32 %v2036, %v2043
    %v2046 = vadd.f32 %v2037, %v2043
    %v2047 = vadd.f32 %v2038, %v2043
    %v2048 = vadd.f32 %v2039, %v2043
    %vm2049 = vcmp.gt.f32.partialorder %v2045, 0.0
    %vm2050 = vcmp.gt.f32.partialorder %v2046, 0.0
    %vm2051 = vcmp.gt.f32.partialorder %v2047, 0.0
    %vm2052 = vcmp.gt.f32.partialorder %v2048, 0.0
    %v2053 = vstv %s2007
    %v2054 = vmul.f32 %v2053, %v2045
    %v2055 = vmul.f32 %v2053, %v2046
    %v2056 = vmul.f32 %v2053, %v2047
    %v2057 = vmul.f32 %v2053, %v2048
    %v2058 = vsel %vm2049, %v2045, %v2054
    %v2059 = vsel %vm2050, %v2046, %v2055
    %v2060 = vsel %vm2051, %v2047, %v2056
    %v2061 = vsel %vm2052, %v2048, %v2057
    %v2062 = vpack.c.bf16 %v2058, %v2058
    %v2063 = vpack.c.bf16 %v2059, %v2059
    %v2064 = vpack.c.bf16 %v2060, %v2060
    %v2065 = vpack.c.bf16 %v2061, %v2061
    %v2066 = vld [vmem:[%s3] sm:$0xf]
    %v2068 = vsel %vm457, %v2066, 0
    %v2071 = vsel %vm461, %v2062, 0
    %v2074 = vsel %vm461, %v2063, 0
    %v2077 = vsel %vm461, %v2064, 0
    %v2080 = vsel %vm461, %v2065, 0
    %2082 = vmatprep.subr.bf16.mxu0 %v2074
    %2083 = vmatpush1.bf16.msra.mxu0 %v2071
    %2084 = vmatprep.subr.bf16.mxu0 0
    %2085 = vmatpush1.bf16.msra.mxu0 0
    %2086 = vmatprep.subr.bf16.mxu0 0
    %2087 = vmatpush1.bf16.msra.mxu0 0
    %2088 = vmatprep.subr.bf16.mxu0 0
    %2089 = vmatpush1.bf16.msra.mxu0 0
    %2090 = vmatprep.subr.bf16.mxu0 0
    %2091 = vmatpush1.bf16.msra.mxu0 0
    %2092 = vmatprep.subr.bf16.mxu0 0
    %2093 = vmatpush1.bf16.msra.mxu0 0
    %2094 = vmatprep.subr.bf16.mxu0 0
    %2095 = vmatpush1.bf16.msra.mxu0 0
    %2096 = vmatprep.subr.bf16.mxu0 0
    %2097 = vmatpush1.bf16.msra.mxu0 0
    %2098 = vmatprep.subr.bf16.mxu0 0
    %2099 = vmatpush1.bf16.msra.mxu0 0
    %2100 = vmatprep.subr.bf16.mxu0 0
    %2101 = vmatpush1.bf16.msra.mxu0 0
    %2102 = vmatprep.subr.bf16.mxu0 0
    %2103 = vmatpush1.bf16.msra.mxu0 0
    %2104 = vmatprep.subr.bf16.mxu0 0
    %2105 = vmatpush1.bf16.msra.mxu0 0
    %2106 = vmatprep.subr.bf16.mxu0 0
    %2107 = vmatpush1.bf16.msra.mxu0 0
    %2108 = vmatprep.subr.bf16.mxu0 0
    %2109 = vmatpush1.bf16.msra.mxu0 0
    %2110 = vmatprep.subr.bf16.mxu0 0
    %2111 = vmatpush1.bf16.msra.mxu0 0
    %2112 = vmatprep.subr.bf16.mxu0 0
    %2113 = vmatpush1.bf16.msra.mxu0 0
    %2114 = vmatprep.mubr.bf16.mxu0 0
    %2115 = vmatmul.mubr.bf16.gmra.mrb[0].mxu0 %v2068
    %v2116 = vpop.f32.mrb[0].mxu0
    %v2117 = vadd.f32 0.0, %v2116
    %v2118 = vpop.f32.mrb[0].mxu0
    %v2119 = vadd.f32 0.0, %v2118
    %v2120 = vpop.f32.mrb[0].mxu0
    %v2121 = vpop.f32.mrb[0].mxu0
    %2122 = vdwg.mxu0
    %2123 = vmatprep.subr.bf16.mxu0 %v2080
    %2124 = vmatpush1.bf16.msra.mxu0 %v2077
    %2125 = vmatprep.subr.bf16.mxu0 0
    %2126 = vmatpush1.bf16.msra.mxu0 0
    %2127 = vmatprep.subr.bf16.mxu0 0
    %2128 = vmatpush1.bf16.msra.mxu0 0
    %2129 = vmatprep.subr.bf16.mxu0 0
    %2130 = vmatpush1.bf16.msra.mxu0 0
    %2131 = vmatprep.subr.bf16.mxu0 0
    %2132 = vmatpush1.bf16.msra.mxu0 0
    %2133 = vmatprep.subr.bf16.mxu0 0
    %2134 = vmatpush1.bf16.msra.mxu0 0
    %2135 = vmatprep.subr.bf16.mxu0 0
    %2136 = vmatpush1.bf16.msra.mxu0 0
    %2137 = vmatprep.subr.bf16.mxu0 0
    %2138 = vmatpush1.bf16.msra.mxu0 0
    %2139 = vmatprep.subr.bf16.mxu0 0
    %2140 = vmatpush1.bf16.msra.mxu0 0
    %2141 = vmatprep.subr.bf16.mxu0 0
    %2142 = vmatpush1.bf16.msra.mxu0 0
    %2143 = vmatprep.subr.bf16.mxu0 0
    %2144 = vmatpush1.bf16.msra.mxu0 0
    %2145 = vmatprep.subr.bf16.mxu0 0
    %2146 = vmatpush1.bf16.msra.mxu0 0
    %2147 = vmatprep.subr.bf16.mxu0 0
    %2148 = vmatpush1.bf16.msra.mxu0 0
    %2149 = vmatprep.subr.bf16.mxu0 0
    %2150 = vmatpush1.bf16.msra.mxu0 0
    %2151 = vmatprep.subr.bf16.mxu0 0
    %2152 = vmatpush1.bf16.msra.mxu0 0
    %2153 = vmatprep.subr.bf16.mxu0 0
    %2154 = vmatpush1.bf16.msra.mxu0 0
    %2155 = vmatprep.mubr.bf16.mxu0 0
    %2156 = vmatmul.mubr.bf16.gmra.mrb[0].mxu0 %v2068
    %v2157 = vpop.f32.mrb[0].mxu0
    %v2158 = vadd.f32 0.0, %v2157
    %v2159 = vpop.f32.mrb[0].mxu0
    %v2160 = vadd.f32 0.0, %v2159
    %v2161 = vpop.f32.mrb[0].mxu0
    %v2162 = vpop.f32.mrb[0].mxu0
    %2163 = vdwg.mxu0
    %s2164 = sld [smem:[#allocation3 + $0x2]]
    %v2165 = vadd.f32 %v2117, %v2119
    %v2166 = vadd.f32 %v2165, %v2158
    %v2167 = vadd.f32 %v2166, %v2160
    %2168 = vadd.xlane.f32.xlu0 %v2167
    %v2169 = vpop.xlane.xlu0 %2168
    %v2170 = vmul.f32 %v2169, 0.001953125
    %v2171 = vsub.f32 %v2117, %v2170
    %v2172 = vsub.f32 %v2119, %v2170
    %v2173 = vsub.f32 %v2158, %v2170
    %v2174 = vsub.f32 %v2160, %v2170
    %v2175 = vmul.f32 %v2171, %v2171
    %v2176 = vmul.f32 %v2172, %v2172
    %v2177 = vmul.f32 %v2173, %v2173
    %v2178 = vmul.f32 %v2174, %v2174
    %v2179 = vadd.f32 %v2175, %v2176
    %v2180 = vadd.f32 %v2179, %v2177
    %v2181 = vadd.f32 %v2180, %v2178
    %2182 = vadd.xlane.f32.xlu0 %v2181
    %v2183 = vpop.xlane.xlu0 %2182
    %v2184 = vmul.f32 %v2183, 0.001953125
    %v2185 = vadd.f32 %v2184, 1e-05
    %v2186 = vrsqrt.pop %v2185
    %v2187 = vmul.f32 %v2186, %v2005
    %2189 = vset.pattern.permute.xlu0 2
    %2190 = vperm.xlu0 %2189, %v2187
    %v2191 = vpop.permute.xlu0 %2190
    %v2193 = vmul.f32 %v2171, %v2191
    %v2194 = vmul.f32 %v2172, %v2191
    %v2195 = vmul.f32 %v2173, %v2191
    %v2196 = vmul.f32 %v2174, %v2191
    %2197 = vset.pattern.permute.xlu0 2
    %2198 = vperm.xlu0 %2197, %v2006
    %v2199 = vpop.permute.xlu0 %2198
    %v2201 = vadd.f32 %v2193, %v2199
    %v2202 = vadd.f32 %v2194, %v2199
    %v2203 = vadd.f32 %v2195, %v2199
    %v2204 = vadd.f32 %v2196, %v2199
    %vm2205 = vcmp.gt.f32.partialorder %v2201, 0.0
    %vm2206 = vcmp.gt.f32.partialorder %v2202, 0.0
    %vm2207 = vcmp.gt.f32.partialorder %v2203, 0.0
    %vm2208 = vcmp.gt.f32.partialorder %v2204, 0.0
    %v2209 = vstv %s2164
    %v2210 = vmul.f32 %v2209, %v2201
    %v2211 = vmul.f32 %v2209, %v2202
    %v2212 = vmul.f32 %v2209, %v2203
    %v2213 = vmul.f32 %v2209, %v2204
    %v2214 = vsel %vm2205, %v2201, %v2210
    %v2215 = vsel %vm2206, %v2202, %v2211
    %v2216 = vsel %vm2207, %v2203, %v2212
    %v2217 = vsel %vm2208, %v2204, %v2213
    %v2218 = vpack.c.bf16 %v2214, %v2214
    %v2219 = vpack.c.bf16 %v2215, %v2215
    %v2220 = vpack.c.bf16 %v2216, %v2216
    %v2221 = vpack.c.bf16 %v2217, %v2217
    %v2222 = vld [vmem:[%s4] sm:$0xf]
    %v2223 = vld [vmem:[%s5] sm:$0xf]
    %v2225 = vsel %vm457, %v2223, 0
    %v2228 = vsel %vm461, %v2218, 0
    %v2231 = vsel %vm461, %v2219, 0
    %v2234 = vsel %vm461, %v2220, 0
    %v2237 = vsel %vm461, %v2221, 0
    %2239 = vmatprep.subr.bf16.mxu0 %v2231
    %2240 = vmatpush1.bf16.msra.mxu0 %v2228
    %2241 = vmatprep.subr.bf16.mxu0 0
    %2242 = vmatpush1.bf16.msra.mxu0 0
    %2243 = vmatprep.subr.bf16.mxu0 0
    %2244 = vmatpush1.bf16.msra.mxu0 0
    %2245 = vmatprep.subr.bf16.mxu0 0
    %2246 = vmatpush1.bf16.msra.mxu0 0
    %2247 = vmatprep.subr.bf16.mxu0 0
    %2248 = vmatpush1.bf16.msra.mxu0 0
    %2249 = vmatprep.subr.bf16.mxu0 0
    %2250 = vmatpush1.bf16.msra.mxu0 0
    %2251 = vmatprep.subr.bf16.mxu0 0
    %2252 = vmatpush1.bf16.msra.mxu0 0
    %2253 = vmatprep.subr.bf16.mxu0 0
    %2254 = vmatpush1.bf16.msra.mxu0 0
    %2255 = vmatprep.subr.bf16.mxu0 0
    %2256 = vmatpush1.bf16.msra.mxu0 0
    %2257 = vmatprep.subr.bf16.mxu0 0
    %2258 = vmatpush1.bf16.msra.mxu0 0
    %2259 = vmatprep.subr.bf16.mxu0 0
    %2260 = vmatpush1.bf16.msra.mxu0 0
    %2261 = vmatprep.subr.bf16.mxu0 0
    %2262 = vmatpush1.bf16.msra.mxu0 0
    %2263 = vmatprep.subr.bf16.mxu0 0
    %2264 = vmatpush1.bf16.msra.mxu0 0
    %2265 = vmatprep.subr.bf16.mxu0 0
    %2266 = vmatpush1.bf16.msra.mxu0 0
    %2267 = vmatprep.subr.bf16.mxu0 0
    %2268 = vmatpush1.bf16.msra.mxu0 0
    %2269 = vmatprep.subr.bf16.mxu0 0
    %2270 = vmatpush1.bf16.msra.mxu0 0
    %2271 = vmatprep.mubr.bf16.mxu0 0
    %2272 = vmatmul.mubr.bf16.gmra.mrb[0].mxu0 %v2225
    %v2273 = vpop.f32.mrb[0].mxu0
    %v2274 = vadd.f32 0.0, %v2273
    %v2275 = vpop.f32.mrb[0].mxu0
    %v2276 = vadd.f32 0.0, %v2275
    %v2277 = vpop.f32.mrb[0].mxu0
    %v2278 = vpop.f32.mrb[0].mxu0
    %2279 = vdwg.mxu0
    %2280 = vmatprep.subr.bf16.mxu0 %v2237
    %2281 = vmatpush1.bf16.msra.mxu0 %v2234
    %2282 = vmatprep.subr.bf16.mxu0 0
    %2283 = vmatpush1.bf16.msra.mxu0 0
    %2284 = vmatprep.subr.bf16.mxu0 0
    %2285 = vmatpush1.bf16.msra.mxu0 0
    %2286 = vmatprep.subr.bf16.mxu0 0
    %2287 = vmatpush1.bf16.msra.mxu0 0
    %2288 = vmatprep.subr.bf16.mxu0 0
    %2289 = vmatpush1.bf16.msra.mxu0 0
    %2290 = vmatprep.subr.bf16.mxu0 0
    %2291 = vmatpush1.bf16.msra.mxu0 0
    %2292 = vmatprep.subr.bf16.mxu0 0
    %2293 = vmatpush1.bf16.msra.mxu0 0
    %2294 = vmatprep.subr.bf16.mxu0 0
    %2295 = vmatpush1.bf16.msra.mxu0 0
    %2296 = vmatprep.subr.bf16.mxu0 0
    %2297 = vmatpush1.bf16.msra.mxu0 0
    %2298 = vmatprep.subr.bf16.mxu0 0
    %2299 = vmatpush1.bf16.msra.mxu0 0
    %2300 = vmatprep.subr.bf16.mxu0 0
    %2301 = vmatpush1.bf16.msra.mxu0 0
    %2302 = vmatprep.subr.bf16.mxu0 0
    %2303 = vmatpush1.bf16.msra.mxu0 0
    %2304 = vmatprep.subr.bf16.mxu0 0
    %2305 = vmatpush1.bf16.msra.mxu0 0
    %2306 = vmatprep.subr.bf16.mxu0 0
    %2307 = vmatpush1.bf16.msra.mxu0 0
    %2308 = vmatprep.subr.bf16.mxu0 0
    %2309 = vmatpush1.bf16.msra.mxu0 0
    %2310 = vmatprep.subr.bf16.mxu0 0
    %2311 = vmatpush1.bf16.msra.mxu0 0
    %2312 = vmatprep.mubr.bf16.mxu0 0
    %2313 = vmatmul.mubr.bf16.gmra.mrb[0].mxu0 %v2225
    %v2314 = vpop.f32.mrb[0].mxu0
    %v2315 = vadd.f32 0.0, %v2314
    %v2316 = vpop.f32.mrb[0].mxu0
    %v2317 = vadd.f32 0.0, %v2316
    %v2318 = vpop.f32.mrb[0].mxu0
    %v2319 = vpop.f32.mrb[0].mxu0
    %2320 = vdwg.mxu0
    %v2322 = vsel %vm457, %v2222, 0
    %v2325 = vsel %vm461, %v276, 0
    %v2328 = vsel %vm461, %v277, 0
    %v2331 = vsel %vm461, %v278, 0
    %v2334 = vsel %vm461, %v279, 0
    %2336 = vmatprep.subr.bf16.mxu0 %v2328
    %2337 = vmatpush1.bf16.msra.mxu0 %v2325
    %2338 = vmatprep.subr.bf16.mxu0 0
    %2339 = vmatpush1.bf16.msra.mxu0 0
    %2340 = vmatprep.subr.bf16.mxu0 0
    %2341 = vmatpush1.bf16.msra.mxu0 0
    %2342 = vmatprep.subr.bf16.mxu0 0
    %2343 = vmatpush1.bf16.msra.mxu0 0
    %2344 = vmatprep.subr.bf16.mxu0 0
    %2345 = vmatpush1.bf16.msra.mxu0 0
    %2346 = vmatprep.subr.bf16.mxu0 0
    %2347 = vmatpush1.bf16.msra.mxu0 0
    %2348 = vmatprep.subr.bf16.mxu0 0
    %2349 = vmatpush1.bf16.msra.mxu0 0
    %2350 = vmatprep.subr.bf16.mxu0 0
    %2351 = vmatpush1.bf16.msra.mxu0 0
    %2352 = vmatprep.subr.bf16.mxu0 0
    %2353 = vmatpush1.bf16.msra.mxu0 0
    %2354 = vmatprep.subr.bf16.mxu0 0
    %2355 = vmatpush1.bf16.msra.mxu0 0
    %2356 = vmatprep.subr.bf16.mxu0 0
    %2357 = vmatpush1.bf16.msra.mxu0 0
    %2358 = vmatprep.subr.bf16.mxu0 0
    %2359 = vmatpush1.bf16.msra.mxu0 0
    %2360 = vmatprep.subr.bf16.mxu0 0
    %2361 = vmatpush1.bf16.msra.mxu0 0
    %2362 = vmatprep.subr.bf16.mxu0 0
    %2363 = vmatpush1.bf16.msra.mxu0 0
    %2364 = vmatprep.subr.bf16.mxu0 0
    %2365 = vmatpush1.bf16.msra.mxu0 0
    %2366 = vmatprep.subr.bf16.mxu0 0
    %2367 = vmatpush1.bf16.msra.mxu0 0
    %2368 = vmatprep.mubr.bf16.mxu0 0
    %2369 = vmatmul.mubr.bf16.gmra.mrb[0].mxu0 %v2322
    %v2370 = vpop.f32.mrb[0].mxu0
    %v2371 = vadd.f32 %v2274, %v2370
    %v2372 = vpop.f32.mrb[0].mxu0
    %v2373 = vadd.f32 %v2276, %v2372
    %v2374 = vpop.f32.mrb[0].mxu0
    %v2375 = vpop.f32.mrb[0].mxu0
    %2376 = vdwg.mxu0
    %2377 = vmatprep.subr.bf16.mxu0 %v2334
    %2378 = vmatpush1.bf16.msra.mxu0 %v2331
    %2379 = vmatprep.subr.bf16.mxu0 0
    %2380 = vmatpush1.bf16.msra.mxu0 0
    %2381 = vmatprep.subr.bf16.mxu0 0
    %2382 = vmatpush1.bf16.msra.mxu0 0
    %2383 = vmatprep.subr.bf16.mxu0 0
    %2384 = vmatpush1.bf16.msra.mxu0 0
    %2385 = vmatprep.subr.bf16.mxu0 0
    %2386 = vmatpush1.bf16.msra.mxu0 0
    %2387 = vmatprep.subr.bf16.mxu0 0
    %2388 = vmatpush1.bf16.msra.mxu0 0
    %2389 = vmatprep.subr.bf16.mxu0 0
    %2390 = vmatpush1.bf16.msra.mxu0 0
    %2391 = vmatprep.subr.bf16.mxu0 0
    %2392 = vmatpush1.bf16.msra.mxu0 0
    %2393 = vmatprep.subr.bf16.mxu0 0
    %2394 = vmatpush1.bf16.msra.mxu0 0
    %2395 = vmatprep.subr.bf16.mxu0 0
    %2396 = vmatpush1.bf16.msra.mxu0 0
    %2397 = vmatprep.subr.bf16.mxu0 0
    %2398 = vmatpush1.bf16.msra.mxu0 0
    %2399 = vmatprep.subr.bf16.mxu0 0
    %2400 = vmatpush1.bf16.msra.mxu0 0
    %2401 = vmatprep.subr.bf16.mxu0 0
    %2402 = vmatpush1.bf16.msra.mxu0 0
    %2403 = vmatprep.subr.bf16.mxu0 0
    %2404 = vmatpush1.bf16.msra.mxu0 0
    %2405 = vmatprep.subr.bf16.mxu0 0
    %2406 = vmatpush1.bf16.msra.mxu0 0
    %2407 = vmatprep.subr.bf16.mxu0 0
    %2408 = vmatpush1.bf16.msra.mxu0 0
    %2409 = vmatprep.mubr.bf16.mxu0 0
    %2410 = vmatmul.mubr.bf16.gmra.mrb[0].mxu0 %v2322
    %v2411 = vpop.f32.mrb[0].mxu0
    %v2412 = vadd.f32 %v2315, %v2411
    %v2413 = vpop.f32.mrb[0].mxu0
    %v2414 = vadd.f32 %v2317, %v2413
    %v2415 = vpop.f32.mrb[0].mxu0
    %v2416 = vpop.f32.mrb[0].mxu0
    %2417 = vdwg.mxu0
    %s2418 = sld [smem:[#allocation3 + $0x3]]
    %v2419 = vadd.f32 %v2371, %v2373
    %v2420 = vadd.f32 %v2419, %v2412
    %v2421 = vadd.f32 %v2420, %v2414
    %2422 = vadd.xlane.f32.xlu0 %v2421
    %v2423 = vpop.xlane.xlu0 %2422
    %v2424 = vmul.f32 %v2423, 0.001953125
    %v2425 = vsub.f32 %v2371, %v2424
    %v2426 = vsub.f32 %v2373, %v2424
    %v2427 = vsub.f32 %v2412, %v2424
    %v2428 = vsub.f32 %v2414, %v2424
    %v2429 = vmul.f32 %v2425, %v2425
    %v2430 = vmul.f32 %v2426, %v2426
    %v2431 = vmul.f32 %v2427, %v2427
    %v2432 = vmul.f32 %v2428, %v2428
    %v2433 = vadd.f32 %v2429, %v2430
    %v2434 = vadd.f32 %v2433, %v2431
    %v2435 = vadd.f32 %v2434, %v2432
    %2436 = vadd.xlane.f32.xlu0 %v2435
    %v2437 = vpop.xlane.xlu0 %2436
    %v2438 = vmul.f32 %v2437, 0.001953125
    %v2439 = vadd.f32 %v2438, 1e-05
    %v2440 = vrsqrt.pop %v2439
    %v2441 = vmul.f32 %v2440, %v2005
    %2443 = vset.pattern.permute.xlu0 3
    %2444 = vperm.xlu0 %2443, %v2441
    %v2445 = vpop.permute.xlu0 %2444
    %v2447 = vmul.f32 %v2425, %v2445
    %v2448 = vmul.f32 %v2426, %v2445
    %v2449 = vmul.f32 %v2427, %v2445
    %v2450 = vmul.f32 %v2428, %v2445
    %2451 = vset.pattern.permute.xlu0 3
    %2452 = vperm.xlu0 %2451, %v2006
    %v2453 = vpop.permute.xlu0 %2452
    %v2455 = vadd.f32 %v2447, %v2453
    %v2456 = vadd.f32 %v2448, %v2453
    %v2457 = vadd.f32 %v2449, %v2453
    %v2458 = vadd.f32 %v2450, %v2453
    %vm2459 = vcmp.gt.f32.partialorder %v2455, 0.0
    %vm2460 = vcmp.gt.f32.partialorder %v2456, 0.0
    %vm2461 = vcmp.gt.f32.partialorder %v2457, 0.0
    %vm2462 = vcmp.gt.f32.partialorder %v2458, 0.0
    %v2463 = vstv %s2418
    %v2464 = vmul.f32 %v2463, %v2455
    %v2465 = vmul.f32 %v2463, %v2456
    %v2466 = vmul.f32 %v2463, %v2457
    %v2467 = vmul.f32 %v2463, %v2458
    %v2468 = vsel %vm2459, %v2455, %v2464
    %v2469 = vsel %vm2460, %v2456, %v2465
    %v2470 = vsel %vm2461, %v2457, %v2466
    %v2471 = vsel %vm2462, %v2458, %v2467
    %v2472 = vpack.c.bf16 %v2468, %v2468
    %v2473 = vpack.c.bf16 %v2469, %v2469
    %v2474 = vpack.c.bf16 %v2470, %v2470
    %v2475 = vpack.c.bf16 %v2471, %v2471
    %v2480 = vunpack.c.l.b16 %v2472
    %v2481 = vunpack.c.l.b16 %v2473
    %v2482 = vunpack.c.l.b16 %v2474
    %v2483 = vunpack.c.l.b16 %v2475
    %v2484 = vpack.c.b16 %v2481, %v2480
    %v2485 = vpack.c.b16 %v2483, %v2482
    %2488 = vst [vmem:[%s26] sm:$0xff] %v2484
    %2489 = vst [vmem:[%s26 + $0x8] sm:$0xff] %v2485
    %v2490 = vld [vmem:[%s17] sm:$0xf]
    %v2491 = vld [vmem:[%s17 + $0x4] sm:$0xf]
    %v2492 = vld [vmem:[%s17 + $0x8] sm:$0xf]
    %v2493 = vld [vmem:[%s17 + $0xc] sm:$0xf]
    %v2494 = vld [vmem:[%s17 + $0x10] sm:$0xf]
    %v2495 = vld [vmem:[%s17 + $0x14] sm:$0xf]
    %v2496 = vld [vmem:[%s17 + $0x18] sm:$0xf]
    %v2497 = vld [vmem:[%s17 + $0x1c] sm:$0xf]
    %v2498 = vld [vmem:[%s17 + $0x20] sm:$0xf]
    %v2499 = vld [vmem:[%s17 + $0x24] sm:$0xf]
    %v2500 = vld [vmem:[%s17 + $0x28] sm:$0xf]
    %v2501 = vld [vmem:[%s17 + $0x2c] sm:$0xf]
    %v2502 = vld [vmem:[%s17 + $0x30] sm:$0xf]
    %v2503 = vld [vmem:[%s17 + $0x34] sm:$0xf]
    %v2504 = vld [vmem:[%s17 + $0x38] sm:$0xf]
    %v2505 = vld [vmem:[%s17 + $0x3c] sm:$0xf]
    %v2506 = vld [vmem:[%s17 + $0x40] sm:$0xf]
    %v2507 = vld [vmem:[%s17 + $0x44] sm:$0xf]
    %v2508 = vld [vmem:[%s17 + $0x48] sm:$0xf]
    %v2509 = vld [vmem:[%s17 + $0x4c] sm:$0xf]
    %v2510 = vld [vmem:[%s17 + $0x50] sm:$0xf]
    %v2511 = vld [vmem:[%s17 + $0x54] sm:$0xf]
    %v2512 = vld [vmem:[%s17 + $0x58] sm:$0xf]
    %v2513 = vld [vmem:[%s17 + $0x5c] sm:$0xf]
    %v2514 = vld [vmem:[%s17 + $0x60] sm:$0xf]
    %v2515 = vld [vmem:[%s17 + $0x64] sm:$0xf]
    %v2516 = vld [vmem:[%s17 + $0x68] sm:$0xf]
    %v2517 = vld [vmem:[%s17 + $0x6c] sm:$0xf]
    %v2518 = vld [vmem:[%s17 + $0x70] sm:$0xf]
    %v2519 = vld [vmem:[%s17 + $0x74] sm:$0xf]
    %v2520 = vld [vmem:[%s17 + $0x78] sm:$0xf]
    %v2521 = vld [vmem:[%s17 + $0x7c] sm:$0xf]
    %v2522 = vld [vmem:[%s17 + $0x80] sm:$0xf]
    %v2523 = vld [vmem:[%s17 + $0x84] sm:$0xf]
    %v2524 = vld [vmem:[%s17 + $0x88] sm:$0xf]
    %v2525 = vld [vmem:[%s17 + $0x8c] sm:$0xf]
    %v2526 = vld [vmem:[%s17 + $0x90] sm:$0xf]
    %v2527 = vld [vmem:[%s17 + $0x94] sm:$0xf]
    %v2528 = vld [vmem:[%s17 + $0x98] sm:$0xf]
    %v2529 = vld [vmem:[%s17 + $0x9c] sm:$0xf]
    %v2530 = vld [vmem:[%s17 + $0xa0] sm:$0xf]
    %v2531 = vld [vmem:[%s17 + $0xa4] sm:$0xf]
    %v2532 = vld [vmem:[%s17 + $0xa8] sm:$0xf]
    %v2533 = vld [vmem:[%s17 + $0xac] sm:$0xf]
    %v2534 = vld [vmem:[%s17 + $0xb0] sm:$0xf]
    %v2535 = vld [vmem:[%s17 + $0xb4] sm:$0xf]
    %v2536 = vld [vmem:[%s17 + $0xb8] sm:$0xf]
    %v2537 = vld [vmem:[%s17 + $0xbc] sm:$0xf]
    %v2538 = vld [vmem:[%s17 + $0xc0] sm:$0xf]
    %v2539 = vld [vmem:[%s17 + $0xc4] sm:$0xf]
    %v2540 = vld [vmem:[%s17 + $0xc8] sm:$0xf]
    %v2541 = vld [vmem:[%s17 + $0xcc] sm:$0xf]
    %v2542 = vld [vmem:[%s17 + $0xd0] sm:$0xf]
    %v2543 = vld [vmem:[%s17 + $0xd4] sm:$0xf]
    %v2544 = vld [vmem:[%s17 + $0xd8] sm:$0xf]
    %v2545 = vld [vmem:[%s17 + $0xdc] sm:$0xf]
    %v2546 = vld [vmem:[%s17 + $0xe0] sm:$0xf]
    %v2547 = vld [vmem:[%s17 + $0xe4] sm:$0xf]
    %v2548 = vld [vmem:[%s17 + $0xe8] sm:$0xf]
    %v2549 = vld [vmem:[%s17 + $0xec] sm:$0xf]
    %v2550 = vld [vmem:[%s17 + $0xf0] sm:$0xf]
    %v2551 = vld [vmem:[%s17 + $0xf4] sm:$0xf]
    %v2552 = vld [vmem:[%s17 + $0xf8] sm:$0xf]
    %v2553 = vld [vmem:[%s17 + $0xfc] sm:$0xf]
    %v2618 = vunpack.c.l.b16 %v2490
    %v2619 = vunpack.c.l.b16 %v2491
    %v2620 = vunpack.c.l.b16 %v2492
    %v2621 = vunpack.c.l.b16 %v2493
    %v2622 = vunpack.c.l.b16 %v2494
    %v2623 = vunpack.c.l.b16 %v2495
    %v2624 = vunpack.c.l.b16 %v2496
    %v2625 = vunpack.c.l.b16 %v2497
    %v2626 = vunpack.c.l.b16 %v2498
    %v2627 = vunpack.c.l.b16 %v2499
    %v2628 = vunpack.c.l.b16 %v2500
    %v2629 = vunpack.c.l.b16 %v2501
    %v2630 = vunpack.c.l.b16 %v2502
    %v2631 = vunpack.c.l.b16 %v2503
    %v2632 = vunpack.c.l.b16 %v2504
    %v2633 = vunpack.c.l.b16 %v2505
    %v2634 = vunpack.c.l.b16 %v2506
    %v2635 = vunpack.c.l.b16 %v2507
    %v2636 = vunpack.c.l.b16 %v2508
    %v2637 = vunpack.c.l.b16 %v2509
    %v2638 = vunpack.c.l.b16 %v2510
    %v2639 = vunpack.c.l.b16 %v2511
    %v2640 = vunpack.c.l.b16 %v2512
    %v2641 = vunpack.c.l.b16 %v2513
    %v2642 = vunpack.c.l.b16 %v2514
    %v2643 = vunpack.c.l.b16 %v2515
    %v2644 = vunpack.c.l.b16 %v2516
    %v2645 = vunpack.c.l.b16 %v2517
    %v2646 = vunpack.c.l.b16 %v2518
    %v2647 = vunpack.c.l.b16 %v2519
    %v2648 = vunpack.c.l.b16 %v2520
    %v2649 = vunpack.c.l.b16 %v2521
    %v2650 = vunpack.c.l.b16 %v2522
    %v2651 = vunpack.c.l.b16 %v2523
    %v2652 = vunpack.c.l.b16 %v2524
    %v2653 = vunpack.c.l.b16 %v2525
    %v2654 = vunpack.c.l.b16 %v2526
    %v2655 = vunpack.c.l.b16 %v2527
    %v2656 = vunpack.c.l.b16 %v2528
    %v2657 = vunpack.c.l.b16 %v2529
    %v2658 = vunpack.c.l.b16 %v2530
    %v2659 = vunpack.c.l.b16 %v2531
    %v2660 = vunpack.c.l.b16 %v2532
    %v2661 = vunpack.c.l.b16 %v2533
    %v2662 = vunpack.c.l.b16 %v2534
    %v2663 = vunpack.c.l.b16 %v2535
    %v2664 = vunpack.c.l.b16 %v2536
    %v2665 = vunpack.c.l.b16 %v2537
    %v2666 = vunpack.c.l.b16 %v2538
    %v2667 = vunpack.c.l.b16 %v2539
    %v2668 = vunpack.c.l.b16 %v2540
    %v2669 = vunpack.c.l.b16 %v2541
    %v2670 = vunpack.c.l.b16 %v2542
    %v2671 = vunpack.c.l.b16 %v2543
    %v2672 = vunpack.c.l.b16 %v2544
    %v2673 = vunpack.c.l.b16 %v2545
    %v2674 = vunpack.c.l.b16 %v2546
    %v2675 = vunpack.c.l.b16 %v2547
    %v2676 = vunpack.c.l.b16 %v2548
    %v2677 = vunpack.c.l.b16 %v2549
    %v2678 = vunpack.c.l.b16 %v2550
    %v2679 = vunpack.c.l.b16 %v2551
    %v2680 = vunpack.c.l.b16 %v2552
    %v2681 = vunpack.c.l.b16 %v2553
    %v2682 = vpack.c.b16 %v2619, %v2618
    %v2683 = vpack.c.b16 %v2621, %v2620
    %v2684 = vpack.c.b16 %v2623, %v2622
    %v2685 = vpack.c.b16 %v2625, %v2624
    %v2686 = vpack.c.b16 %v2627, %v2626
    %v2687 = vpack.c.b16 %v2629, %v2628
    %v2688 = vpack.c.b16 %v2631, %v2630
    %v2689 = vpack.c.b16 %v2633, %v2632
    %v2690 = vpack.c.b16 %v2635, %v2634
    %v2691 = vpack.c.b16 %v2637, %v2636
    %v2692 = vpack.c.b16 %v2639, %v2638
    %v2693 = vpack.c.b16 %v2641, %v2640
    %v2694 = vpack.c.b16 %v2643, %v2642
    %v2695 = vpack.c.b16 %v2645, %v2644
    %v2696 = vpack.c.b16 %v2647, %v2646
    %v2697 = vpack.c.b16 %v2649, %v2648
    %v2698 = vpack.c.b16 %v2651, %v2650
    %v2699 = vpack.c.b16 %v2653, %v2652
    %v2700 = vpack.c.b16 %v2655, %v2654
    %v2701 = vpack.c.b16 %v2657, %v2656
    %v2702 = vpack.c.b16 %v2659, %v2658
    %v2703 = vpack.c.b16 %v2661, %v2660
    %v2704 = vpack.c.b16 %v2663, %v2662
    %v2705 = vpack.c.b16 %v2665, %v2664
    %v2706 = vpack.c.b16 %v2667, %v2666
    %v2707 = vpack.c.b16 %v2669, %v2668
    %v2708 = vpack.c.b16 %v2671, %v2670
    %v2709 = vpack.c.b16 %v2673, %v2672
    %v2710 = vpack.c.b16 %v2675, %v2674
    %v2711 = vpack.c.b16 %v2677, %v2676
    %v2712 = vpack.c.b16 %v2679, %v2678
    %v2713 = vpack.c.b16 %v2681, %v2680
    %2746 = vmatprep.subr.bf16.mxu0 0
    %2747 = vmatpush1.bf16.msra.mxu0 %v2682
    %2748 = vmatprep.subr.bf16.mxu0 0
    %2749 = vmatpush1.bf16.msra.mxu0 %v2683
    %2750 = vmatprep.subr.bf16.mxu0 0
    %2751 = vmatpush1.bf16.msra.mxu0 %v2684
    %2752 = vmatprep.subr.bf16.mxu0 0
    %2753 = vmatpush1.bf16.msra.mxu0 %v2685
    %2754 = vmatprep.subr.bf16.mxu0 0
    %2755 = vmatpush1.bf16.msra.mxu0 %v2686
    %2756 = vmatprep.subr.bf16.mxu0 0
    %2757 = vmatpush1.bf16.msra.mxu0 %v2687
    %2758 = vmatprep.subr.bf16.mxu0 0
    %2759 = vmatpush1.bf16.msra.mxu0 %v2688
    %2760 = vmatprep.subr.bf16.mxu0 0
    %2761 = vmatpush1.bf16.msra.mxu0 %v2689
    %2762 = vmatprep.subr.bf16.mxu0 0
    %2763 = vmatpush1.bf16.msra.mxu0 %v2690
    %2764 = vmatprep.subr.bf16.mxu0 0
    %2765 = vmatpush1.bf16.msra.mxu0 %v2691
    %2766 = vmatprep.subr.bf16.mxu0 0
    %2767 = vmatpush1.bf16.msra.mxu0 %v2692
    %2768 = vmatprep.subr.bf16.mxu0 0
    %2769 = vmatpush1.bf16.msra.mxu0 %v2693
    %2770 = vmatprep.subr.bf16.mxu0 0
    %2771 = vmatpush1.bf16.msra.mxu0 %v2694
    %2772 = vmatprep.subr.bf16.mxu0 0
    %2773 = vmatpush1.bf16.msra.mxu0 %v2695
    %2774 = vmatprep.subr.bf16.mxu0 0
    %2775 = vmatpush1.bf16.msra.mxu0 %v2696
    %2776 = vmatprep.subr.bf16.mxu0 0
    %2777 = vmatpush1.bf16.msra.mxu0 %v2697
    %2778 = vmatprep.mubr.bf16.mxu0 %v2473
    %2779 = vmatmul.mubr.bf16.gmra.mrb[0].mxu0 %v2472
    %v2780 = vpop.f32.mrb[0].mxu0
    %v2781 = vadd.f32 0.0, %v2780
    %v2782 = vpop.f32.mrb[0].mxu0
    %v2783 = vpop.f32.mrb[0].mxu0
    %v2784 = vpop.f32.mrb[0].mxu0
    %2785 = vdwg.mxu0
    %2786 = vmatprep.subr.bf16.mxu0 0
    %2787 = vmatpush1.bf16.msra.mxu0 %v2698
    %2788 = vmatprep.subr.bf16.mxu0 0
    %2789 = vmatpush1.bf16.msra.mxu0 %v2699
    %2790 = vmatprep.subr.bf16.mxu0 0
    %2791 = vmatpush1.bf16.msra.mxu0 %v2700
    %2792 = vmatprep.subr.bf16.mxu0 0
    %2793 = vmatpush1.bf16.msra.mxu0 %v2701
    %2794 = vmatprep.subr.bf16.mxu0 0
    %2795 = vmatpush1.bf16.msra.mxu0 %v2702
    %2796 = vmatprep.subr.bf16.mxu0 0
    %2797 = vmatpush1.bf16.msra.mxu0 %v2703
    %2798 = vmatprep.subr.bf16.mxu0 0
    %2799 = vmatpush1.bf16.msra.mxu0 %v2704
    %2800 = vmatprep.subr.bf16.mxu0 0
    %2801 = vmatpush1.bf16.msra.mxu0 %v2705
    %2802 = vmatprep.subr.bf16.mxu0 0
    %2803 = vmatpush1.bf16.msra.mxu0 %v2706
    %2804 = vmatprep.subr.bf16.mxu0 0
    %2805 = vmatpush1.bf16.msra.mxu0 %v2707
    %2806 = vmatprep.subr.bf16.mxu0 0
    %2807 = vmatpush1.bf16.msra.mxu0 %v2708
    %2808 = vmatprep.subr.bf16.mxu0 0
    %2809 = vmatpush1.bf16.msra.mxu0 %v2709
    %2810 = vmatprep.subr.bf16.mxu0 0
    %2811 = vmatpush1.bf16.msra.mxu0 %v2710
    %2812 = vmatprep.subr.bf16.mxu0 0
    %2813 = vmatpush1.bf16.msra.mxu0 %v2711
    %2814 = vmatprep.subr.bf16.mxu0 0
    %2815 = vmatpush1.bf16.msra.mxu0 %v2712
    %2816 = vmatprep.subr.bf16.mxu0 0
    %2817 = vmatpush1.bf16.msra.mxu0 %v2713
    %2818 = vmatprep.mubr.bf16.mxu0 %v2475
    %2819 = vmatmul.mubr.bf16.gmra.mrb[0].mxu0 %v2474
    %v2820 = vpop.f32.mrb[0].mxu0
    %v2821 = vadd.f32 %v2781, %v2820
    %v2822 = vpop.f32.mrb[0].mxu0
    %v2823 = vpop.f32.mrb[0].mxu0
    %v2824 = vpop.f32.mrb[0].mxu0
    %2825 = vdwg.mxu0
    %v2826 = vpack.c.bf16 %v2821, %v2821
    %v2827 = vld [vmem:[%s6] sm:$0xf]
    %v2829 = vsel %vm457, %v2827, 0
    %v2832 = vsel %vm461, %v2826, 0
    %2834 = vmatprep.subr.bf16.mxu0 0
    %2835 = vmatpush1.bf16.msra.mxu0 %v2832
    %2836 = vmatprep.subr.bf16.mxu0 0
    %2837 = vmatpush1.bf16.msra.mxu0 0
    %2838 = vmatprep.subr.bf16.mxu0 0
    %2839 = vmatpush1.bf16.msra.mxu0 0
    %2840 = vmatprep.subr.bf16.mxu0 0
    %2841 = vmatpush1.bf16.msra.mxu0 0
    %2842 = vmatprep.subr.bf16.mxu0 0
    %2843 = vmatpush1.bf16.msra.mxu0 0
    %2844 = vmatprep.subr.bf16.mxu0 0
    %2845 = vmatpush1.bf16.msra.mxu0 0
    %2846 = vmatprep.subr.bf16.mxu0 0
    %2847 = vmatpush1.bf16.msra.mxu0 0
    %2848 = vmatprep.subr.bf16.mxu0 0
    %2849 = vmatpush1.bf16.msra.mxu0 0
    %2850 = vmatprep.subr.bf16.mxu0 0
    %2851 = vmatpush1.bf16.msra.mxu0 0
    %2852 = vmatprep.subr.bf16.mxu0 0
    %2853 = vmatpush1.bf16.msra.mxu0 0
    %2854 = vmatprep.subr.bf16.mxu0 0
    %2855 = vmatpush1.bf16.msra.mxu0 0
    %2856 = vmatprep.subr.bf16.mxu0 0
    %2857 = vmatpush1.bf16.msra.mxu0 0
    %2858 = vmatprep.subr.bf16.mxu0 0
    %2859 = vmatpush1.bf16.msra.mxu0 0
    %2860 = vmatprep.subr.bf16.mxu0 0
    %2861 = vmatpush1.bf16.msra.mxu0 0
    %2862 = vmatprep.subr.bf16.mxu0 0
    %2863 = vmatpush1.bf16.msra.mxu0 0
    %2864 = vmatprep.subr.bf16.mxu0 0
    %2865 = vmatpush1.bf16.msra.mxu0 0
    %2866 = vmatprep.mubr.bf16.mxu0 0
    %2867 = vmatmul.mubr.bf16.gmra.mrb[0].mxu0 %v2829
    %v2868 = vpop.f32.mrb[0].mxu0
    %v2869 = vadd.f32 0.0, %v2868
    %v2870 = vpop.f32.mrb[0].mxu0
    %v2871 = vpop.f32.mrb[0].mxu0
    %v2872 = vpop.f32.mrb[0].mxu0
    %2873 = vdwg.mxu0
    %v2874 = vld [vmem:[%s23] sm:$0xff]
    %v2875 = vld [vmem:[%s24] sm:$0xff]
    %s2876 = sld [smem:[#allocation3 + $0x4]]
    %2877 = vadd.xlane.f32.xlu0 %v2869
    %v2878 = vpop.xlane.xlu0 %2877
    %v2879 = vmul.f32 %v2878, 0.0078125
    %v2880 = vsub.f32 %v2869, %v2879
    %v2881 = vmul.f32 %v2880, %v2880
    %2882 = vadd.xlane.f32.xlu0 %v2881
    %v2883 = vpop.xlane.xlu0 %2882
    %v2884 = vmul.f32 %v2883, 0.0078125
    %v2885 = vadd.f32 %v2884, 1e-05
    %v2886 = vrsqrt.pop %v2885
    %v2887 = vmul.f32 %v2886, %v2874
    %2889 = vset.pattern.permute.xlu0 4
    %2890 = vperm.xlu0 %2889, %v2887
    %v2891 = vpop.permute.xlu0 %2890
    %v2893 = vmul.f32 %v2880, %v2891
    %2895 = vset.pattern.permute.xlu0 4
    %2896 = vperm.xlu0 %2895, %v2875
    %v2897 = vpop.permute.xlu0 %2896
    %v2899 = vadd.f32 %v2893, %v2897
    %vm2900 = vcmp.gt.f32.partialorder %v2899, 0.0
    %v2901 = vstv %s2876
    %v2902 = vmul.f32 %v2901, %v2899
    %v2903 = vsel %vm2900, %v2899, %v2902
    %v2904 = vpack.c.bf16 %v2903, %v2903
    %2905 = vst [vmem:[#allocation2] sm:$0xff] 0
    %2906 = vst [vmem:[#allocation2 + $0x8] sm:$0xff] 0
    %2907 = vst.msk [vmem:[#allocation2 + $0x10] sm:$0xf] %vm282, 0
    %v2909 = vunpack.c.l.b16 %v2904
    %v2910 = vpack.c.b16 %v2909, %v2909
    %2911 = vrot.lane.b32.xlu0 %v2910, 9
    %v2912 = vpop.permute.xlu0 %2911
    %v2913 = vrot.slane %v2912, 4
    %vm2914 = vcmask 72704
    %v2915 = vsel %vm2914, %v2913, %v2912
    %vm2917 = vcmask 1043528
    %vm2918 = vcmask 72708
    %vm2919 = vmor %vm2918, %vm2917
    %2920 = vst.msk [vmem:[#allocation2] sm:$0xff] %vm2919, %v2915
    %v2921 = vld [vmem:[#allocation2] sm:$0xf]
    %v2922 = vld [vmem:[%s21] sm:$0x1]
    %v2924 = vpack.i.b16 %v2922, %v2922
    %v2926 = vlaneseq
    %v2927 = vshrl.u32 %v2926, 7
    %v2928 = vsub.s32 0, %v2927
    %v2929 = vrot.slane %v2924, %v2928
    %v2930 = vmul.bf16 %v2921, %v2929
    %v2931 = vld [vmem:[%s7] sm:$0xf]
    %v2932 = vld [vmem:[#allocation2] sm:$0xff]
    %v2933 = vshrl.u32 %v2922, 16
    %v2934 = vpack.i.b16 %v2933, %v2933
    %v2936 = vlaneseq
    %v2937 = vshrl.u32 %v2936, 7
    %v2938 = vsub.s32 0, %v2937
    %v2939 = vrot.slane %v2934, %v2938
    %v2941 = vunpack.c.l.b16 %v2939
    %v2942 = vpack.c.b16 %v2941, %v2941
    %2943 = vrot.lane.b32.xlu0 %v2942, 1
    %v2944 = vpop.permute.xlu0 %2943
    %v2945 = vrot.slane %v2944, 4
    %v2946 = vsel %vm417, %v2945, %v2944
    %v2948 = vmul.bf16 %v2932, %v2946
    %s2949 = scalar_lea.vmem %s7, 4
    %v2950 = vld [vmem:[%s2949] sm:$0xf]
    %v2952 = vunpack.c.l.b16 %v2948
    %v2953 = vunpack.c.h.b16 %v2948
    %v2954 = vpack.c.b16 %v2952, %v2952
    %v2955 = vpack.c.b16 %v2953, %v2953
    %2956 = vrot.lane.b32.xlu0 %v2954, 127
    %v2957 = vpop.permute.xlu0 %2956
    %2958 = vrot.lane.b32.xlu0 %v2955, 127
    %v2959 = vpop.permute.xlu0 %2958
    %v2960 = vsel %vm452, %v2957, %v2959
    %v2962 = vsel %vm457, %v2950, 0
    %v2965 = vsel %vm461, %v2960, 0
    %2967 = vmatprep.subr.bf16.mxu0 0
    %2968 = vmatpush1.bf16.msra.mxu0 %v2965
    %2969 = vmatprep.subr.bf16.mxu0 0
    %2970 = vmatpush1.bf16.msra.mxu0 0
    %2971 = vmatprep.subr.bf16.mxu0 0
    %2972 = vmatpush1.bf16.msra.mxu0 0
    %2973 = vmatprep.subr.bf16.mxu0 0
    %2974 = vmatpush1.bf16.msra.mxu0 0
    %2975 = vmatprep.subr.bf16.mxu0 0
    %2976 = vmatpush1.bf16.msra.mxu0 0
    %2977 = vmatprep.subr.bf16.mxu0 0
    %2978 = vmatpush1.bf16.msra.mxu0 0
    %2979 = vmatprep.subr.bf16.mxu0 0
    %2980 = vmatpush1.bf16.msra.mxu0 0
    %2981 = vmatprep.subr.bf16.mxu0 0
    %2982 = vmatpush1.bf16.msra.mxu0 0
    %2983 = vmatprep.subr.bf16.mxu0 0
    %2984 = vmatpush1.bf16.msra.mxu0 0
    %2985 = vmatprep.subr.bf16.mxu0 0
    %2986 = vmatpush1.bf16.msra.mxu0 0
    %2987 = vmatprep.subr.bf16.mxu0 0
    %2988 = vmatpush1.bf16.msra.mxu0 0
    %2989 = vmatprep.subr.bf16.mxu0 0
    %2990 = vmatpush1.bf16.msra.mxu0 0
    %2991 = vmatprep.subr.bf16.mxu0 0
    %2992 = vmatpush1.bf16.msra.mxu0 0
    %2993 = vmatprep.subr.bf16.mxu0 0
    %2994 = vmatpush1.bf16.msra.mxu0 0
    %2995 = vmatprep.subr.bf16.mxu0 0
    %2996 = vmatpush1.bf16.msra.mxu0 0
    %2997 = vmatprep.subr.bf16.mxu0 0
    %2998 = vmatpush1.bf16.msra.mxu0 0
    %2999 = vmatprep.mubr.bf16.mxu0 0
    %3000 = vmatmul.mubr.bf16.gmra.mrb[0].mxu0 %v2962
    %v3001 = vpop.f32.mrb[0].mxu0
    %v3002 = vadd.f32 0.0, %v3001
    %v3003 = vpop.f32.mrb[0].mxu0
    %v3004 = vpop.f32.mrb[0].mxu0
    %v3005 = vpop.f32.mrb[0].mxu0
    %3006 = vdwg.mxu0
    %v3008 = vsel %vm457, %v2931, 0
    %v3011 = vsel %vm461, %v2930, 0
    %3013 = vmatprep.subr.bf16.mxu0 0
    %3014 = vmatpush1.bf16.msra.mxu0 %v3011
    %3015 = vmatprep.subr.bf16.mxu0 0
    %3016 = vmatpush1.bf16.msra.mxu0 0
    %3017 = vmatprep.subr.bf16.mxu0 0
    %3018 = vmatpush1.bf16.msra.mxu0 0
    %3019 = vmatprep.subr.bf16.mxu0 0
    %3020 = vmatpush1.bf16.msra.mxu0 0
    %3021 = vmatprep.subr.bf16.mxu0 0
    %3022 = vmatpush1.bf16.msra.mxu0 0
    %3023 = vmatprep.subr.bf16.mxu0 0
    %3024 = vmatpush1.bf16.msra.mxu0 0
    %3025 = vmatprep.subr.bf16.mxu0 0
    %3026 = vmatpush1.bf16.msra.mxu0 0
    %3027 = vmatprep.subr.bf16.mxu0 0
    %3028 = vmatpush1.bf16.msra.mxu0 0
    %3029 = vmatprep.subr.bf16.mxu0 0
    %3030 = vmatpush1.bf16.msra.mxu0 0
    %3031 = vmatprep.subr.bf16.mxu0 0
    %3032 = vmatpush1.bf16.msra.mxu0 0
    %3033 = vmatprep.subr.bf16.mxu0 0
    %3034 = vmatpush1.bf16.msra.mxu0 0
    %3035 = vmatprep.subr.bf16.mxu0 0
    %3036 = vmatpush1.bf16.msra.mxu0 0
    %3037 = vmatprep.subr.bf16.mxu0 0
    %3038 = vmatpush1.bf16.msra.mxu0 0
    %3039 = vmatprep.subr.bf16.mxu0 0
    %3040 = vmatpush1.bf16.msra.mxu0 0
    %3041 = vmatprep.subr.bf16.mxu0 0
    %3042 = vmatpush1.bf16.msra.mxu0 0
    %3043 = vmatprep.subr.bf16.mxu0 0
    %3044 = vmatpush1.bf16.msra.mxu0 0
    %3045 = vmatprep.mubr.bf16.mxu0 0
    %3046 = vmatmul.mubr.bf16.gmra.mrb[0].mxu0 %v3008
    %v3047 = vpop.f32.mrb[0].mxu0
    %v3048 = vadd.f32 %v3002, %v3047
    %v3049 = vpop.f32.mrb[0].mxu0
    %v3050 = vpop.f32.mrb[0].mxu0
    %v3051 = vpop.f32.mrb[0].mxu0
    %3052 = vdwg.mxu0
    %v3053 = vld [vmem:[%s21] sm:$0x2]
    %v3055 = vpack.i.b16 %v3053, %v3053
    %v3057 = vlaneseq
    %v3058 = vshrl.u32 %v3057, 7
    %v3059 = vsub.s32 1, %v3058
    %v3060 = vrot.slane %v3055, %v3059
    %v3062 = vunpack.c.l.b16 %v3060
    %v3063 = vpack.c.b16 %v3062, %v3062
    %3064 = vrot.lane.b32.xlu0 %v3063, 2
    %v3065 = vpop.permute.xlu0 %3064
    %v3066 = vrot.slane %v3065, 4
    %v3067 = vsel %vm719, %v3066, %v3065
    %v3069 = vmul.bf16 %v2932, %v3067
    %s3070 = scalar_lea.vmem %s7, 8
    %v3071 = vld [vmem:[%s3070] sm:$0xf]
    %v3073 = vunpack.c.l.b16 %v3069
    %v3074 = vunpack.c.h.b16 %v3069
    %v3075 = vpack.c.b16 %v3073, %v3073
    %v3076 = vpack.c.b16 %v3074, %v3074
    %3077 = vrot.lane.b32.xlu0 %v3075, 126
    %v3078 = vpop.permute.xlu0 %3077
    %3079 = vrot.lane.b32.xlu0 %v3076, 126
    %v3080 = vpop.permute.xlu0 %3079
    %v3081 = vsel %vm754, %v3078, %v3080
    %v3083 = vsel %vm457, %v3071, 0
    %v3086 = vsel %vm461, %v3081, 0
    %3088 = vmatprep.subr.bf16.mxu0 0
    %3089 = vmatpush1.bf16.msra.mxu0 %v3086
    %3090 = vmatprep.subr.bf16.mxu0 0
    %3091 = vmatpush1.bf16.msra.mxu0 0
    %3092 = vmatprep.subr.bf16.mxu0 0
    %3093 = vmatpush1.bf16.msra.mxu0 0
    %3094 = vmatprep.subr.bf16.mxu0 0
    %3095 = vmatpush1.bf16.msra.mxu0 0
    %3096 = vmatprep.subr.bf16.mxu0 0
    %3097 = vmatpush1.bf16.msra.mxu0 0
    %3098 = vmatprep.subr.bf16.mxu0 0
    %3099 = vmatpush1.bf16.msra.mxu0 0
    %3100 = vmatprep.subr.bf16.mxu0 0
    %3101 = vmatpush1.bf16.msra.mxu0 0
    %3102 = vmatprep.subr.bf16.mxu0 0
    %3103 = vmatpush1.bf16.msra.mxu0 0
    %3104 = vmatprep.subr.bf16.mxu0 0
    %3105 = vmatpush1.bf16.msra.mxu0 0
    %3106 = vmatprep.subr.bf16.mxu0 0
    %3107 = vmatpush1.bf16.msra.mxu0 0
    %3108 = vmatprep.subr.bf16.mxu0 0
    %3109 = vmatpush1.bf16.msra.mxu0 0
    %3110 = vmatprep.subr.bf16.mxu0 0
    %3111 = vmatpush1.bf16.msra.mxu0 0
    %3112 = vmatprep.subr.bf16.mxu0 0
    %3113 = vmatpush1.bf16.msra.mxu0 0
    %3114 = vmatprep.subr.bf16.mxu0 0
    %3115 = vmatpush1.bf16.msra.mxu0 0
    %3116 = vmatprep.subr.bf16.mxu0 0
    %3117 = vmatpush1.bf16.msra.mxu0 0
    %3118 = vmatprep.subr.bf16.mxu0 0
    %3119 = vmatpush1.bf16.msra.mxu0 0
    %3120 = vmatprep.mubr.bf16.mxu0 0
    %3121 = vmatmul.mubr.bf16.gmra.mrb[0].mxu0 %v3083
    %v3122 = vpop.f32.mrb[0].mxu0
    %v3123 = vadd.f32 0.0, %v3122
    %v3124 = vpop.f32.mrb[0].mxu0
    %v3125 = vpop.f32.mrb[0].mxu0
    %v3126 = vpop.f32.mrb[0].mxu0
    %3127 = vdwg.mxu0
    %v3128 = vadd.f32 %v3048, %v3123
    %v3129 = vshrl.u32 %v3053, 16
    %v3130 = vpack.i.b16 %v3129, %v3129
    %v3132 = vlaneseq
    %v3133 = vshrl.u32 %v3132, 7
    %v3134 = vsub.s32 1, %v3133
    %v3135 = vrot.slane %v3130, %v3134
    %v3137 = vunpack.c.l.b16 %v3135
    %v3138 = vpack.c.b16 %v3137, %v3137
    %3139 = vrot.lane.b32.xlu0 %v3138, 8
    %v3140 = vpop.permute.xlu0 %3139
    %v3141 = vrot.slane %v3140, 4
    %vm3142 = vcmask 64512
    %v3143 = vsel %vm3142, %v3141, %v3140
    %v3145 = vmul.bf16 %v2932, %v3143
    %s3146 = scalar_lea.vmem %s7, 12
    %v3147 = vld [vmem:[%s3146] sm:$0xf]
    %v3149 = vunpack.c.l.b16 %v3145
    %v3150 = vunpack.c.h.b16 %v3145
    %v3151 = vpack.c.b16 %v3149, %v3149
    %v3152 = vpack.c.b16 %v3150, %v3150
    %3153 = vrot.lane.b32.xlu0 %v3151, 120
    %v3154 = vpop.permute.xlu0 %3153
    %3155 = vrot.lane.b32.xlu0 %v3152, 120
    %v3156 = vpop.permute.xlu0 %3155
    %vm3157 = vcmask 982016
    %v3158 = vsel %vm3157, %v3154, %v3156
    %v3160 = vsel %vm457, %v3147, 0
    %v3163 = vsel %vm461, %v3158, 0
    %3165 = vmatprep.subr.bf16.mxu0 0
    %3166 = vmatpush1.bf16.msra.mxu0 %v3163
    %3167 = vmatprep.subr.bf16.mxu0 0
    %3168 = vmatpush1.bf16.msra.mxu0 0
    %3169 = vmatprep.subr.bf16.mxu0 0
    %3170 = vmatpush1.bf16.msra.mxu0 0
    %3171 = vmatprep.subr.bf16.mxu0 0
    %3172 = vmatpush1.bf16.msra.mxu0 0
    %3173 = vmatprep.subr.bf16.mxu0 0
    %3174 = vmatpush1.bf16.msra.mxu0 0
    %3175 = vmatprep.subr.bf16.mxu0 0
    %3176 = vmatpush1.bf16.msra.mxu0 0
    %3177 = vmatprep.subr.bf16.mxu0 0
    %3178 = vmatpush1.bf16.msra.mxu0 0
    %3179 = vmatprep.subr.bf16.mxu0 0
    %3180 = vmatpush1.bf16.msra.mxu0 0
    %3181 = vmatprep.subr.bf16.mxu0 0
    %3182 = vmatpush1.bf16.msra.mxu0 0
    %3183 = vmatprep.subr.bf16.mxu0 0
    %3184 = vmatpush1.bf16.msra.mxu0 0
    %3185 = vmatprep.subr.bf16.mxu0 0
    %3186 = vmatpush1.bf16.msra.mxu0 0
    %3187 = vmatprep.subr.bf16.mxu0 0
    %3188 = vmatpush1.bf16.msra.mxu0 0
    %3189 = vmatprep.subr.bf16.mxu0 0
    %3190 = vmatpush1.bf16.msra.mxu0 0
    %3191 = vmatprep.subr.bf16.mxu0 0
    %3192 = vmatpush1.bf16.msra.mxu0 0
    %3193 = vmatprep.subr.bf16.mxu0 0
    %3194 = vmatpush1.bf16.msra.mxu0 0
    %3195 = vmatprep.subr.bf16.mxu0 0
    %3196 = vmatpush1.bf16.msra.mxu0 0
    %3197 = vmatprep.mubr.bf16.mxu0 0
    %3198 = vmatmul.mubr.bf16.gmra.mrb[0].mxu0 %v3160
    %v3199 = vpop.f32.mrb[0].mxu0
    %v3200 = vadd.f32 0.0, %v3199
    %v3201 = vpop.f32.mrb[0].mxu0
    %v3202 = vpop.f32.mrb[0].mxu0
    %v3203 = vpop.f32.mrb[0].mxu0
    %3204 = vdwg.mxu0
    %v3205 = vadd.f32 %v3128, %v3200
    %v3206 = vld [vmem:[%s21] sm:$0x4]
    %v3208 = vpack.i.b16 %v3206, %v3206
    %v3210 = vlaneseq
    %v3211 = vshrl.u32 %v3210, 7
    %v3212 = vsub.s32 2, %v3211
    %v3213 = vrot.slane %v3208, %v3212
    %v3215 = vunpack.c.l.b16 %v3213
    %v3216 = vpack.c.b16 %v3215, %v3215
    %3217 = vrot.lane.b32.xlu0 %v3216, 9
    %v3218 = vpop.permute.xlu0 %3217
    %v3219 = vrot.slane %v3218, 4
    %v3220 = vsel %vm2914, %v3219, %v3218
    %v3222 = vmul.bf16 %v2932, %v3220
    %s3223 = scalar_lea.vmem %s7, 16
    %v3224 = vld [vmem:[%s3223] sm:$0xf]
    %v3226 = vunpack.c.l.b16 %v3222
    %v3227 = vunpack.c.h.b16 %v3222
    %v3228 = vpack.c.b16 %v3226, %v3226
    %v3229 = vpack.c.b16 %v3227, %v3227
    %3230 = vrot.lane.b32.xlu0 %v3228, 119
    %v3231 = vpop.permute.xlu0 %3230
    %3232 = vrot.lane.b32.xlu0 %v3229, 119
    %v3233 = vpop.permute.xlu0 %3232
    %vm3234 = vcmask 973824
    %v3235 = vsel %vm3234, %v3231, %v3233
    %v3237 = vsel %vm457, %v3224, 0
    %v3240 = vsel %vm461, %v3235, 0
    %3242 = vmatprep.subr.bf16.mxu0 0
    %3243 = vmatpush1.bf16.msra.mxu0 %v3240
    %3244 = vmatprep.subr.bf16.mxu0 0
    %3245 = vmatpush1.bf16.msra.mxu0 0
    %3246 = vmatprep.subr.bf16.mxu0 0
    %3247 = vmatpush1.bf16.msra.mxu0 0
    %3248 = vmatprep.subr.bf16.mxu0 0
    %3249 = vmatpush1.bf16.msra.mxu0 0
    %3250 = vmatprep.subr.bf16.mxu0 0
    %3251 = vmatpush1.bf16.msra.mxu0 0
    %3252 = vmatprep.subr.bf16.mxu0 0
    %3253 = vmatpush1.bf16.msra.mxu0 0
    %3254 = vmatprep.subr.bf16.mxu0 0
    %3255 = vmatpush1.bf16.msra.mxu0 0
    %3256 = vmatprep.subr.bf16.mxu0 0
    %3257 = vmatpush1.bf16.msra.mxu0 0
    %3258 = vmatprep.subr.bf16.mxu0 0
    %3259 = vmatpush1.bf16.msra.mxu0 0
    %3260 = vmatprep.subr.bf16.mxu0 0
    %3261 = vmatpush1.bf16.msra.mxu0 0
    %3262 = vmatprep.subr.bf16.mxu0 0
    %3263 = vmatpush1.bf16.msra.mxu0 0
    %3264 = vmatprep.subr.bf16.mxu0 0
    %3265 = vmatpush1.bf16.msra.mxu0 0
    %3266 = vmatprep.subr.bf16.mxu0 0
    %3267 = vmatpush1.bf16.msra.mxu0 0
    %3268 = vmatprep.subr.bf16.mxu0 0
    %3269 = vmatpush1.bf16.msra.mxu0 0
    %3270 = vmatprep.subr.bf16.mxu0 0
    %3271 = vmatpush1.bf16.msra.mxu0 0
    %3272 = vmatprep.subr.bf16.mxu0 0
    %3273 = vmatpush1.bf16.msra.mxu0 0
    %3274 = vmatprep.mubr.bf16.mxu0 0
    %3275 = vmatmul.mubr.bf16.gmra.mrb[0].mxu0 %v3237
    %v3276 = vpop.f32.mrb[0].mxu0
    %v3277 = vadd.f32 0.0, %v3276
    %v3278 = vpop.f32.mrb[0].mxu0
    %v3279 = vpop.f32.mrb[0].mxu0
    %v3280 = vpop.f32.mrb[0].mxu0
    %3281 = vdwg.mxu0
    %v3282 = vadd.f32 %v3205, %v3277
    %v3283 = vshrl.u32 %v3206, 16
    %v3284 = vpack.i.b16 %v3283, %v3283
    %v3286 = vlaneseq
    %v3287 = vshrl.u32 %v3286, 7
    %v3288 = vsub.s32 2, %v3287
    %v3289 = vrot.slane %v3284, %v3288
    %v3291 = vunpack.c.l.b16 %v3289
    %v3292 = vpack.c.b16 %v3291, %v3291
    %3293 = vrot.lane.b32.xlu0 %v3292, 10
    %v3294 = vpop.permute.xlu0 %3293
    %v3295 = vrot.slane %v3294, 4
    %vm3296 = vcmask 80896
    %v3297 = vsel %vm3296, %v3295, %v3294
    %v3299 = vmul.bf16 %v2932, %v3297
    %s3300 = scalar_lea.vmem %s7, 20
    %v3301 = vld [vmem:[%s3300] sm:$0xf]
    %v3303 = vunpack.c.l.b16 %v3299
    %v3304 = vunpack.c.h.b16 %v3299
    %v3305 = vpack.c.b16 %v3303, %v3303
    %v3306 = vpack.c.b16 %v3304, %v3304
    %3307 = vrot.lane.b32.xlu0 %v3305, 118
    %v3308 = vpop.permute.xlu0 %3307
    %3309 = vrot.lane.b32.xlu0 %v3306, 118
    %v3310 = vpop.permute.xlu0 %3309
    %vm3311 = vcmask 965632
    %v3312 = vsel %vm3311, %v3308, %v3310
    %v3314 = vsel %vm457, %v3301, 0
    %v3317 = vsel %vm461, %v3312, 0
    %3319 = vmatprep.subr.bf16.mxu0 0
    %3320 = vmatpush1.bf16.msra.mxu0 %v3317
    %3321 = vmatprep.subr.bf16.mxu0 0
    %3322 = vmatpush1.bf16.msra.mxu0 0
    %3323 = vmatprep.subr.bf16.mxu0 0
    %3324 = vmatpush1.bf16.msra.mxu0 0
    %3325 = vmatprep.subr.bf16.mxu0 0
    %3326 = vmatpush1.bf16.msra.mxu0 0
    %3327 = vmatprep.subr.bf16.mxu0 0
    %3328 = vmatpush1.bf16.msra.mxu0 0
    %3329 = vmatprep.subr.bf16.mxu0 0
    %3330 = vmatpush1.bf16.msra.mxu0 0
    %3331 = vmatprep.subr.bf16.mxu0 0
    %3332 = vmatpush1.bf16.msra.mxu0 0
    %3333 = vmatprep.subr.bf16.mxu0 0
    %3334 = vmatpush1.bf16.msra.mxu0 0
    %3335 = vmatprep.subr.bf16.mxu0 0
    %3336 = vmatpush1.bf16.msra.mxu0 0
    %3337 = vmatprep.subr.bf16.mxu0 0
    %3338 = vmatpush1.bf16.msra.mxu0 0
    %3339 = vmatprep.subr.bf16.mxu0 0
    %3340 = vmatpush1.bf16.msra.mxu0 0
    %3341 = vmatprep.subr.bf16.mxu0 0
    %3342 = vmatpush1.bf16.msra.mxu0 0
    %3343 = vmatprep.subr.bf16.mxu0 0
    %3344 = vmatpush1.bf16.msra.mxu0 0
    %3345 = vmatprep.subr.bf16.mxu0 0
    %3346 = vmatpush1.bf16.msra.mxu0 0
    %3347 = vmatprep.subr.bf16.mxu0 0
    %3348 = vmatpush1.bf16.msra.mxu0 0
    %3349 = vmatprep.subr.bf16.mxu0 0
    %3350 = vmatpush1.bf16.msra.mxu0 0
    %3351 = vmatprep.mubr.bf16.mxu0 0
    %3352 = vmatmul.mubr.bf16.gmra.mrb[0].mxu0 %v3314
    %v3353 = vpop.f32.mrb[0].mxu0
    %v3354 = vadd.f32 0.0, %v3353
    %v3355 = vpop.f32.mrb[0].mxu0
    %v3356 = vpop.f32.mrb[0].mxu0
    %v3357 = vpop.f32.mrb[0].mxu0
    %3358 = vdwg.mxu0
    %v3359 = vadd.f32 %v3282, %v3354
    %v3360 = vld [vmem:[%s21] sm:$0x8]
    %v3362 = vpack.i.b16 %v3360, %v3360
    %v3364 = vlaneseq
    %v3365 = vshrl.u32 %v3364, 7
    %v3366 = vsub.s32 3, %v3365
    %v3367 = vrot.slane %v3362, %v3366
    %v3369 = vunpack.c.l.b16 %v3367
    %v3370 = vpack.c.b16 %v3369, %v3369
    %3371 = vrot.lane.b32.xlu0 %v3370, 16
    %v3372 = vpop.permute.xlu0 %3371
    %v3373 = vrot.slane %v3372, 4
    %v3374 = vsel %vm904, %v3373, %v3372
    %v3376 = vmul.bf16 %v2932, %v3374
    %s3377 = scalar_lea.vmem %s7, 24
    %v3378 = vld [vmem:[%s3377] sm:$0xf]
    %v3380 = vunpack.c.l.b16 %v3376
    %v3381 = vunpack.c.h.b16 %v3376
    %v3382 = vpack.c.b16 %v3380, %v3380
    %v3383 = vpack.c.b16 %v3381, %v3381
    %3384 = vrot.lane.b32.xlu0 %v3382, 112
    %v3385 = vpop.permute.xlu0 %3384
    %3386 = vrot.lane.b32.xlu0 %v3383, 112
    %v3387 = vpop.permute.xlu0 %3386
    %v3388 = vsel %vm939, %v3385, %v3387
    %v3390 = vsel %vm457, %v3378, 0
    %v3393 = vsel %vm461, %v3388, 0
    %3395 = vmatprep.subr.bf16.mxu0 0
    %3396 = vmatpush1.bf16.msra.mxu0 %v3393
    %3397 = vmatprep.subr.bf16.mxu0 0
    %3398 = vmatpush1.bf16.msra.mxu0 0
    %3399 = vmatprep.subr.bf16.mxu0 0
    %3400 = vmatpush1.bf16.msra.mxu0 0
    %3401 = vmatprep.subr.bf16.mxu0 0
    %3402 = vmatpush1.bf16.msra.mxu0 0
    %3403 = vmatprep.subr.bf16.mxu0 0
    %3404 = vmatpush1.bf16.msra.mxu0 0
    %3405 = vmatprep.subr.bf16.mxu0 0
    %3406 = vmatpush1.bf16.msra.mxu0 0
    %3407 = vmatprep.subr.bf16.mxu0 0
    %3408 = vmatpush1.bf16.msra.mxu0 0
    %3409 = vmatprep.subr.bf16.mxu0 0
    %3410 = vmatpush1.bf16.msra.mxu0 0
    %3411 = vmatprep.subr.bf16.mxu0 0
    %3412 = vmatpush1.bf16.msra.mxu0 0
    %3413 = vmatprep.subr.bf16.mxu0 0
    %3414 = vmatpush1.bf16.msra.mxu0 0
    %3415 = vmatprep.subr.bf16.mxu0 0
    %3416 = vmatpush1.bf16.msra.mxu0 0
    %3417 = vmatprep.subr.bf16.mxu0 0
    %3418 = vmatpush1.bf16.msra.mxu0 0
    %3419 = vmatprep.subr.bf16.mxu0 0
    %3420 = vmatpush1.bf16.msra.mxu0 0
    %3421 = vmatprep.subr.bf16.mxu0 0
    %3422 = vmatpush1.bf16.msra.mxu0 0
    %3423 = vmatprep.subr.bf16.mxu0 0
    %3424 = vmatpush1.bf16.msra.mxu0 0
    %3425 = vmatprep.subr.bf16.mxu0 0
    %3426 = vmatpush1.bf16.msra.mxu0 0
    %3427 = vmatprep.mubr.bf16.mxu0 0
    %3428 = vmatmul.mubr.bf16.gmra.mrb[0].mxu0 %v3390
    %v3429 = vpop.f32.mrb[0].mxu0
    %v3430 = vadd.f32 0.0, %v3429
    %v3431 = vpop.f32.mrb[0].mxu0
    %v3432 = vpop.f32.mrb[0].mxu0
    %v3433 = vpop.f32.mrb[0].mxu0
    %3434 = vdwg.mxu0
    %v3435 = vadd.f32 %v3359, %v3430
    %v3436 = vshrl.u32 %v3360, 16
    %v3437 = vpack.i.b16 %v3436, %v3436
    %v3439 = vlaneseq
    %v3440 = vshrl.u32 %v3439, 7
    %v3441 = vsub.s32 3, %v3440
    %v3442 = vrot.slane %v3437, %v3441
    %v3444 = vunpack.c.l.b16 %v3442
    %v3445 = vpack.c.b16 %v3444, %v3444
    %3446 = vrot.lane.b32.xlu0 %v3445, 17
    %v3447 = vpop.permute.xlu0 %3446
    %v3448 = vrot.slane %v3447, 4
    %v3449 = vsel %vm300, %v3448, %v3447
    %v3451 = vmul.bf16 %v2932, %v3449
    %s3452 = scalar_lea.vmem %s7, 28
    %v3453 = vld [vmem:[%s3452] sm:$0xf]
    %v3455 = vunpack.c.l.b16 %v3451
    %v3456 = vunpack.c.h.b16 %v3451
    %v3457 = vpack.c.b16 %v3455, %v3455
    %v3458 = vpack.c.b16 %v3456, %v3456
    %3459 = vrot.lane.b32.xlu0 %v3457, 111
    %v3460 = vpop.permute.xlu0 %3459
    %3461 = vrot.lane.b32.xlu0 %v3458, 111
    %v3462 = vpop.permute.xlu0 %3461
    %v3463 = vsel %vm1135, %v3460, %v3462
    %v3465 = vsel %vm457, %v3453, 0
    %v3468 = vsel %vm461, %v3463, 0
    %3470 = vmatprep.subr.bf16.mxu0 0
    %3471 = vmatpush1.bf16.msra.mxu0 %v3468
    %3472 = vmatprep.subr.bf16.mxu0 0
    %3473 = vmatpush1.bf16.msra.mxu0 0
    %3474 = vmatprep.subr.bf16.mxu0 0
    %3475 = vmatpush1.bf16.msra.mxu0 0
    %3476 = vmatprep.subr.bf16.mxu0 0
    %3477 = vmatpush1.bf16.msra.mxu0 0
    %3478 = vmatprep.subr.bf16.mxu0 0
    %3479 = vmatpush1.bf16.msra.mxu0 0
    %3480 = vmatprep.subr.bf16.mxu0 0
    %3481 = vmatpush1.bf16.msra.mxu0 0
    %3482 = vmatprep.subr.bf16.mxu0 0
    %3483 = vmatpush1.bf16.msra.mxu0 0
    %3484 = vmatprep.subr.bf16.mxu0 0
    %3485 = vmatpush1.bf16.msra.mxu0 0
    %3486 = vmatprep.subr.bf16.mxu0 0
    %3487 = vmatpush1.bf16.msra.mxu0 0
    %3488 = vmatprep.subr.bf16.mxu0 0
    %3489 = vmatpush1.bf16.msra.mxu0 0
    %3490 = vmatprep.subr.bf16.mxu0 0
    %3491 = vmatpush1.bf16.msra.mxu0 0
    %3492 = vmatprep.subr.bf16.mxu0 0
    %3493 = vmatpush1.bf16.msra.mxu0 0
    %3494 = vmatprep.subr.bf16.mxu0 0
    %3495 = vmatpush1.bf16.msra.mxu0 0
    %3496 = vmatprep.subr.bf16.mxu0 0
    %3497 = vmatpush1.bf16.msra.mxu0 0
    %3498 = vmatprep.subr.bf16.mxu0 0
    %3499 = vmatpush1.bf16.msra.mxu0 0
    %3500 = vmatprep.subr.bf16.mxu0 0
    %3501 = vmatpush1.bf16.msra.mxu0 0
    %3502 = vmatprep.mubr.bf16.mxu0 0
    %3503 = vmatmul.mubr.bf16.gmra.mrb[0].mxu0 %v3465
    %v3504 = vpop.f32.mrb[0].mxu0
    %v3505 = vadd.f32 0.0, %v3504
    %v3506 = vpop.f32.mrb[0].mxu0
    %v3507 = vpop.f32.mrb[0].mxu0
    %v3508 = vpop.f32.mrb[0].mxu0
    %3509 = vdwg.mxu0
    %v3510 = vadd.f32 %v3435, %v3505
    %v3511 = vld [vmem:[%s21 + $0x4] sm:$0x1]
    %v3513 = vpack.i.b16 %v3511, %v3511
    %v3515 = vlaneseq
    %v3516 = vshrl.u32 %v3515, 7
    %v3517 = vsub.s32 0, %v3516
    %v3518 = vrot.slane %v3513, %v3517
    %v3520 = vunpack.c.l.b16 %v3518
    %v3521 = vpack.c.b16 %v3520, %v3520
    %3522 = vrot.lane.b32.xlu0 %v3521, 18
    %v3523 = vpop.permute.xlu0 %3522
    %v3524 = vrot.slane %v3523, 4
    %v3525 = vsel %vm1285, %v3524, %v3523
    %v3527 = vmul.bf16 %v2932, %v3525
    %s3528 = scalar_lea.vmem %s7, 32
    %v3529 = vld [vmem:[%s3528] sm:$0xf]
    %v3531 = vunpack.c.l.b16 %v3527
    %v3532 = vunpack.c.h.b16 %v3527
    %v3533 = vpack.c.b16 %v3531, %v3531
    %v3534 = vpack.c.b16 %v3532, %v3532
    %3535 = vrot.lane.b32.xlu0 %v3533, 110
    %v3536 = vpop.permute.xlu0 %3535
    %3537 = vrot.lane.b32.xlu0 %v3534, 110
    %v3538 = vpop.permute.xlu0 %3537
    %v3539 = vsel %vm1320, %v3536, %v3538
    %v3541 = vsel %vm457, %v3529, 0
    %v3544 = vsel %vm461, %v3539, 0
    %3546 = vmatprep.subr.bf16.mxu0 0
    %3547 = vmatpush1.bf16.msra.mxu0 %v3544
    %3548 = vmatprep.subr.bf16.mxu0 0
    %3549 = vmatpush1.bf16.msra.mxu0 0
    %3550 = vmatprep.subr.bf16.mxu0 0
    %3551 = vmatpush1.bf16.msra.mxu0 0
    %3552 = vmatprep.subr.bf16.mxu0 0
    %3553 = vmatpush1.bf16.msra.mxu0 0
    %3554 = vmatprep.subr.bf16.mxu0 0
    %3555 = vmatpush1.bf16.msra.mxu0 0
    %3556 = vmatprep.subr.bf16.mxu0 0
    %3557 = vmatpush1.bf16.msra.mxu0 0
    %3558 = vmatprep.subr.bf16.mxu0 0
    %3559 = vmatpush1.bf16.msra.mxu0 0
    %3560 = vmatprep.subr.bf16.mxu0 0
    %3561 = vmatpush1.bf16.msra.mxu0 0
    %3562 = vmatprep.subr.bf16.mxu0 0
    %3563 = vmatpush1.bf16.msra.mxu0 0
    %3564 = vmatprep.subr.bf16.mxu0 0
    %3565 = vmatpush1.bf16.msra.mxu0 0
    %3566 = vmatprep.subr.bf16.mxu0 0
    %3567 = vmatpush1.bf16.msra.mxu0 0
    %3568 = vmatprep.subr.bf16.mxu0 0
    %3569 = vmatpush1.bf16.msra.mxu0 0
    %3570 = vmatprep.subr.bf16.mxu0 0
    %3571 = vmatpush1.bf16.msra.mxu0 0
    %3572 = vmatprep.subr.bf16.mxu0 0
    %3573 = vmatpush1.bf16.msra.mxu0 0
    %3574 = vmatprep.subr.bf16.mxu0 0
    %3575 = vmatpush1.bf16.msra.mxu0 0
    %3576 = vmatprep.subr.bf16.mxu0 0
    %3577 = vmatpush1.bf16.msra.mxu0 0
    %3578 = vmatprep.mubr.bf16.mxu0 0
    %3579 = vmatmul.mubr.bf16.gmra.mrb[0].mxu0 %v3541
    %v3580 = vpop.f32.mrb[0].mxu0
    %v3581 = vadd.f32 0.0, %v3580
    %v3582 = vpop.f32.mrb[0].mxu0
    %v3583 = vpop.f32.mrb[0].mxu0
    %v3584 = vpop.f32.mrb[0].mxu0
    %3585 = vdwg.mxu0
    %v3586 = vadd.f32 %v3510, %v3581
    %v3587 = vld [vmem:[%s23] sm:$0xff]
    %v3588 = vld [vmem:[%s24] sm:$0xff]
    %s3589 = sld [smem:[#allocation3 + $0x5]]
    %3590 = vadd.xlane.f32.xlu0 %v3586
    %v3591 = vpop.xlane.xlu0 %3590
    %v3592 = vmul.f32 %v3591, 0.0078125
    %v3593 = vsub.f32 %v3586, %v3592
    %v3594 = vmul.f32 %v3593, %v3593
    %3595 = vadd.xlane.f32.xlu0 %v3594
    %v3596 = vpop.xlane.xlu0 %3595
    %v3597 = vmul.f32 %v3596, 0.0078125
    %v3598 = vadd.f32 %v3597, 1e-05
    %v3599 = vrsqrt.pop %v3598
    %v3600 = vmul.f32 %v3599, %v3587
    %3602 = vset.pattern.permute.xlu0 5
    %3603 = vperm.xlu0 %3602, %v3600
    %v3604 = vpop.permute.xlu0 %3603
    %v3606 = vmul.f32 %v3593, %v3604
    %3608 = vset.pattern.permute.xlu0 5
    %3609 = vperm.xlu0 %3608, %v3588
    %v3610 = vpop.permute.xlu0 %3609
    %v3612 = vadd.f32 %v3606, %v3610
    %vm3613 = vcmp.gt.f32.partialorder %v3612, 0.0
    %v3614 = vstv %s3589
    %v3615 = vmul.f32 %v3614, %v3612
    %v3616 = vsel %vm3613, %v3612, %v3615
    %v3617 = vpack.c.bf16 %v3616, %v3616
    %v3618 = vld [vmem:[%s8] sm:$0xf]
    %v3620 = vsel %vm457, %v3618, 0
    %v3623 = vsel %vm461, %v3617, 0
    %3625 = vmatprep.subr.bf16.mxu0 0
    %3626 = vmatpush1.bf16.msra.mxu0 %v3623
    %3627 = vmatprep.subr.bf16.mxu0 0
    %3628 = vmatpush1.bf16.msra.mxu0 0
    %3629 = vmatprep.subr.bf16.mxu0 0
    %3630 = vmatpush1.bf16.msra.mxu0 0
    %3631 = vmatprep.subr.bf16.mxu0 0
    %3632 = vmatpush1.bf16.msra.mxu0 0
    %3633 = vmatprep.subr.bf16.mxu0 0
    %3634 = vmatpush1.bf16.msra.mxu0 0
    %3635 = vmatprep.subr.bf16.mxu0 0
    %3636 = vmatpush1.bf16.msra.mxu0 0
    %3637 = vmatprep.subr.bf16.mxu0 0
    %3638 = vmatpush1.bf16.msra.mxu0 0
    %3639 = vmatprep.subr.bf16.mxu0 0
    %3640 = vmatpush1.bf16.msra.mxu0 0
    %3641 = vmatprep.subr.bf16.mxu0 0
    %3642 = vmatpush1.bf16.msra.mxu0 0
    %3643 = vmatprep.subr.bf16.mxu0 0
    %3644 = vmatpush1.bf16.msra.mxu0 0
    %3645 = vmatprep.subr.bf16.mxu0 0
    %3646 = vmatpush1.bf16.msra.mxu0 0
    %3647 = vmatprep.subr.bf16.mxu0 0
    %3648 = vmatpush1.bf16.msra.mxu0 0
    %3649 = vmatprep.subr.bf16.mxu0 0
    %3650 = vmatpush1.bf16.msra.mxu0 0
    %3651 = vmatprep.subr.bf16.mxu0 0
    %3652 = vmatpush1.bf16.msra.mxu0 0
    %3653 = vmatprep.subr.bf16.mxu0 0
    %3654 = vmatpush1.bf16.msra.mxu0 0
    %3655 = vmatprep.subr.bf16.mxu0 0
    %3656 = vmatpush1.bf16.msra.mxu0 0
    %3657 = vmatprep.mubr.bf16.mxu0 0
    %3658 = vmatmul.mubr.bf16.gmra.mrb[0].mxu0 %v3620
    %v3659 = vpop.f32.mrb[0].mxu0
    %v3660 = vadd.f32 0.0, %v3659
    %v3661 = vpop.f32.mrb[0].mxu0
    %v3662 = vpop.f32.mrb[0].mxu0
    %v3663 = vpop.f32.mrb[0].mxu0
    %3664 = vdwg.mxu0
    %s3665 = sld [smem:[#allocation3 + $0x6]]
    %3666 = vadd.xlane.f32.xlu0 %v3660
    %v3667 = vpop.xlane.xlu0 %3666
    %v3668 = vmul.f32 %v3667, 0.0078125
    %v3669 = vsub.f32 %v3660, %v3668
    %v3670 = vmul.f32 %v3669, %v3669
    %3671 = vadd.xlane.f32.xlu0 %v3670
    %v3672 = vpop.xlane.xlu0 %3671
    %v3673 = vmul.f32 %v3672, 0.0078125
    %v3674 = vadd.f32 %v3673, 1e-05
    %v3675 = vrsqrt.pop %v3674
    %v3676 = vmul.f32 %v3675, %v3587
    %3678 = vset.pattern.permute.xlu0 6
    %3679 = vperm.xlu0 %3678, %v3676
    %v3680 = vpop.permute.xlu0 %3679
    %v3682 = vmul.f32 %v3669, %v3680
    %3683 = vset.pattern.permute.xlu0 6
    %3684 = vperm.xlu0 %3683, %v3588
    %v3685 = vpop.permute.xlu0 %3684
    %v3687 = vadd.f32 %v3682, %v3685
    %vm3688 = vcmp.gt.f32.partialorder %v3687, 0.0
    %v3689 = vstv %s3665
    %v3690 = vmul.f32 %v3689, %v3687
    %v3691 = vsel %vm3688, %v3687, %v3690
    %v3692 = vpack.c.bf16 %v3691, %v3691
    %v3693 = vld [vmem:[%s9] sm:$0xf]
    %v3694 = vld [vmem:[%s10] sm:$0xf]
    %v3696 = vsel %vm457, %v3694, 0
    %v3699 = vsel %vm461, %v3692, 0
    %3701 = vmatprep.subr.bf16.mxu0 0
    %3702 = vmatpush1.bf16.msra.mxu0 %v3699
    %3703 = vmatprep.subr.bf16.mxu0 0
    %3704 = vmatpush1.bf16.msra.mxu0 0
    %3705 = vmatprep.subr.bf16.mxu0 0
    %3706 = vmatpush1.bf16.msra.mxu0 0
    %3707 = vmatprep.subr.bf16.mxu0 0
    %3708 = vmatpush1.bf16.msra.mxu0 0
    %3709 = vmatprep.subr.bf16.mxu0 0
    %3710 = vmatpush1.bf16.msra.mxu0 0
    %3711 = vmatprep.subr.bf16.mxu0 0
    %3712 = vmatpush1.bf16.msra.mxu0 0
    %3713 = vmatprep.subr.bf16.mxu0 0
    %3714 = vmatpush1.bf16.msra.mxu0 0
    %3715 = vmatprep.subr.bf16.mxu0 0
    %3716 = vmatpush1.bf16.msra.mxu0 0
    %3717 = vmatprep.subr.bf16.mxu0 0
    %3718 = vmatpush1.bf16.msra.mxu0 0
    %3719 = vmatprep.subr.bf16.mxu0 0
    %3720 = vmatpush1.bf16.msra.mxu0 0
    %3721 = vmatprep.subr.bf16.mxu0 0
    %3722 = vmatpush1.bf16.msra.mxu0 0
    %3723 = vmatprep.subr.bf16.mxu0 0
    %3724 = vmatpush1.bf16.msra.mxu0 0
    %3725 = vmatprep.subr.bf16.mxu0 0
    %3726 = vmatpush1.bf16.msra.mxu0 0
    %3727 = vmatprep.subr.bf16.mxu0 0
    %3728 = vmatpush1.bf16.msra.mxu0 0
    %3729 = vmatprep.subr.bf16.mxu0 0
    %3730 = vmatpush1.bf16.msra.mxu0 0
    %3731 = vmatprep.subr.bf16.mxu0 0
    %3732 = vmatpush1.bf16.msra.mxu0 0
    %3733 = vmatprep.mubr.bf16.mxu0 0
    %3734 = vmatmul.mubr.bf16.gmra.mrb[0].mxu0 %v3696
    %v3735 = vpop.f32.mrb[0].mxu0
    %v3736 = vadd.f32 0.0, %v3735
    %v3737 = vpop.f32.mrb[0].mxu0
    %v3738 = vpop.f32.mrb[0].mxu0
    %v3739 = vpop.f32.mrb[0].mxu0
    %3740 = vdwg.mxu0
    %v3742 = vsel %vm457, %v3693, 0
    %3744 = vmatprep.subr.bf16.mxu0 0
    %3745 = vmatpush1.bf16.msra.mxu0 %v2832
    %3746 = vmatprep.subr.bf16.mxu0 0
    %3747 = vmatpush1.bf16.msra.mxu0 0
    %3748 = vmatprep.subr.bf16.mxu0 0
    %3749 = vmatpush1.bf16.msra.mxu0 0
    %3750 = vmatprep.subr.bf16.mxu0 0
    %3751 = vmatpush1.bf16.msra.mxu0 0
    %3752 = vmatprep.subr.bf16.mxu0 0
    %3753 = vmatpush1.bf16.msra.mxu0 0
    %3754 = vmatprep.subr.bf16.mxu0 0
    %3755 = vmatpush1.bf16.msra.mxu0 0
    %3756 = vmatprep.subr.bf16.mxu0 0
    %3757 = vmatpush1.bf16.msra.mxu0 0
    %3758 = vmatprep.subr.bf16.mxu0 0
    %3759 = vmatpush1.bf16.msra.mxu0 0
    %3760 = vmatprep.subr.bf16.mxu0 0
    %3761 = vmatpush1.bf16.msra.mxu0 0
    %3762 = vmatprep.subr.bf16.mxu0 0
    %3763 = vmatpush1.bf16.msra.mxu0 0
    %3764 = vmatprep.subr.bf16.mxu0 0
    %3765 = vmatpush1.bf16.msra.mxu0 0
    %3766 = vmatprep.subr.bf16.mxu0 0
    %3767 = vmatpush1.bf16.msra.mxu0 0
    %3768 = vmatprep.subr.bf16.mxu0 0
    %3769 = vmatpush1.bf16.msra.mxu0 0
    %3770 = vmatprep.subr.bf16.mxu0 0
    %3771 = vmatpush1.bf16.msra.mxu0 0
    %3772 = vmatprep.subr.bf16.mxu0 0
    %3773 = vmatpush1.bf16.msra.mxu0 0
    %3774 = vmatprep.subr.bf16.mxu0 0
    %3775 = vmatpush1.bf16.msra.mxu0 0
    %3776 = vmatprep.mubr.bf16.mxu0 0
    %3777 = vmatmul.mubr.bf16.gmra.mrb[0].mxu0 %v3742
    %v3778 = vpop.f32.mrb[0].mxu0
    %v3779 = vadd.f32 %v3736, %v3778
    %v3780 = vpop.f32.mrb[0].mxu0
    %v3781 = vpop.f32.mrb[0].mxu0
    %v3782 = vpop.f32.mrb[0].mxu0
    %3783 = vdwg.mxu0
    %s3784 = sld [smem:[#allocation3 + $0x7]]
    %3785 = vadd.xlane.f32.xlu0 %v3779
    %v3786 = vpop.xlane.xlu0 %3785
    %v3787 = vmul.f32 %v3786, 0.0078125
    %v3788 = vsub.f32 %v3779, %v3787
    %v3789 = vmul.f32 %v3788, %v3788
    %3790 = vadd.xlane.f32.xlu0 %v3789
    %v3791 = vpop.xlane.xlu0 %3790
    %v3792 = vmul.f32 %v3791, 0.0078125
    %v3793 = vadd.f32 %v3792, 1e-05
    %v3794 = vrsqrt.pop %v3793
    %v3795 = vmul.f32 %v3794, %v3587
    %3797 = vset.pattern.permute.xlu0 7
    %3798 = vperm.xlu0 %3797, %v3795
    %v3799 = vpop.permute.xlu0 %3798
    %v3801 = vmul.f32 %v3788, %v3799
    %3802 = vset.pattern.permute.xlu0 7
    %3803 = vperm.xlu0 %3802, %v3588
    %v3804 = vpop.permute.xlu0 %3803
    %v3806 = vadd.f32 %v3801, %v3804
    %vm3807 = vcmp.gt.f32.partialorder %v3806, 0.0
    %v3808 = vstv %s3784
    %v3809 = vmul.f32 %v3808, %v3806
    %v3810 = vsel %vm3807, %v3806, %v3809
    %v3811 = vpack.c.bf16 %v3810, %v3810
    %3812 = vst [vmem:[%s27] sm:$0xf] %v3811
    %v3813 = vld [vmem:[%s18] sm:$0xf]
    %v3814 = vld [vmem:[%s18 + $0x4] sm:$0xf]
    %v3815 = vld [vmem:[%s18 + $0x8] sm:$0xf]
    %v3816 = vld [vmem:[%s18 + $0xc] sm:$0xf]
    %v3817 = vld [vmem:[%s18 + $0x10] sm:$0xf]
    %v3818 = vld [vmem:[%s18 + $0x14] sm:$0xf]
    %v3819 = vld [vmem:[%s18 + $0x18] sm:$0xf]
    %v3820 = vld [vmem:[%s18 + $0x1c] sm:$0xf]
    %v3821 = vld [vmem:[%s18 + $0x20] sm:$0xf]
    %v3822 = vld [vmem:[%s18 + $0x24] sm:$0xf]
    %v3823 = vld [vmem:[%s18 + $0x28] sm:$0xf]
    %v3824 = vld [vmem:[%s18 + $0x2c] sm:$0xf]
    %v3825 = vld [vmem:[%s18 + $0x30] sm:$0xf]
    %v3826 = vld [vmem:[%s18 + $0x34] sm:$0xf]
    %v3827 = vld [vmem:[%s18 + $0x38] sm:$0xf]
    %v3828 = vld [vmem:[%s18 + $0x3c] sm:$0xf]
    %v3845 = vunpack.c.l.b16 %v3813
    %v3846 = vunpack.c.l.b16 %v3814
    %v3847 = vunpack.c.l.b16 %v3815
    %v3848 = vunpack.c.l.b16 %v3816
    %v3849 = vunpack.c.l.b16 %v3817
    %v3850 = vunpack.c.l.b16 %v3818
    %v3851 = vunpack.c.l.b16 %v3819
    %v3852 = vunpack.c.l.b16 %v3820
    %v3853 = vunpack.c.l.b16 %v3821
    %v3854 = vunpack.c.l.b16 %v3822
    %v3855 = vunpack.c.l.b16 %v3823
    %v3856 = vunpack.c.l.b16 %v3824
    %v3857 = vunpack.c.l.b16 %v3825
    %v3858 = vunpack.c.l.b16 %v3826
    %v3859 = vunpack.c.l.b16 %v3827
    %v3860 = vunpack.c.l.b16 %v3828
    %v3861 = vpack.c.b16 %v3846, %v3845
    %v3862 = vpack.c.b16 %v3848, %v3847
    %v3863 = vpack.c.b16 %v3850, %v3849
    %v3864 = vpack.c.b16 %v3852, %v3851
    %v3865 = vpack.c.b16 %v3854, %v3853
    %v3866 = vpack.c.b16 %v3856, %v3855
    %v3867 = vpack.c.b16 %v3858, %v3857
    %v3868 = vpack.c.b16 %v3860, %v3859
    %3877 = vmatprep.subr.bf16.mxu0 0
    %3878 = vmatpush1.bf16.msra.mxu0 %v3861
    %3879 = vmatprep.subr.bf16.mxu0 0
    %3880 = vmatpush1.bf16.msra.mxu0 %v3862
    %3881 = vmatprep.subr.bf16.mxu0 0
    %3882 = vmatpush1.bf16.msra.mxu0 %v3863
    %3883 = vmatprep.subr.bf16.mxu0 0
    %3884 = vmatpush1.bf16.msra.mxu0 %v3864
    %3885 = vmatprep.subr.bf16.mxu0 0
    %3886 = vmatpush1.bf16.msra.mxu0 %v3865
    %3887 = vmatprep.subr.bf16.mxu0 0
    %3888 = vmatpush1.bf16.msra.mxu0 %v3866
    %3889 = vmatprep.subr.bf16.mxu0 0
    %3890 = vmatpush1.bf16.msra.mxu0 %v3867
    %3891 = vmatprep.subr.bf16.mxu0 0
    %3892 = vmatpush1.bf16.msra.mxu0 %v3868
    %3893 = vmatprep.subr.bf16.mxu0 0
    %3894 = vmatpush1.bf16.msra.mxu0 0
    %3895 = vmatprep.subr.bf16.mxu0 0
    %3896 = vmatpush1.bf16.msra.mxu0 0
    %3897 = vmatprep.subr.bf16.mxu0 0
    %3898 = vmatpush1.bf16.msra.mxu0 0
    %3899 = vmatprep.subr.bf16.mxu0 0
    %3900 = vmatpush1.bf16.msra.mxu0 0
    %3901 = vmatprep.subr.bf16.mxu0 0
    %3902 = vmatpush1.bf16.msra.mxu0 0
    %3903 = vmatprep.subr.bf16.mxu0 0
    %3904 = vmatpush1.bf16.msra.mxu0 0
    %3905 = vmatprep.subr.bf16.mxu0 0
    %3906 = vmatpush1.bf16.msra.mxu0 0
    %3907 = vmatprep.subr.bf16.mxu0 0
    %3908 = vmatpush1.bf16.msra.mxu0 0
    %3909 = vmatprep.mubr.bf16.mxu0 0
    %3910 = vmatmul.mubr.bf16.gmra.mrb[0].mxu0 %v3811
    %v3911 = vpop.f32.mrb[0].mxu0
    %v3912 = vadd.f32 0.0, %v3911
    %v3913 = vpop.f32.mrb[0].mxu0
    %v3914 = vpop.f32.mrb[0].mxu0
    %v3915 = vpop.f32.mrb[0].mxu0
    %3916 = vdwg.mxu0
    %v3917 = vpack.c.bf16 %v3912, %v3912
    %v3918 = vld [vmem:[%s11] sm:$0xf]
    %v3920 = vsel %vm457, %v3918, 0
    %v3923 = vsel %vm461, %v3917, 0
    %3925 = vmatprep.subr.bf16.mxu0 0
    %3926 = vmatpush1.bf16.msra.mxu0 %v3923
    %3927 = vmatprep.subr.bf16.mxu0 0
    %3928 = vmatpush1.bf16.msra.mxu0 0
    %3929 = vmatprep.subr.bf16.mxu0 0
    %3930 = vmatpush1.bf16.msra.mxu0 0
    %3931 = vmatprep.subr.bf16.mxu0 0
    %3932 = vmatpush1.bf16.msra.mxu0 0
    %3933 = vmatprep.subr.bf16.mxu0 0
    %3934 = vmatpush1.bf16.msra.mxu0 0
    %3935 = vmatprep.subr.bf16.mxu0 0
    %3936 = vmatpush1.bf16.msra.mxu0 0
    %3937 = vmatprep.subr.bf16.mxu0 0
    %3938 = vmatpush1.bf16.msra.mxu0 0
    %3939 = vmatprep.subr.bf16.mxu0 0
    %3940 = vmatpush1.bf16.msra.mxu0 0
    %3941 = vmatprep.subr.bf16.mxu0 0
    %3942 = vmatpush1.bf16.msra.mxu0 0
    %3943 = vmatprep.subr.bf16.mxu0 0
    %3944 = vmatpush1.bf16.msra.mxu0 0
    %3945 = vmatprep.subr.bf16.mxu0 0
    %3946 = vmatpush1.bf16.msra.mxu0 0
    %3947 = vmatprep.subr.bf16.mxu0 0
    %3948 = vmatpush1.bf16.msra.mxu0 0
    %3949 = vmatprep.subr.bf16.mxu0 0
    %3950 = vmatpush1.bf16.msra.mxu0 0
    %3951 = vmatprep.subr.bf16.mxu0 0
    %3952 = vmatpush1.bf16.msra.mxu0 0
    %3953 = vmatprep.subr.bf16.mxu0 0
    %3954 = vmatpush1.bf16.msra.mxu0 0
    %3955 = vmatprep.subr.bf16.mxu0 0
    %3956 = vmatpush1.bf16.msra.mxu0 0
    %3957 = vmatprep.mubr.bf16.mxu0 0
    %3958 = vmatmul.mubr.bf16.gmra.mrb[0].mxu0 %v3920
    %v3959 = vpop.f32.mrb[0].mxu0
    %v3960 = vadd.f32 0.0, %v3959
    %v3961 = vpop.f32.mrb[0].mxu0
    %v3962 = vpop.f32.mrb[0].mxu0
    %v3963 = vpop.f32.mrb[0].mxu0
    %3964 = vdwg.mxu0
    %v3965 = vld [vmem:[%s23] sm:$0xff]
    %v3966 = vld [vmem:[%s24] sm:$0xff]
    %s3967 = sld [smem:[#allocation3 + $0x8]]
    %vm3968 = vcmask 261120
    %v3969 = vsel %vm3968, %v3960, 0.0
    %3970 = vadd.xlane.f32.xlu0 %v3969
    %v3971 = vpop.xlane.xlu0 %3970
    %v3972 = vmul.f32 %v3971, 0.03125
    %v3973 = vsub.f32 %v3960, %v3972
    %v3974 = vmul.f32 %v3973, %v3973
    %v3975 = vsel %vm3968, %v3974, 0.0
    %3976 = vadd.xlane.f32.xlu0 %v3975
    %v3977 = vpop.xlane.xlu0 %3976
    %v3978 = vmul.f32 %v3977, 0.03125
    %v3979 = vadd.f32 %v3978, 1e-05
    %v3980 = vrsqrt.pop %v3979
    %v3981 = vmul.f32 %v3980, %v3965
    %3983 = vset.pattern.permute.xlu0 8
    %3984 = vperm.xlu0 %3983, %v3981
    %v3985 = vpop.permute.xlu0 %3984
    %v3987 = vmul.f32 %v3973, %v3985
    %3989 = vset.pattern.permute.xlu0 8
    %3990 = vperm.xlu0 %3989, %v3966
    %v3991 = vpop.permute.xlu0 %3990
    %v3993 = vadd.f32 %v3987, %v3991
    %vm3994 = vcmp.gt.f32.partialorder %v3993, 0.0
    %v3995 = vstv %s3967
    %v3996 = vmul.f32 %v3995, %v3993
    %v3997 = vsel %vm3994, %v3993, %v3996
    %v3998 = vpack.c.bf16 %v3997, %v3997
    %3999 = vst [vmem:[#allocation2] sm:$0xff] 0
    %4000 = vst [vmem:[#allocation2 + $0x8] sm:$0xff] 0
    %4001 = vst.msk [vmem:[#allocation2 + $0x10] sm:$0xf] %vm282, 0
    %v4003 = vunpack.c.l.b16 %v3998
    %v4004 = vpack.c.b16 %v4003, %v4003
    %4005 = vrot.lane.b32.xlu0 %v4004, 5
    %v4006 = vpop.permute.xlu0 %4005
    %vm4008 = vcmask 298024
    %4009 = vst.msk [vmem:[#allocation2] sm:$0xf] %vm4008, %v4006
    %v4010 = vld [vmem:[#allocation2] sm:$0xf]
    %v4011 = vld [vmem:[%s22] sm:$0x1]
    %v4013 = vpack.i.b16 %v4011, %v4011
    %v4015 = vlaneseq
    %v4016 = vshrl.u32 %v4015, 7
    %v4017 = vsub.s32 0, %v4016
    %v4018 = vrot.slane %v4013, %v4017
    %v4019 = vmul.bf16 %v4010, %v4018
    %v4020 = vld [vmem:[%s12] sm:$0xf]
    %v4021 = vshrl.u32 %v4011, 16
    %v4022 = vpack.i.b16 %v4021, %v4021
    %v4024 = vlaneseq
    %v4025 = vshrl.u32 %v4024, 7
    %v4026 = vsub.s32 0, %v4025
    %v4027 = vrot.slane %v4022, %v4026
    %v4029 = vunpack.c.l.b16 %v4027
    %v4030 = vpack.c.b16 %v4029, %v4029
    %4031 = vrot.lane.b32.xlu0 %v4030, 1
    %v4032 = vpop.permute.xlu0 %4031
    %v4034 = vmul.bf16 %v4010, %v4032
    %s4035 = scalar_lea.vmem %s12, 4
    %v4036 = vld [vmem:[%s4035] sm:$0xf]
    %v4038 = vunpack.c.l.b16 %v4034
    %v4039 = vpack.c.b16 %v4038, %v4038
    %4040 = vrot.lane.b32.xlu0 %v4039, 127
    %v4041 = vpop.permute.xlu0 %4040
    %v4043 = vsel %vm457, %v4036, 0
    %v4046 = vsel %vm461, %v4041, 0
    %4048 = vmatprep.subr.bf16.mxu0 0
    %4049 = vmatpush1.bf16.msra.mxu0 %v4046
    %4050 = vmatprep.subr.bf16.mxu0 0
    %4051 = vmatpush1.bf16.msra.mxu0 0
    %4052 = vmatprep.subr.bf16.mxu0 0
    %4053 = vmatpush1.bf16.msra.mxu0 0
    %4054 = vmatprep.subr.bf16.mxu0 0
    %4055 = vmatpush1.bf16.msra.mxu0 0
    %4056 = vmatprep.subr.bf16.mxu0 0
    %4057 = vmatpush1.bf16.msra.mxu0 0
    %4058 = vmatprep.subr.bf16.mxu0 0
    %4059 = vmatpush1.bf16.msra.mxu0 0
    %4060 = vmatprep.subr.bf16.mxu0 0
    %4061 = vmatpush1.bf16.msra.mxu0 0
    %4062 = vmatprep.subr.bf16.mxu0 0
    %4063 = vmatpush1.bf16.msra.mxu0 0
    %4064 = vmatprep.subr.bf16.mxu0 0
    %4065 = vmatpush1.bf16.msra.mxu0 0
    %4066 = vmatprep.subr.bf16.mxu0 0
    %4067 = vmatpush1.bf16.msra.mxu0 0
    %4068 = vmatprep.subr.bf16.mxu0 0
    %4069 = vmatpush1.bf16.msra.mxu0 0
    %4070 = vmatprep.subr.bf16.mxu0 0
    %4071 = vmatpush1.bf16.msra.mxu0 0
    %4072 = vmatprep.subr.bf16.mxu0 0
    %4073 = vmatpush1.bf16.msra.mxu0 0
    %4074 = vmatprep.subr.bf16.mxu0 0
    %4075 = vmatpush1.bf16.msra.mxu0 0
    %4076 = vmatprep.subr.bf16.mxu0 0
    %4077 = vmatpush1.bf16.msra.mxu0 0
    %4078 = vmatprep.subr.bf16.mxu0 0
    %4079 = vmatpush1.bf16.msra.mxu0 0
    %4080 = vmatprep.mubr.bf16.mxu0 0
    %4081 = vmatmul.mubr.bf16.gmra.mrb[0].mxu0 %v4043
    %v4082 = vpop.f32.mrb[0].mxu0
    %v4083 = vadd.f32 0.0, %v4082
    %v4084 = vpop.f32.mrb[0].mxu0
    %v4085 = vpop.f32.mrb[0].mxu0
    %v4086 = vpop.f32.mrb[0].mxu0
    %4087 = vdwg.mxu0
    %v4089 = vsel %vm457, %v4020, 0
    %v4092 = vsel %vm461, %v4019, 0
    %4094 = vmatprep.subr.bf16.mxu0 0
    %4095 = vmatpush1.bf16.msra.mxu0 %v4092
    %4096 = vmatprep.subr.bf16.mxu0 0
    %4097 = vmatpush1.bf16.msra.mxu0 0
    %4098 = vmatprep.subr.bf16.mxu0 0
    %4099 = vmatpush1.bf16.msra.mxu0 0
    %4100 = vmatprep.subr.bf16.mxu0 0
    %4101 = vmatpush1.bf16.msra.mxu0 0
    %4102 = vmatprep.subr.bf16.mxu0 0
    %4103 = vmatpush1.bf16.msra.mxu0 0
    %4104 = vmatprep.subr.bf16.mxu0 0
    %4105 = vmatpush1.bf16.msra.mxu0 0
    %4106 = vmatprep.subr.bf16.mxu0 0
    %4107 = vmatpush1.bf16.msra.mxu0 0
    %4108 = vmatprep.subr.bf16.mxu0 0
    %4109 = vmatpush1.bf16.msra.mxu0 0
    %4110 = vmatprep.subr.bf16.mxu0 0
    %4111 = vmatpush1.bf16.msra.mxu0 0
    %4112 = vmatprep.subr.bf16.mxu0 0
    %4113 = vmatpush1.bf16.msra.mxu0 0
    %4114 = vmatprep.subr.bf16.mxu0 0
    %4115 = vmatpush1.bf16.msra.mxu0 0
    %4116 = vmatprep.subr.bf16.mxu0 0
    %4117 = vmatpush1.bf16.msra.mxu0 0
    %4118 = vmatprep.subr.bf16.mxu0 0
    %4119 = vmatpush1.bf16.msra.mxu0 0
    %4120 = vmatprep.subr.bf16.mxu0 0
    %4121 = vmatpush1.bf16.msra.mxu0 0
    %4122 = vmatprep.subr.bf16.mxu0 0
    %4123 = vmatpush1.bf16.msra.mxu0 0
    %4124 = vmatprep.subr.bf16.mxu0 0
    %4125 = vmatpush1.bf16.msra.mxu0 0
    %4126 = vmatprep.mubr.bf16.mxu0 0
    %4127 = vmatmul.mubr.bf16.gmra.mrb[0].mxu0 %v4089
    %v4128 = vpop.f32.mrb[0].mxu0
    %v4129 = vadd.f32 %v4083, %v4128
    %v4130 = vpop.f32.mrb[0].mxu0
    %v4131 = vpop.f32.mrb[0].mxu0
    %v4132 = vpop.f32.mrb[0].mxu0
    %4133 = vdwg.mxu0
    %v4134 = vld [vmem:[%s22] sm:$0x2]
    %v4136 = vpack.i.b16 %v4134, %v4134
    %v4138 = vlaneseq
    %v4139 = vshrl.u32 %v4138, 7
    %v4140 = vsub.s32 1, %v4139
    %v4141 = vrot.slane %v4136, %v4140
    %v4143 = vunpack.c.l.b16 %v4141
    %v4144 = vpack.c.b16 %v4143, %v4143
    %4145 = vrot.lane.b32.xlu0 %v4144, 2
    %v4146 = vpop.permute.xlu0 %4145
    %v4148 = vmul.bf16 %v4010, %v4146
    %s4149 = scalar_lea.vmem %s12, 8
    %v4150 = vld [vmem:[%s4149] sm:$0xf]
    %v4152 = vunpack.c.l.b16 %v4148
    %v4153 = vpack.c.b16 %v4152, %v4152
    %4154 = vrot.lane.b32.xlu0 %v4153, 126
    %v4155 = vpop.permute.xlu0 %4154
    %v4157 = vsel %vm457, %v4150, 0
    %v4160 = vsel %vm461, %v4155, 0
    %4162 = vmatprep.subr.bf16.mxu0 0
    %4163 = vmatpush1.bf16.msra.mxu0 %v4160
    %4164 = vmatprep.subr.bf16.mxu0 0
    %4165 = vmatpush1.bf16.msra.mxu0 0
    %4166 = vmatprep.subr.bf16.mxu0 0
    %4167 = vmatpush1.bf16.msra.mxu0 0
    %4168 = vmatprep.subr.bf16.mxu0 0
    %4169 = vmatpush1.bf16.msra.mxu0 0
    %4170 = vmatprep.subr.bf16.mxu0 0
    %4171 = vmatpush1.bf16.msra.mxu0 0
    %4172 = vmatprep.subr.bf16.mxu0 0
    %4173 = vmatpush1.bf16.msra.mxu0 0
    %4174 = vmatprep.subr.bf16.mxu0 0
    %4175 = vmatpush1.bf16.msra.mxu0 0
    %4176 = vmatprep.subr.bf16.mxu0 0
    %4177 = vmatpush1.bf16.msra.mxu0 0
    %4178 = vmatprep.subr.bf16.mxu0 0
    %4179 = vmatpush1.bf16.msra.mxu0 0
    %4180 = vmatprep.subr.bf16.mxu0 0
    %4181 = vmatpush1.bf16.msra.mxu0 0
    %4182 = vmatprep.subr.bf16.mxu0 0
    %4183 = vmatpush1.bf16.msra.mxu0 0
    %4184 = vmatprep.subr.bf16.mxu0 0
    %4185 = vmatpush1.bf16.msra.mxu0 0
    %4186 = vmatprep.subr.bf16.mxu0 0
    %4187 = vmatpush1.bf16.msra.mxu0 0
    %4188 = vmatprep.subr.bf16.mxu0 0
    %4189 = vmatpush1.bf16.msra.mxu0 0
    %4190 = vmatprep.subr.bf16.mxu0 0
    %4191 = vmatpush1.bf16.msra.mxu0 0
    %4192 = vmatprep.subr.bf16.mxu0 0
    %4193 = vmatpush1.bf16.msra.mxu0 0
    %4194 = vmatprep.mubr.bf16.mxu0 0
    %4195 = vmatmul.mubr.bf16.gmra.mrb[0].mxu0 %v4157
    %v4196 = vpop.f32.mrb[0].mxu0
    %v4197 = vadd.f32 0.0, %v4196
    %v4198 = vpop.f32.mrb[0].mxu0
    %v4199 = vpop.f32.mrb[0].mxu0
    %v4200 = vpop.f32.mrb[0].mxu0
    %4201 = vdwg.mxu0
    %v4202 = vadd.f32 %v4129, %v4197
    %v4203 = vshrl.u32 %v4134, 16
    %v4204 = vpack.i.b16 %v4203, %v4203
    %v4206 = vlaneseq
    %v4207 = vshrl.u32 %v4206, 7
    %v4208 = vsub.s32 1, %v4207
    %v4209 = vrot.slane %v4204, %v4208
    %v4211 = vunpack.c.l.b16 %v4209
    %v4212 = vpack.c.b16 %v4211, %v4211
    %4213 = vrot.lane.b32.xlu0 %v4212, 4
    %v4214 = vpop.permute.xlu0 %4213
    %v4216 = vmul.bf16 %v4010, %v4214
    %s4217 = scalar_lea.vmem %s12, 12
    %v4218 = vld [vmem:[%s4217] sm:$0xf]
    %v4220 = vunpack.c.l.b16 %v4216
    %v4221 = vpack.c.b16 %v4220, %v4220
    %4222 = vrot.lane.b32.xlu0 %v4221, 124
    %v4223 = vpop.permute.xlu0 %4222
    %v4225 = vsel %vm457, %v4218, 0
    %v4228 = vsel %vm461, %v4223, 0
    %4230 = vmatprep.subr.bf16.mxu0 0
    %4231 = vmatpush1.bf16.msra.mxu0 %v4228
    %4232 = vmatprep.subr.bf16.mxu0 0
    %4233 = vmatpush1.bf16.msra.mxu0 0
    %4234 = vmatprep.subr.bf16.mxu0 0
    %4235 = vmatpush1.bf16.msra.mxu0 0
    %4236 = vmatprep.subr.bf16.mxu0 0
    %4237 = vmatpush1.bf16.msra.mxu0 0
    %4238 = vmatprep.subr.bf16.mxu0 0
    %4239 = vmatpush1.bf16.msra.mxu0 0
    %4240 = vmatprep.subr.bf16.mxu0 0
    %4241 = vmatpush1.bf16.msra.mxu0 0
    %4242 = vmatprep.subr.bf16.mxu0 0
    %4243 = vmatpush1.bf16.msra.mxu0 0
    %4244 = vmatprep.subr.bf16.mxu0 0
    %4245 = vmatpush1.bf16.msra.mxu0 0
    %4246 = vmatprep.subr.bf16.mxu0 0
    %4247 = vmatpush1.bf16.msra.mxu0 0
    %4248 = vmatprep.subr.bf16.mxu0 0
    %4249 = vmatpush1.bf16.msra.mxu0 0
    %4250 = vmatprep.subr.bf16.mxu0 0
    %4251 = vmatpush1.bf16.msra.mxu0 0
    %4252 = vmatprep.subr.bf16.mxu0 0
    %4253 = vmatpush1.bf16.msra.mxu0 0
    %4254 = vmatprep.subr.bf16.mxu0 0
    %4255 = vmatpush1.bf16.msra.mxu0 0
    %4256 = vmatprep.subr.bf16.mxu0 0
    %4257 = vmatpush1.bf16.msra.mxu0 0
    %4258 = vmatprep.subr.bf16.mxu0 0
    %4259 = vmatpush1.bf16.msra.mxu0 0
    %4260 = vmatprep.subr.bf16.mxu0 0
    %4261 = vmatpush1.bf16.msra.mxu0 0
    %4262 = vmatprep.mubr.bf16.mxu0 0
    %4263 = vmatmul.mubr.bf16.gmra.mrb[0].mxu0 %v4225
    %v4264 = vpop.f32.mrb[0].mxu0
    %v4265 = vadd.f32 0.0, %v4264
    %v4266 = vpop.f32.mrb[0].mxu0
    %v4267 = vpop.f32.mrb[0].mxu0
    %v4268 = vpop.f32.mrb[0].mxu0
    %4269 = vdwg.mxu0
    %v4270 = vadd.f32 %v4202, %v4265
    %v4271 = vld [vmem:[%s22] sm:$0x4]
    %v4273 = vpack.i.b16 %v4271, %v4271
    %v4275 = vlaneseq
    %v4276 = vshrl.u32 %v4275, 7
    %v4277 = vsub.s32 2, %v4276
    %v4278 = vrot.slane %v4273, %v4277
    %v4280 = vunpack.c.l.b16 %v4278
    %v4281 = vpack.c.b16 %v4280, %v4280
    %4282 = vrot.lane.b32.xlu0 %v4281, 5
    %v4283 = vpop.permute.xlu0 %4282
    %v4285 = vmul.bf16 %v4010, %v4283
    %s4286 = scalar_lea.vmem %s12, 16
    %v4287 = vld [vmem:[%s4286] sm:$0xf]
    %v4289 = vunpack.c.l.b16 %v4285
    %v4290 = vpack.c.b16 %v4289, %v4289
    %4291 = vrot.lane.b32.xlu0 %v4290, 123
    %v4292 = vpop.permute.xlu0 %4291
    %v4294 = vsel %vm457, %v4287, 0
    %v4297 = vsel %vm461, %v4292, 0
    %4299 = vmatprep.subr.bf16.mxu0 0
    %4300 = vmatpush1.bf16.msra.mxu0 %v4297
    %4301 = vmatprep.subr.bf16.mxu0 0
    %4302 = vmatpush1.bf16.msra.mxu0 0
    %4303 = vmatprep.subr.bf16.mxu0 0
    %4304 = vmatpush1.bf16.msra.mxu0 0
    %4305 = vmatprep.subr.bf16.mxu0 0
    %4306 = vmatpush1.bf16.msra.mxu0 0
    %4307 = vmatprep.subr.bf16.mxu0 0
    %4308 = vmatpush1.bf16.msra.mxu0 0
    %4309 = vmatprep.subr.bf16.mxu0 0
    %4310 = vmatpush1.bf16.msra.mxu0 0
    %4311 = vmatprep.subr.bf16.mxu0 0
    %4312 = vmatpush1.bf16.msra.mxu0 0
    %4313 = vmatprep.subr.bf16.mxu0 0
    %4314 = vmatpush1.bf16.msra.mxu0 0
    %4315 = vmatprep.subr.bf16.mxu0 0
    %4316 = vmatpush1.bf16.msra.mxu0 0
    %4317 = vmatprep.subr.bf16.mxu0 0
    %4318 = vmatpush1.bf16.msra.mxu0 0
    %4319 = vmatprep.subr.bf16.mxu0 0
    %4320 = vmatpush1.bf16.msra.mxu0 0
    %4321 = vmatprep.subr.bf16.mxu0 0
    %4322 = vmatpush1.bf16.msra.mxu0 0
    %4323 = vmatprep.subr.bf16.mxu0 0
    %4324 = vmatpush1.bf16.msra.mxu0 0
    %4325 = vmatprep.subr.bf16.mxu0 0
    %4326 = vmatpush1.bf16.msra.mxu0 0
    %4327 = vmatprep.subr.bf16.mxu0 0
    %4328 = vmatpush1.bf16.msra.mxu0 0
    %4329 = vmatprep.subr.bf16.mxu0 0
    %4330 = vmatpush1.bf16.msra.mxu0 0
    %4331 = vmatprep.mubr.bf16.mxu0 0
    %4332 = vmatmul.mubr.bf16.gmra.mrb[0].mxu0 %v4294
    %v4333 = vpop.f32.mrb[0].mxu0
    %v4334 = vadd.f32 0.0, %v4333
    %v4335 = vpop.f32.mrb[0].mxu0
    %v4336 = vpop.f32.mrb[0].mxu0
    %v4337 = vpop.f32.mrb[0].mxu0
    %4338 = vdwg.mxu0
    %v4339 = vadd.f32 %v4270, %v4334
    %v4340 = vshrl.u32 %v4271, 16
    %v4341 = vpack.i.b16 %v4340, %v4340
    %v4343 = vlaneseq
    %v4344 = vshrl.u32 %v4343, 7
    %v4345 = vsub.s32 2, %v4344
    %v4346 = vrot.slane %v4341, %v4345
    %v4348 = vunpack.c.l.b16 %v4346
    %v4349 = vpack.c.b16 %v4348, %v4348
    %4350 = vrot.lane.b32.xlu0 %v4349, 6
    %v4351 = vpop.permute.xlu0 %4350
    %v4353 = vmul.bf16 %v4010, %v4351
    %s4354 = scalar_lea.vmem %s12, 20
    %v4355 = vld [vmem:[%s4354] sm:$0xf]
    %v4357 = vunpack.c.l.b16 %v4353
    %v4358 = vpack.c.b16 %v4357, %v4357
    %4359 = vrot.lane.b32.xlu0 %v4358, 122
    %v4360 = vpop.permute.xlu0 %4359
    %v4362 = vsel %vm457, %v4355, 0
    %v4365 = vsel %vm461, %v4360, 0
    %4367 = vmatprep.subr.bf16.mxu0 0
    %4368 = vmatpush1.bf16.msra.mxu0 %v4365
    %4369 = vmatprep.subr.bf16.mxu0 0
    %4370 = vmatpush1.bf16.msra.mxu0 0
    %4371 = vmatprep.subr.bf16.mxu0 0
    %4372 = vmatpush1.bf16.msra.mxu0 0
    %4373 = vmatprep.subr.bf16.mxu0 0
    %4374 = vmatpush1.bf16.msra.mxu0 0
    %4375 = vmatprep.subr.bf16.mxu0 0
    %4376 = vmatpush1.bf16.msra.mxu0 0
    %4377 = vmatprep.subr.bf16.mxu0 0
    %4378 = vmatpush1.bf16.msra.mxu0 0
    %4379 = vmatprep.subr.bf16.mxu0 0
    %4380 = vmatpush1.bf16.msra.mxu0 0
    %4381 = vmatprep.subr.bf16.mxu0 0
    %4382 = vmatpush1.bf16.msra.mxu0 0
    %4383 = vmatprep.subr.bf16.mxu0 0
    %4384 = vmatpush1.bf16.msra.mxu0 0
    %4385 = vmatprep.subr.bf16.mxu0 0
    %4386 = vmatpush1.bf16.msra.mxu0 0
    %4387 = vmatprep.subr.bf16.mxu0 0
    %4388 = vmatpush1.bf16.msra.mxu0 0
    %4389 = vmatprep.subr.bf16.mxu0 0
    %4390 = vmatpush1.bf16.msra.mxu0 0
    %4391 = vmatprep.subr.bf16.mxu0 0
    %4392 = vmatpush1.bf16.msra.mxu0 0
    %4393 = vmatprep.subr.bf16.mxu0 0
    %4394 = vmatpush1.bf16.msra.mxu0 0
    %4395 = vmatprep.subr.bf16.mxu0 0
    %4396 = vmatpush1.bf16.msra.mxu0 0
    %4397 = vmatprep.subr.bf16.mxu0 0
    %4398 = vmatpush1.bf16.msra.mxu0 0
    %4399 = vmatprep.mubr.bf16.mxu0 0
    %4400 = vmatmul.mubr.bf16.gmra.mrb[0].mxu0 %v4362
    %v4401 = vpop.f32.mrb[0].mxu0
    %v4402 = vadd.f32 0.0, %v4401
    %v4403 = vpop.f32.mrb[0].mxu0
    %v4404 = vpop.f32.mrb[0].mxu0
    %v4405 = vpop.f32.mrb[0].mxu0
    %4406 = vdwg.mxu0
    %v4407 = vadd.f32 %v4339, %v4402
    %v4408 = vld [vmem:[%s22] sm:$0x8]
    %v4410 = vpack.i.b16 %v4408, %v4408
    %v4412 = vlaneseq
    %v4413 = vshrl.u32 %v4412, 7
    %v4414 = vsub.s32 3, %v4413
    %v4415 = vrot.slane %v4410, %v4414
    %v4417 = vunpack.c.l.b16 %v4415
    %v4418 = vpack.c.b16 %v4417, %v4417
    %4419 = vrot.lane.b32.xlu0 %v4418, 8
    %v4420 = vpop.permute.xlu0 %4419
    %v4422 = vmul.bf16 %v4010, %v4420
    %s4423 = scalar_lea.vmem %s12, 24
    %v4424 = vld [vmem:[%s4423] sm:$0xf]
    %v4426 = vunpack.c.l.b16 %v4422
    %v4427 = vpack.c.b16 %v4426, %v4426
    %4428 = vrot.lane.b32.xlu0 %v4427, 120
    %v4429 = vpop.permute.xlu0 %4428
    %v4431 = vsel %vm457, %v4424, 0
    %v4434 = vsel %vm461, %v4429, 0
    %4436 = vmatprep.subr.bf16.mxu0 0
    %4437 = vmatpush1.bf16.msra.mxu0 %v4434
    %4438 = vmatprep.subr.bf16.mxu0 0
    %4439 = vmatpush1.bf16.msra.mxu0 0
    %4440 = vmatprep.subr.bf16.mxu0 0
    %4441 = vmatpush1.bf16.msra.mxu0 0
    %4442 = vmatprep.subr.bf16.mxu0 0
    %4443 = vmatpush1.bf16.msra.mxu0 0
    %4444 = vmatprep.subr.bf16.mxu0 0
    %4445 = vmatpush1.bf16.msra.mxu0 0
    %4446 = vmatprep.subr.bf16.mxu0 0
    %4447 = vmatpush1.bf16.msra.mxu0 0
    %4448 = vmatprep.subr.bf16.mxu0 0
    %4449 = vmatpush1.bf16.msra.mxu0 0
    %4450 = vmatprep.subr.bf16.mxu0 0
    %4451 = vmatpush1.bf16.msra.mxu0 0
    %4452 = vmatprep.subr.bf16.mxu0 0
    %4453 = vmatpush1.bf16.msra.mxu0 0
    %4454 = vmatprep.subr.bf16.mxu0 0
    %4455 = vmatpush1.bf16.msra.mxu0 0
    %4456 = vmatprep.subr.bf16.mxu0 0
    %4457 = vmatpush1.bf16.msra.mxu0 0
    %4458 = vmatprep.subr.bf16.mxu0 0
    %4459 = vmatpush1.bf16.msra.mxu0 0
    %4460 = vmatprep.subr.bf16.mxu0 0
    %4461 = vmatpush1.bf16.msra.mxu0 0
    %4462 = vmatprep.subr.bf16.mxu0 0
    %4463 = vmatpush1.bf16.msra.mxu0 0
    %4464 = vmatprep.subr.bf16.mxu0 0
    %4465 = vmatpush1.bf16.msra.mxu0 0
    %4466 = vmatprep.subr.bf16.mxu0 0
    %4467 = vmatpush1.bf16.msra.mxu0 0
    %4468 = vmatprep.mubr.bf16.mxu0 0
    %4469 = vmatmul.mubr.bf16.gmra.mrb[0].mxu0 %v4431
    %v4470 = vpop.f32.mrb[0].mxu0
    %v4471 = vadd.f32 0.0, %v4470
    %v4472 = vpop.f32.mrb[0].mxu0
    %v4473 = vpop.f32.mrb[0].mxu0
    %v4474 = vpop.f32.mrb[0].mxu0
    %4475 = vdwg.mxu0
    %v4476 = vadd.f32 %v4407, %v4471
    %v4477 = vshrl.u32 %v4408, 16
    %v4478 = vpack.i.b16 %v4477, %v4477
    %v4480 = vlaneseq
    %v4481 = vshrl.u32 %v4480, 7
    %v4482 = vsub.s32 3, %v4481
    %v4483 = vrot.slane %v4478, %v4482
    %v4485 = vunpack.c.l.b16 %v4483
    %v4486 = vpack.c.b16 %v4485, %v4485
    %4487 = vrot.lane.b32.xlu0 %v4486, 9
    %v4488 = vpop.permute.xlu0 %4487
    %v4490 = vmul.bf16 %v4010, %v4488
    %s4491 = scalar_lea.vmem %s12, 28
    %v4492 = vld [vmem:[%s4491] sm:$0xf]
    %v4494 = vunpack.c.l.b16 %v4490
    %v4495 = vpack.c.b16 %v4494, %v4494
    %4496 = vrot.lane.b32.xlu0 %v4495, 119
    %v4497 = vpop.permute.xlu0 %4496
    %v4499 = vsel %vm457, %v4492, 0
    %v4502 = vsel %vm461, %v4497, 0
    %4504 = vmatprep.subr.bf16.mxu0 0
    %4505 = vmatpush1.bf16.msra.mxu0 %v4502
    %4506 = vmatprep.subr.bf16.mxu0 0
    %4507 = vmatpush1.bf16.msra.mxu0 0
    %4508 = vmatprep.subr.bf16.mxu0 0
    %4509 = vmatpush1.bf16.msra.mxu0 0
    %4510 = vmatprep.subr.bf16.mxu0 0
    %4511 = vmatpush1.bf16.msra.mxu0 0
    %4512 = vmatprep.subr.bf16.mxu0 0
    %4513 = vmatpush1.bf16.msra.mxu0 0
    %4514 = vmatprep.subr.bf16.mxu0 0
    %4515 = vmatpush1.bf16.msra.mxu0 0
    %4516 = vmatprep.subr.bf16.mxu0 0
    %4517 = vmatpush1.bf16.msra.mxu0 0
    %4518 = vmatprep.subr.bf16.mxu0 0
    %4519 = vmatpush1.bf16.msra.mxu0 0
    %4520 = vmatprep.subr.bf16.mxu0 0
    %4521 = vmatpush1.bf16.msra.mxu0 0
    %4522 = vmatprep.subr.bf16.mxu0 0
    %4523 = vmatpush1.bf16.msra.mxu0 0
    %4524 = vmatprep.subr.bf16.mxu0 0
    %4525 = vmatpush1.bf16.msra.mxu0 0
    %4526 = vmatprep.subr.bf16.mxu0 0
    %4527 = vmatpush1.bf16.msra.mxu0 0
    %4528 = vmatprep.subr.bf16.mxu0 0
    %4529 = vmatpush1.bf16.msra.mxu0 0
    %4530 = vmatprep.subr.bf16.mxu0 0
    %4531 = vmatpush1.bf16.msra.mxu0 0
    %4532 = vmatprep.subr.bf16.mxu0 0
    %4533 = vmatpush1.bf16.msra.mxu0 0
    %4534 = vmatprep.subr.bf16.mxu0 0
    %4535 = vmatpush1.bf16.msra.mxu0 0
    %4536 = vmatprep.mubr.bf16.mxu0 0
    %4537 = vmatmul.mubr.bf16.gmra.mrb[0].mxu0 %v4499
    %v4538 = vpop.f32.mrb[0].mxu0
    %v4539 = vadd.f32 0.0, %v4538
    %v4540 = vpop.f32.mrb[0].mxu0
    %v4541 = vpop.f32.mrb[0].mxu0
    %v4542 = vpop.f32.mrb[0].mxu0
    %4543 = vdwg.mxu0
    %v4544 = vadd.f32 %v4476, %v4539
    %v4545 = vld [vmem:[%s22 + $0x4] sm:$0x1]
    %v4547 = vpack.i.b16 %v4545, %v4545
    %v4549 = vlaneseq
    %v4550 = vshrl.u32 %v4549, 7
    %v4551 = vsub.s32 0, %v4550
    %v4552 = vrot.slane %v4547, %v4551
    %v4554 = vunpack.c.l.b16 %v4552
    %v4555 = vpack.c.b16 %v4554, %v4554
    %4556 = vrot.lane.b32.xlu0 %v4555, 10
    %v4557 = vpop.permute.xlu0 %4556
    %v4559 = vmul.bf16 %v4010, %v4557
    %s4560 = scalar_lea.vmem %s12, 32
    %v4561 = vld [vmem:[%s4560] sm:$0xf]
    %v4563 = vunpack.c.l.b16 %v4559
    %v4564 = vpack.c.b16 %v4563, %v4563
    %4565 = vrot.lane.b32.xlu0 %v4564, 118
    %v4566 = vpop.permute.xlu0 %4565
    %v4568 = vsel %vm457, %v4561, 0
    %v4571 = vsel %vm461, %v4566, 0
    %4573 = vmatprep.subr.bf16.mxu0 0
    %4574 = vmatpush1.bf16.msra.mxu0 %v4571
    %4575 = vmatprep.subr.bf16.mxu0 0
    %4576 = vmatpush1.bf16.msra.mxu0 0
    %4577 = vmatprep.subr.bf16.mxu0 0
    %4578 = vmatpush1.bf16.msra.mxu0 0
    %4579 = vmatprep.subr.bf16.mxu0 0
    %4580 = vmatpush1.bf16.msra.mxu0 0
    %4581 = vmatprep.subr.bf16.mxu0 0
    %4582 = vmatpush1.bf16.msra.mxu0 0
    %4583 = vmatprep.subr.bf16.mxu0 0
    %4584 = vmatpush1.bf16.msra.mxu0 0
    %4585 = vmatprep.subr.bf16.mxu0 0
    %4586 = vmatpush1.bf16.msra.mxu0 0
    %4587 = vmatprep.subr.bf16.mxu0 0
    %4588 = vmatpush1.bf16.msra.mxu0 0
    %4589 = vmatprep.subr.bf16.mxu0 0
    %4590 = vmatpush1.bf16.msra.mxu0 0
    %4591 = vmatprep.subr.bf16.mxu0 0
    %4592 = vmatpush1.bf16.msra.mxu0 0
    %4593 = vmatprep.subr.bf16.mxu0 0
    %4594 = vmatpush1.bf16.msra.mxu0 0
    %4595 = vmatprep.subr.bf16.mxu0 0
    %4596 = vmatpush1.bf16.msra.mxu0 0
    %4597 = vmatprep.subr.bf16.mxu0 0
    %4598 = vmatpush1.bf16.msra.mxu0 0
    %4599 = vmatprep.subr.bf16.mxu0 0
    %4600 = vmatpush1.bf16.msra.mxu0 0
    %4601 = vmatprep.subr.bf16.mxu0 0
    %4602 = vmatpush1.bf16.msra.mxu0 0
    %4603 = vmatprep.subr.bf16.mxu0 0
    %4604 = vmatpush1.bf16.msra.mxu0 0
    %4605 = vmatprep.mubr.bf16.mxu0 0
    %4606 = vmatmul.mubr.bf16.gmra.mrb[0].mxu0 %v4568
    %v4607 = vpop.f32.mrb[0].mxu0
    %v4608 = vadd.f32 0.0, %v4607
    %v4609 = vpop.f32.mrb[0].mxu0
    %v4610 = vpop.f32.mrb[0].mxu0
    %v4611 = vpop.f32.mrb[0].mxu0
    %4612 = vdwg.mxu0
    %v4613 = vadd.f32 %v4544, %v4608
    %v4614 = vld [vmem:[%s23] sm:$0xff]
    %v4615 = vld [vmem:[%s24] sm:$0xff]
    %s4616 = sld [smem:[#allocation3 + $0x9]]
    %v4617 = vsel %vm3968, %v4613, 0.0
    %4618 = vadd.xlane.f32.xlu0 %v4617
    %v4619 = vpop.xlane.xlu0 %4618
    %v4620 = vmul.f32 %v4619, 0.03125
    %v4621 = vsub.f32 %v4613, %v4620
    %v4622 = vmul.f32 %v4621, %v4621
    %v4623 = vsel %vm3968, %v4622, 0.0
    %4624 = vadd.xlane.f32.xlu0 %v4623
    %v4625 = vpop.xlane.xlu0 %4624
    %v4626 = vmul.f32 %v4625, 0.03125
    %v4627 = vadd.f32 %v4626, 1e-05
    %v4628 = vrsqrt.pop %v4627
    %v4629 = vmul.f32 %v4628, %v4614
    %4631 = vset.pattern.permute.xlu0 9
    %4632 = vperm.xlu0 %4631, %v4629
    %v4633 = vpop.permute.xlu0 %4632
    %v4635 = vmul.f32 %v4621, %v4633
    %4637 = vset.pattern.permute.xlu0 9
    %4638 = vperm.xlu0 %4637, %v4615
    %v4639 = vpop.permute.xlu0 %4638
    %v4641 = vadd.f32 %v4635, %v4639
    %vm4642 = vcmp.gt.f32.partialorder %v4641, 0.0
    %v4643 = vstv %s4616
    %v4644 = vmul.f32 %v4643, %v4641
    %v4645 = vsel %vm4642, %v4641, %v4644
    %v4646 = vpack.c.bf16 %v4645, %v4645
    %v4647 = vld [vmem:[%s13] sm:$0xf]
    %v4649 = vsel %vm457, %v4647, 0
    %v4652 = vsel %vm461, %v4646, 0
    %4654 = vmatprep.subr.bf16.mxu0 0
    %4655 = vmatpush1.bf16.msra.mxu0 %v4652
    %4656 = vmatprep.subr.bf16.mxu0 0
    %4657 = vmatpush1.bf16.msra.mxu0 0
    %4658 = vmatprep.subr.bf16.mxu0 0
    %4659 = vmatpush1.bf16.msra.mxu0 0
    %4660 = vmatprep.subr.bf16.mxu0 0
    %4661 = vmatpush1.bf16.msra.mxu0 0
    %4662 = vmatprep.subr.bf16.mxu0 0
    %4663 = vmatpush1.bf16.msra.mxu0 0
    %4664 = vmatprep.subr.bf16.mxu0 0
    %4665 = vmatpush1.bf16.msra.mxu0 0
    %4666 = vmatprep.subr.bf16.mxu0 0
    %4667 = vmatpush1.bf16.msra.mxu0 0
    %4668 = vmatprep.subr.bf16.mxu0 0
    %4669 = vmatpush1.bf16.msra.mxu0 0
    %4670 = vmatprep.subr.bf16.mxu0 0
    %4671 = vmatpush1.bf16.msra.mxu0 0
    %4672 = vmatprep.subr.bf16.mxu0 0
    %4673 = vmatpush1.bf16.msra.mxu0 0
    %4674 = vmatprep.subr.bf16.mxu0 0
    %4675 = vmatpush1.bf16.msra.mxu0 0
    %4676 = vmatprep.subr.bf16.mxu0 0
    %4677 = vmatpush1.bf16.msra.mxu0 0
    %4678 = vmatprep.subr.bf16.mxu0 0
    %4679 = vmatpush1.bf16.msra.mxu0 0
    %4680 = vmatprep.subr.bf16.mxu0 0
    %4681 = vmatpush1.bf16.msra.mxu0 0
    %4682 = vmatprep.subr.bf16.mxu0 0
    %4683 = vmatpush1.bf16.msra.mxu0 0
    %4684 = vmatprep.subr.bf16.mxu0 0
    %4685 = vmatpush1.bf16.msra.mxu0 0
    %4686 = vmatprep.mubr.bf16.mxu0 0
    %4687 = vmatmul.mubr.bf16.gmra.mrb[0].mxu0 %v4649
    %v4688 = vpop.f32.mrb[0].mxu0
    %v4689 = vadd.f32 0.0, %v4688
    %v4690 = vpop.f32.mrb[0].mxu0
    %v4691 = vpop.f32.mrb[0].mxu0
    %v4692 = vpop.f32.mrb[0].mxu0
    %4693 = vdwg.mxu0
    %s4694 = sld [smem:[#allocation3 + $0xa]]
    %v4695 = vsel %vm3968, %v4689, 0.0
    %4696 = vadd.xlane.f32.xlu0 %v4695
    %v4697 = vpop.xlane.xlu0 %4696
    %v4698 = vmul.f32 %v4697, 0.03125
    %v4699 = vsub.f32 %v4689, %v4698
    %v4700 = vmul.f32 %v4699, %v4699
    %v4701 = vsel %vm3968, %v4700, 0.0
    %4702 = vadd.xlane.f32.xlu0 %v4701
    %v4703 = vpop.xlane.xlu0 %4702
    %v4704 = vmul.f32 %v4703, 0.03125
    %v4705 = vadd.f32 %v4704, 1e-05
    %v4706 = vrsqrt.pop %v4705
    %v4707 = vmul.f32 %v4706, %v4614
    %4709 = vset.pattern.permute.xlu0 10
    %4710 = vperm.xlu0 %4709, %v4707
    %v4711 = vpop.permute.xlu0 %4710
    %v4713 = vmul.f32 %v4699, %v4711
    %4714 = vset.pattern.permute.xlu0 10
    %4715 = vperm.xlu0 %4714, %v4615
    %v4716 = vpop.permute.xlu0 %4715
    %v4718 = vadd.f32 %v4713, %v4716
    %vm4719 = vcmp.gt.f32.partialorder %v4718, 0.0
    %v4720 = vstv %s4694
    %v4721 = vmul.f32 %v4720, %v4718
    %v4722 = vsel %vm4719, %v4718, %v4721
    %v4723 = vpack.c.bf16 %v4722, %v4722
    %v4724 = vld [vmem:[%s14] sm:$0xf]
    %v4725 = vld [vmem:[%s15] sm:$0xf]
    %v4727 = vsel %vm457, %v4725, 0
    %v4730 = vsel %vm461, %v4723, 0
    %4732 = vmatprep.subr.bf16.mxu0 0
    %4733 = vmatpush1.bf16.msra.mxu0 %v4730
    %4734 = vmatprep.subr.bf16.mxu0 0
    %4735 = vmatpush1.bf16.msra.mxu0 0
    %4736 = vmatprep.subr.bf16.mxu0 0
    %4737 = vmatpush1.bf16.msra.mxu0 0
    %4738 = vmatprep.subr.bf16.mxu0 0
    %4739 = vmatpush1.bf16.msra.mxu0 0
    %4740 = vmatprep.subr.bf16.mxu0 0
    %4741 = vmatpush1.bf16.msra.mxu0 0
    %4742 = vmatprep.subr.bf16.mxu0 0
    %4743 = vmatpush1.bf16.msra.mxu0 0
    %4744 = vmatprep.subr.bf16.mxu0 0
    %4745 = vmatpush1.bf16.msra.mxu0 0
    %4746 = vmatprep.subr.bf16.mxu0 0
    %4747 = vmatpush1.bf16.msra.mxu0 0
    %4748 = vmatprep.subr.bf16.mxu0 0
    %4749 = vmatpush1.bf16.msra.mxu0 0
    %4750 = vmatprep.subr.bf16.mxu0 0
    %4751 = vmatpush1.bf16.msra.mxu0 0
    %4752 = vmatprep.subr.bf16.mxu0 0
    %4753 = vmatpush1.bf16.msra.mxu0 0
    %4754 = vmatprep.subr.bf16.mxu0 0
    %4755 = vmatpush1.bf16.msra.mxu0 0
    %4756 = vmatprep.subr.bf16.mxu0 0
    %4757 = vmatpush1.bf16.msra.mxu0 0
    %4758 = vmatprep.subr.bf16.mxu0 0
    %4759 = vmatpush1.bf16.msra.mxu0 0
    %4760 = vmatprep.subr.bf16.mxu0 0
    %4761 = vmatpush1.bf16.msra.mxu0 0
    %4762 = vmatprep.subr.bf16.mxu0 0
    %4763 = vmatpush1.bf16.msra.mxu0 0
    %4764 = vmatprep.mubr.bf16.mxu0 0
    %4765 = vmatmul.mubr.bf16.gmra.mrb[0].mxu0 %v4727
    %v4766 = vpop.f32.mrb[0].mxu0
    %v4767 = vadd.f32 0.0, %v4766
    %v4768 = vpop.f32.mrb[0].mxu0
    %v4769 = vpop.f32.mrb[0].mxu0
    %v4770 = vpop.f32.mrb[0].mxu0
    %4771 = vdwg.mxu0
    %v4773 = vsel %vm457, %v4724, 0
    %4775 = vmatprep.subr.bf16.mxu0 0
    %4776 = vmatpush1.bf16.msra.mxu0 %v3923
    %4777 = vmatprep.subr.bf16.mxu0 0
    %4778 = vmatpush1.bf16.msra.mxu0 0
    %4779 = vmatprep.subr.bf16.mxu0 0
    %4780 = vmatpush1.bf16.msra.mxu0 0
    %4781 = vmatprep.subr.bf16.mxu0 0
    %4782 = vmatpush1.bf16.msra.mxu0 0
    %4783 = vmatprep.subr.bf16.mxu0 0
    %4784 = vmatpush1.bf16.msra.mxu0 0
    %4785 = vmatprep.subr.bf16.mxu0 0
    %4786 = vmatpush1.bf16.msra.mxu0 0
    %4787 = vmatprep.subr.bf16.mxu0 0
    %4788 = vmatpush1.bf16.msra.mxu0 0
    %4789 = vmatprep.subr.bf16.mxu0 0
    %4790 = vmatpush1.bf16.msra.mxu0 0
    %4791 = vmatprep.subr.bf16.mxu0 0
    %4792 = vmatpush1.bf16.msra.mxu0 0
    %4793 = vmatprep.subr.bf16.mxu0 0
    %4794 = vmatpush1.bf16.msra.mxu0 0
    %4795 = vmatprep.subr.bf16.mxu0 0
    %4796 = vmatpush1.bf16.msra.mxu0 0
    %4797 = vmatprep.subr.bf16.mxu0 0
    %4798 = vmatpush1.bf16.msra.mxu0 0
    %4799 = vmatprep.subr.bf16.mxu0 0
    %4800 = vmatpush1.bf16.msra.mxu0 0
    %4801 = vmatprep.subr.bf16.mxu0 0
    %4802 = vmatpush1.bf16.msra.mxu0 0
    %4803 = vmatprep.subr.bf16.mxu0 0
    %4804 = vmatpush1.bf16.msra.mxu0 0
    %4805 = vmatprep.subr.bf16.mxu0 0
    %4806 = vmatpush1.bf16.msra.mxu0 0
    %4807 = vmatprep.mubr.bf16.mxu0 0
    %4808 = vmatmul.mubr.bf16.gmra.mrb[0].mxu0 %v4773
    %v4809 = vpop.f32.mrb[0].mxu0
    %v4810 = vadd.f32 %v4767, %v4809
    %v4811 = vpop.f32.mrb[0].mxu0
    %v4812 = vpop.f32.mrb[0].mxu0
    %v4813 = vpop.f32.mrb[0].mxu0
    %4814 = vdwg.mxu0
    %s4815 = sld [smem:[#allocation3 + $0xb]]
    %v4816 = vsel %vm3968, %v4810, 0.0
    %4817 = vadd.xlane.f32.xlu0 %v4816
    %v4818 = vpop.xlane.xlu0 %4817
    %v4819 = vmul.f32 %v4818, 0.03125
    %v4820 = vsub.f32 %v4810, %v4819
    %v4821 = vmul.f32 %v4820, %v4820
    %v4822 = vsel %vm3968, %v4821, 0.0
    %4823 = vadd.xlane.f32.xlu0 %v4822
    %v4824 = vpop.xlane.xlu0 %4823
    %v4825 = vmul.f32 %v4824, 0.03125
    %v4826 = vadd.f32 %v4825, 1e-05
    %v4827 = vrsqrt.pop %v4826
    %v4828 = vmul.f32 %v4827, %v4614
    %4830 = vset.pattern.permute.xlu0 11
    %4831 = vperm.xlu0 %4830, %v4828
    %v4832 = vpop.permute.xlu0 %4831
    %v4834 = vmul.f32 %v4820, %v4832
    %4835 = vset.pattern.permute.xlu0 11
    %4836 = vperm.xlu0 %4835, %v4615
    %v4837 = vpop.permute.xlu0 %4836
    %v4839 = vadd.f32 %v4834, %v4837
    %vm4840 = vcmp.gt.f32.partialorder %v4839, 0.0
    %v4841 = vstv %s4815
    %v4842 = vmul.f32 %v4841, %v4839
    %v4843 = vsel %vm4840, %v4839, %v4842
    %v4844 = vpack.c.bf16 %v4843, %v4843
    %v4845 = vld [vmem:[%s19] sm:$0xf]
    %v4846 = vld [vmem:[%s19 + $0x4] sm:$0xf]
    %v4847 = vld [vmem:[%s19 + $0x8] sm:$0xf]
    %v4848 = vld [vmem:[%s19 + $0xc] sm:$0xf]
    %v4853 = vunpack.c.l.b16 %v4845
    %v4854 = vunpack.c.l.b16 %v4846
    %v4855 = vunpack.c.l.b16 %v4847
    %v4856 = vunpack.c.l.b16 %v4848
    %v4857 = vpack.c.b16 %v4854, %v4853
    %v4858 = vpack.c.b16 %v4856, %v4855
    %v4862 = vsel %vm3968, %v4844, 0
    %4864 = vmatprep.subr.bf16.mxu0 0
    %4865 = vmatpush1.bf16.msra.mxu0 %v4857
    %4866 = vmatprep.subr.bf16.mxu0 0
    %4867 = vmatpush1.bf16.msra.mxu0 %v4858
    %4868 = vmatprep.subr.bf16.mxu0 0
    %4869 = vmatpush1.bf16.msra.mxu0 0
    %4870 = vmatprep.subr.bf16.mxu0 0
    %4871 = vmatpush1.bf16.msra.mxu0 0
    %4872 = vmatprep.subr.bf16.mxu0 0
    %4873 = vmatpush1.bf16.msra.mxu0 0
    %4874 = vmatprep.subr.bf16.mxu0 0
    %4875 = vmatpush1.bf16.msra.mxu0 0
    %4876 = vmatprep.subr.bf16.mxu0 0
    %4877 = vmatpush1.bf16.msra.mxu0 0
    %4878 = vmatprep.subr.bf16.mxu0 0
    %4879 = vmatpush1.bf16.msra.mxu0 0
    %4880 = vmatprep.subr.bf16.mxu0 0
    %4881 = vmatpush1.bf16.msra.mxu0 0
    %4882 = vmatprep.subr.bf16.mxu0 0
    %4883 = vmatpush1.bf16.msra.mxu0 0
    %4884 = vmatprep.subr.bf16.mxu0 0
    %4885 = vmatpush1.bf16.msra.mxu0 0
    %4886 = vmatprep.subr.bf16.mxu0 0
    %4887 = vmatpush1.bf16.msra.mxu0 0
    %4888 = vmatprep.subr.bf16.mxu0 0
    %4889 = vmatpush1.bf16.msra.mxu0 0
    %4890 = vmatprep.subr.bf16.mxu0 0
    %4891 = vmatpush1.bf16.msra.mxu0 0
    %4892 = vmatprep.subr.bf16.mxu0 0
    %4893 = vmatpush1.bf16.msra.mxu0 0
    %4894 = vmatprep.subr.bf16.mxu0 0
    %4895 = vmatpush1.bf16.msra.mxu0 0
    %4896 = vmatprep.mubr.bf16.mxu0 0
    %4897 = vmatmul.mubr.bf16.gmra.mrb[0].mxu0 %v4862
    %v4898 = vpop.f32.mrb[0].mxu0
    %v4899 = vadd.f32 0.0, %v4898
    %v4900 = vpop.f32.mrb[0].mxu0
    %v4901 = vpop.f32.mrb[0].mxu0
    %v4902 = vpop.f32.mrb[0].mxu0
    %4903 = vdwg.mxu0
    %v4904 = vpack.c.bf16 %v4899, %v4899
    %v4905 = vld [vmem:[%s16] sm:$0xf]
    %v4907 = vsel %vm457, %v4905, 0
    %v4910 = vsel %vm461, %v4904, 0
    %4912 = vmatprep.subr.bf16.mxu0 0
    %4913 = vmatpush1.bf16.msra.mxu0 %v4910
    %4914 = vmatprep.subr.bf16.mxu0 0
    %4915 = vmatpush1.bf16.msra.mxu0 0
    %4916 = vmatprep.subr.bf16.mxu0 0
    %4917 = vmatpush1.bf16.msra.mxu0 0
    %4918 = vmatprep.subr.bf16.mxu0 0
    %4919 = vmatpush1.bf16.msra.mxu0 0
    %4920 = vmatprep.subr.bf16.mxu0 0
    %4921 = vmatpush1.bf16.msra.mxu0 0
    %4922 = vmatprep.subr.bf16.mxu0 0
    %4923 = vmatpush1.bf16.msra.mxu0 0
    %4924 = vmatprep.subr.bf16.mxu0 0
    %4925 = vmatpush1.bf16.msra.mxu0 0
    %4926 = vmatprep.subr.bf16.mxu0 0
    %4927 = vmatpush1.bf16.msra.mxu0 0
    %4928 = vmatprep.subr.bf16.mxu0 0
    %4929 = vmatpush1.bf16.msra.mxu0 0
    %4930 = vmatprep.subr.bf16.mxu0 0
    %4931 = vmatpush1.bf16.msra.mxu0 0
    %4932 = vmatprep.subr.bf16.mxu0 0
    %4933 = vmatpush1.bf16.msra.mxu0 0
    %4934 = vmatprep.subr.bf16.mxu0 0
    %4935 = vmatpush1.bf16.msra.mxu0 0
    %4936 = vmatprep.subr.bf16.mxu0 0
    %4937 = vmatpush1.bf16.msra.mxu0 0
    %4938 = vmatprep.subr.bf16.mxu0 0
    %4939 = vmatpush1.bf16.msra.mxu0 0
    %4940 = vmatprep.subr.bf16.mxu0 0
    %4941 = vmatpush1.bf16.msra.mxu0 0
    %4942 = vmatprep.subr.bf16.mxu0 0
    %4943 = vmatpush1.bf16.msra.mxu0 0
    %4944 = vmatprep.mubr.bf16.mxu0 0
    %4945 = vmatmul.mubr.bf16.gmra.mrb[0].mxu0 %v4907
    %v4946 = vpop.f32.mrb[0].mxu0
    %v4947 = vadd.f32 0.0, %v4946
    %v4948 = vpop.f32.mrb[0].mxu0
    %v4949 = vpop.f32.mrb[0].mxu0
    %v4950 = vpop.f32.mrb[0].mxu0
    %4951 = vdwg.mxu0
    %s4952 = sld [smem:[#allocation3 + $0xc]]
    %v4953 = vsel %vm457, %v4947, 0.0
    %4954 = vadd.xlane.f32.xlu0 %v4953
    %v4955 = vpop.xlane.xlu0 %4954
    %v4956 = vmul.f32 %v4955, 0.125
    %v4957 = vsub.f32 %v4947, %v4956
    %v4958 = vmul.f32 %v4957, %v4957
    %v4959 = vsel %vm457, %v4958, 0.0
    %4960 = vadd.xlane.f32.xlu0 %v4959
    %v4961 = vpop.xlane.xlu0 %4960
    %v4962 = vmul.f32 %v4961, 0.125
    %v4963 = vadd.f32 %v4962, 1e-05
    %v4964 = vrsqrt.pop %v4963
    %v4965 = vmul.f32 %v4964, %v4614
    %4967 = vset.pattern.permute.xlu0 12
    %4968 = vperm.xlu0 %4967, %v4965
    %v4969 = vpop.permute.xlu0 %4968
    %v4971 = vmul.f32 %v4957, %v4969
    %4972 = vset.pattern.permute.xlu0 12
    %4973 = vperm.xlu0 %4972, %v4615
    %v4974 = vpop.permute.xlu0 %4973
    %v4976 = vadd.f32 %v4971, %v4974
    %vm4977 = vcmp.gt.f32.partialorder %v4976, 0.0
    %v4978 = vstv %s4952
    %v4979 = vmul.f32 %v4978, %v4976
    %v4980 = vsel %vm4977, %v4976, %v4979
    %v4981 = vpack.c.bf16 %v4980, %v4980
    %vm4982 = vcmask 60416
    %4983 = vst.msk [vmem:[%s28] sm:$0xf] %vm4982, %v4981
    // Predicated region
    $region110: #{encoder_block_forward.2} parent=1 // pred_check
      _
    $region111: #{encoder_block_forward.2} parent=1 // pred_check_branch
      %4985 = sbr.rel (0) target = $region113
    $region112: #{encoder_block_forward.2} parent=1 // pred_region
      _
    $region113: #{encoder_block_forward.2} parent=1 // pred_fallthru
      _
    // Predicated region
    $region114: #{encoder_block_forward.2} parent=1 // pred_check
      _
    $region115: #{encoder_block_forward.2} parent=1 // pred_check_branch
      %4987 = sbr.rel (0) target = $region117
    $region116: #{encoder_block_forward.2} parent=1 // pred_region
      _
    $region117: #{encoder_block_forward.2} parent=1 // pred_fallthru
      _
    // Predicated region
    $region118: #{encoder_block_forward.2} parent=1 // pred_check
      _
    $region119: #{encoder_block_forward.2} parent=1 // pred_check_branch
      %4989 = sbr.rel (0) target = $region121
    $region120: #{encoder_block_forward.2} parent=1 // pred_region
      _
    $region121: #{encoder_block_forward.2} parent=1 // pred_fallthru
      _
    // Predicated region
    $region122: #{encoder_block_forward.2} parent=1 // pred_check
      _
    $region123: #{encoder_block_forward.2} parent=1 // pred_check_branch
      %4991 = sbr.rel (0) target = $region125
    $region124: #{encoder_block_forward.2} parent=1 // pred_region
      _
    $region125: #{encoder_block_forward.2} parent=1 // pred_fallthru
      _
    // Predicated region
    $region126: #{encoder_block_forward.2} parent=1 // pred_check
      _
    $region127: #{encoder_block_forward.2} parent=1 // pred_check_branch
      %4993 = sbr.rel (0) target = $region129
    $region128: #{encoder_block_forward.2} parent=1 // pred_region
      _
    $region129: #{encoder_block_forward.2} parent=1 // pred_fallthru
      _
    // Predicated region
    $region130: #{encoder_block_forward.2} parent=1 // pred_check
      _
    $region131: #{encoder_block_forward.2} parent=1 // pred_check_branch
      %4995 = sbr.rel (0) target = $region133
    $region132: #{encoder_block_forward.2} parent=1 // pred_region
      _
    $region133: #{encoder_block_forward.2} parent=1 // pred_fallthru
      _
    %4996 = vsyncpa [#allocation4], 1

// kernel: encoder_block_forward.3
$region0: #{encoder_block_forward.3}
  #allocation0 [shape = 'u32[]', space=smem, size = 0x4, offset = 0x4, fixed_abs, tag = 'smem constant byte address 0x4 - core index']
  #allocation1 [shape = 'u32[144,128]{1,0:T(1,128)}', space=vmem, size = 0x12000, scoped, tag = 'internal scratch']
  #allocation2 [shape = 'bf16[8,14]{1,0:T(8,128)(2,1)}', space=vmem, size = 0x800, scoped, tag = 'scratch operand']
  %s0 = inlined_call_operand.vmem [shape: bf16[8,8], index: 0, kind: input, shape index: {}]
  %s1 = inlined_call_operand.vmem [shape: bf16[1152,8], index: 1, kind: input, shape index: {}]
  %s2 = inlined_call_operand.vmem [shape: bf16[512,8], index: 2, kind: input, shape index: {}]
  %s3 = inlined_call_operand.vmem [shape: bf16[8,1152], index: 3, kind: input, shape index: {}]
  %s4 = inlined_call_operand.vmem [shape: bf16[8,512], index: 4, kind: input, shape index: {}]
  %s5 = inlined_call_operand.vmem [shape: bf16[9,8,8], index: 5, kind: input, shape index: {}]
  %s6 = inlined_call_operand.vmem [shape: bf16[9,8,8], index: 6, kind: input, shape index: {}]
  %s7 = inlined_call_operand.vmem [shape: bf16[9,8,8], index: 7, kind: input, shape index: {}]
  %s8 = inlined_call_operand.vmem [shape: bf16[4,8], index: 8, kind: input, shape index: {}]
  %s9 = inlined_call_operand.vmem [shape: bf16[9,8], index: 9, kind: input, shape index: {}]
  %s10 = inlined_call_operand.vmem [shape: f32[8,3], index: 10, kind: input, shape index: {}]
  %s11 = inlined_call_operand.vmem [shape: f32[8,3], index: 11, kind: input, shape index: {}]
  %s12 = inlined_call_operand.vmem [shape: f32[4,1], index: 12, kind: input, shape index: {}]
  %s13 = inlined_call_operand.vmem [shape: f32[4,1], index: 13, kind: input, shape index: {}]
  %s14 = inlined_call_operand.vmem [shape: f32[4], index: 14, kind: input, shape index: {}]
  %s15 = inlined_call_operand.vmem [shape: bf16[4,8], index: 15, kind: output, shape index: {}]
  %s16 = sld [smem:[#allocation0]]
  $region74: #{encoder_block_forward.3} parent=0
    _
  %s18 = ssub.s32 1, %s16
  %s19 = scalar_select 0, %s18, %s16
  $region1: #{encoder_block_forward.3} parent=0
    #allocation3 [shape = 'u8[512]{0}', space=smem, size = 0x200, scoped, tag = 'input window, operand 14, single buffered']
    #allocation4 [shape = 's32[1]{0}', space=sflag, size = 0x4, scoped, tag = 'scoped memory for encoder_block_forward.3']
    %20 = vsyncpa [#allocation4], 0
    // Predicated region
    $region2: #{encoder_block_forward.3} parent=1 // pred_check
      _
    $region3: #{encoder_block_forward.3} parent=1 // pred_check_branch
      %22 = sbr.rel (0) target = $region5
    $region4: #{encoder_block_forward.3} parent=1 // pred_region
      _
    $region5: #{encoder_block_forward.3} parent=1 // pred_fallthru
      _
    // Predicated region
    $region6: #{encoder_block_forward.3} parent=1 // pred_check
      _
    $region7: #{encoder_block_forward.3} parent=1 // pred_check_branch
      %24 = sbr.rel (0) target = $region9
    $region8: #{encoder_block_forward.3} parent=1 // pred_region
      _
    $region9: #{encoder_block_forward.3} parent=1 // pred_fallthru
      _
    // Predicated region
    $region10: #{encoder_block_forward.3} parent=1 // pred_check
      _
    $region11: #{encoder_block_forward.3} parent=1 // pred_check_branch
      %26 = sbr.rel (0) target = $region13
    $region12: #{encoder_block_forward.3} parent=1 // pred_region
      _
    $region13: #{encoder_block_forward.3} parent=1 // pred_fallthru
      _
    // Predicated region
    $region14: #{encoder_block_forward.3} parent=1 // pred_check
      _
    $region15: #{encoder_block_forward.3} parent=1 // pred_check_branch
      %28 = sbr.rel (0) target = $region17
    $region16: #{encoder_block_forward.3} parent=1 // pred_region
      _
    $region17: #{encoder_block_forward.3} parent=1 // pred_fallthru
      _
    // Predicated region
    $region18: #{encoder_block_forward.3} parent=1 // pred_check
      _
    $region19: #{encoder_block_forward.3} parent=1 // pred_check_branch
      %30 = sbr.rel (0) target = $region21
    $region20: #{encoder_block_forward.3} parent=1 // pred_region
      _
    $region21: #{encoder_block_forward.3} parent=1 // pred_fallthru
      _
    // Predicated region
    $region22: #{encoder_block_forward.3} parent=1 // pred_check
      _
    $region23: #{encoder_block_forward.3} parent=1 // pred_check_branch
      %32 = sbr.rel (0) target = $region25
    $region24: #{encoder_block_forward.3} parent=1 // pred_region
      _
    $region25: #{encoder_block_forward.3} parent=1 // pred_fallthru
      _
    // Predicated region
    $region26: #{encoder_block_forward.3} parent=1 // pred_check
      _
    $region27: #{encoder_block_forward.3} parent=1 // pred_check_branch
      %34 = sbr.rel (0) target = $region29
    $region28: #{encoder_block_forward.3} parent=1 // pred_region
      _
    $region29: #{encoder_block_forward.3} parent=1 // pred_fallthru
      _
    // Predicated region
    $region30: #{encoder_block_forward.3} parent=1 // pred_check
      _
    $region31: #{encoder_block_forward.3} parent=1 // pred_check_branch
      %36 = sbr.rel (0) target = $region33
    $region32: #{encoder_block_forward.3} parent=1 // pred_region
      _
    $region33: #{encoder_block_forward.3} parent=1 // pred_fallthru
      _
    // Predicated region
    $region34: #{encoder_block_forward.3} parent=1 // pred_check
      _
    $region35: #{encoder_block_forward.3} parent=1 // pred_check_branch
      %38 = sbr.rel (0) target = $region37
    $region36: #{encoder_block_forward.3} parent=1 // pred_region
      _
    $region37: #{encoder_block_forward.3} parent=1 // pred_fallthru
      _
    // Predicated region
    $region38: #{encoder_block_forward.3} parent=1 // pred_check
      _
    $region39: #{encoder_block_forward.3} parent=1 // pred_check_branch
      %40 = sbr.rel (0) target = $region41
    $region40: #{encoder_block_forward.3} parent=1 // pred_region
      _
    $region41: #{encoder_block_forward.3} parent=1 // pred_fallthru
      _
    // Predicated region
    $region42: #{encoder_block_forward.3} parent=1 // pred_check
      _
    $region43: #{encoder_block_forward.3} parent=1 // pred_check_branch
      %42 = sbr.rel (0) target = $region45
    $region44: #{encoder_block_forward.3} parent=1 // pred_region
      _
    $region45: #{encoder_block_forward.3} parent=1 // pred_fallthru
      _
    // Predicated region
    $region46: #{encoder_block_forward.3} parent=1 // pred_check
      _
    $region47: #{encoder_block_forward.3} parent=1 // pred_check_branch
      %44 = sbr.rel (0) target = $region49
    $region48: #{encoder_block_forward.3} parent=1 // pred_region
      _
    $region49: #{encoder_block_forward.3} parent=1 // pred_fallthru
      _
    // Predicated region
    $region50: #{encoder_block_forward.3} parent=1 // pred_check
      _
    $region51: #{encoder_block_forward.3} parent=1 // pred_check_branch
      %46 = sbr.rel (0) target = $region53
    $region52: #{encoder_block_forward.3} parent=1 // pred_region
      _
    $region53: #{encoder_block_forward.3} parent=1 // pred_fallthru
      _
    // Predicated region
    $region54: #{encoder_block_forward.3} parent=1 // pred_check
      _
    $region55: #{encoder_block_forward.3} parent=1 // pred_check_branch
      %48 = sbr.rel (0) target = $region57
    $region56: #{encoder_block_forward.3} parent=1 // pred_region
      _
    $region57: #{encoder_block_forward.3} parent=1 // pred_fallthru
      _
    // Predicated region
    $region58: #{encoder_block_forward.3} parent=1 // pred_check
      _
    $region59: #{encoder_block_forward.3} parent=1 // pred_check_branch
      %50 = sbr.rel (0) target = $region61
    $region60: #{encoder_block_forward.3} parent=1 // pred_region
      %s52 = ssub.s32 16, 16
      %53 = vsyncadd [#allocation4], %s52
      %s55 = sshll.u32 %s14, 4
      %s56 = int_to_ptr.vmem [resolvable:$true] %s55
      %58 = dma.vmem_to_smem %s56, 16, [#allocation3], [#allocation4]
    $region61: #{encoder_block_forward.3} parent=1 // pred_fallthru
      _
    // Predicated region
    $region62: #{encoder_block_forward.3} parent=1 // pred_check
      _
    $region63: #{encoder_block_forward.3} parent=1 // pred_check_branch
      %60 = sbr.rel (0) target = $region65
    $region64: #{encoder_block_forward.3} parent=1 // pred_region
      %61 = dma.done [#allocation4], 16
    $region65: #{encoder_block_forward.3} parent=1 // pred_fallthru
      _
    %62 = sfence
    %v64 = vld [vmem:[%s3] sm:$0xff]
    %v65 = vld [vmem:[%s3 + $0x8] sm:$0xff]
    %v66 = vld [vmem:[%s3 + $0x10] sm:$0xff]
    %v67 = vld [vmem:[%s3 + $0x18] sm:$0xff]
    %v68 = vld [vmem:[%s3 + $0x20] sm:$0xf]
    %v69 = vld [vmem:[%s1] sm:$0xf]
    %v70 = vld [vmem:[%s1 + $0x4] sm:$0xf]
    %v71 = vld [vmem:[%s1 + $0x8] sm:$0xf]
    %v72 = vld [vmem:[%s1 + $0xc] sm:$0xf]
    %v73 = vld [vmem:[%s1 + $0x10] sm:$0xf]
    %v74 = vld [vmem:[%s1 + $0x14] sm:$0xf]
    %v75 = vld [vmem:[%s1 + $0x18] sm:$0xf]
    %v76 = vld [vmem:[%s1 + $0x1c] sm:$0xf]
    %v77 = vld [vmem:[%s1 + $0x20] sm:$0xf]
    %v78 = vld [vmem:[%s1 + $0x24] sm:$0xf]
    %v79 = vld [vmem:[%s1 + $0x28] sm:$0xf]
    %v80 = vld [vmem:[%s1 + $0x2c] sm:$0xf]
    %v81 = vld [vmem:[%s1 + $0x30] sm:$0xf]
    %v82 = vld [vmem:[%s1 + $0x34] sm:$0xf]
    %v83 = vld [vmem:[%s1 + $0x38] sm:$0xf]
    %v84 = vld [vmem:[%s1 + $0x3c] sm:$0xf]
    %v85 = vld [vmem:[%s1 + $0x40] sm:$0xf]
    %v86 = vld [vmem:[%s1 + $0x44] sm:$0xf]
    %v87 = vld [vmem:[%s1 + $0x48] sm:$0xf]
    %v88 = vld [vmem:[%s1 + $0x4c] sm:$0xf]
    %v89 = vld [vmem:[%s1 + $0x50] sm:$0xf]
    %v90 = vld [vmem:[%s1 + $0x54] sm:$0xf]
    %v91 = vld [vmem:[%s1 + $0x58] sm:$0xf]
    %v92 = vld [vmem:[%s1 + $0x5c] sm:$0xf]
    %v93 = vld [vmem:[%s1 + $0x60] sm:$0xf]
    %v94 = vld [vmem:[%s1 + $0x64] sm:$0xf]
    %v95 = vld [vmem:[%s1 + $0x68] sm:$0xf]
    %v96 = vld [vmem:[%s1 + $0x6c] sm:$0xf]
    %v97 = vld [vmem:[%s1 + $0x70] sm:$0xf]
    %v98 = vld [vmem:[%s1 + $0x74] sm:$0xf]
    %v99 = vld [vmem:[%s1 + $0x78] sm:$0xf]
    %v100 = vld [vmem:[%s1 + $0x7c] sm:$0xf]
    %v101 = vld [vmem:[%s1 + $0x80] sm:$0xf]
    %v102 = vld [vmem:[%s1 + $0x84] sm:$0xf]
    %v103 = vld [vmem:[%s1 + $0x88] sm:$0xf]
    %v104 = vld [vmem:[%s1 + $0x8c] sm:$0xf]
    %v105 = vld [vmem:[%s1 + $0x90] sm:$0xf]
    %v106 = vld [vmem:[%s1 + $0x94] sm:$0xf]
    %v107 = vld [vmem:[%s1 + $0x98] sm:$0xf]
    %v108 = vld [vmem:[%s1 + $0x9c] sm:$0xf]
    %v109 = vld [vmem:[%s1 + $0xa0] sm:$0xf]
    %v110 = vld [vmem:[%s1 + $0xa4] sm:$0xf]
    %v111 = vld [vmem:[%s1 + $0xa8] sm:$0xf]
    %v112 = vld [vmem:[%s1 + $0xac] sm:$0xf]
    %v113 = vld [vmem:[%s1 + $0xb0] sm:$0xf]
    %v114 = vld [vmem:[%s1 + $0xb4] sm:$0xf]
    %v115 = vld [vmem:[%s1 + $0xb8] sm:$0xf]
    %v116 = vld [vmem:[%s1 + $0xbc] sm:$0xf]
    %v117 = vld [vmem:[%s1 + $0xc0] sm:$0xf]
    %v118 = vld [vmem:[%s1 + $0xc4] sm:$0xf]
    %v119 = vld [vmem:[%s1 + $0xc8] sm:$0xf]
    %v120 = vld [vmem:[%s1 + $0xcc] sm:$0xf]
    %v121 = vld [vmem:[%s1 + $0xd0] sm:$0xf]
    %v122 = vld [vmem:[%s1 + $0xd4] sm:$0xf]
    %v123 = vld [vmem:[%s1 + $0xd8] sm:$0xf]
    %v124 = vld [vmem:[%s1 + $0xdc] sm:$0xf]
    %v125 = vld [vmem:[%s1 + $0xe0] sm:$0xf]
    %v126 = vld [vmem:[%s1 + $0xe4] sm:$0xf]
    %v127 = vld [vmem:[%s1 + $0xe8] sm:$0xf]
    %v128 = vld [vmem:[%s1 + $0xec] sm:$0xf]
    %v129 = vld [vmem:[%s1 + $0xf0] sm:$0xf]
    %v130 = vld [vmem:[%s1 + $0xf4] sm:$0xf]
    %v131 = vld [vmem:[%s1 + $0xf8] sm:$0xf]
    %v132 = vld [vmem:[%s1 + $0xfc] sm:$0xf]
    %v133 = vld [vmem:[%s1 + $0x100] sm:$0xf]
    %v134 = vld [vmem:[%s1 + $0x104] sm:$0xf]
    %v135 = vld [vmem:[%s1 + $0x108] sm:$0xf]
    %v136 = vld [vmem:[%s1 + $0x10c] sm:$0xf]
    %v137 = vld [vmem:[%s1 + $0x110] sm:$0xf]
    %v138 = vld [vmem:[%s1 + $0x114] sm:$0xf]
    %v139 = vld [vmem:[%s1 + $0x118] sm:$0xf]
    %v140 = vld [vmem:[%s1 + $0x11c] sm:$0xf]
    %v141 = vld [vmem:[%s1 + $0x120] sm:$0xf]
    %v142 = vld [vmem:[%s1 + $0x124] sm:$0xf]
    %v143 = vld [vmem:[%s1 + $0x128] sm:$0xf]
    %v144 = vld [vmem:[%s1 + $0x12c] sm:$0xf]
    %v145 = vld [vmem:[%s1 + $0x130] sm:$0xf]
    %v146 = vld [vmem:[%s1 + $0x134] sm:$0xf]
    %v147 = vld [vmem:[%s1 + $0x138] sm:$0xf]
    %v148 = vld [vmem:[%s1 + $0x13c] sm:$0xf]
    %v149 = vld [vmem:[%s1 + $0x140] sm:$0xf]
    %v150 = vld [vmem:[%s1 + $0x144] sm:$0xf]
    %v151 = vld [vmem:[%s1 + $0x148] sm:$0xf]
    %v152 = vld [vmem:[%s1 + $0x14c] sm:$0xf]
    %v153 = vld [vmem:[%s1 + $0x150] sm:$0xf]
    %v154 = vld [vmem:[%s1 + $0x154] sm:$0xf]
    %v155 = vld [vmem:[%s1 + $0x158] sm:$0xf]
    %v156 = vld [vmem:[%s1 + $0x15c] sm:$0xf]
    %v157 = vld [vmem:[%s1 + $0x160] sm:$0xf]
    %v158 = vld [vmem:[%s1 + $0x164] sm:$0xf]
    %v159 = vld [vmem:[%s1 + $0x168] sm:$0xf]
    %v160 = vld [vmem:[%s1 + $0x16c] sm:$0xf]
    %v161 = vld [vmem:[%s1 + $0x170] sm:$0xf]
    %v162 = vld [vmem:[%s1 + $0x174] sm:$0xf]
    %v163 = vld [vmem:[%s1 + $0x178] sm:$0xf]
    %v164 = vld [vmem:[%s1 + $0x17c] sm:$0xf]
    %v165 = vld [vmem:[%s1 + $0x180] sm:$0xf]
    %v166 = vld [vmem:[%s1 + $0x184] sm:$0xf]
    %v167 = vld [vmem:[%s1 + $0x188] sm:$0xf]
    %v168 = vld [vmem:[%s1 + $0x18c] sm:$0xf]
    %v169 = vld [vmem:[%s1 + $0x190] sm:$0xf]
    %v170 = vld [vmem:[%s1 + $0x194] sm:$0xf]
    %v171 = vld [vmem:[%s1 + $0x198] sm:$0xf]
    %v172 = vld [vmem:[%s1 + $0x19c] sm:$0xf]
    %v173 = vld [vmem:[%s1 + $0x1a0] sm:$0xf]
    %v174 = vld [vmem:[%s1 + $0x1a4] sm:$0xf]
    %v175 = vld [vmem:[%s1 + $0x1a8] sm:$0xf]
    %v176 = vld [vmem:[%s1 + $0x1ac] sm:$0xf]
    %v177 = vld [vmem:[%s1 + $0x1b0] sm:$0xf]
    %v178 = vld [vmem:[%s1 + $0x1b4] sm:$0xf]
    %v179 = vld [vmem:[%s1 + $0x1b8] sm:$0xf]
    %v180 = vld [vmem:[%s1 + $0x1bc] sm:$0xf]
    %v181 = vld [vmem:[%s1 + $0x1c0] sm:$0xf]
    %v182 = vld [vmem:[%s1 + $0x1c4] sm:$0xf]
    %v183 = vld [vmem:[%s1 + $0x1c8] sm:$0xf]
    %v184 = vld [vmem:[%s1 + $0x1cc] sm:$0xf]
    %v185 = vld [vmem:[%s1 + $0x1d0] sm:$0xf]
    %v186 = vld [vmem:[%s1 + $0x1d4] sm:$0xf]
    %v187 = vld [vmem:[%s1 + $0x1d8] sm:$0xf]
    %v188 = vld [vmem:[%s1 + $0x1dc] sm:$0xf]
    %v189 = vld [vmem:[%s1 + $0x1e0] sm:$0xf]
    %v190 = vld [vmem:[%s1 + $0x1e4] sm:$0xf]
    %v191 = vld [vmem:[%s1 + $0x1e8] sm:$0xf]
    %v192 = vld [vmem:[%s1 + $0x1ec] sm:$0xf]
    %v193 = vld [vmem:[%s1 + $0x1f0] sm:$0xf]
    %v194 = vld [vmem:[%s1 + $0x1f4] sm:$0xf]
    %v195 = vld [vmem:[%s1 + $0x1f8] sm:$0xf]
    %v196 = vld [vmem:[%s1 + $0x1fc] sm:$0xf]
    %v197 = vld [vmem:[%s1 + $0x200] sm:$0xf]
    %v198 = vld [vmem:[%s1 + $0x204] sm:$0xf]
    %v199 = vld [vmem:[%s1 + $0x208] sm:$0xf]
    %v200 = vld [vmem:[%s1 + $0x20c] sm:$0xf]
    %v201 = vld [vmem:[%s1 + $0x210] sm:$0xf]
    %v202 = vld [vmem:[%s1 + $0x214] sm:$0xf]
    %v203 = vld [vmem:[%s1 + $0x218] sm:$0xf]
    %v204 = vld [vmem:[%s1 + $0x21c] sm:$0xf]
    %v205 = vld [vmem:[%s1 + $0x220] sm:$0xf]
    %v206 = vld [vmem:[%s1 + $0x224] sm:$0xf]
    %v207 = vld [vmem:[%s1 + $0x228] sm:$0xf]
    %v208 = vld [vmem:[%s1 + $0x22c] sm:$0xf]
    %v209 = vld [vmem:[%s1 + $0x230] sm:$0xf]
    %v210 = vld [vmem:[%s1 + $0x234] sm:$0xf]
    %v211 = vld [vmem:[%s1 + $0x238] sm:$0xf]
    %v212 = vld [vmem:[%s1 + $0x23c] sm:$0xf]
    %v218 = vunpack.c.l.b16 %v64
    %v219 = vunpack.c.h.b16 %v64
    %v220 = vunpack.c.l.b16 %v65
    %v221 = vunpack.c.h.b16 %v65
    %v222 = vunpack.c.l.b16 %v66
    %v223 = vunpack.c.h.b16 %v66
    %v224 = vunpack.c.l.b16 %v67
    %v225 = vunpack.c.h.b16 %v67
    %v226 = vunpack.c.l.b16 %v68
    %v227 = vpack.c.b16 %v218, %v218
    %v228 = vpack.c.b16 %v219, %v219
    %v229 = vpack.c.b16 %v220, %v220
    %v230 = vpack.c.b16 %v221, %v221
    %v231 = vpack.c.b16 %v222, %v222
    %v232 = vpack.c.b16 %v223, %v223
    %v233 = vpack.c.b16 %v224, %v224
    %v234 = vpack.c.b16 %v225, %v225
    %v235 = vpack.c.b16 %v226, %v226
    %v389 = vunpack.c.l.b16 %v69
    %v390 = vunpack.c.l.b16 %v70
    %v391 = vunpack.c.l.b16 %v71
    %v392 = vunpack.c.l.b16 %v72
    %v393 = vunpack.c.l.b16 %v73
    %v394 = vunpack.c.l.b16 %v74
    %v395 = vunpack.c.l.b16 %v75
    %v396 = vunpack.c.l.b16 %v76
    %v397 = vunpack.c.l.b16 %v77
    %v398 = vunpack.c.l.b16 %v78
    %v399 = vunpack.c.l.b16 %v79
    %v400 = vunpack.c.l.b16 %v80
    %v401 = vunpack.c.l.b16 %v81
    %v402 = vunpack.c.l.b16 %v82
    %v403 = vunpack.c.l.b16 %v83
    %v404 = vunpack.c.l.b16 %v84
    %v405 = vunpack.c.l.b16 %v85
    %v406 = vunpack.c.l.b16 %v86
    %v407 = vunpack.c.l.b16 %v87
    %v408 = vunpack.c.l.b16 %v88
    %v409 = vunpack.c.l.b16 %v89
    %v410 = vunpack.c.l.b16 %v90
    %v411 = vunpack.c.l.b16 %v91
    %v412 = vunpack.c.l.b16 %v92
    %v413 = vunpack.c.l.b16 %v93
    %v414 = vunpack.c.l.b16 %v94
    %v415 = vunpack.c.l.b16 %v95
    %v416 = vunpack.c.l.b16 %v96
    %v417 = vunpack.c.l.b16 %v97
    %v418 = vunpack.c.l.b16 %v98
    %v419 = vunpack.c.l.b16 %v99
    %v420 = vunpack.c.l.b16 %v100
    %v421 = vunpack.c.l.b16 %v101
    %v422 = vunpack.c.l.b16 %v102
    %v423 = vunpack.c.l.b16 %v103
    %v424 = vunpack.c.l.b16 %v104
    %v425 = vunpack.c.l.b16 %v105
    %v426 = vunpack.c.l.b16 %v106
    %v427 = vunpack.c.l.b16 %v107
    %v428 = vunpack.c.l.b16 %v108
    %v429 = vunpack.c.l.b16 %v109
    %v430 = vunpack.c.l.b16 %v110
    %v431 = vunpack.c.l.b16 %v111
    %v432 = vunpack.c.l.b16 %v112
    %v433 = vunpack.c.l.b16 %v113
    %v434 = vunpack.c.l.b16 %v114
    %v435 = vunpack.c.l.b16 %v115
    %v436 = vunpack.c.l.b16 %v116
    %v437 = vunpack.c.l.b16 %v117
    %v438 = vunpack.c.l.b16 %v118
    %v439 = vunpack.c.l.b16 %v119
    %v440 = vunpack.c.l.b16 %v120
    %v441 = vunpack.c.l.b16 %v121
    %v442 = vunpack.c.l.b16 %v122
    %v443 = vunpack.c.l.b16 %v123
    %v444 = vunpack.c.l.b16 %v124
    %v445 = vunpack.c.l.b16 %v125
    %v446 = vunpack.c.l.b16 %v126
    %v447 = vunpack.c.l.b16 %v127
    %v448 = vunpack.c.l.b16 %v128
    %v449 = vunpack.c.l.b16 %v129
    %v450 = vunpack.c.l.b16 %v130
    %v451 = vunpack.c.l.b16 %v131
    %v452 = vunpack.c.l.b16 %v132
    %v453 = vunpack.c.l.b16 %v133
    %v454 = vunpack.c.l.b16 %v134
    %v455 = vunpack.c.l.b16 %v135
    %v456 = vunpack.c.l.b16 %v136
    %v457 = vunpack.c.l.b16 %v137
    %v458 = vunpack.c.l.b16 %v138
    %v459 = vunpack.c.l.b16 %v139
    %v460 = vunpack.c.l.b16 %v140
    %v461 = vunpack.c.l.b16 %v141
    %v462 = vunpack.c.l.b16 %v142
    %v463 = vunpack.c.l.b16 %v143
    %v464 = vunpack.c.l.b16 %v144
    %v465 = vunpack.c.l.b16 %v145
    %v466 = vunpack.c.l.b16 %v146
    %v467 = vunpack.c.l.b16 %v147
    %v468 = vunpack.c.l.b16 %v148
    %v469 = vunpack.c.l.b16 %v149
    %v470 = vunpack.c.l.b16 %v150
    %v471 = vunpack.c.l.b16 %v151
    %v472 = vunpack.c.l.b16 %v152
    %v473 = vunpack.c.l.b16 %v153
    %v474 = vunpack.c.l.b16 %v154
    %v475 = vunpack.c.l.b16 %v155
    %v476 = vunpack.c.l.b16 %v156
    %v477 = vunpack.c.l.b16 %v157
    %v478 = vunpack.c.l.b16 %v158
    %v479 = vunpack.c.l.b16 %v159
    %v480 = vunpack.c.l.b16 %v160
    %v481 = vunpack.c.l.b16 %v161
    %v482 = vunpack.c.l.b16 %v162
    %v483 = vunpack.c.l.b16 %v163
    %v484 = vunpack.c.l.b16 %v164
    %v485 = vunpack.c.l.b16 %v165
    %v486 = vunpack.c.l.b16 %v166
    %v487 = vunpack.c.l.b16 %v167
    %v488 = vunpack.c.l.b16 %v168
    %v489 = vunpack.c.l.b16 %v169
    %v490 = vunpack.c.l.b16 %v170
    %v491 = vunpack.c.l.b16 %v171
    %v492 = vunpack.c.l.b16 %v172
    %v493 = vunpack.c.l.b16 %v173
    %v494 = vunpack.c.l.b16 %v174
    %v495 = vunpack.c.l.b16 %v175
    %v496 = vunpack.c.l.b16 %v176
    %v497 = vunpack.c.l.b16 %v177
    %v498 = vunpack.c.l.b16 %v178
    %v499 = vunpack.c.l.b16 %v179
    %v500 = vunpack.c.l.b16 %v180
    %v501 = vunpack.c.l.b16 %v181
    %v502 = vunpack.c.l.b16 %v182
    %v503 = vunpack.c.l.b16 %v183
    %v504 = vunpack.c.l.b16 %v184
    %v505 = vunpack.c.l.b16 %v185
    %v506 = vunpack.c.l.b16 %v186
    %v507 = vunpack.c.l.b16 %v187
    %v508 = vunpack.c.l.b16 %v188
    %v509 = vunpack.c.l.b16 %v189
    %v510 = vunpack.c.l.b16 %v190
    %v511 = vunpack.c.l.b16 %v191
    %v512 = vunpack.c.l.b16 %v192
    %v513 = vunpack.c.l.b16 %v193
    %v514 = vunpack.c.l.b16 %v194
    %v515 = vunpack.c.l.b16 %v195
    %v516 = vunpack.c.l.b16 %v196
    %v517 = vunpack.c.l.b16 %v197
    %v518 = vunpack.c.l.b16 %v198
    %v519 = vunpack.c.l.b16 %v199
    %v520 = vunpack.c.l.b16 %v200
    %v521 = vunpack.c.l.b16 %v201
    %v522 = vunpack.c.l.b16 %v202
    %v523 = vunpack.c.l.b16 %v203
    %v524 = vunpack.c.l.b16 %v204
    %v525 = vunpack.c.l.b16 %v205
    %v526 = vunpack.c.l.b16 %v206
    %v527 = vunpack.c.l.b16 %v207
    %v528 = vunpack.c.l.b16 %v208
    %v529 = vunpack.c.l.b16 %v209
    %v530 = vunpack.c.l.b16 %v210
    %v531 = vunpack.c.l.b16 %v211
    %v532 = vunpack.c.l.b16 %v212
    %v533 = vpack.c.b16 %v390, %v389
    %v534 = vpack.c.b16 %v392, %v391
    %v535 = vpack.c.b16 %v394, %v393
    %v536 = vpack.c.b16 %v396, %v395
    %v537 = vpack.c.b16 %v398, %v397
    %v538 = vpack.c.b16 %v400, %v399
    %v539 = vpack.c.b16 %v402, %v401
    %v540 = vpack.c.b16 %v404, %v403
    %v541 = vpack.c.b16 %v406, %v405
    %v542 = vpack.c.b16 %v408, %v407
    %v543 = vpack.c.b16 %v410, %v409
    %v544 = vpack.c.b16 %v412, %v411
    %v545 = vpack.c.b16 %v414, %v413
    %v546 = vpack.c.b16 %v416, %v415
    %v547 = vpack.c.b16 %v418, %v417
    %v548 = vpack.c.b16 %v420, %v419
    %v549 = vpack.c.b16 %v422, %v421
    %v550 = vpack.c.b16 %v424, %v423
    %v551 = vpack.c.b16 %v426, %v425
    %v552 = vpack.c.b16 %v428, %v427
    %v553 = vpack.c.b16 %v430, %v429
    %v554 = vpack.c.b16 %v432, %v431
    %v555 = vpack.c.b16 %v434, %v433
    %v556 = vpack.c.b16 %v436, %v435
    %v557 = vpack.c.b16 %v438, %v437
    %v558 = vpack.c.b16 %v440, %v439
    %v559 = vpack.c.b16 %v442, %v441
    %v560 = vpack.c.b16 %v444, %v443
    %v561 = vpack.c.b16 %v446, %v445
    %v562 = vpack.c.b16 %v448, %v447
    %v563 = vpack.c.b16 %v450, %v449
    %v564 = vpack.c.b16 %v452, %v451
    %v565 = vpack.c.b16 %v454, %v453
    %v566 = vpack.c.b16 %v456, %v455
    %v567 = vpack.c.b16 %v458, %v457
    %v568 = vpack.c.b16 %v460, %v459
    %v569 = vpack.c.b16 %v462, %v461
    %v570 = vpack.c.b16 %v464, %v463
    %v571 = vpack.c.b16 %v466, %v465
    %v572 = vpack.c.b16 %v468, %v467
    %v573 = vpack.c.b16 %v470, %v469
    %v574 = vpack.c.b16 %v472, %v471
    %v575 = vpack.c.b16 %v474, %v473
    %v576 = vpack.c.b16 %v476, %v475
    %v577 = vpack.c.b16 %v478, %v477
    %v578 = vpack.c.b16 %v480, %v479
    %v579 = vpack.c.b16 %v482, %v481
    %v580 = vpack.c.b16 %v484, %v483
    %v581 = vpack.c.b16 %v486, %v485
    %v582 = vpack.c.b16 %v488, %v487
    %v583 = vpack.c.b16 %v490, %v489
    %v584 = vpack.c.b16 %v492, %v491
    %v585 = vpack.c.b16 %v494, %v493
    %v586 = vpack.c.b16 %v496, %v495
    %v587 = vpack.c.b16 %v498, %v497
    %v588 = vpack.c.b16 %v500, %v499
    %v589 = vpack.c.b16 %v502, %v501
    %v590 = vpack.c.b16 %v504, %v503
    %v591 = vpack.c.b16 %v506, %v505
    %v592 = vpack.c.b16 %v508, %v507
    %v593 = vpack.c.b16 %v510, %v509
    %v594 = vpack.c.b16 %v512, %v511
    %v595 = vpack.c.b16 %v514, %v513
    %v596 = vpack.c.b16 %v516, %v515
    %v597 = vpack.c.b16 %v518, %v517
    %v598 = vpack.c.b16 %v520, %v519
    %v599 = vpack.c.b16 %v522, %v521
    %v600 = vpack.c.b16 %v524, %v523
    %v601 = vpack.c.b16 %v526, %v525
    %v602 = vpack.c.b16 %v528, %v527
    %v603 = vpack.c.b16 %v530, %v529
    %v604 = vpack.c.b16 %v532, %v531
    %677 = vmatprep.subr.bf16.mxu0 0
    %678 = vmatpush1.bf16.msra.mxu0 %v533
    %679 = vmatprep.subr.bf16.mxu0 0
    %680 = vmatpush1.bf16.msra.mxu0 %v534
    %681 = vmatprep.subr.bf16.mxu0 0
    %682 = vmatpush1.bf16.msra.mxu0 %v535
    %683 = vmatprep.subr.bf16.mxu0 0
    %684 = vmatpush1.bf16.msra.mxu0 %v536
    %685 = vmatprep.subr.bf16.mxu0 0
    %686 = vmatpush1.bf16.msra.mxu0 %v537
    %687 = vmatprep.subr.bf16.mxu0 0
    %688 = vmatpush1.bf16.msra.mxu0 %v538
    %689 = vmatprep.subr.bf16.mxu0 0
    %690 = vmatpush1.bf16.msra.mxu0 %v539
    %691 = vmatprep.subr.bf16.mxu0 0
    %692 = vmatpush1.bf16.msra.mxu0 %v540
    %693 = vmatprep.subr.bf16.mxu0 0
    %694 = vmatpush1.bf16.msra.mxu0 %v541
    %695 = vmatprep.subr.bf16.mxu0 0
    %696 = vmatpush1.bf16.msra.mxu0 %v542
    %697 = vmatprep.subr.bf16.mxu0 0
    %698 = vmatpush1.bf16.msra.mxu0 %v543
    %699 = vmatprep.subr.bf16.mxu0 0
    %700 = vmatpush1.bf16.msra.mxu0 %v544
    %701 = vmatprep.subr.bf16.mxu0 0
    %702 = vmatpush1.bf16.msra.mxu0 %v545
    %703 = vmatprep.subr.bf16.mxu0 0
    %704 = vmatpush1.bf16.msra.mxu0 %v546
    %705 = vmatprep.subr.bf16.mxu0 0
    %706 = vmatpush1.bf16.msra.mxu0 %v547
    %707 = vmatprep.subr.bf16.mxu0 0
    %708 = vmatpush1.bf16.msra.mxu0 %v548
    %709 = vmatprep.mubr.bf16.mxu0 %v228
    %710 = vmatmul.mubr.bf16.gmra.mrb[0].mxu0 %v227
    %v711 = vpop.f32.mrb[0].mxu0
    %v712 = vadd.f32 0.0, %v711
    %v713 = vpop.f32.mrb[0].mxu0
    %v714 = vpop.f32.mrb[0].mxu0
    %v715 = vpop.f32.mrb[0].mxu0
    %716 = vdwg.mxu0
    %717 = vmatprep.subr.bf16.mxu0 0
    %718 = vmatpush1.bf16.msra.mxu0 %v549
    %719 = vmatprep.subr.bf16.mxu0 0
    %720 = vmatpush1.bf16.msra.mxu0 %v550
    %721 = vmatprep.subr.bf16.mxu0 0
    %722 = vmatpush1.bf16.msra.mxu0 %v551
    %723 = vmatprep.subr.bf16.mxu0 0
    %724 = vmatpush1.bf16.msra.mxu0 %v552
    %725 = vmatprep.subr.bf16.mxu0 0
    %726 = vmatpush1.bf16.msra.mxu0 %v553
    %727 = vmatprep.subr.bf16.mxu0 0
    %728 = vmatpush1.bf16.msra.mxu0 %v554
    %729 = vmatprep.subr.bf16.mxu0 0
    %730 = vmatpush1.bf16.msra.mxu0 %v555
    %731 = vmatprep.subr.bf16.mxu0 0
    %732 = vmatpush1.bf16.msra.mxu0 %v556
    %733 = vmatprep.subr.bf16.mxu0 0
    %734 = vmatpush1.bf16.msra.mxu0 %v557
    %735 = vmatprep.subr.bf16.mxu0 0
    %736 = vmatpush1.bf16.msra.mxu0 %v558
    %737 = vmatprep.subr.bf16.mxu0 0
    %738 = vmatpush1.bf16.msra.mxu0 %v559
    %739 = vmatprep.subr.bf16.mxu0 0
    %740 = vmatpush1.bf16.msra.mxu0 %v560
    %741 = vmatprep.subr.bf16.mxu0 0
    %742 = vmatpush1.bf16.msra.mxu0 %v561
    %743 = vmatprep.subr.bf16.mxu0 0
    %744 = vmatpush1.bf16.msra.mxu0 %v562
    %745 = vmatprep.subr.bf16.mxu0 0
    %746 = vmatpush1.bf16.msra.mxu0 %v563
    %747 = vmatprep.subr.bf16.mxu0 0
    %748 = vmatpush1.bf16.msra.mxu0 %v564
    %749 = vmatprep.mubr.bf16.mxu0 %v230
    %750 = vmatmul.mubr.bf16.gmra.mrb[0].mxu0 %v229
    %v751 = vpop.f32.mrb[0].mxu0
    %v752 = vadd.f32 %v712, %v751
    %v753 = vpop.f32.mrb[0].mxu0
    %v754 = vpop.f32.mrb[0].mxu0
    %v755 = vpop.f32.mrb[0].mxu0
    %756 = vdwg.mxu0
    %757 = vmatprep.subr.bf16.mxu0 0
    %758 = vmatpush1.bf16.msra.mxu0 %v565
    %759 = vmatprep.subr.bf16.mxu0 0
    %760 = vmatpush1.bf16.msra.mxu0 %v566
    %761 = vmatprep.subr.bf16.mxu0 0
    %762 = vmatpush1.bf16.msra.mxu0 %v567
    %763 = vmatprep.subr.bf16.mxu0 0
    %764 = vmatpush1.bf16.msra.mxu0 %v568
    %765 = vmatprep.subr.bf16.mxu0 0
    %766 = vmatpush1.bf16.msra.mxu0 %v569
    %767 = vmatprep.subr.bf16.mxu0 0
    %768 = vmatpush1.bf16.msra.mxu0 %v570
    %769 = vmatprep.subr.bf16.mxu0 0
    %770 = vmatpush1.bf16.msra.mxu0 %v571
    %771 = vmatprep.subr.bf16.mxu0 0
    %772 = vmatpush1.bf16.msra.mxu0 %v572
    %773 = vmatprep.subr.bf16.mxu0 0
    %774 = vmatpush1.bf16.msra.mxu0 %v573
    %775 = vmatprep.subr.bf16.mxu0 0
    %776 = vmatpush1.bf16.msra.mxu0 %v574
    %777 = vmatprep.subr.bf16.mxu0 0
    %778 = vmatpush1.bf16.msra.mxu0 %v575
    %779 = vmatprep.subr.bf16.mxu0 0
    %780 = vmatpush1.bf16.msra.mxu0 %v576
    %781 = vmatprep.subr.bf16.mxu0 0
    %782 = vmatpush1.bf16.msra.mxu0 %v577
    %783 = vmatprep.subr.bf16.mxu0 0
    %784 = vmatpush1.bf16.msra.mxu0 %v578
    %785 = vmatprep.subr.bf16.mxu0 0
    %786 = vmatpush1.bf16.msra.mxu0 %v579
    %787 = vmatprep.subr.bf16.mxu0 0
    %788 = vmatpush1.bf16.msra.mxu0 %v580
    %789 = vmatprep.mubr.bf16.mxu0 %v232
    %790 = vmatmul.mubr.bf16.gmra.mrb[0].mxu0 %v231
    %v791 = vpop.f32.mrb[0].mxu0
    %v792 = vadd.f32 %v752, %v791
    %v793 = vpop.f32.mrb[0].mxu0
    %v794 = vpop.f32.mrb[0].mxu0
    %v795 = vpop.f32.mrb[0].mxu0
    %796 = vdwg.mxu0
    %797 = vmatprep.subr.bf16.mxu0 0
    %798 = vmatpush1.bf16.msra.mxu0 %v581
    %799 = vmatprep.subr.bf16.mxu0 0
    %800 = vmatpush1.bf16.msra.mxu0 %v582
    %801 = vmatprep.subr.bf16.mxu0 0
    %802 = vmatpush1.bf16.msra.mxu0 %v583
    %803 = vmatprep.subr.bf16.mxu0 0
    %804 = vmatpush1.bf16.msra.mxu0 %v584
    %805 = vmatprep.subr.bf16.mxu0 0
    %806 = vmatpush1.bf16.msra.mxu0 %v585
    %807 = vmatprep.subr.bf16.mxu0 0
    %808 = vmatpush1.bf16.msra.mxu0 %v586
    %809 = vmatprep.subr.bf16.mxu0 0
    %810 = vmatpush1.bf16.msra.mxu0 %v587
    %811 = vmatprep.subr.bf16.mxu0 0
    %812 = vmatpush1.bf16.msra.mxu0 %v588
    %813 = vmatprep.subr.bf16.mxu0 0
    %814 = vmatpush1.bf16.msra.mxu0 %v589
    %815 = vmatprep.subr.bf16.mxu0 0
    %816 = vmatpush1.bf16.msra.mxu0 %v590
    %817 = vmatprep.subr.bf16.mxu0 0
    %818 = vmatpush1.bf16.msra.mxu0 %v591
    %819 = vmatprep.subr.bf16.mxu0 0
    %820 = vmatpush1.bf16.msra.mxu0 %v592
    %821 = vmatprep.subr.bf16.mxu0 0
    %822 = vmatpush1.bf16.msra.mxu0 %v593
    %823 = vmatprep.subr.bf16.mxu0 0
    %824 = vmatpush1.bf16.msra.mxu0 %v594
    %825 = vmatprep.subr.bf16.mxu0 0
    %826 = vmatpush1.bf16.msra.mxu0 %v595
    %827 = vmatprep.subr.bf16.mxu0 0
    %828 = vmatpush1.bf16.msra.mxu0 %v596
    %829 = vmatprep.mubr.bf16.mxu0 %v234
    %830 = vmatmul.mubr.bf16.gmra.mrb[0].mxu0 %v233
    %v831 = vpop.f32.mrb[0].mxu0
    %v832 = vadd.f32 %v792, %v831
    %v833 = vpop.f32.mrb[0].mxu0
    %v834 = vpop.f32.mrb[0].mxu0
    %v835 = vpop.f32.mrb[0].mxu0
    %836 = vdwg.mxu0
    %837 = vmatprep.subr.bf16.mxu0 0
    %838 = vmatpush1.bf16.msra.mxu0 %v597
    %839 = vmatprep.subr.bf16.mxu0 0
    %840 = vmatpush1.bf16.msra.mxu0 %v598
    %841 = vmatprep.subr.bf16.mxu0 0
    %842 = vmatpush1.bf16.msra.mxu0 %v599
    %843 = vmatprep.subr.bf16.mxu0 0
    %844 = vmatpush1.bf16.msra.mxu0 %v600
    %845 = vmatprep.subr.bf16.mxu0 0
    %846 = vmatpush1.bf16.msra.mxu0 %v601
    %847 = vmatprep.subr.bf16.mxu0 0
    %848 = vmatpush1.bf16.msra.mxu0 %v602
    %849 = vmatprep.subr.bf16.mxu0 0
    %850 = vmatpush1.bf16.msra.mxu0 %v603
    %851 = vmatprep.subr.bf16.mxu0 0
    %852 = vmatpush1.bf16.msra.mxu0 %v604
    %853 = vmatprep.subr.bf16.mxu0 0
    %854 = vmatpush1.bf16.msra.mxu0 0
    %855 = vmatprep.subr.bf16.mxu0 0
    %856 = vmatpush1.bf16.msra.mxu0 0
    %857 = vmatprep.subr.bf16.mxu0 0
    %858 = vmatpush1.bf16.msra.mxu0 0
    %859 = vmatprep.subr.bf16.mxu0 0
    %860 = vmatpush1.bf16.msra.mxu0 0
    %861 = vmatprep.subr.bf16.mxu0 0
    %862 = vmatpush1.bf16.msra.mxu0 0
    %863 = vmatprep.subr.bf16.mxu0 0
    %864 = vmatpush1.bf16.msra.mxu0 0
    %865 = vmatprep.subr.bf16.mxu0 0
    %866 = vmatpush1.bf16.msra.mxu0 0
    %867 = vmatprep.subr.bf16.mxu0 0
    %868 = vmatpush1.bf16.msra.mxu0 0
    %869 = vmatprep.mubr.bf16.mxu0 0
    %870 = vmatmul.mubr.bf16.gmra.mrb[0].mxu0 %v235
    %v871 = vpop.f32.mrb[0].mxu0
    %v872 = vadd.f32 %v832, %v871
    %v873 = vpop.f32.mrb[0].mxu0
    %v874 = vpop.f32.mrb[0].mxu0
    %v875 = vpop.f32.mrb[0].mxu0
    %876 = vdwg.mxu0
    %v877 = vld [vmem:[%s10] sm:$0xff]
    %v878 = vld [vmem:[%s11] sm:$0xff]
    %s879 = sld [smem:[#allocation3]]
    %vm880 = vcmask 64512
    %v881 = vsel %vm880, %v872, 0.0
    %882 = vadd.xlane.f32.xlu0 %v881
    %v883 = vpop.xlane.xlu0 %882
    %v884 = vmul.f32 %v883, 0.125
    %v885 = vsub.f32 %v872, %v884
    %v886 = vmul.f32 %v885, %v885
    %v887 = vsel %vm880, %v886, 0.0
    %888 = vadd.xlane.f32.xlu0 %v887
    %v889 = vpop.xlane.xlu0 %888
    %v890 = vmul.f32 %v889, 0.125
    %v891 = vadd.f32 %v890, 1e-05
    %v892 = vrsqrt.pop %v891
    %v893 = vmul.f32 %v892, %v877
    %895 = vset.pattern.permute.xlu0 0
    %896 = vperm.xlu0 %895, %v893
    %v897 = vpop.permute.xlu0 %896
    %v899 = vmul.f32 %v885, %v897
    %901 = vset.pattern.permute.xlu0 0
    %902 = vperm.xlu0 %901, %v878
    %v903 = vpop.permute.xlu0 %902
    %v905 = vadd.f32 %v899, %v903
    %vm906 = vcmp.gt.f32.partialorder %v905, 0.0
    %v907 = vstv %s879
    %v908 = vmul.f32 %v907, %v905
    %v909 = vsel %vm906, %v905, %v908
    %v910 = vpack.c.bf16 %v909, %v909
    %v911 = vld [vmem:[%s4] sm:$0xff]
    %v912 = vld [vmem:[%s4 + $0x8] sm:$0xff]
    %v913 = vld [vmem:[%s2] sm:$0xf]
    %v914 = vld [vmem:[%s2 + $0x4] sm:$0xf]
    %v915 = vld [vmem:[%s2 + $0x8] sm:$0xf]
    %v916 = vld [vmem:[%s2 + $0xc] sm:$0xf]
    %v917 = vld [vmem:[%s2 + $0x10] sm:$0xf]
    %v918 = vld [vmem:[%s2 + $0x14] sm:$0xf]
    %v919 = vld [vmem:[%s2 + $0x18] sm:$0xf]
    %v920 = vld [vmem:[%s2 + $0x1c] sm:$0xf]
    %v921 = vld [vmem:[%s2 + $0x20] sm:$0xf]
    %v922 = vld [vmem:[%s2 + $0x24] sm:$0xf]
    %v923 = vld [vmem:[%s2 + $0x28] sm:$0xf]
    %v924 = vld [vmem:[%s2 + $0x2c] sm:$0xf]
    %v925 = vld [vmem:[%s2 + $0x30] sm:$0xf]
    %v926 = vld [vmem:[%s2 + $0x34] sm:$0xf]
    %v927 = vld [vmem:[%s2 + $0x38] sm:$0xf]
    %v928 = vld [vmem:[%s2 + $0x3c] sm:$0xf]
    %v929 = vld [vmem:[%s2 + $0x40] sm:$0xf]
    %v930 = vld [vmem:[%s2 + $0x44] sm:$0xf]
    %v931 = vld [vmem:[%s2 + $0x48] sm:$0xf]
    %v932 = vld [vmem:[%s2 + $0x4c] sm:$0xf]
    %v933 = vld [vmem:[%s2 + $0x50] sm:$0xf]
    %v934 = vld [vmem:[%s2 + $0x54] sm:$0xf]
    %v935 = vld [vmem:[%s2 + $0x58] sm:$0xf]
    %v936 = vld [vmem:[%s2 + $0x5c] sm:$0xf]
    %v937 = vld [vmem:[%s2 + $0x60] sm:$0xf]
    %v938 = vld [vmem:[%s2 + $0x64] sm:$0xf]
    %v939 = vld [vmem:[%s2 + $0x68] sm:$0xf]
    %v940 = vld [vmem:[%s2 + $0x6c] sm:$0xf]
    %v941 = vld [vmem:[%s2 + $0x70] sm:$0xf]
    %v942 = vld [vmem:[%s2 + $0x74] sm:$0xf]
    %v943 = vld [vmem:[%s2 + $0x78] sm:$0xf]
    %v944 = vld [vmem:[%s2 + $0x7c] sm:$0xf]
    %v945 = vld [vmem:[%s2 + $0x80] sm:$0xf]
    %v946 = vld [vmem:[%s2 + $0x84] sm:$0xf]
    %v947 = vld [vmem:[%s2 + $0x88] sm:$0xf]
    %v948 = vld [vmem:[%s2 + $0x8c] sm:$0xf]
    %v949 = vld [vmem:[%s2 + $0x90] sm:$0xf]
    %v950 = vld [vmem:[%s2 + $0x94] sm:$0xf]
    %v951 = vld [vmem:[%s2 + $0x98] sm:$0xf]
    %v952 = vld [vmem:[%s2 + $0x9c] sm:$0xf]
    %v953 = vld [vmem:[%s2 + $0xa0] sm:$0xf]
    %v954 = vld [vmem:[%s2 + $0xa4] sm:$0xf]
    %v955 = vld [vmem:[%s2 + $0xa8] sm:$0xf]
    %v956 = vld [vmem:[%s2 + $0xac] sm:$0xf]
    %v957 = vld [vmem:[%s2 + $0xb0] sm:$0xf]
    %v958 = vld [vmem:[%s2 + $0xb4] sm:$0xf]
    %v959 = vld [vmem:[%s2 + $0xb8] sm:$0xf]
    %v960 = vld [vmem:[%s2 + $0xbc] sm:$0xf]
    %v961 = vld [vmem:[%s2 + $0xc0] sm:$0xf]
    %v962 = vld [vmem:[%s2 + $0xc4] sm:$0xf]
    %v963 = vld [vmem:[%s2 + $0xc8] sm:$0xf]
    %v964 = vld [vmem:[%s2 + $0xcc] sm:$0xf]
    %v965 = vld [vmem:[%s2 + $0xd0] sm:$0xf]
    %v966 = vld [vmem:[%s2 + $0xd4] sm:$0xf]
    %v967 = vld [vmem:[%s2 + $0xd8] sm:$0xf]
    %v968 = vld [vmem:[%s2 + $0xdc] sm:$0xf]
    %v969 = vld [vmem:[%s2 + $0xe0] sm:$0xf]
    %v970 = vld [vmem:[%s2 + $0xe4] sm:$0xf]
    %v971 = vld [vmem:[%s2 + $0xe8] sm:$0xf]
    %v972 = vld [vmem:[%s2 + $0xec] sm:$0xf]
    %v973 = vld [vmem:[%s2 + $0xf0] sm:$0xf]
    %v974 = vld [vmem:[%s2 + $0xf4] sm:$0xf]
    %v975 = vld [vmem:[%s2 + $0xf8] sm:$0xf]
    %v976 = vld [vmem:[%s2 + $0xfc] sm:$0xf]
    %v979 = vunpack.c.l.b16 %v911
    %v980 = vunpack.c.h.b16 %v911
    %v981 = vunpack.c.l.b16 %v912
    %v982 = vunpack.c.h.b16 %v912
    %v983 = vpack.c.b16 %v979, %v979
    %v984 = vpack.c.b16 %v980, %v980
    %v985 = vpack.c.b16 %v981, %v981
    %v986 = vpack.c.b16 %v982, %v982
    %v1055 = vunpack.c.l.b16 %v913
    %v1056 = vunpack.c.l.b16 %v914
    %v1057 = vunpack.c.l.b16 %v915
    %v1058 = vunpack.c.l.b16 %v916
    %v1059 = vunpack.c.l.b16 %v917
    %v1060 = vunpack.c.l.b16 %v918
    %v1061 = vunpack.c.l.b16 %v919
    %v1062 = vunpack.c.l.b16 %v920
    %v1063 = vunpack.c.l.b16 %v921
    %v1064 = vunpack.c.l.b16 %v922
    %v1065 = vunpack.c.l.b16 %v923
    %v1066 = vunpack.c.l.b16 %v924
    %v1067 = vunpack.c.l.b16 %v925
    %v1068 = vunpack.c.l.b16 %v926
    %v1069 = vunpack.c.l.b16 %v927
    %v1070 = vunpack.c.l.b16 %v928
    %v1071 = vunpack.c.l.b16 %v929
    %v1072 = vunpack.c.l.b16 %v930
    %v1073 = vunpack.c.l.b16 %v931
    %v1074 = vunpack.c.l.b16 %v932
    %v1075 = vunpack.c.l.b16 %v933
    %v1076 = vunpack.c.l.b16 %v934
    %v1077 = vunpack.c.l.b16 %v935
    %v1078 = vunpack.c.l.b16 %v936
    %v1079 = vunpack.c.l.b16 %v937
    %v1080 = vunpack.c.l.b16 %v938
    %v1081 = vunpack.c.l.b16 %v939
    %v1082 = vunpack.c.l.b16 %v940
    %v1083 = vunpack.c.l.b16 %v941
    %v1084 = vunpack.c.l.b16 %v942
    %v1085 = vunpack.c.l.b16 %v943
    %v1086 = vunpack.c.l.b16 %v944
    %v1087 = vunpack.c.l.b16 %v945
    %v1088 = vunpack.c.l.b16 %v946
    %v1089 = vunpack.c.l.b16 %v947
    %v1090 = vunpack.c.l.b16 %v948
    %v1091 = vunpack.c.l.b16 %v949
    %v1092 = vunpack.c.l.b16 %v950
    %v1093 = vunpack.c.l.b16 %v951
    %v1094 = vunpack.c.l.b16 %v952
    %v1095 = vunpack.c.l.b16 %v953
    %v1096 = vunpack.c.l.b16 %v954
    %v1097 = vunpack.c.l.b16 %v955
    %v1098 = vunpack.c.l.b16 %v956
    %v1099 = vunpack.c.l.b16 %v957
    %v1100 = vunpack.c.l.b16 %v958
    %v1101 = vunpack.c.l.b16 %v959
    %v1102 = vunpack.c.l.b16 %v960
    %v1103 = vunpack.c.l.b16 %v961
    %v1104 = vunpack.c.l.b16 %v962
    %v1105 = vunpack.c.l.b16 %v963
    %v1106 = vunpack.c.l.b16 %v964
    %v1107 = vunpack.c.l.b16 %v965
    %v1108 = vunpack.c.l.b16 %v966
    %v1109 = vunpack.c.l.b16 %v967
    %v1110 = vunpack.c.l.b16 %v968
    %v1111 = vunpack.c.l.b16 %v969
    %v1112 = vunpack.c.l.b16 %v970
    %v1113 = vunpack.c.l.b16 %v971
    %v1114 = vunpack.c.l.b16 %v972
    %v1115 = vunpack.c.l.b16 %v973
    %v1116 = vunpack.c.l.b16 %v974
    %v1117 = vunpack.c.l.b16 %v975
    %v1118 = vunpack.c.l.b16 %v976
    %v1119 = vpack.c.b16 %v1056, %v1055
    %v1120 = vpack.c.b16 %v1058, %v1057
    %v1121 = vpack.c.b16 %v1060, %v1059
    %v1122 = vpack.c.b16 %v1062, %v1061
    %v1123 = vpack.c.b16 %v1064, %v1063
    %v1124 = vpack.c.b16 %v1066, %v1065
    %v1125 = vpack.c.b16 %v1068, %v1067
    %v1126 = vpack.c.b16 %v1070, %v1069
    %v1127 = vpack.c.b16 %v1072, %v1071
    %v1128 = vpack.c.b16 %v1074, %v1073
    %v1129 = vpack.c.b16 %v1076, %v1075
    %v1130 = vpack.c.b16 %v1078, %v1077
    %v1131 = vpack.c.b16 %v1080, %v1079
    %v1132 = vpack.c.b16 %v1082, %v1081
    %v1133 = vpack.c.b16 %v1084, %v1083
    %v1134 = vpack.c.b16 %v1086, %v1085
    %v1135 = vpack.c.b16 %v1088, %v1087
    %v1136 = vpack.c.b16 %v1090, %v1089
    %v1137 = vpack.c.b16 %v1092, %v1091
    %v1138 = vpack.c.b16 %v1094, %v1093
    %v1139 = vpack.c.b16 %v1096, %v1095
    %v1140 = vpack.c.b16 %v1098, %v1097
    %v1141 = vpack.c.b16 %v1100, %v1099
    %v1142 = vpack.c.b16 %v1102, %v1101
    %v1143 = vpack.c.b16 %v1104, %v1103
    %v1144 = vpack.c.b16 %v1106, %v1105
    %v1145 = vpack.c.b16 %v1108, %v1107
    %v1146 = vpack.c.b16 %v1110, %v1109
    %v1147 = vpack.c.b16 %v1112, %v1111
    %v1148 = vpack.c.b16 %v1114, %v1113
    %v1149 = vpack.c.b16 %v1116, %v1115
    %v1150 = vpack.c.b16 %v1118, %v1117
    %1183 = vmatprep.subr.bf16.mxu0 0
    %1184 = vmatpush1.bf16.msra.mxu0 %v1119
    %1185 = vmatprep.subr.bf16.mxu0 0
    %1186 = vmatpush1.bf16.msra.mxu0 %v1120
    %1187 = vmatprep.subr.bf16.mxu0 0
    %1188 = vmatpush1.bf16.msra.mxu0 %v1121
    %1189 = vmatprep.subr.bf16.mxu0 0
    %1190 = vmatpush1.bf16.msra.mxu0 %v1122
    %1191 = vmatprep.subr.bf16.mxu0 0
    %1192 = vmatpush1.bf16.msra.mxu0 %v1123
    %1193 = vmatprep.subr.bf16.mxu0 0
    %1194 = vmatpush1.bf16.msra.mxu0 %v1124
    %1195 = vmatprep.subr.bf16.mxu0 0
    %1196 = vmatpush1.bf16.msra.mxu0 %v1125
    %1197 = vmatprep.subr.bf16.mxu0 0
    %1198 = vmatpush1.bf16.msra.mxu0 %v1126
    %1199 = vmatprep.subr.bf16.mxu0 0
    %1200 = vmatpush1.bf16.msra.mxu0 %v1127
    %1201 = vmatprep.subr.bf16.mxu0 0
    %1202 = vmatpush1.bf16.msra.mxu0 %v1128
    %1203 = vmatprep.subr.bf16.mxu0 0
    %1204 = vmatpush1.bf16.msra.mxu0 %v1129
    %1205 = vmatprep.subr.bf16.mxu0 0
    %1206 = vmatpush1.bf16.msra.mxu0 %v1130
    %1207 = vmatprep.subr.bf16.mxu0 0
    %1208 = vmatpush1.bf16.msra.mxu0 %v1131
    %1209 = vmatprep.subr.bf16.mxu0 0
    %1210 = vmatpush1.bf16.msra.mxu0 %v1132
    %1211 = vmatprep.subr.bf16.mxu0 0
    %1212 = vmatpush1.bf16.msra.mxu0 %v1133
    %1213 = vmatprep.subr.bf16.mxu0 0
    %1214 = vmatpush1.bf16.msra.mxu0 %v1134
    %1215 = vmatprep.mubr.bf16.mxu0 %v984
    %1216 = vmatmul.mubr.bf16.gmra.mrb[0].mxu0 %v983
    %v1217 = vpop.f32.mrb[0].mxu0
    %v1218 = vadd.f32 0.0, %v1217
    %v1219 = vpop.f32.mrb[0].mxu0
    %v1220 = vpop.f32.mrb[0].mxu0
    %v1221 = vpop.f32.mrb[0].mxu0
    %1222 = vdwg.mxu0
    %1223 = vmatprep.subr.bf16.mxu0 0
    %1224 = vmatpush1.bf16.msra.mxu0 %v1135
    %1225 = vmatprep.subr.bf16.mxu0 0
    %1226 = vmatpush1.bf16.msra.mxu0 %v1136
    %1227 = vmatprep.subr.bf16.mxu0 0
    %1228 = vmatpush1.bf16.msra.mxu0 %v1137
    %1229 = vmatprep.subr.bf16.mxu0 0
    %1230 = vmatpush1.bf16.msra.mxu0 %v1138
    %1231 = vmatprep.subr.bf16.mxu0 0
    %1232 = vmatpush1.bf16.msra.mxu0 %v1139
    %1233 = vmatprep.subr.bf16.mxu0 0
    %1234 = vmatpush1.bf16.msra.mxu0 %v1140
    %1235 = vmatprep.subr.bf16.mxu0 0
    %1236 = vmatpush1.bf16.msra.mxu0 %v1141
    %1237 = vmatprep.subr.bf16.mxu0 0
    %1238 = vmatpush1.bf16.msra.mxu0 %v1142
    %1239 = vmatprep.subr.bf16.mxu0 0
    %1240 = vmatpush1.bf16.msra.mxu0 %v1143
    %1241 = vmatprep.subr.bf16.mxu0 0
    %1242 = vmatpush1.bf16.msra.mxu0 %v1144
    %1243 = vmatprep.subr.bf16.mxu0 0
    %1244 = vmatpush1.bf16.msra.mxu0 %v1145
    %1245 = vmatprep.subr.bf16.mxu0 0
    %1246 = vmatpush1.bf16.msra.mxu0 %v1146
    %1247 = vmatprep.subr.bf16.mxu0 0
    %1248 = vmatpush1.bf16.msra.mxu0 %v1147
    %1249 = vmatprep.subr.bf16.mxu0 0
    %1250 = vmatpush1.bf16.msra.mxu0 %v1148
    %1251 = vmatprep.subr.bf16.mxu0 0
    %1252 = vmatpush1.bf16.msra.mxu0 %v1149
    %1253 = vmatprep.subr.bf16.mxu0 0
    %1254 = vmatpush1.bf16.msra.mxu0 %v1150
    %1255 = vmatprep.mubr.bf16.mxu0 %v986
    %1256 = vmatmul.mubr.bf16.gmra.mrb[0].mxu0 %v985
    %v1257 = vpop.f32.mrb[0].mxu0
    %v1258 = vadd.f32 %v1218, %v1257
    %v1259 = vpop.f32.mrb[0].mxu0
    %v1260 = vpop.f32.mrb[0].mxu0
    %v1261 = vpop.f32.mrb[0].mxu0
    %1262 = vdwg.mxu0
    %s1263 = sld [smem:[#allocation3 + $0x1]]
    %v1264 = vsel %vm880, %v1258, 0.0
    %1265 = vadd.xlane.f32.xlu0 %v1264
    %v1266 = vpop.xlane.xlu0 %1265
    %v1267 = vmul.f32 %v1266, 0.125
    %v1268 = vsub.f32 %v1258, %v1267
    %v1269 = vmul.f32 %v1268, %v1268
    %v1270 = vsel %vm880, %v1269, 0.0
    %1271 = vadd.xlane.f32.xlu0 %v1270
    %v1272 = vpop.xlane.xlu0 %1271
    %v1273 = vmul.f32 %v1272, 0.125
    %v1274 = vadd.f32 %v1273, 1e-05
    %v1275 = vrsqrt.pop %v1274
    %v1276 = vmul.f32 %v1275, %v877
    %1278 = vset.pattern.permute.xlu0 1
    %1279 = vperm.xlu0 %1278, %v1276
    %v1280 = vpop.permute.xlu0 %1279
    %v1282 = vmul.f32 %v1268, %v1280
    %1283 = vset.pattern.permute.xlu0 1
    %1284 = vperm.xlu0 %1283, %v878
    %v1285 = vpop.permute.xlu0 %1284
    %v1287 = vadd.f32 %v1282, %v1285
    %vm1288 = vcmp.gt.f32.partialorder %v1287, 0.0
    %v1289 = vstv %s1263
    %v1290 = vmul.f32 %v1289, %v1287
    %v1291 = vsel %vm1288, %v1287, %v1290
    %v1292 = vpack.c.bf16 %v1291, %v1291
    %v1293 = vld [vmem:[%s0] sm:$0xf]
    %vm1294 = vcmask 109568
    %1295 = vst.msk [vmem:[#allocation2] sm:$0xf] %vm1294, 0
    %1297 = vrot.lane.b32.xlu0 %v1293, 3
    %v1298 = vpop.permute.xlu0 %1297
    %vm1300 = vcmask 85016
    %1301 = vst.msk [vmem:[#allocation2] sm:$0xf] %vm1300, %v1298
    %v1302 = vld [vmem:[#allocation2] sm:$0xf]
    %v1303 = vld [vmem:[%s9] sm:$0x1]
    %v1305 = vpack.i.b16 %v1303, %v1303
    %v1307 = vlaneseq
    %v1308 = vshrl.u32 %v1307, 7
    %v1309 = vsub.s32 0, %v1308
    %v1310 = vrot.slane %v1305, %v1309
    %v1311 = vmul.bf16 %v1302, %v1310
    %v1312 = vld [vmem:[%s5] sm:$0xf]
    %v1313 = vshrl.u32 %v1303, 16
    %v1314 = vpack.i.b16 %v1313, %v1313
    %v1316 = vlaneseq
    %v1317 = vshrl.u32 %v1316, 7
    %v1318 = vsub.s32 0, %v1317
    %v1319 = vrot.slane %v1314, %v1318
    %v1321 = vunpack.c.l.b16 %v1319
    %v1322 = vpack.c.b16 %v1321, %v1321
    %1323 = vrot.lane.b32.xlu0 %v1322, 1
    %v1324 = vpop.permute.xlu0 %1323
    %v1326 = vmul.bf16 %v1302, %v1324
    %s1327 = scalar_lea.vmem %s5, 4
    %v1328 = vld [vmem:[%s1327] sm:$0xf]
    %v1330 = vunpack.c.l.b16 %v1326
    %v1331 = vpack.c.b16 %v1330, %v1330
    %1332 = vrot.lane.b32.xlu0 %v1331, 127
    %v1333 = vpop.permute.xlu0 %1332
    %v1335 = vsel %vm880, %v1328, 0
    %vm1337 = vcmask 1043456
    %v1339 = vsel %vm1337, %v1333, 0
    %1341 = vmatprep.subr.bf16.mxu0 0
    %1342 = vmatpush1.bf16.msra.mxu0 %v1339
    %1343 = vmatprep.subr.bf16.mxu0 0
    %1344 = vmatpush1.bf16.msra.mxu0 0
    %1345 = vmatprep.subr.bf16.mxu0 0
    %1346 = vmatpush1.bf16.msra.mxu0 0
    %1347 = vmatprep.subr.bf16.mxu0 0
    %1348 = vmatpush1.bf16.msra.mxu0 0
    %1349 = vmatprep.subr.bf16.mxu0 0
    %1350 = vmatpush1.bf16.msra.mxu0 0
    %1351 = vmatprep.subr.bf16.mxu0 0
    %1352 = vmatpush1.bf16.msra.mxu0 0
    %1353 = vmatprep.subr.bf16.mxu0 0
    %1354 = vmatpush1.bf16.msra.mxu0 0
    %1355 = vmatprep.subr.bf16.mxu0 0
    %1356 = vmatpush1.bf16.msra.mxu0 0
    %1357 = vmatprep.subr.bf16.mxu0 0
    %1358 = vmatpush1.bf16.msra.mxu0 0
    %1359 = vmatprep.subr.bf16.mxu0 0
    %1360 = vmatpush1.bf16.msra.mxu0 0
    %1361 = vmatprep.subr.bf16.mxu0 0
    %1362 = vmatpush1.bf16.msra.mxu0 0
    %1363 = vmatprep.subr.bf16.mxu0 0
    %1364 = vmatpush1.bf16.msra.mxu0 0
    %1365 = vmatprep.subr.bf16.mxu0 0
    %1366 = vmatpush1.bf16.msra.mxu0 0
    %1367 = vmatprep.subr.bf16.mxu0 0
    %1368 = vmatpush1.bf16.msra.mxu0 0
    %1369 = vmatprep.subr.bf16.mxu0 0
    %1370 = vmatpush1.bf16.msra.mxu0 0
    %1371 = vmatprep.subr.bf16.mxu0 0
    %1372 = vmatpush1.bf16.msra.mxu0 0
    %1373 = vmatprep.mubr.bf16.mxu0 0
    %1374 = vmatmul.mubr.bf16.gmra.mrb[0].mxu0 %v1335
    %v1375 = vpop.f32.mrb[0].mxu0
    %v1376 = vadd.f32 0.0, %v1375
    %v1377 = vpop.f32.mrb[0].mxu0
    %v1378 = vpop.f32.mrb[0].mxu0
    %v1379 = vpop.f32.mrb[0].mxu0
    %1380 = vdwg.mxu0
    %v1382 = vsel %vm880, %v1312, 0
    %v1385 = vsel %vm1337, %v1311, 0
    %1387 = vmatprep.subr.bf16.mxu0 0
    %1388 = vmatpush1.bf16.msra.mxu0 %v1385
    %1389 = vmatprep.subr.bf16.mxu0 0
    %1390 = vmatpush1.bf16.msra.mxu0 0
    %1391 = vmatprep.subr.bf16.mxu0 0
    %1392 = vmatpush1.bf16.msra.mxu0 0
    %1393 = vmatprep.subr.bf16.mxu0 0
    %1394 = vmatpush1.bf16.msra.mxu0 0
    %1395 = vmatprep.subr.bf16.mxu0 0
    %1396 = vmatpush1.bf16.msra.mxu0 0
    %1397 = vmatprep.subr.bf16.mxu0 0
    %1398 = vmatpush1.bf16.msra.mxu0 0
    %1399 = vmatprep.subr.bf16.mxu0 0
    %1400 = vmatpush1.bf16.msra.mxu0 0
    %1401 = vmatprep.subr.bf16.mxu0 0
    %1402 = vmatpush1.bf16.msra.mxu0 0
    %1403 = vmatprep.subr.bf16.mxu0 0
    %1404 = vmatpush1.bf16.msra.mxu0 0
    %1405 = vmatprep.subr.bf16.mxu0 0
    %1406 = vmatpush1.bf16.msra.mxu0 0
    %1407 = vmatprep.subr.bf16.mxu0 0
    %1408 = vmatpush1.bf16.msra.mxu0 0
    %1409 = vmatprep.subr.bf16.mxu0 0
    %1410 = vmatpush1.bf16.msra.mxu0 0
    %1411 = vmatprep.subr.bf16.mxu0 0
    %1412 = vmatpush1.bf16.msra.mxu0 0
    %1413 = vmatprep.subr.bf16.mxu0 0
    %1414 = vmatpush1.bf16.msra.mxu0 0
    %1415 = vmatprep.subr.bf16.mxu0 0
    %1416 = vmatpush1.bf16.msra.mxu0 0
    %1417 = vmatprep.subr.bf16.mxu0 0
    %1418 = vmatpush1.bf16.msra.mxu0 0
    %1419 = vmatprep.mubr.bf16.mxu0 0
    %1420 = vmatmul.mubr.bf16.gmra.mrb[0].mxu0 %v1382
    %v1421 = vpop.f32.mrb[0].mxu0
    %v1422 = vadd.f32 %v1376, %v1421
    %v1423 = vpop.f32.mrb[0].mxu0
    %v1424 = vpop.f32.mrb[0].mxu0
    %v1425 = vpop.f32.mrb[0].mxu0
    %1426 = vdwg.mxu0
    %v1427 = vld [vmem:[%s9] sm:$0x2]
    %v1429 = vpack.i.b16 %v1427, %v1427
    %v1431 = vlaneseq
    %v1432 = vshrl.u32 %v1431, 7
    %v1433 = vsub.s32 1, %v1432
    %v1434 = vrot.slane %v1429, %v1433
    %v1436 = vunpack.c.l.b16 %v1434
    %v1437 = vpack.c.b16 %v1436, %v1436
    %1438 = vrot.lane.b32.xlu0 %v1437, 2
    %v1439 = vpop.permute.xlu0 %1438
    %v1441 = vmul.bf16 %v1302, %v1439
    %s1442 = scalar_lea.vmem %s5, 8
    %v1443 = vld [vmem:[%s1442] sm:$0xf]
    %v1445 = vunpack.c.l.b16 %v1441
    %v1446 = vpack.c.b16 %v1445, %v1445
    %1447 = vrot.lane.b32.xlu0 %v1446, 126
    %v1448 = vpop.permute.xlu0 %1447
    %v1450 = vsel %vm880, %v1443, 0
    %v1453 = vsel %vm1337, %v1448, 0
    %1455 = vmatprep.subr.bf16.mxu0 0
    %1456 = vmatpush1.bf16.msra.mxu0 %v1453
    %1457 = vmatprep.subr.bf16.mxu0 0
    %1458 = vmatpush1.bf16.msra.mxu0 0
    %1459 = vmatprep.subr.bf16.mxu0 0
    %1460 = vmatpush1.bf16.msra.mxu0 0
    %1461 = vmatprep.subr.bf16.mxu0 0
    %1462 = vmatpush1.bf16.msra.mxu0 0
    %1463 = vmatprep.subr.bf16.mxu0 0
    %1464 = vmatpush1.bf16.msra.mxu0 0
    %1465 = vmatprep.subr.bf16.mxu0 0
    %1466 = vmatpush1.bf16.msra.mxu0 0
    %1467 = vmatprep.subr.bf16.mxu0 0
    %1468 = vmatpush1.bf16.msra.mxu0 0
    %1469 = vmatprep.subr.bf16.mxu0 0
    %1470 = vmatpush1.bf16.msra.mxu0 0
    %1471 = vmatprep.subr.bf16.mxu0 0
    %1472 = vmatpush1.bf16.msra.mxu0 0
    %1473 = vmatprep.subr.bf16.mxu0 0
    %1474 = vmatpush1.bf16.msra.mxu0 0
    %1475 = vmatprep.subr.bf16.mxu0 0
    %1476 = vmatpush1.bf16.msra.mxu0 0
    %1477 = vmatprep.subr.bf16.mxu0 0
    %1478 = vmatpush1.bf16.msra.mxu0 0
    %1479 = vmatprep.subr.bf16.mxu0 0
    %1480 = vmatpush1.bf16.msra.mxu0 0
    %1481 = vmatprep.subr.bf16.mxu0 0
    %1482 = vmatpush1.bf16.msra.mxu0 0
    %1483 = vmatprep.subr.bf16.mxu0 0
    %1484 = vmatpush1.bf16.msra.mxu0 0
    %1485 = vmatprep.subr.bf16.mxu0 0
    %1486 = vmatpush1.bf16.msra.mxu0 0
    %1487 = vmatprep.mubr.bf16.mxu0 0
    %1488 = vmatmul.mubr.bf16.gmra.mrb[0].mxu0 %v1450
    %v1489 = vpop.f32.mrb[0].mxu0
    %v1490 = vadd.f32 0.0, %v1489
    %v1491 = vpop.f32.mrb[0].mxu0
    %v1492 = vpop.f32.mrb[0].mxu0
    %v1493 = vpop.f32.mrb[0].mxu0
    %1494 = vdwg.mxu0
    %v1495 = vadd.f32 %v1422, %v1490
    %v1496 = vshrl.u32 %v1427, 16
    %v1497 = vpack.i.b16 %v1496, %v1496
    %v1499 = vlaneseq
    %v1500 = vshrl.u32 %v1499, 7
    %v1501 = vsub.s32 1, %v1500
    %v1502 = vrot.slane %v1497, %v1501
    %v1504 = vunpack.c.l.b16 %v1502
    %v1505 = vpack.c.b16 %v1504, %v1504
    %1506 = vrot.lane.b32.xlu0 %v1505, 2
    %v1507 = vpop.permute.xlu0 %1506
    %v1509 = vmul.bf16 %v1302, %v1507
    %s1510 = scalar_lea.vmem %s5, 12
    %v1511 = vld [vmem:[%s1510] sm:$0xf]
    %v1513 = vunpack.c.l.b16 %v1509
    %v1514 = vpack.c.b16 %v1513, %v1513
    %1515 = vrot.lane.b32.xlu0 %v1514, 126
    %v1516 = vpop.permute.xlu0 %1515
    %v1518 = vsel %vm880, %v1511, 0
    %v1521 = vsel %vm1337, %v1516, 0
    %1523 = vmatprep.subr.bf16.mxu0 0
    %1524 = vmatpush1.bf16.msra.mxu0 %v1521
    %1525 = vmatprep.subr.bf16.mxu0 0
    %1526 = vmatpush1.bf16.msra.mxu0 0
    %1527 = vmatprep.subr.bf16.mxu0 0
    %1528 = vmatpush1.bf16.msra.mxu0 0
    %1529 = vmatprep.subr.bf16.mxu0 0
    %1530 = vmatpush1.bf16.msra.mxu0 0
    %1531 = vmatprep.subr.bf16.mxu0 0
    %1532 = vmatpush1.bf16.msra.mxu0 0
    %1533 = vmatprep.subr.bf16.mxu0 0
    %1534 = vmatpush1.bf16.msra.mxu0 0
    %1535 = vmatprep.subr.bf16.mxu0 0
    %1536 = vmatpush1.bf16.msra.mxu0 0
    %1537 = vmatprep.subr.bf16.mxu0 0
    %1538 = vmatpush1.bf16.msra.mxu0 0
    %1539 = vmatprep.subr.bf16.mxu0 0
    %1540 = vmatpush1.bf16.msra.mxu0 0
    %1541 = vmatprep.subr.bf16.mxu0 0
    %1542 = vmatpush1.bf16.msra.mxu0 0
    %1543 = vmatprep.subr.bf16.mxu0 0
    %1544 = vmatpush1.bf16.msra.mxu0 0
    %1545 = vmatprep.subr.bf16.mxu0 0
    %1546 = vmatpush1.bf16.msra.mxu0 0
    %1547 = vmatprep.subr.bf16.mxu0 0
    %1548 = vmatpush1.bf16.msra.mxu0 0
    %1549 = vmatprep.subr.bf16.mxu0 0
    %1550 = vmatpush1.bf16.msra.mxu0 0
    %1551 = vmatprep.subr.bf16.mxu0 0
    %1552 = vmatpush1.bf16.msra.mxu0 0
    %1553 = vmatprep.subr.bf16.mxu0 0
    %1554 = vmatpush1.bf16.msra.mxu0 0
    %1555 = vmatprep.mubr.bf16.mxu0 0
    %1556 = vmatmul.mubr.bf16.gmra.mrb[0].mxu0 %v1518
    %v1557 = vpop.f32.mrb[0].mxu0
    %v1558 = vadd.f32 0.0, %v1557
    %v1559 = vpop.f32.mrb[0].mxu0
    %v1560 = vpop.f32.mrb[0].mxu0
    %v1561 = vpop.f32.mrb[0].mxu0
    %1562 = vdwg.mxu0
    %v1563 = vadd.f32 %v1495, %v1558
    %v1564 = vld [vmem:[%s9] sm:$0x4]
    %v1566 = vpack.i.b16 %v1564, %v1564
    %v1568 = vlaneseq
    %v1569 = vshrl.u32 %v1568, 7
    %v1570 = vsub.s32 2, %v1569
    %v1571 = vrot.slane %v1566, %v1570
    %v1573 = vunpack.c.l.b16 %v1571
    %v1574 = vpack.c.b16 %v1573, %v1573
    %1575 = vrot.lane.b32.xlu0 %v1574, 3
    %v1576 = vpop.permute.xlu0 %1575
    %v1578 = vmul.bf16 %v1302, %v1576
    %s1579 = scalar_lea.vmem %s5, 16
    %v1580 = vld [vmem:[%s1579] sm:$0xf]
    %v1582 = vunpack.c.l.b16 %v1578
    %v1583 = vpack.c.b16 %v1582, %v1582
    %1584 = vrot.lane.b32.xlu0 %v1583, 125
    %v1585 = vpop.permute.xlu0 %1584
    %v1587 = vsel %vm880, %v1580, 0
    %v1590 = vsel %vm1337, %v1585, 0
    %1592 = vmatprep.subr.bf16.mxu0 0
    %1593 = vmatpush1.bf16.msra.mxu0 %v1590
    %1594 = vmatprep.subr.bf16.mxu0 0
    %1595 = vmatpush1.bf16.msra.mxu0 0
    %1596 = vmatprep.subr.bf16.mxu0 0
    %1597 = vmatpush1.bf16.msra.mxu0 0
    %1598 = vmatprep.subr.bf16.mxu0 0
    %1599 = vmatpush1.bf16.msra.mxu0 0
    %1600 = vmatprep.subr.bf16.mxu0 0
    %1601 = vmatpush1.bf16.msra.mxu0 0
    %1602 = vmatprep.subr.bf16.mxu0 0
    %1603 = vmatpush1.bf16.msra.mxu0 0
    %1604 = vmatprep.subr.bf16.mxu0 0
    %1605 = vmatpush1.bf16.msra.mxu0 0
    %1606 = vmatprep.subr.bf16.mxu0 0
    %1607 = vmatpush1.bf16.msra.mxu0 0
    %1608 = vmatprep.subr.bf16.mxu0 0
    %1609 = vmatpush1.bf16.msra.mxu0 0
    %1610 = vmatprep.subr.bf16.mxu0 0
    %1611 = vmatpush1.bf16.msra.mxu0 0
    %1612 = vmatprep.subr.bf16.mxu0 0
    %1613 = vmatpush1.bf16.msra.mxu0 0
    %1614 = vmatprep.subr.bf16.mxu0 0
    %1615 = vmatpush1.bf16.msra.mxu0 0
    %1616 = vmatprep.subr.bf16.mxu0 0
    %1617 = vmatpush1.bf16.msra.mxu0 0
    %1618 = vmatprep.subr.bf16.mxu0 0
    %1619 = vmatpush1.bf16.msra.mxu0 0
    %1620 = vmatprep.subr.bf16.mxu0 0
    %1621 = vmatpush1.bf16.msra.mxu0 0
    %1622 = vmatprep.subr.bf16.mxu0 0
    %1623 = vmatpush1.bf16.msra.mxu0 0
    %1624 = vmatprep.mubr.bf16.mxu0 0
    %1625 = vmatmul.mubr.bf16.gmra.mrb[0].mxu0 %v1587
    %v1626 = vpop.f32.mrb[0].mxu0
    %v1627 = vadd.f32 0.0, %v1626
    %v1628 = vpop.f32.mrb[0].mxu0
    %v1629 = vpop.f32.mrb[0].mxu0
    %v1630 = vpop.f32.mrb[0].mxu0
    %1631 = vdwg.mxu0
    %v1632 = vadd.f32 %v1563, %v1627
    %v1633 = vshrl.u32 %v1564, 16
    %v1634 = vpack.i.b16 %v1633, %v1633
    %v1636 = vlaneseq
    %v1637 = vshrl.u32 %v1636, 7
    %v1638 = vsub.s32 2, %v1637
    %v1639 = vrot.slane %v1634, %v1638
    %v1641 = vunpack.c.l.b16 %v1639
    %v1642 = vpack.c.b16 %v1641, %v1641
    %1643 = vrot.lane.b32.xlu0 %v1642, 4
    %v1644 = vpop.permute.xlu0 %1643
    %v1646 = vmul.bf16 %v1302, %v1644
    %s1647 = scalar_lea.vmem %s5, 20
    %v1648 = vld [vmem:[%s1647] sm:$0xf]
    %v1650 = vunpack.c.l.b16 %v1646
    %v1651 = vpack.c.b16 %v1650, %v1650
    %1652 = vrot.lane.b32.xlu0 %v1651, 124
    %v1653 = vpop.permute.xlu0 %1652
    %v1655 = vsel %vm880, %v1648, 0
    %v1658 = vsel %vm1337, %v1653, 0
    %1660 = vmatprep.subr.bf16.mxu0 0
    %1661 = vmatpush1.bf16.msra.mxu0 %v1658
    %1662 = vmatprep.subr.bf16.mxu0 0
    %1663 = vmatpush1.bf16.msra.mxu0 0
    %1664 = vmatprep.subr.bf16.mxu0 0
    %1665 = vmatpush1.bf16.msra.mxu0 0
    %1666 = vmatprep.subr.bf16.mxu0 0
    %1667 = vmatpush1.bf16.msra.mxu0 0
    %1668 = vmatprep.subr.bf16.mxu0 0
    %1669 = vmatpush1.bf16.msra.mxu0 0
    %1670 = vmatprep.subr.bf16.mxu0 0
    %1671 = vmatpush1.bf16.msra.mxu0 0
    %1672 = vmatprep.subr.bf16.mxu0 0
    %1673 = vmatpush1.bf16.msra.mxu0 0
    %1674 = vmatprep.subr.bf16.mxu0 0
    %1675 = vmatpush1.bf16.msra.mxu0 0
    %1676 = vmatprep.subr.bf16.mxu0 0
    %1677 = vmatpush1.bf16.msra.mxu0 0
    %1678 = vmatprep.subr.bf16.mxu0 0
    %1679 = vmatpush1.bf16.msra.mxu0 0
    %1680 = vmatprep.subr.bf16.mxu0 0
    %1681 = vmatpush1.bf16.msra.mxu0 0
    %1682 = vmatprep.subr.bf16.mxu0 0
    %1683 = vmatpush1.bf16.msra.mxu0 0
    %1684 = vmatprep.subr.bf16.mxu0 0
    %1685 = vmatpush1.bf16.msra.mxu0 0
    %1686 = vmatprep.subr.bf16.mxu0 0
    %1687 = vmatpush1.bf16.msra.mxu0 0
    %1688 = vmatprep.subr.bf16.mxu0 0
    %1689 = vmatpush1.bf16.msra.mxu0 0
    %1690 = vmatprep.subr.bf16.mxu0 0
    %1691 = vmatpush1.bf16.msra.mxu0 0
    %1692 = vmatprep.mubr.bf16.mxu0 0
    %1693 = vmatmul.mubr.bf16.gmra.mrb[0].mxu0 %v1655
    %v1694 = vpop.f32.mrb[0].mxu0
    %v1695 = vadd.f32 0.0, %v1694
    %v1696 = vpop.f32.mrb[0].mxu0
    %v1697 = vpop.f32.mrb[0].mxu0
    %v1698 = vpop.f32.mrb[0].mxu0
    %1699 = vdwg.mxu0
    %v1700 = vadd.f32 %v1632, %v1695
    %v1701 = vld [vmem:[%s9] sm:$0x8]
    %v1703 = vpack.i.b16 %v1701, %v1701
    %v1705 = vlaneseq
    %v1706 = vshrl.u32 %v1705, 7
    %v1707 = vsub.s32 3, %v1706
    %v1708 = vrot.slane %v1703, %v1707
    %v1710 = vunpack.c.l.b16 %v1708
    %v1711 = vpack.c.b16 %v1710, %v1710
    %1712 = vrot.lane.b32.xlu0 %v1711, 4
    %v1713 = vpop.permute.xlu0 %1712
    %v1715 = vmul.bf16 %v1302, %v1713
    %s1716 = scalar_lea.vmem %s5, 24
    %v1717 = vld [vmem:[%s1716] sm:$0xf]
    %v1719 = vunpack.c.l.b16 %v1715
    %v1720 = vpack.c.b16 %v1719, %v1719
    %1721 = vrot.lane.b32.xlu0 %v1720, 124
    %v1722 = vpop.permute.xlu0 %1721
    %v1724 = vsel %vm880, %v1717, 0
    %v1727 = vsel %vm1337, %v1722, 0
    %1729 = vmatprep.subr.bf16.mxu0 0
    %1730 = vmatpush1.bf16.msra.mxu0 %v1727
    %1731 = vmatprep.subr.bf16.mxu0 0
    %1732 = vmatpush1.bf16.msra.mxu0 0
    %1733 = vmatprep.subr.bf16.mxu0 0
    %1734 = vmatpush1.bf16.msra.mxu0 0
    %1735 = vmatprep.subr.bf16.mxu0 0
    %1736 = vmatpush1.bf16.msra.mxu0 0
    %1737 = vmatprep.subr.bf16.mxu0 0
    %1738 = vmatpush1.bf16.msra.mxu0 0
    %1739 = vmatprep.subr.bf16.mxu0 0
    %1740 = vmatpush1.bf16.msra.mxu0 0
    %1741 = vmatprep.subr.bf16.mxu0 0
    %1742 = vmatpush1.bf16.msra.mxu0 0
    %1743 = vmatprep.subr.bf16.mxu0 0
    %1744 = vmatpush1.bf16.msra.mxu0 0
    %1745 = vmatprep.subr.bf16.mxu0 0
    %1746 = vmatpush1.bf16.msra.mxu0 0
    %1747 = vmatprep.subr.bf16.mxu0 0
    %1748 = vmatpush1.bf16.msra.mxu0 0
    %1749 = vmatprep.subr.bf16.mxu0 0
    %1750 = vmatpush1.bf16.msra.mxu0 0
    %1751 = vmatprep.subr.bf16.mxu0 0
    %1752 = vmatpush1.bf16.msra.mxu0 0
    %1753 = vmatprep.subr.bf16.mxu0 0
    %1754 = vmatpush1.bf16.msra.mxu0 0
    %1755 = vmatprep.subr.bf16.mxu0 0
    %1756 = vmatpush1.bf16.msra.mxu0 0
    %1757 = vmatprep.subr.bf16.mxu0 0
    %1758 = vmatpush1.bf16.msra.mxu0 0
    %1759 = vmatprep.subr.bf16.mxu0 0
    %1760 = vmatpush1.bf16.msra.mxu0 0
    %1761 = vmatprep.mubr.bf16.mxu0 0
    %1762 = vmatmul.mubr.bf16.gmra.mrb[0].mxu0 %v1724
    %v1763 = vpop.f32.mrb[0].mxu0
    %v1764 = vadd.f32 0.0, %v1763
    %v1765 = vpop.f32.mrb[0].mxu0
    %v1766 = vpop.f32.mrb[0].mxu0
    %v1767 = vpop.f32.mrb[0].mxu0
    %1768 = vdwg.mxu0
    %v1769 = vadd.f32 %v1700, %v1764
    %v1770 = vshrl.u32 %v1701, 16
    %v1771 = vpack.i.b16 %v1770, %v1770
    %v1773 = vlaneseq
    %v1774 = vshrl.u32 %v1773, 7
    %v1775 = vsub.s32 3, %v1774
    %v1776 = vrot.slane %v1771, %v1775
    %v1778 = vunpack.c.l.b16 %v1776
    %v1779 = vpack.c.b16 %v1778, %v1778
    %1780 = vrot.lane.b32.xlu0 %v1779, 5
    %v1781 = vpop.permute.xlu0 %1780
    %v1783 = vmul.bf16 %v1302, %v1781
    %s1784 = scalar_lea.vmem %s5, 28
    %v1785 = vld [vmem:[%s1784] sm:$0xf]
    %v1787 = vunpack.c.l.b16 %v1783
    %v1788 = vpack.c.b16 %v1787, %v1787
    %1789 = vrot.lane.b32.xlu0 %v1788, 123
    %v1790 = vpop.permute.xlu0 %1789
    %v1792 = vsel %vm880, %v1785, 0
    %v1795 = vsel %vm1337, %v1790, 0
    %1797 = vmatprep.subr.bf16.mxu0 0
    %1798 = vmatpush1.bf16.msra.mxu0 %v1795
    %1799 = vmatprep.subr.bf16.mxu0 0
    %1800 = vmatpush1.bf16.msra.mxu0 0
    %1801 = vmatprep.subr.bf16.mxu0 0
    %1802 = vmatpush1.bf16.msra.mxu0 0
    %1803 = vmatprep.subr.bf16.mxu0 0
    %1804 = vmatpush1.bf16.msra.mxu0 0
    %1805 = vmatprep.subr.bf16.mxu0 0
    %1806 = vmatpush1.bf16.msra.mxu0 0
    %1807 = vmatprep.subr.bf16.mxu0 0
    %1808 = vmatpush1.bf16.msra.mxu0 0
    %1809 = vmatprep.subr.bf16.mxu0 0
    %1810 = vmatpush1.bf16.msra.mxu0 0
    %1811 = vmatprep.subr.bf16.mxu0 0
    %1812 = vmatpush1.bf16.msra.mxu0 0
    %1813 = vmatprep.subr.bf16.mxu0 0
    %1814 = vmatpush1.bf16.msra.mxu0 0
    %1815 = vmatprep.subr.bf16.mxu0 0
    %1816 = vmatpush1.bf16.msra.mxu0 0
    %1817 = vmatprep.subr.bf16.mxu0 0
    %1818 = vmatpush1.bf16.msra.mxu0 0
    %1819 = vmatprep.subr.bf16.mxu0 0
    %1820 = vmatpush1.bf16.msra.mxu0 0
    %1821 = vmatprep.subr.bf16.mxu0 0
    %1822 = vmatpush1.bf16.msra.mxu0 0
    %1823 = vmatprep.subr.bf16.mxu0 0
    %1824 = vmatpush1.bf16.msra.mxu0 0
    %1825 = vmatprep.subr.bf16.mxu0 0
    %1826 = vmatpush1.bf16.msra.mxu0 0
    %1827 = vmatprep.subr.bf16.mxu0 0
    %1828 = vmatpush1.bf16.msra.mxu0 0
    %1829 = vmatprep.mubr.bf16.mxu0 0
    %1830 = vmatmul.mubr.bf16.gmra.mrb[0].mxu0 %v1792
    %v1831 = vpop.f32.mrb[0].mxu0
    %v1832 = vadd.f32 0.0, %v1831
    %v1833 = vpop.f32.mrb[0].mxu0
    %v1834 = vpop.f32.mrb[0].mxu0
    %v1835 = vpop.f32.mrb[0].mxu0
    %1836 = vdwg.mxu0
    %v1837 = vadd.f32 %v1769, %v1832
    %v1838 = vld [vmem:[%s9 + $0x4] sm:$0x1]
    %v1840 = vpack.i.b16 %v1838, %v1838
    %v1842 = vlaneseq
    %v1843 = vshrl.u32 %v1842, 7
    %v1844 = vsub.s32 0, %v1843
    %v1845 = vrot.slane %v1840, %v1844
    %v1847 = vunpack.c.l.b16 %v1845
    %v1848 = vpack.c.b16 %v1847, %v1847
    %1849 = vrot.lane.b32.xlu0 %v1848, 6
    %v1850 = vpop.permute.xlu0 %1849
    %v1852 = vmul.bf16 %v1302, %v1850
    %s1853 = scalar_lea.vmem %s5, 32
    %v1854 = vld [vmem:[%s1853] sm:$0xf]
    %v1856 = vunpack.c.l.b16 %v1852
    %v1857 = vpack.c.b16 %v1856, %v1856
    %1858 = vrot.lane.b32.xlu0 %v1857, 122
    %v1859 = vpop.permute.xlu0 %1858
    %v1861 = vsel %vm880, %v1854, 0
    %v1864 = vsel %vm1337, %v1859, 0
    %1866 = vmatprep.subr.bf16.mxu0 0
    %1867 = vmatpush1.bf16.msra.mxu0 %v1864
    %1868 = vmatprep.subr.bf16.mxu0 0
    %1869 = vmatpush1.bf16.msra.mxu0 0
    %1870 = vmatprep.subr.bf16.mxu0 0
    %1871 = vmatpush1.bf16.msra.mxu0 0
    %1872 = vmatprep.subr.bf16.mxu0 0
    %1873 = vmatpush1.bf16.msra.mxu0 0
    %1874 = vmatprep.subr.bf16.mxu0 0
    %1875 = vmatpush1.bf16.msra.mxu0 0
    %1876 = vmatprep.subr.bf16.mxu0 0
    %1877 = vmatpush1.bf16.msra.mxu0 0
    %1878 = vmatprep.subr.bf16.mxu0 0
    %1879 = vmatpush1.bf16.msra.mxu0 0
    %1880 = vmatprep.subr.bf16.mxu0 0
    %1881 = vmatpush1.bf16.msra.mxu0 0
    %1882 = vmatprep.subr.bf16.mxu0 0
    %1883 = vmatpush1.bf16.msra.mxu0 0
    %1884 = vmatprep.subr.bf16.mxu0 0
    %1885 = vmatpush1.bf16.msra.mxu0 0
    %1886 = vmatprep.subr.bf16.mxu0 0
    %1887 = vmatpush1.bf16.msra.mxu0 0
    %1888 = vmatprep.subr.bf16.mxu0 0
    %1889 = vmatpush1.bf16.msra.mxu0 0
    %1890 = vmatprep.subr.bf16.mxu0 0
    %1891 = vmatpush1.bf16.msra.mxu0 0
    %1892 = vmatprep.subr.bf16.mxu0 0
    %1893 = vmatpush1.bf16.msra.mxu0 0
    %1894 = vmatprep.subr.bf16.mxu0 0
    %1895 = vmatpush1.bf16.msra.mxu0 0
    %1896 = vmatprep.subr.bf16.mxu0 0
    %1897 = vmatpush1.bf16.msra.mxu0 0
    %1898 = vmatprep.mubr.bf16.mxu0 0
    %1899 = vmatmul.mubr.bf16.gmra.mrb[0].mxu0 %v1861
    %v1900 = vpop.f32.mrb[0].mxu0
    %v1901 = vadd.f32 0.0, %v1900
    %v1902 = vpop.f32.mrb[0].mxu0
    %v1903 = vpop.f32.mrb[0].mxu0
    %v1904 = vpop.f32.mrb[0].mxu0
    %1905 = vdwg.mxu0
    %v1906 = vadd.f32 %v1837, %v1901
    %1907 = vst.msk [vmem:[#allocation2] sm:$0xf] %vm1294, 0
    %v1909 = vunpack.c.l.b16 %v910
    %v1910 = vpack.c.b16 %v1909, %v1909
    %1911 = vrot.lane.b32.xlu0 %v1910, 3
    %v1912 = vpop.permute.xlu0 %1911
    %1914 = vst.msk [vmem:[#allocation2] sm:$0xf] %vm1300, %v1912
    %v1915 = vld [vmem:[#allocation2] sm:$0xf]
    %v1916 = vld [vmem:[%s9] sm:$0x1]
    %v1918 = vpack.i.b16 %v1916, %v1916
    %v1920 = vlaneseq
    %v1921 = vshrl.u32 %v1920, 7
    %v1922 = vsub.s32 0, %v1921
    %v1923 = vrot.slane %v1918, %v1922
    %v1924 = vmul.bf16 %v1915, %v1923
    %v1925 = vld [vmem:[%s6] sm:$0xf]
    %v1927 = vsel %vm880, %v1925, 0
    %v1930 = vsel %vm1337, %v1924, 0
    %1932 = vmatprep.subr.bf16.mxu0 0
    %1933 = vmatpush1.bf16.msra.mxu0 %v1930
    %1934 = vmatprep.subr.bf16.mxu0 0
    %1935 = vmatpush1.bf16.msra.mxu0 0
    %1936 = vmatprep.subr.bf16.mxu0 0
    %1937 = vmatpush1.bf16.msra.mxu0 0
    %1938 = vmatprep.subr.bf16.mxu0 0
    %1939 = vmatpush1.bf16.msra.mxu0 0
    %1940 = vmatprep.subr.bf16.mxu0 0
    %1941 = vmatpush1.bf16.msra.mxu0 0
    %1942 = vmatprep.subr.bf16.mxu0 0
    %1943 = vmatpush1.bf16.msra.mxu0 0
    %1944 = vmatprep.subr.bf16.mxu0 0
    %1945 = vmatpush1.bf16.msra.mxu0 0
    %1946 = vmatprep.subr.bf16.mxu0 0
    %1947 = vmatpush1.bf16.msra.mxu0 0
    %1948 = vmatprep.subr.bf16.mxu0 0
    %1949 = vmatpush1.bf16.msra.mxu0 0
    %1950 = vmatprep.subr.bf16.mxu0 0
    %1951 = vmatpush1.bf16.msra.mxu0 0
    %1952 = vmatprep.subr.bf16.mxu0 0
    %1953 = vmatpush1.bf16.msra.mxu0 0
    %1954 = vmatprep.subr.bf16.mxu0 0
    %1955 = vmatpush1.bf16.msra.mxu0 0
    %1956 = vmatprep.subr.bf16.mxu0 0
    %1957 = vmatpush1.bf16.msra.mxu0 0
    %1958 = vmatprep.subr.bf16.mxu0 0
    %1959 = vmatpush1.bf16.msra.mxu0 0
    %1960 = vmatprep.subr.bf16.mxu0 0
    %1961 = vmatpush1.bf16.msra.mxu0 0
    %1962 = vmatprep.subr.bf16.mxu0 0
    %1963 = vmatpush1.bf16.msra.mxu0 0
    %1964 = vmatprep.mubr.bf16.mxu0 0
    %1965 = vmatmul.mubr.bf16.gmra.mrb[0].mxu0 %v1927
    %v1966 = vpop.f32.mrb[0].mxu0
    %v1967 = vadd.f32 0.0, %v1966
    %v1968 = vpop.f32.mrb[0].mxu0
    %v1969 = vpop.f32.mrb[0].mxu0
    %v1970 = vpop.f32.mrb[0].mxu0
    %1971 = vdwg.mxu0
    %v1972 = vadd.f32 %v1906, %v1967
    %v1973 = vshrl.u32 %v1916, 16
    %v1974 = vpack.i.b16 %v1973, %v1973
    %v1976 = vlaneseq
    %v1977 = vshrl.u32 %v1976, 7
    %v1978 = vsub.s32 0, %v1977
    %v1979 = vrot.slane %v1974, %v1978
    %v1981 = vunpack.c.l.b16 %v1979
    %v1982 = vpack.c.b16 %v1981, %v1981
    %1983 = vrot.lane.b32.xlu0 %v1982, 1
    %v1984 = vpop.permute.xlu0 %1983
    %v1986 = vmul.bf16 %v1915, %v1984
    %s1987 = scalar_lea.vmem %s6, 4
    %v1988 = vld [vmem:[%s1987] sm:$0xf]
    %v1990 = vunpack.c.l.b16 %v1986
    %v1991 = vpack.c.b16 %v1990, %v1990
    %1992 = vrot.lane.b32.xlu0 %v1991, 127
    %v1993 = vpop.permute.xlu0 %1992
    %v1995 = vsel %vm880, %v1988, 0
    %v1998 = vsel %vm1337, %v1993, 0
    %2000 = vmatprep.subr.bf16.mxu0 0
    %2001 = vmatpush1.bf16.msra.mxu0 %v1998
    %2002 = vmatprep.subr.bf16.mxu0 0
    %2003 = vmatpush1.bf16.msra.mxu0 0
    %2004 = vmatprep.subr.bf16.mxu0 0
    %2005 = vmatpush1.bf16.msra.mxu0 0
    %2006 = vmatprep.subr.bf16.mxu0 0
    %2007 = vmatpush1.bf16.msra.mxu0 0
    %2008 = vmatprep.subr.bf16.mxu0 0
    %2009 = vmatpush1.bf16.msra.mxu0 0
    %2010 = vmatprep.subr.bf16.mxu0 0
    %2011 = vmatpush1.bf16.msra.mxu0 0
    %2012 = vmatprep.subr.bf16.mxu0 0
    %2013 = vmatpush1.bf16.msra.mxu0 0
    %2014 = vmatprep.subr.bf16.mxu0 0
    %2015 = vmatpush1.bf16.msra.mxu0 0
    %2016 = vmatprep.subr.bf16.mxu0 0
    %2017 = vmatpush1.bf16.msra.mxu0 0
    %2018 = vmatprep.subr.bf16.mxu0 0
    %2019 = vmatpush1.bf16.msra.mxu0 0
    %2020 = vmatprep.subr.bf16.mxu0 0
    %2021 = vmatpush1.bf16.msra.mxu0 0
    %2022 = vmatprep.subr.bf16.mxu0 0
    %2023 = vmatpush1.bf16.msra.mxu0 0
    %2024 = vmatprep.subr.bf16.mxu0 0
    %2025 = vmatpush1.bf16.msra.mxu0 0
    %2026 = vmatprep.subr.bf16.mxu0 0
    %2027 = vmatpush1.bf16.msra.mxu0 0
    %2028 = vmatprep.subr.bf16.mxu0 0
    %2029 = vmatpush1.bf16.msra.mxu0 0
    %2030 = vmatprep.subr.bf16.mxu0 0
    %2031 = vmatpush1.bf16.msra.mxu0 0
    %2032 = vmatprep.mubr.bf16.mxu0 0
    %2033 = vmatmul.mubr.bf16.gmra.mrb[0].mxu0 %v1995
    %v2034 = vpop.f32.mrb[0].mxu0
    %v2035 = vadd.f32 0.0, %v2034
    %v2036 = vpop.f32.mrb[0].mxu0
    %v2037 = vpop.f32.mrb[0].mxu0
    %v2038 = vpop.f32.mrb[0].mxu0
    %2039 = vdwg.mxu0
    %v2040 = vadd.f32 %v1972, %v2035
    %v2041 = vld [vmem:[%s9] sm:$0x2]
    %v2043 = vpack.i.b16 %v2041, %v2041
    %v2045 = vlaneseq
    %v2046 = vshrl.u32 %v2045, 7
    %v2047 = vsub.s32 1, %v2046
    %v2048 = vrot.slane %v2043, %v2047
    %v2050 = vunpack.c.l.b16 %v2048
    %v2051 = vpack.c.b16 %v2050, %v2050
    %2052 = vrot.lane.b32.xlu0 %v2051, 2
    %v2053 = vpop.permute.xlu0 %2052
    %v2055 = vmul.bf16 %v1915, %v2053
    %s2056 = scalar_lea.vmem %s6, 8
    %v2057 = vld [vmem:[%s2056] sm:$0xf]
    %v2059 = vunpack.c.l.b16 %v2055
    %v2060 = vpack.c.b16 %v2059, %v2059
    %2061 = vrot.lane.b32.xlu0 %v2060, 126
    %v2062 = vpop.permute.xlu0 %2061
    %v2064 = vsel %vm880, %v2057, 0
    %v2067 = vsel %vm1337, %v2062, 0
    %2069 = vmatprep.subr.bf16.mxu0 0
    %2070 = vmatpush1.bf16.msra.mxu0 %v2067
    %2071 = vmatprep.subr.bf16.mxu0 0
    %2072 = vmatpush1.bf16.msra.mxu0 0
    %2073 = vmatprep.subr.bf16.mxu0 0
    %2074 = vmatpush1.bf16.msra.mxu0 0
    %2075 = vmatprep.subr.bf16.mxu0 0
    %2076 = vmatpush1.bf16.msra.mxu0 0
    %2077 = vmatprep.subr.bf16.mxu0 0
    %2078 = vmatpush1.bf16.msra.mxu0 0
    %2079 = vmatprep.subr.bf16.mxu0 0
    %2080 = vmatpush1.bf16.msra.mxu0 0
    %2081 = vmatprep.subr.bf16.mxu0 0
    %2082 = vmatpush1.bf16.msra.mxu0 0
    %2083 = vmatprep.subr.bf16.mxu0 0
    %2084 = vmatpush1.bf16.msra.mxu0 0
    %2085 = vmatprep.subr.bf16.mxu0 0
    %2086 = vmatpush1.bf16.msra.mxu0 0
    %2087 = vmatprep.subr.bf16.mxu0 0
    %2088 = vmatpush1.bf16.msra.mxu0 0
    %2089 = vmatprep.subr.bf16.mxu0 0
    %2090 = vmatpush1.bf16.msra.mxu0 0
    %2091 = vmatprep.subr.bf16.mxu0 0
    %2092 = vmatpush1.bf16.msra.mxu0 0
    %2093 = vmatprep.subr.bf16.mxu0 0
    %2094 = vmatpush1.bf16.msra.mxu0 0
    %2095 = vmatprep.subr.bf16.mxu0 0
    %2096 = vmatpush1.bf16.msra.mxu0 0
    %2097 = vmatprep.subr.bf16.mxu0 0
    %2098 = vmatpush1.bf16.msra.mxu0 0
    %2099 = vmatprep.subr.bf16.mxu0 0
    %2100 = vmatpush1.bf16.msra.mxu0 0
    %2101 = vmatprep.mubr.bf16.mxu0 0
    %2102 = vmatmul.mubr.bf16.gmra.mrb[0].mxu0 %v2064
    %v2103 = vpop.f32.mrb[0].mxu0
    %v2104 = vadd.f32 0.0, %v2103
    %v2105 = vpop.f32.mrb[0].mxu0
    %v2106 = vpop.f32.mrb[0].mxu0
    %v2107 = vpop.f32.mrb[0].mxu0
    %2108 = vdwg.mxu0
    %v2109 = vadd.f32 %v2040, %v2104
    %v2110 = vshrl.u32 %v2041, 16
    %v2111 = vpack.i.b16 %v2110, %v2110
    %v2113 = vlaneseq
    %v2114 = vshrl.u32 %v2113, 7
    %v2115 = vsub.s32 1, %v2114
    %v2116 = vrot.slane %v2111, %v2115
    %v2118 = vunpack.c.l.b16 %v2116
    %v2119 = vpack.c.b16 %v2118, %v2118
    %2120 = vrot.lane.b32.xlu0 %v2119, 2
    %v2121 = vpop.permute.xlu0 %2120
    %v2123 = vmul.bf16 %v1915, %v2121
    %s2124 = scalar_lea.vmem %s6, 12
    %v2125 = vld [vmem:[%s2124] sm:$0xf]
    %v2127 = vunpack.c.l.b16 %v2123
    %v2128 = vpack.c.b16 %v2127, %v2127
    %2129 = vrot.lane.b32.xlu0 %v2128, 126
    %v2130 = vpop.permute.xlu0 %2129
    %v2132 = vsel %vm880, %v2125, 0
    %v2135 = vsel %vm1337, %v2130, 0
    %2137 = vmatprep.subr.bf16.mxu0 0
    %2138 = vmatpush1.bf16.msra.mxu0 %v2135
    %2139 = vmatprep.subr.bf16.mxu0 0
    %2140 = vmatpush1.bf16.msra.mxu0 0
    %2141 = vmatprep.subr.bf16.mxu0 0
    %2142 = vmatpush1.bf16.msra.mxu0 0
    %2143 = vmatprep.subr.bf16.mxu0 0
    %2144 = vmatpush1.bf16.msra.mxu0 0
    %2145 = vmatprep.subr.bf16.mxu0 0
    %2146 = vmatpush1.bf16.msra.mxu0 0
    %2147 = vmatprep.subr.bf16.mxu0 0
    %2148 = vmatpush1.bf16.msra.mxu0 0
    %2149 = vmatprep.subr.bf16.mxu0 0
    %2150 = vmatpush1.bf16.msra.mxu0 0
    %2151 = vmatprep.subr.bf16.mxu0 0
    %2152 = vmatpush1.bf16.msra.mxu0 0
    %2153 = vmatprep.subr.bf16.mxu0 0
    %2154 = vmatpush1.bf16.msra.mxu0 0
    %2155 = vmatprep.subr.bf16.mxu0 0
    %2156 = vmatpush1.bf16.msra.mxu0 0
    %2157 = vmatprep.subr.bf16.mxu0 0
    %2158 = vmatpush1.bf16.msra.mxu0 0
    %2159 = vmatprep.subr.bf16.mxu0 0
    %2160 = vmatpush1.bf16.msra.mxu0 0
    %2161 = vmatprep.subr.bf16.mxu0 0
    %2162 = vmatpush1.bf16.msra.mxu0 0
    %2163 = vmatprep.subr.bf16.mxu0 0
    %2164 = vmatpush1.bf16.msra.mxu0 0
    %2165 = vmatprep.subr.bf16.mxu0 0
    %2166 = vmatpush1.bf16.msra.mxu0 0
    %2167 = vmatprep.subr.bf16.mxu0 0
    %2168 = vmatpush1.bf16.msra.mxu0 0
    %2169 = vmatprep.mubr.bf16.mxu0 0
    %2170 = vmatmul.mubr.bf16.gmra.mrb[0].mxu0 %v2132
    %v2171 = vpop.f32.mrb[0].mxu0
    %v2172 = vadd.f32 0.0, %v2171
    %v2173 = vpop.f32.mrb[0].mxu0
    %v2174 = vpop.f32.mrb[0].mxu0
    %v2175 = vpop.f32.mrb[0].mxu0
    %2176 = vdwg.mxu0
    %v2177 = vadd.f32 %v2109, %v2172
    %v2178 = vld [vmem:[%s9] sm:$0x4]
    %v2180 = vpack.i.b16 %v2178, %v2178
    %v2182 = vlaneseq
    %v2183 = vshrl.u32 %v2182, 7
    %v2184 = vsub.s32 2, %v2183
    %v2185 = vrot.slane %v2180, %v2184
    %v2187 = vunpack.c.l.b16 %v2185
    %v2188 = vpack.c.b16 %v2187, %v2187
    %2189 = vrot.lane.b32.xlu0 %v2188, 3
    %v2190 = vpop.permute.xlu0 %2189
    %v2192 = vmul.bf16 %v1915, %v2190
    %s2193 = scalar_lea.vmem %s6, 16
    %v2194 = vld [vmem:[%s2193] sm:$0xf]
    %v2196 = vunpack.c.l.b16 %v2192
    %v2197 = vpack.c.b16 %v2196, %v2196
    %2198 = vrot.lane.b32.xlu0 %v2197, 125
    %v2199 = vpop.permute.xlu0 %2198
    %v2201 = vsel %vm880, %v2194, 0
    %v2204 = vsel %vm1337, %v2199, 0
    %2206 = vmatprep.subr.bf16.mxu0 0
    %2207 = vmatpush1.bf16.msra.mxu0 %v2204
    %2208 = vmatprep.subr.bf16.mxu0 0
    %2209 = vmatpush1.bf16.msra.mxu0 0
    %2210 = vmatprep.subr.bf16.mxu0 0
    %2211 = vmatpush1.bf16.msra.mxu0 0
    %2212 = vmatprep.subr.bf16.mxu0 0
    %2213 = vmatpush1.bf16.msra.mxu0 0
    %2214 = vmatprep.subr.bf16.mxu0 0
    %2215 = vmatpush1.bf16.msra.mxu0 0
    %2216 = vmatprep.subr.bf16.mxu0 0
    %2217 = vmatpush1.bf16.msra.mxu0 0
    %2218 = vmatprep.subr.bf16.mxu0 0
    %2219 = vmatpush1.bf16.msra.mxu0 0
    %2220 = vmatprep.subr.bf16.mxu0 0
    %2221 = vmatpush1.bf16.msra.mxu0 0
    %2222 = vmatprep.subr.bf16.mxu0 0
    %2223 = vmatpush1.bf16.msra.mxu0 0
    %2224 = vmatprep.subr.bf16.mxu0 0
    %2225 = vmatpush1.bf16.msra.mxu0 0
    %2226 = vmatprep.subr.bf16.mxu0 0
    %2227 = vmatpush1.bf16.msra.mxu0 0
    %2228 = vmatprep.subr.bf16.mxu0 0
    %2229 = vmatpush1.bf16.msra.mxu0 0
    %2230 = vmatprep.subr.bf16.mxu0 0
    %2231 = vmatpush1.bf16.msra.mxu0 0
    %2232 = vmatprep.subr.bf16.mxu0 0
    %2233 = vmatpush1.bf16.msra.mxu0 0
    %2234 = vmatprep.subr.bf16.mxu0 0
    %2235 = vmatpush1.bf16.msra.mxu0 0
    %2236 = vmatprep.subr.bf16.mxu0 0
    %2237 = vmatpush1.bf16.msra.mxu0 0
    %2238 = vmatprep.mubr.bf16.mxu0 0
    %2239 = vmatmul.mubr.bf16.gmra.mrb[0].mxu0 %v2201
    %v2240 = vpop.f32.mrb[0].mxu0
    %v2241 = vadd.f32 0.0, %v2240
    %v2242 = vpop.f32.mrb[0].mxu0
    %v2243 = vpop.f32.mrb[0].mxu0
    %v2244 = vpop.f32.mrb[0].mxu0
    %2245 = vdwg.mxu0
    %v2246 = vadd.f32 %v2177, %v2241
    %v2247 = vshrl.u32 %v2178, 16
    %v2248 = vpack.i.b16 %v2247, %v2247
    %v2250 = vlaneseq
    %v2251 = vshrl.u32 %v2250, 7
    %v2252 = vsub.s32 2, %v2251
    %v2253 = vrot.slane %v2248, %v2252
    %v2255 = vunpack.c.l.b16 %v2253
    %v2256 = vpack.c.b16 %v2255, %v2255
    %2257 = vrot.lane.b32.xlu0 %v2256, 4
    %v2258 = vpop.permute.xlu0 %2257
    %v2260 = vmul.bf16 %v1915, %v2258
    %s2261 = scalar_lea.vmem %s6, 20
    %v2262 = vld [vmem:[%s2261] sm:$0xf]
    %v2264 = vunpack.c.l.b16 %v2260
    %v2265 = vpack.c.b16 %v2264, %v2264
    %2266 = vrot.lane.b32.xlu0 %v2265, 124
    %v2267 = vpop.permute.xlu0 %2266
    %v2269 = vsel %vm880, %v2262, 0
    %v2272 = vsel %vm1337, %v2267, 0
    %2274 = vmatprep.subr.bf16.mxu0 0
    %2275 = vmatpush1.bf16.msra.mxu0 %v2272
    %2276 = vmatprep.subr.bf16.mxu0 0
    %2277 = vmatpush1.bf16.msra.mxu0 0
    %2278 = vmatprep.subr.bf16.mxu0 0
    %2279 = vmatpush1.bf16.msra.mxu0 0
    %2280 = vmatprep.subr.bf16.mxu0 0
    %2281 = vmatpush1.bf16.msra.mxu0 0
    %2282 = vmatprep.subr.bf16.mxu0 0
    %2283 = vmatpush1.bf16.msra.mxu0 0
    %2284 = vmatprep.subr.bf16.mxu0 0
    %2285 = vmatpush1.bf16.msra.mxu0 0
    %2286 = vmatprep.subr.bf16.mxu0 0
    %2287 = vmatpush1.bf16.msra.mxu0 0
    %2288 = vmatprep.subr.bf16.mxu0 0
    %2289 = vmatpush1.bf16.msra.mxu0 0
    %2290 = vmatprep.subr.bf16.mxu0 0
    %2291 = vmatpush1.bf16.msra.mxu0 0
    %2292 = vmatprep.subr.bf16.mxu0 0
    %2293 = vmatpush1.bf16.msra.mxu0 0
    %2294 = vmatprep.subr.bf16.mxu0 0
    %2295 = vmatpush1.bf16.msra.mxu0 0
    %2296 = vmatprep.subr.bf16.mxu0 0
    %2297 = vmatpush1.bf16.msra.mxu0 0
    %2298 = vmatprep.subr.bf16.mxu0 0
    %2299 = vmatpush1.bf16.msra.mxu0 0
    %2300 = vmatprep.subr.bf16.mxu0 0
    %2301 = vmatpush1.bf16.msra.mxu0 0
    %2302 = vmatprep.subr.bf16.mxu0 0
    %2303 = vmatpush1.bf16.msra.mxu0 0
    %2304 = vmatprep.subr.bf16.mxu0 0
    %2305 = vmatpush1.bf16.msra.mxu0 0
    %2306 = vmatprep.mubr.bf16.mxu0 0
    %2307 = vmatmul.mubr.bf16.gmra.mrb[0].mxu0 %v2269
    %v2308 = vpop.f32.mrb[0].mxu0
    %v2309 = vadd.f32 0.0, %v2308
    %v2310 = vpop.f32.mrb[0].mxu0
    %v2311 = vpop.f32.mrb[0].mxu0
    %v2312 = vpop.f32.mrb[0].mxu0
    %2313 = vdwg.mxu0
    %v2314 = vadd.f32 %v2246, %v2309
    %v2315 = vld [vmem:[%s9] sm:$0x8]
    %v2317 = vpack.i.b16 %v2315, %v2315
    %v2319 = vlaneseq
    %v2320 = vshrl.u32 %v2319, 7
    %v2321 = vsub.s32 3, %v2320
    %v2322 = vrot.slane %v2317, %v2321
    %v2324 = vunpack.c.l.b16 %v2322
    %v2325 = vpack.c.b16 %v2324, %v2324
    %2326 = vrot.lane.b32.xlu0 %v2325, 4
    %v2327 = vpop.permute.xlu0 %2326
    %v2329 = vmul.bf16 %v1915, %v2327
    %s2330 = scalar_lea.vmem %s6, 24
    %v2331 = vld [vmem:[%s2330] sm:$0xf]
    %v2333 = vunpack.c.l.b16 %v2329
    %v2334 = vpack.c.b16 %v2333, %v2333
    %2335 = vrot.lane.b32.xlu0 %v2334, 124
    %v2336 = vpop.permute.xlu0 %2335
    %v2338 = vsel %vm880, %v2331, 0
    %v2341 = vsel %vm1337, %v2336, 0
    %2343 = vmatprep.subr.bf16.mxu0 0
    %2344 = vmatpush1.bf16.msra.mxu0 %v2341
    %2345 = vmatprep.subr.bf16.mxu0 0
    %2346 = vmatpush1.bf16.msra.mxu0 0
    %2347 = vmatprep.subr.bf16.mxu0 0
    %2348 = vmatpush1.bf16.msra.mxu0 0
    %2349 = vmatprep.subr.bf16.mxu0 0
    %2350 = vmatpush1.bf16.msra.mxu0 0
    %2351 = vmatprep.subr.bf16.mxu0 0
    %2352 = vmatpush1.bf16.msra.mxu0 0
    %2353 = vmatprep.subr.bf16.mxu0 0
    %2354 = vmatpush1.bf16.msra.mxu0 0
    %2355 = vmatprep.subr.bf16.mxu0 0
    %2356 = vmatpush1.bf16.msra.mxu0 0
    %2357 = vmatprep.subr.bf16.mxu0 0
    %2358 = vmatpush1.bf16.msra.mxu0 0
    %2359 = vmatprep.subr.bf16.mxu0 0
    %2360 = vmatpush1.bf16.msra.mxu0 0
    %2361 = vmatprep.subr.bf16.mxu0 0
    %2362 = vmatpush1.bf16.msra.mxu0 0
    %2363 = vmatprep.subr.bf16.mxu0 0
    %2364 = vmatpush1.bf16.msra.mxu0 0
    %2365 = vmatprep.subr.bf16.mxu0 0
    %2366 = vmatpush1.bf16.msra.mxu0 0
    %2367 = vmatprep.subr.bf16.mxu0 0
    %2368 = vmatpush1.bf16.msra.mxu0 0
    %2369 = vmatprep.subr.bf16.mxu0 0
    %2370 = vmatpush1.bf16.msra.mxu0 0
    %2371 = vmatprep.subr.bf16.mxu0 0
    %2372 = vmatpush1.bf16.msra.mxu0 0
    %2373 = vmatprep.subr.bf16.mxu0 0
    %2374 = vmatpush1.bf16.msra.mxu0 0
    %2375 = vmatprep.mubr.bf16.mxu0 0
    %2376 = vmatmul.mubr.bf16.gmra.mrb[0].mxu0 %v2338
    %v2377 = vpop.f32.mrb[0].mxu0
    %v2378 = vadd.f32 0.0, %v2377
    %v2379 = vpop.f32.mrb[0].mxu0
    %v2380 = vpop.f32.mrb[0].mxu0
    %v2381 = vpop.f32.mrb[0].mxu0
    %2382 = vdwg.mxu0
    %v2383 = vadd.f32 %v2314, %v2378
    %v2384 = vshrl.u32 %v2315, 16
    %v2385 = vpack.i.b16 %v2384, %v2384
    %v2387 = vlaneseq
    %v2388 = vshrl.u32 %v2387, 7
    %v2389 = vsub.s32 3, %v2388
    %v2390 = vrot.slane %v2385, %v2389
    %v2392 = vunpack.c.l.b16 %v2390
    %v2393 = vpack.c.b16 %v2392, %v2392
    %2394 = vrot.lane.b32.xlu0 %v2393, 5
    %v2395 = vpop.permute.xlu0 %2394
    %v2397 = vmul.bf16 %v1915, %v2395
    %s2398 = scalar_lea.vmem %s6, 28
    %v2399 = vld [vmem:[%s2398] sm:$0xf]
    %v2401 = vunpack.c.l.b16 %v2397
    %v2402 = vpack.c.b16 %v2401, %v2401
    %2403 = vrot.lane.b32.xlu0 %v2402, 123
    %v2404 = vpop.permute.xlu0 %2403
    %v2406 = vsel %vm880, %v2399, 0
    %v2409 = vsel %vm1337, %v2404, 0
    %2411 = vmatprep.subr.bf16.mxu0 0
    %2412 = vmatpush1.bf16.msra.mxu0 %v2409
    %2413 = vmatprep.subr.bf16.mxu0 0
    %2414 = vmatpush1.bf16.msra.mxu0 0
    %2415 = vmatprep.subr.bf16.mxu0 0
    %2416 = vmatpush1.bf16.msra.mxu0 0
    %2417 = vmatprep.subr.bf16.mxu0 0
    %2418 = vmatpush1.bf16.msra.mxu0 0
    %2419 = vmatprep.subr.bf16.mxu0 0
    %2420 = vmatpush1.bf16.msra.mxu0 0
    %2421 = vmatprep.subr.bf16.mxu0 0
    %2422 = vmatpush1.bf16.msra.mxu0 0
    %2423 = vmatprep.subr.bf16.mxu0 0
    %2424 = vmatpush1.bf16.msra.mxu0 0
    %2425 = vmatprep.subr.bf16.mxu0 0
    %2426 = vmatpush1.bf16.msra.mxu0 0
    %2427 = vmatprep.subr.bf16.mxu0 0
    %2428 = vmatpush1.bf16.msra.mxu0 0
    %2429 = vmatprep.subr.bf16.mxu0 0
    %2430 = vmatpush1.bf16.msra.mxu0 0
    %2431 = vmatprep.subr.bf16.mxu0 0
    %2432 = vmatpush1.bf16.msra.mxu0 0
    %2433 = vmatprep.subr.bf16.mxu0 0
    %2434 = vmatpush1.bf16.msra.mxu0 0
    %2435 = vmatprep.subr.bf16.mxu0 0
    %2436 = vmatpush1.bf16.msra.mxu0 0
    %2437 = vmatprep.subr.bf16.mxu0 0
    %2438 = vmatpush1.bf16.msra.mxu0 0
    %2439 = vmatprep.subr.bf16.mxu0 0
    %2440 = vmatpush1.bf16.msra.mxu0 0
    %2441 = vmatprep.subr.bf16.mxu0 0
    %2442 = vmatpush1.bf16.msra.mxu0 0
    %2443 = vmatprep.mubr.bf16.mxu0 0
    %2444 = vmatmul.mubr.bf16.gmra.mrb[0].mxu0 %v2406
    %v2445 = vpop.f32.mrb[0].mxu0
    %v2446 = vadd.f32 0.0, %v2445
    %v2447 = vpop.f32.mrb[0].mxu0
    %v2448 = vpop.f32.mrb[0].mxu0
    %v2449 = vpop.f32.mrb[0].mxu0
    %2450 = vdwg.mxu0
    %v2451 = vadd.f32 %v2383, %v2446
    %v2452 = vld [vmem:[%s9 + $0x4] sm:$0x1]
    %v2454 = vpack.i.b16 %v2452, %v2452
    %v2456 = vlaneseq
    %v2457 = vshrl.u32 %v2456, 7
    %v2458 = vsub.s32 0, %v2457
    %v2459 = vrot.slane %v2454, %v2458
    %v2461 = vunpack.c.l.b16 %v2459
    %v2462 = vpack.c.b16 %v2461, %v2461
    %2463 = vrot.lane.b32.xlu0 %v2462, 6
    %v2464 = vpop.permute.xlu0 %2463
    %v2466 = vmul.bf16 %v1915, %v2464
    %s2467 = scalar_lea.vmem %s6, 32
    %v2468 = vld [vmem:[%s2467] sm:$0xf]
    %v2470 = vunpack.c.l.b16 %v2466
    %v2471 = vpack.c.b16 %v2470, %v2470
    %2472 = vrot.lane.b32.xlu0 %v2471, 122
    %v2473 = vpop.permute.xlu0 %2472
    %v2475 = vsel %vm880, %v2468, 0
    %v2478 = vsel %vm1337, %v2473, 0
    %2480 = vmatprep.subr.bf16.mxu0 0
    %2481 = vmatpush1.bf16.msra.mxu0 %v2478
    %2482 = vmatprep.subr.bf16.mxu0 0
    %2483 = vmatpush1.bf16.msra.mxu0 0
    %2484 = vmatprep.subr.bf16.mxu0 0
    %2485 = vmatpush1.bf16.msra.mxu0 0
    %2486 = vmatprep.subr.bf16.mxu0 0
    %2487 = vmatpush1.bf16.msra.mxu0 0
    %2488 = vmatprep.subr.bf16.mxu0 0
    %2489 = vmatpush1.bf16.msra.mxu0 0
    %2490 = vmatprep.subr.bf16.mxu0 0
    %2491 = vmatpush1.bf16.msra.mxu0 0
    %2492 = vmatprep.subr.bf16.mxu0 0
    %2493 = vmatpush1.bf16.msra.mxu0 0
    %2494 = vmatprep.subr.bf16.mxu0 0
    %2495 = vmatpush1.bf16.msra.mxu0 0
    %2496 = vmatprep.subr.bf16.mxu0 0
    %2497 = vmatpush1.bf16.msra.mxu0 0
    %2498 = vmatprep.subr.bf16.mxu0 0
    %2499 = vmatpush1.bf16.msra.mxu0 0
    %2500 = vmatprep.subr.bf16.mxu0 0
    %2501 = vmatpush1.bf16.msra.mxu0 0
    %2502 = vmatprep.subr.bf16.mxu0 0
    %2503 = vmatpush1.bf16.msra.mxu0 0
    %2504 = vmatprep.subr.bf16.mxu0 0
    %2505 = vmatpush1.bf16.msra.mxu0 0
    %2506 = vmatprep.subr.bf16.mxu0 0
    %2507 = vmatpush1.bf16.msra.mxu0 0
    %2508 = vmatprep.subr.bf16.mxu0 0
    %2509 = vmatpush1.bf16.msra.mxu0 0
    %2510 = vmatprep.subr.bf16.mxu0 0
    %2511 = vmatpush1.bf16.msra.mxu0 0
    %2512 = vmatprep.mubr.bf16.mxu0 0
    %2513 = vmatmul.mubr.bf16.gmra.mrb[0].mxu0 %v2475
    %v2514 = vpop.f32.mrb[0].mxu0
    %v2515 = vadd.f32 0.0, %v2514
    %v2516 = vpop.f32.mrb[0].mxu0
    %v2517 = vpop.f32.mrb[0].mxu0
    %v2518 = vpop.f32.mrb[0].mxu0
    %2519 = vdwg.mxu0
    %v2520 = vadd.f32 %v2451, %v2515
    %2521 = vst.msk [vmem:[#allocation2] sm:$0xf] %vm1294, 0
    %v2523 = vunpack.c.l.b16 %v1292
    %v2524 = vpack.c.b16 %v2523, %v2523
    %2525 = vrot.lane.b32.xlu0 %v2524, 3
    %v2526 = vpop.permute.xlu0 %2525
    %2528 = vst.msk [vmem:[#allocation2] sm:$0xf] %vm1300, %v2526
    %v2529 = vld [vmem:[#allocation2] sm:$0xf]
    %v2530 = vld [vmem:[%s9] sm:$0x1]
    %v2532 = vpack.i.b16 %v2530, %v2530
    %v2534 = vlaneseq
    %v2535 = vshrl.u32 %v2534, 7
    %v2536 = vsub.s32 0, %v2535
    %v2537 = vrot.slane %v2532, %v2536
    %v2538 = vmul.bf16 %v2529, %v2537
    %v2539 = vld [vmem:[%s7] sm:$0xf]
    %v2541 = vsel %vm880, %v2539, 0
    %v2544 = vsel %vm1337, %v2538, 0
    %2546 = vmatprep.subr.bf16.mxu0 0
    %2547 = vmatpush1.bf16.msra.mxu0 %v2544
    %2548 = vmatprep.subr.bf16.mxu0 0
    %2549 = vmatpush1.bf16.msra.mxu0 0
    %2550 = vmatprep.subr.bf16.mxu0 0
    %2551 = vmatpush1.bf16.msra.mxu0 0
    %2552 = vmatprep.subr.bf16.mxu0 0
    %2553 = vmatpush1.bf16.msra.mxu0 0
    %2554 = vmatprep.subr.bf16.mxu0 0
    %2555 = vmatpush1.bf16.msra.mxu0 0
    %2556 = vmatprep.subr.bf16.mxu0 0
    %2557 = vmatpush1.bf16.msra.mxu0 0
    %2558 = vmatprep.subr.bf16.mxu0 0
    %2559 = vmatpush1.bf16.msra.mxu0 0
    %2560 = vmatprep.subr.bf16.mxu0 0
    %2561 = vmatpush1.bf16.msra.mxu0 0
    %2562 = vmatprep.subr.bf16.mxu0 0
    %2563 = vmatpush1.bf16.msra.mxu0 0
    %2564 = vmatprep.subr.bf16.mxu0 0
    %2565 = vmatpush1.bf16.msra.mxu0 0
    %2566 = vmatprep.subr.bf16.mxu0 0
    %2567 = vmatpush1.bf16.msra.mxu0 0
    %2568 = vmatprep.subr.bf16.mxu0 0
    %2569 = vmatpush1.bf16.msra.mxu0 0
    %2570 = vmatprep.subr.bf16.mxu0 0
    %2571 = vmatpush1.bf16.msra.mxu0 0
    %2572 = vmatprep.subr.bf16.mxu0 0
    %2573 = vmatpush1.bf16.msra.mxu0 0
    %2574 = vmatprep.subr.bf16.mxu0 0
    %2575 = vmatpush1.bf16.msra.mxu0 0
    %2576 = vmatprep.subr.bf16.mxu0 0
    %2577 = vmatpush1.bf16.msra.mxu0 0
    %2578 = vmatprep.mubr.bf16.mxu0 0
    %2579 = vmatmul.mubr.bf16.gmra.mrb[0].mxu0 %v2541
    %v2580 = vpop.f32.mrb[0].mxu0
    %v2581 = vadd.f32 0.0, %v2580
    %v2582 = vpop.f32.mrb[0].mxu0
    %v2583 = vpop.f32.mrb[0].mxu0
    %v2584 = vpop.f32.mrb[0].mxu0
    %2585 = vdwg.mxu0
    %v2586 = vadd.f32 %v2520, %v2581
    %v2587 = vshrl.u32 %v2530, 16
    %v2588 = vpack.i.b16 %v2587, %v2587
    %v2590 = vlaneseq
    %v2591 = vshrl.u32 %v2590, 7
    %v2592 = vsub.s32 0, %v2591
    %v2593 = vrot.slane %v2588, %v2592
    %v2595 = vunpack.c.l.b16 %v2593
    %v2596 = vpack.c.b16 %v2595, %v2595
    %2597 = vrot.lane.b32.xlu0 %v2596, 1
    %v2598 = vpop.permute.xlu0 %2597
    %v2600 = vmul.bf16 %v2529, %v2598
    %s2601 = scalar_lea.vmem %s7, 4
    %v2602 = vld [vmem:[%s2601] sm:$0xf]
    %v2604 = vunpack.c.l.b16 %v2600
    %v2605 = vpack.c.b16 %v2604, %v2604
    %2606 = vrot.lane.b32.xlu0 %v2605, 127
    %v2607 = vpop.permute.xlu0 %2606
    %v2609 = vsel %vm880, %v2602, 0
    %v2612 = vsel %vm1337, %v2607, 0
    %2614 = vmatprep.subr.bf16.mxu0 0
    %2615 = vmatpush1.bf16.msra.mxu0 %v2612
    %2616 = vmatprep.subr.bf16.mxu0 0
    %2617 = vmatpush1.bf16.msra.mxu0 0
    %2618 = vmatprep.subr.bf16.mxu0 0
    %2619 = vmatpush1.bf16.msra.mxu0 0
    %2620 = vmatprep.subr.bf16.mxu0 0
    %2621 = vmatpush1.bf16.msra.mxu0 0
    %2622 = vmatprep.subr.bf16.mxu0 0
    %2623 = vmatpush1.bf16.msra.mxu0 0
    %2624 = vmatprep.subr.bf16.mxu0 0
    %2625 = vmatpush1.bf16.msra.mxu0 0
    %2626 = vmatprep.subr.bf16.mxu0 0
    %2627 = vmatpush1.bf16.msra.mxu0 0
    %2628 = vmatprep.subr.bf16.mxu0 0
    %2629 = vmatpush1.bf16.msra.mxu0 0
    %2630 = vmatprep.subr.bf16.mxu0 0
    %2631 = vmatpush1.bf16.msra.mxu0 0
    %2632 = vmatprep.subr.bf16.mxu0 0
    %2633 = vmatpush1.bf16.msra.mxu0 0
    %2634 = vmatprep.subr.bf16.mxu0 0
    %2635 = vmatpush1.bf16.msra.mxu0 0
    %2636 = vmatprep.subr.bf16.mxu0 0
    %2637 = vmatpush1.bf16.msra.mxu0 0
    %2638 = vmatprep.subr.bf16.mxu0 0
    %2639 = vmatpush1.bf16.msra.mxu0 0
    %2640 = vmatprep.subr.bf16.mxu0 0
    %2641 = vmatpush1.bf16.msra.mxu0 0
    %2642 = vmatprep.subr.bf16.mxu0 0
    %2643 = vmatpush1.bf16.msra.mxu0 0
    %2644 = vmatprep.subr.bf16.mxu0 0
    %2645 = vmatpush1.bf16.msra.mxu0 0
    %2646 = vmatprep.mubr.bf16.mxu0 0
    %2647 = vmatmul.mubr.bf16.gmra.mrb[0].mxu0 %v2609
    %v2648 = vpop.f32.mrb[0].mxu0
    %v2649 = vadd.f32 0.0, %v2648
    %v2650 = vpop.f32.mrb[0].mxu0
    %v2651 = vpop.f32.mrb[0].mxu0
    %v2652 = vpop.f32.mrb[0].mxu0
    %2653 = vdwg.mxu0
    %v2654 = vadd.f32 %v2586, %v2649
    %v2655 = vld [vmem:[%s9] sm:$0x2]
    %v2657 = vpack.i.b16 %v2655, %v2655
    %v2659 = vlaneseq
    %v2660 = vshrl.u32 %v2659, 7
    %v2661 = vsub.s32 1, %v2660
    %v2662 = vrot.slane %v2657, %v2661
    %v2664 = vunpack.c.l.b16 %v2662
    %v2665 = vpack.c.b16 %v2664, %v2664
    %2666 = vrot.lane.b32.xlu0 %v2665, 2
    %v2667 = vpop.permute.xlu0 %2666
    %v2669 = vmul.bf16 %v2529, %v2667
    %s2670 = scalar_lea.vmem %s7, 8
    %v2671 = vld [vmem:[%s2670] sm:$0xf]
    %v2673 = vunpack.c.l.b16 %v2669
    %v2674 = vpack.c.b16 %v2673, %v2673
    %2675 = vrot.lane.b32.xlu0 %v2674, 126
    %v2676 = vpop.permute.xlu0 %2675
    %v2678 = vsel %vm880, %v2671, 0
    %v2681 = vsel %vm1337, %v2676, 0
    %2683 = vmatprep.subr.bf16.mxu0 0
    %2684 = vmatpush1.bf16.msra.mxu0 %v2681
    %2685 = vmatprep.subr.bf16.mxu0 0
    %2686 = vmatpush1.bf16.msra.mxu0 0
    %2687 = vmatprep.subr.bf16.mxu0 0
    %2688 = vmatpush1.bf16.msra.mxu0 0
    %2689 = vmatprep.subr.bf16.mxu0 0
    %2690 = vmatpush1.bf16.msra.mxu0 0
    %2691 = vmatprep.subr.bf16.mxu0 0
    %2692 = vmatpush1.bf16.msra.mxu0 0
    %2693 = vmatprep.subr.bf16.mxu0 0
    %2694 = vmatpush1.bf16.msra.mxu0 0
    %2695 = vmatprep.subr.bf16.mxu0 0
    %2696 = vmatpush1.bf16.msra.mxu0 0
    %2697 = vmatprep.subr.bf16.mxu0 0
    %2698 = vmatpush1.bf16.msra.mxu0 0
    %2699 = vmatprep.subr.bf16.mxu0 0
    %2700 = vmatpush1.bf16.msra.mxu0 0
    %2701 = vmatprep.subr.bf16.mxu0 0
    %2702 = vmatpush1.bf16.msra.mxu0 0
    %2703 = vmatprep.subr.bf16.mxu0 0
    %2704 = vmatpush1.bf16.msra.mxu0 0
    %2705 = vmatprep.subr.bf16.mxu0 0
    %2706 = vmatpush1.bf16.msra.mxu0 0
    %2707 = vmatprep.subr.bf16.mxu0 0
    %2708 = vmatpush1.bf16.msra.mxu0 0
    %2709 = vmatprep.subr.bf16.mxu0 0
    %2710 = vmatpush1.bf16.msra.mxu0 0
    %2711 = vmatprep.subr.bf16.mxu0 0
    %2712 = vmatpush1.bf16.msra.mxu0 0
    %2713 = vmatprep.subr.bf16.mxu0 0
    %2714 = vmatpush1.bf16.msra.mxu0 0
    %2715 = vmatprep.mubr.bf16.mxu0 0
    %2716 = vmatmul.mubr.bf16.gmra.mrb[0].mxu0 %v2678
    %v2717 = vpop.f32.mrb[0].mxu0
    %v2718 = vadd.f32 0.0, %v2717
    %v2719 = vpop.f32.mrb[0].mxu0
    %v2720 = vpop.f32.mrb[0].mxu0
    %v2721 = vpop.f32.mrb[0].mxu0
    %2722 = vdwg.mxu0
    %v2723 = vadd.f32 %v2654, %v2718
    %v2724 = vshrl.u32 %v2655, 16
    %v2725 = vpack.i.b16 %v2724, %v2724
    %v2727 = vlaneseq
    %v2728 = vshrl.u32 %v2727, 7
    %v2729 = vsub.s32 1, %v2728
    %v2730 = vrot.slane %v2725, %v2729
    %v2732 = vunpack.c.l.b16 %v2730
    %v2733 = vpack.c.b16 %v2732, %v2732
    %2734 = vrot.lane.b32.xlu0 %v2733, 2
    %v2735 = vpop.permute.xlu0 %2734
    %v2737 = vmul.bf16 %v2529, %v2735
    %s2738 = scalar_lea.vmem %s7, 12
    %v2739 = vld [vmem:[%s2738] sm:$0xf]
    %v2741 = vunpack.c.l.b16 %v2737
    %v2742 = vpack.c.b16 %v2741, %v2741
    %2743 = vrot.lane.b32.xlu0 %v2742, 126
    %v2744 = vpop.permute.xlu0 %2743
    %v2746 = vsel %vm880, %v2739, 0
    %v2749 = vsel %vm1337, %v2744, 0
    %2751 = vmatprep.subr.bf16.mxu0 0
    %2752 = vmatpush1.bf16.msra.mxu0 %v2749
    %2753 = vmatprep.subr.bf16.mxu0 0
    %2754 = vmatpush1.bf16.msra.mxu0 0
    %2755 = vmatprep.subr.bf16.mxu0 0
    %2756 = vmatpush1.bf16.msra.mxu0 0
    %2757 = vmatprep.subr.bf16.mxu0 0
    %2758 = vmatpush1.bf16.msra.mxu0 0
    %2759 = vmatprep.subr.bf16.mxu0 0
    %2760 = vmatpush1.bf16.msra.mxu0 0
    %2761 = vmatprep.subr.bf16.mxu0 0
    %2762 = vmatpush1.bf16.msra.mxu0 0
    %2763 = vmatprep.subr.bf16.mxu0 0
    %2764 = vmatpush1.bf16.msra.mxu0 0
    %2765 = vmatprep.subr.bf16.mxu0 0
    %2766 = vmatpush1.bf16.msra.mxu0 0
    %2767 = vmatprep.subr.bf16.mxu0 0
    %2768 = vmatpush1.bf16.msra.mxu0 0
    %2769 = vmatprep.subr.bf16.mxu0 0
    %2770 = vmatpush1.bf16.msra.mxu0 0
    %2771 = vmatprep.subr.bf16.mxu0 0
    %2772 = vmatpush1.bf16.msra.mxu0 0
    %2773 = vmatprep.subr.bf16.mxu0 0
    %2774 = vmatpush1.bf16.msra.mxu0 0
    %2775 = vmatprep.subr.bf16.mxu0 0
    %2776 = vmatpush1.bf16.msra.mxu0 0
    %2777 = vmatprep.subr.bf16.mxu0 0
    %2778 = vmatpush1.bf16.msra.mxu0 0
    %2779 = vmatprep.subr.bf16.mxu0 0
    %2780 = vmatpush1.bf16.msra.mxu0 0
    %2781 = vmatprep.subr.bf16.mxu0 0
    %2782 = vmatpush1.bf16.msra.mxu0 0
    %2783 = vmatprep.mubr.bf16.mxu0 0
    %2784 = vmatmul.mubr.bf16.gmra.mrb[0].mxu0 %v2746
    %v2785 = vpop.f32.mrb[0].mxu0
    %v2786 = vadd.f32 0.0, %v2785
    %v2787 = vpop.f32.mrb[0].mxu0
    %v2788 = vpop.f32.mrb[0].mxu0
    %v2789 = vpop.f32.mrb[0].mxu0
    %2790 = vdwg.mxu0
    %v2791 = vadd.f32 %v2723, %v2786
    %v2792 = vld [vmem:[%s9] sm:$0x4]
    %v2794 = vpack.i.b16 %v2792, %v2792
    %v2796 = vlaneseq
    %v2797 = vshrl.u32 %v2796, 7
    %v2798 = vsub.s32 2, %v2797
    %v2799 = vrot.slane %v2794, %v2798
    %v2801 = vunpack.c.l.b16 %v2799
    %v2802 = vpack.c.b16 %v2801, %v2801
    %2803 = vrot.lane.b32.xlu0 %v2802, 3
    %v2804 = vpop.permute.xlu0 %2803
    %v2806 = vmul.bf16 %v2529, %v2804
    %s2807 = scalar_lea.vmem %s7, 16
    %v2808 = vld [vmem:[%s2807] sm:$0xf]
    %v2810 = vunpack.c.l.b16 %v2806
    %v2811 = vpack.c.b16 %v2810, %v2810
    %2812 = vrot.lane.b32.xlu0 %v2811, 125
    %v2813 = vpop.permute.xlu0 %2812
    %v2815 = vsel %vm880, %v2808, 0
    %v2818 = vsel %vm1337, %v2813, 0
    %2820 = vmatprep.subr.bf16.mxu0 0
    %2821 = vmatpush1.bf16.msra.mxu0 %v2818
    %2822 = vmatprep.subr.bf16.mxu0 0
    %2823 = vmatpush1.bf16.msra.mxu0 0
    %2824 = vmatprep.subr.bf16.mxu0 0
    %2825 = vmatpush1.bf16.msra.mxu0 0
    %2826 = vmatprep.subr.bf16.mxu0 0
    %2827 = vmatpush1.bf16.msra.mxu0 0
    %2828 = vmatprep.subr.bf16.mxu0 0
    %2829 = vmatpush1.bf16.msra.mxu0 0
    %2830 = vmatprep.subr.bf16.mxu0 0
    %2831 = vmatpush1.bf16.msra.mxu0 0
    %2832 = vmatprep.subr.bf16.mxu0 0
    %2833 = vmatpush1.bf16.msra.mxu0 0
    %2834 = vmatprep.subr.bf16.mxu0 0
    %2835 = vmatpush1.bf16.msra.mxu0 0
    %2836 = vmatprep.subr.bf16.mxu0 0
    %2837 = vmatpush1.bf16.msra.mxu0 0
    %2838 = vmatprep.subr.bf16.mxu0 0
    %2839 = vmatpush1.bf16.msra.mxu0 0
    %2840 = vmatprep.subr.bf16.mxu0 0
    %2841 = vmatpush1.bf16.msra.mxu0 0
    %2842 = vmatprep.subr.bf16.mxu0 0
    %2843 = vmatpush1.bf16.msra.mxu0 0
    %2844 = vmatprep.subr.bf16.mxu0 0
    %2845 = vmatpush1.bf16.msra.mxu0 0
    %2846 = vmatprep.subr.bf16.mxu0 0
    %2847 = vmatpush1.bf16.msra.mxu0 0
    %2848 = vmatprep.subr.bf16.mxu0 0
    %2849 = vmatpush1.bf16.msra.mxu0 0
    %2850 = vmatprep.subr.bf16.mxu0 0
    %2851 = vmatpush1.bf16.msra.mxu0 0
    %2852 = vmatprep.mubr.bf16.mxu0 0
    %2853 = vmatmul.mubr.bf16.gmra.mrb[0].mxu0 %v2815
    %v2854 = vpop.f32.mrb[0].mxu0
    %v2855 = vadd.f32 0.0, %v2854
    %v2856 = vpop.f32.mrb[0].mxu0
    %v2857 = vpop.f32.mrb[0].mxu0
    %v2858 = vpop.f32.mrb[0].mxu0
    %2859 = vdwg.mxu0
    %v2860 = vadd.f32 %v2791, %v2855
    %v2861 = vshrl.u32 %v2792, 16
    %v2862 = vpack.i.b16 %v2861, %v2861
    %v2864 = vlaneseq
    %v2865 = vshrl.u32 %v2864, 7
    %v2866 = vsub.s32 2, %v2865
    %v2867 = vrot.slane %v2862, %v2866
    %v2869 = vunpack.c.l.b16 %v2867
    %v2870 = vpack.c.b16 %v2869, %v2869
    %2871 = vrot.lane.b32.xlu0 %v2870, 4
    %v2872 = vpop.permute.xlu0 %2871
    %v2874 = vmul.bf16 %v2529, %v2872
    %s2875 = scalar_lea.vmem %s7, 20
    %v2876 = vld [vmem:[%s2875] sm:$0xf]
    %v2878 = vunpack.c.l.b16 %v2874
    %v2879 = vpack.c.b16 %v2878, %v2878
    %2880 = vrot.lane.b32.xlu0 %v2879, 124
    %v2881 = vpop.permute.xlu0 %2880
    %v2883 = vsel %vm880, %v2876, 0
    %v2886 = vsel %vm1337, %v2881, 0
    %2888 = vmatprep.subr.bf16.mxu0 0
    %2889 = vmatpush1.bf16.msra.mxu0 %v2886
    %2890 = vmatprep.subr.bf16.mxu0 0
    %2891 = vmatpush1.bf16.msra.mxu0 0
    %2892 = vmatprep.subr.bf16.mxu0 0
    %2893 = vmatpush1.bf16.msra.mxu0 0
    %2894 = vmatprep.subr.bf16.mxu0 0
    %2895 = vmatpush1.bf16.msra.mxu0 0
    %2896 = vmatprep.subr.bf16.mxu0 0
    %2897 = vmatpush1.bf16.msra.mxu0 0
    %2898 = vmatprep.subr.bf16.mxu0 0
    %2899 = vmatpush1.bf16.msra.mxu0 0
    %2900 = vmatprep.subr.bf16.mxu0 0
    %2901 = vmatpush1.bf16.msra.mxu0 0
    %2902 = vmatprep.subr.bf16.mxu0 0
    %2903 = vmatpush1.bf16.msra.mxu0 0
    %2904 = vmatprep.subr.bf16.mxu0 0
    %2905 = vmatpush1.bf16.msra.mxu0 0
    %2906 = vmatprep.subr.bf16.mxu0 0
    %2907 = vmatpush1.bf16.msra.mxu0 0
    %2908 = vmatprep.subr.bf16.mxu0 0
    %2909 = vmatpush1.bf16.msra.mxu0 0
    %2910 = vmatprep.subr.bf16.mxu0 0
    %2911 = vmatpush1.bf16.msra.mxu0 0
    %2912 = vmatprep.subr.bf16.mxu0 0
    %2913 = vmatpush1.bf16.msra.mxu0 0
    %2914 = vmatprep.subr.bf16.mxu0 0
    %2915 = vmatpush1.bf16.msra.mxu0 0
    %2916 = vmatprep.subr.bf16.mxu0 0
    %2917 = vmatpush1.bf16.msra.mxu0 0
    %2918 = vmatprep.subr.bf16.mxu0 0
    %2919 = vmatpush1.bf16.msra.mxu0 0
    %2920 = vmatprep.mubr.bf16.mxu0 0
    %2921 = vmatmul.mubr.bf16.gmra.mrb[0].mxu0 %v2883
    %v2922 = vpop.f32.mrb[0].mxu0
    %v2923 = vadd.f32 0.0, %v2922
    %v2924 = vpop.f32.mrb[0].mxu0
    %v2925 = vpop.f32.mrb[0].mxu0
    %v2926 = vpop.f32.mrb[0].mxu0
    %2927 = vdwg.mxu0
    %v2928 = vadd.f32 %v2860, %v2923
    %v2929 = vld [vmem:[%s9] sm:$0x8]
    %v2931 = vpack.i.b16 %v2929, %v2929
    %v2933 = vlaneseq
    %v2934 = vshrl.u32 %v2933, 7
    %v2935 = vsub.s32 3, %v2934
    %v2936 = vrot.slane %v2931, %v2935
    %v2938 = vunpack.c.l.b16 %v2936
    %v2939 = vpack.c.b16 %v2938, %v2938
    %2940 = vrot.lane.b32.xlu0 %v2939, 4
    %v2941 = vpop.permute.xlu0 %2940
    %v2943 = vmul.bf16 %v2529, %v2941
    %s2944 = scalar_lea.vmem %s7, 24
    %v2945 = vld [vmem:[%s2944] sm:$0xf]
    %v2947 = vunpack.c.l.b16 %v2943
    %v2948 = vpack.c.b16 %v2947, %v2947
    %2949 = vrot.lane.b32.xlu0 %v2948, 124
    %v2950 = vpop.permute.xlu0 %2949
    %v2952 = vsel %vm880, %v2945, 0
    %v2955 = vsel %vm1337, %v2950, 0
    %2957 = vmatprep.subr.bf16.mxu0 0
    %2958 = vmatpush1.bf16.msra.mxu0 %v2955
    %2959 = vmatprep.subr.bf16.mxu0 0
    %2960 = vmatpush1.bf16.msra.mxu0 0
    %2961 = vmatprep.subr.bf16.mxu0 0
    %2962 = vmatpush1.bf16.msra.mxu0 0
    %2963 = vmatprep.subr.bf16.mxu0 0
    %2964 = vmatpush1.bf16.msra.mxu0 0
    %2965 = vmatprep.subr.bf16.mxu0 0
    %2966 = vmatpush1.bf16.msra.mxu0 0
    %2967 = vmatprep.subr.bf16.mxu0 0
    %2968 = vmatpush1.bf16.msra.mxu0 0
    %2969 = vmatprep.subr.bf16.mxu0 0
    %2970 = vmatpush1.bf16.msra.mxu0 0
    %2971 = vmatprep.subr.bf16.mxu0 0
    %2972 = vmatpush1.bf16.msra.mxu0 0
    %2973 = vmatprep.subr.bf16.mxu0 0
    %2974 = vmatpush1.bf16.msra.mxu0 0
    %2975 = vmatprep.subr.bf16.mxu0 0
    %2976 = vmatpush1.bf16.msra.mxu0 0
    %2977 = vmatprep.subr.bf16.mxu0 0
    %2978 = vmatpush1.bf16.msra.mxu0 0
    %2979 = vmatprep.subr.bf16.mxu0 0
    %2980 = vmatpush1.bf16.msra.mxu0 0
    %2981 = vmatprep.subr.bf16.mxu0 0
    %2982 = vmatpush1.bf16.msra.mxu0 0
    %2983 = vmatprep.subr.bf16.mxu0 0
    %2984 = vmatpush1.bf16.msra.mxu0 0
    %2985 = vmatprep.subr.bf16.mxu0 0
    %2986 = vmatpush1.bf16.msra.mxu0 0
    %2987 = vmatprep.subr.bf16.mxu0 0
    %2988 = vmatpush1.bf16.msra.mxu0 0
    %2989 = vmatprep.mubr.bf16.mxu0 0
    %2990 = vmatmul.mubr.bf16.gmra.mrb[0].mxu0 %v2952
    %v2991 = vpop.f32.mrb[0].mxu0
    %v2992 = vadd.f32 0.0, %v2991
    %v2993 = vpop.f32.mrb[0].mxu0
    %v2994 = vpop.f32.mrb[0].mxu0
    %v2995 = vpop.f32.mrb[0].mxu0
    %2996 = vdwg.mxu0
    %v2997 = vadd.f32 %v2928, %v2992
    %v2998 = vshrl.u32 %v2929, 16
    %v2999 = vpack.i.b16 %v2998, %v2998
    %v3001 = vlaneseq
    %v3002 = vshrl.u32 %v3001, 7
    %v3003 = vsub.s32 3, %v3002
    %v3004 = vrot.slane %v2999, %v3003
    %v3006 = vunpack.c.l.b16 %v3004
    %v3007 = vpack.c.b16 %v3006, %v3006
    %3008 = vrot.lane.b32.xlu0 %v3007, 5
    %v3009 = vpop.permute.xlu0 %3008
    %v3011 = vmul.bf16 %v2529, %v3009
    %s3012 = scalar_lea.vmem %s7, 28
    %v3013 = vld [vmem:[%s3012] sm:$0xf]
    %v3015 = vunpack.c.l.b16 %v3011
    %v3016 = vpack.c.b16 %v3015, %v3015
    %3017 = vrot.lane.b32.xlu0 %v3016, 123
    %v3018 = vpop.permute.xlu0 %3017
    %v3020 = vsel %vm880, %v3013, 0
    %v3023 = vsel %vm1337, %v3018, 0
    %3025 = vmatprep.subr.bf16.mxu0 0
    %3026 = vmatpush1.bf16.msra.mxu0 %v3023
    %3027 = vmatprep.subr.bf16.mxu0 0
    %3028 = vmatpush1.bf16.msra.mxu0 0
    %3029 = vmatprep.subr.bf16.mxu0 0
    %3030 = vmatpush1.bf16.msra.mxu0 0
    %3031 = vmatprep.subr.bf16.mxu0 0
    %3032 = vmatpush1.bf16.msra.mxu0 0
    %3033 = vmatprep.subr.bf16.mxu0 0
    %3034 = vmatpush1.bf16.msra.mxu0 0
    %3035 = vmatprep.subr.bf16.mxu0 0
    %3036 = vmatpush1.bf16.msra.mxu0 0
    %3037 = vmatprep.subr.bf16.mxu0 0
    %3038 = vmatpush1.bf16.msra.mxu0 0
    %3039 = vmatprep.subr.bf16.mxu0 0
    %3040 = vmatpush1.bf16.msra.mxu0 0
    %3041 = vmatprep.subr.bf16.mxu0 0
    %3042 = vmatpush1.bf16.msra.mxu0 0
    %3043 = vmatprep.subr.bf16.mxu0 0
    %3044 = vmatpush1.bf16.msra.mxu0 0
    %3045 = vmatprep.subr.bf16.mxu0 0
    %3046 = vmatpush1.bf16.msra.mxu0 0
    %3047 = vmatprep.subr.bf16.mxu0 0
    %3048 = vmatpush1.bf16.msra.mxu0 0
    %3049 = vmatprep.subr.bf16.mxu0 0
    %3050 = vmatpush1.bf16.msra.mxu0 0
    %3051 = vmatprep.subr.bf16.mxu0 0
    %3052 = vmatpush1.bf16.msra.mxu0 0
    %3053 = vmatprep.subr.bf16.mxu0 0
    %3054 = vmatpush1.bf16.msra.mxu0 0
    %3055 = vmatprep.subr.bf16.mxu0 0
    %3056 = vmatpush1.bf16.msra.mxu0 0
    %3057 = vmatprep.mubr.bf16.mxu0 0
    %3058 = vmatmul.mubr.bf16.gmra.mrb[0].mxu0 %v3020
    %v3059 = vpop.f32.mrb[0].mxu0
    %v3060 = vadd.f32 0.0, %v3059
    %v3061 = vpop.f32.mrb[0].mxu0
    %v3062 = vpop.f32.mrb[0].mxu0
    %v3063 = vpop.f32.mrb[0].mxu0
    %3064 = vdwg.mxu0
    %v3065 = vadd.f32 %v2997, %v3060
    %v3066 = vld [vmem:[%s9 + $0x4] sm:$0x1]
    %v3068 = vpack.i.b16 %v3066, %v3066
    %v3070 = vlaneseq
    %v3071 = vshrl.u32 %v3070, 7
    %v3072 = vsub.s32 0, %v3071
    %v3073 = vrot.slane %v3068, %v3072
    %v3075 = vunpack.c.l.b16 %v3073
    %v3076 = vpack.c.b16 %v3075, %v3075
    %3077 = vrot.lane.b32.xlu0 %v3076, 6
    %v3078 = vpop.permute.xlu0 %3077
    %v3080 = vmul.bf16 %v2529, %v3078
    %s3081 = scalar_lea.vmem %s7, 32
    %v3082 = vld [vmem:[%s3081] sm:$0xf]
    %v3084 = vunpack.c.l.b16 %v3080
    %v3085 = vpack.c.b16 %v3084, %v3084
    %3086 = vrot.lane.b32.xlu0 %v3085, 122
    %v3087 = vpop.permute.xlu0 %3086
    %v3089 = vsel %vm880, %v3082, 0
    %v3092 = vsel %vm1337, %v3087, 0
    %3094 = vmatprep.subr.bf16.mxu0 0
    %3095 = vmatpush1.bf16.msra.mxu0 %v3092
    %3096 = vmatprep.subr.bf16.mxu0 0
    %3097 = vmatpush1.bf16.msra.mxu0 0
    %3098 = vmatprep.subr.bf16.mxu0 0
    %3099 = vmatpush1.bf16.msra.mxu0 0
    %3100 = vmatprep.subr.bf16.mxu0 0
    %3101 = vmatpush1.bf16.msra.mxu0 0
    %3102 = vmatprep.subr.bf16.mxu0 0
    %3103 = vmatpush1.bf16.msra.mxu0 0
    %3104 = vmatprep.subr.bf16.mxu0 0
    %3105 = vmatpush1.bf16.msra.mxu0 0
    %3106 = vmatprep.subr.bf16.mxu0 0
    %3107 = vmatpush1.bf16.msra.mxu0 0
    %3108 = vmatprep.subr.bf16.mxu0 0
    %3109 = vmatpush1.bf16.msra.mxu0 0
    %3110 = vmatprep.subr.bf16.mxu0 0
    %3111 = vmatpush1.bf16.msra.mxu0 0
    %3112 = vmatprep.subr.bf16.mxu0 0
    %3113 = vmatpush1.bf16.msra.mxu0 0
    %3114 = vmatprep.subr.bf16.mxu0 0
    %3115 = vmatpush1.bf16.msra.mxu0 0
    %3116 = vmatprep.subr.bf16.mxu0 0
    %3117 = vmatpush1.bf16.msra.mxu0 0
    %3118 = vmatprep.subr.bf16.mxu0 0
    %3119 = vmatpush1.bf16.msra.mxu0 0
    %3120 = vmatprep.subr.bf16.mxu0 0
    %3121 = vmatpush1.bf16.msra.mxu0 0
    %3122 = vmatprep.subr.bf16.mxu0 0
    %3123 = vmatpush1.bf16.msra.mxu0 0
    %3124 = vmatprep.subr.bf16.mxu0 0
    %3125 = vmatpush1.bf16.msra.mxu0 0
    %3126 = vmatprep.mubr.bf16.mxu0 0
    %3127 = vmatmul.mubr.bf16.gmra.mrb[0].mxu0 %v3089
    %v3128 = vpop.f32.mrb[0].mxu0
    %v3129 = vadd.f32 0.0, %v3128
    %v3130 = vpop.f32.mrb[0].mxu0
    %v3131 = vpop.f32.mrb[0].mxu0
    %v3132 = vpop.f32.mrb[0].mxu0
    %3133 = vdwg.mxu0
    %v3134 = vadd.f32 %v3065, %v3129
    %v3135 = vld [vmem:[%s10] sm:$0xff]
    %v3136 = vld [vmem:[%s11] sm:$0xff]
    %s3137 = sld [smem:[#allocation3 + $0x2]]
    %v3138 = vsel %vm880, %v3134, 0.0
    %3139 = vadd.xlane.f32.xlu0 %v3138
    %v3140 = vpop.xlane.xlu0 %3139
    %v3141 = vmul.f32 %v3140, 0.125
    %v3142 = vsub.f32 %v3134, %v3141
    %v3143 = vmul.f32 %v3142, %v3142
    %v3144 = vsel %vm880, %v3143, 0.0
    %3145 = vadd.xlane.f32.xlu0 %v3144
    %v3146 = vpop.xlane.xlu0 %3145
    %v3147 = vmul.f32 %v3146, 0.125
    %v3148 = vadd.f32 %v3147, 1e-05
    %v3149 = vrsqrt.pop %v3148
    %v3150 = vmul.f32 %v3149, %v3135
    %3152 = vset.pattern.permute.xlu0 2
    %3153 = vperm.xlu0 %3152, %v3150
    %v3154 = vpop.permute.xlu0 %3153
    %v3156 = vmul.f32 %v3142, %v3154
    %3158 = vset.pattern.permute.xlu0 2
    %3159 = vperm.xlu0 %3158, %v3136
    %v3160 = vpop.permute.xlu0 %3159
    %v3162 = vadd.f32 %v3156, %v3160
    %vm3163 = vcmp.gt.f32.partialorder %v3162, 0.0
    %v3164 = vstv %s3137
    %v3165 = vmul.f32 %v3164, %v3162
    %v3166 = vsel %vm3163, %v3162, %v3165
    %v3167 = vpack.c.bf16 %v3166, %v3166
    %v3168 = vld [vmem:[%s8] sm:$0x3]
    %v3170 = vsel %vm880, %v3168, 0
    %v3173 = vsel %vm1337, %v3167, 0
    %3175 = vmatprep.subr.bf16.mxu0 0
    %3176 = vmatpush1.bf16.msra.mxu0 %v3173
    %3177 = vmatprep.subr.bf16.mxu0 0
    %3178 = vmatpush1.bf16.msra.mxu0 0
    %3179 = vmatprep.subr.bf16.mxu0 0
    %3180 = vmatpush1.bf16.msra.mxu0 0
    %3181 = vmatprep.subr.bf16.mxu0 0
    %3182 = vmatpush1.bf16.msra.mxu0 0
    %3183 = vmatprep.subr.bf16.mxu0 0
    %3184 = vmatpush1.bf16.msra.mxu0 0
    %3185 = vmatprep.subr.bf16.mxu0 0
    %3186 = vmatpush1.bf16.msra.mxu0 0
    %3187 = vmatprep.subr.bf16.mxu0 0
    %3188 = vmatpush1.bf16.msra.mxu0 0
    %3189 = vmatprep.subr.bf16.mxu0 0
    %3190 = vmatpush1.bf16.msra.mxu0 0
    %3191 = vmatprep.subr.bf16.mxu0 0
    %3192 = vmatpush1.bf16.msra.mxu0 0
    %3193 = vmatprep.subr.bf16.mxu0 0
    %3194 = vmatpush1.bf16.msra.mxu0 0
    %3195 = vmatprep.subr.bf16.mxu0 0
    %3196 = vmatpush1.bf16.msra.mxu0 0
    %3197 = vmatprep.subr.bf16.mxu0 0
    %3198 = vmatpush1.bf16.msra.mxu0 0
    %3199 = vmatprep.subr.bf16.mxu0 0
    %3200 = vmatpush1.bf16.msra.mxu0 0
    %3201 = vmatprep.subr.bf16.mxu0 0
    %3202 = vmatpush1.bf16.msra.mxu0 0
    %3203 = vmatprep.subr.bf16.mxu0 0
    %3204 = vmatpush1.bf16.msra.mxu0 0
    %3205 = vmatprep.subr.bf16.mxu0 0
    %3206 = vmatpush1.bf16.msra.mxu0 0
    %3207 = vmatprep.mubr.bf16.mxu0 0
    %3208 = vmatmul.mubr.bf16.gmra.mrb[0].mxu0 %v3170
    %v3209 = vpop.f32.mrb[0].mxu0
    %v3210 = vadd.f32 0.0, %v3209
    %v3211 = vpop.f32.mrb[0].mxu0
    %v3212 = vpop.f32.mrb[0].mxu0
    %v3213 = vpop.f32.mrb[0].mxu0
    %3214 = vdwg.mxu0
    %v3215 = vld [vmem:[%s12] sm:$0xf]
    %v3216 = vld [vmem:[%s13] sm:$0xf]
    %s3217 = sld [smem:[#allocation3 + $0x3]]
    %vm3218 = vcmask 60416
    %v3219 = vsel %vm3218, %v3210, 0.0
    %3220 = vadd.xlane.f32.xlu0 %v3219
    %v3221 = vpop.xlane.xlu0 %3220
    %v3222 = vmul.f32 %v3221, 0.125
    %v3223 = vsub.f32 %v3210, %v3222
    %v3224 = vmul.f32 %v3223, %v3223
    %v3225 = vsel %vm3218, %v3224, 0.0
    %3226 = vadd.xlane.f32.xlu0 %v3225
    %v3227 = vpop.xlane.xlu0 %3226
    %v3228 = vmul.f32 %v3227, 0.125
    %v3229 = vadd.f32 %v3228, 1e-05
    %v3230 = vrsqrt.pop %v3229
    %v3231 = vmul.f32 %v3230, %v3215
    %3233 = vset.pattern.permute.xlu0 0
    %3234 = vperm.xlu0 %3233, %v3231
    %v3235 = vpop.permute.xlu0 %3234
    %v3237 = vmul.f32 %v3223, %v3235
    %3239 = vset.pattern.permute.xlu0 0
    %3240 = vperm.xlu0 %3239, %v3216
    %v3241 = vpop.permute.xlu0 %3240
    %v3243 = vadd.f32 %v3237, %v3241
    %vm3244 = vcmp.gt.f32.partialorder %v3243, 0.0
    %v3245 = vstv %s3217
    %v3246 = vmul.f32 %v3245, %v3243
    %v3247 = vsel %vm3244, %v3243, %v3246
    %v3248 = vpack.c.bf16 %v3247, %v3247
    %vm3249 = vcmask 58368
    %3250 = vst.msk [vmem:[%s15] sm:$0x3] %vm3249, %v3248
    // Predicated region
    $region66: #{encoder_block_forward.3} parent=1 // pred_check
      _
    $region67: #{encoder_block_forward.3} parent=1 // pred_check_branch
      %3252 = sbr.rel (0) target = $region69
    $region68: #{encoder_block_forward.3} parent=1 // pred_region
      _
    $region69: #{encoder_block_forward.3} parent=1 // pred_fallthru
      _
    // Predicated region
    $region70: #{encoder_block_forward.3} parent=1 // pred_check
      _
    $region71: #{encoder_block_forward.3} parent=1 // pred_check_branch
      %3254 = sbr.rel (0) target = $region73
    $region72: #{encoder_block_forward.3} parent=1 // pred_region
      _
    $region73: #{encoder_block_forward.3} parent=1 // pred_fallthru
      _
    %3255 = vsyncpa [#allocation4], 1

</llo_original>
